<compile_context>
chip_gen: v5e
topology: v5e:2x2
jax: 0.10.0
libtpu: 0.0.40
codegen_flags: <defaults>
</compile_context>

<pallas_src>
import jax
import jax.numpy as jnp
from jax.experimental import pallas as pl
from jax.experimental.pallas import tpu as pltpu

BN_EPS = 1e-5
LANE = 128


def _round_up(x, m):
    return (x + m - 1) // m * m


# ------------------------------ Pallas kernels ------------------------------

def _conv_elu_stats_kernel(x_ref, sc_ref, sh_ref, w_ref, b_ref,
                           y_ref, st_ref, xp_ref, im_ref):
    """One batch element:
       input affine (folds previous BN; identity for conv1) -> zero-padded
       bf16 tile (Cin-lane-narrow scratch) -> compact im2col (H*W, 9*Cin) in
       VMEM -> one MXU matmul per <=128-row half against the (9*Cin, 128)
       packed weight -> +bias -> ELU -> bf16 store of the real Cout channels,
       plus f32 per-channel sum / sum-of-squares partials for BatchNorm."""
    H, W, Cin = x_ref.shape[1], x_ref.shape[2], x_ref.shape[3]
    K, Coutp = w_ref.shape
    Cout = y_ref.shape[3]
    M = H * W

    # Fold the previous layer's BN into the input; single f32 -> bf16 cast.
    xb = (x_ref[0] * sc_ref[...] + sh_ref[...]).astype(jnp.bfloat16)  # (H,W,Cin)

    # Zero-padded activation tile (borders stay zero, interior rewritten).
    xp_ref[...] = jnp.zeros(xp_ref.shape, xp_ref.dtype)
    xp_ref[1:H + 1, 1:W + 1, :] = xb

    # Compact im2col: column block [tap*Cin, (tap+1)*Cin) holds the window
    # shifted by (dy, dx).  Each copy is only (H*W, Cin) bf16.
    for dy in range(3):
        for dx in range(3):
            tap = 3 * dy + dx
            im_ref[:, tap * Cin:(tap + 1) * Cin] = (
                xp_ref[dy:dy + H, dx:dx + W, :].reshape(M, Cin))

    w = w_ref[...]                    # (K, Coutp) bf16, resident in VMEM
    bias = b_ref[...]                 # (1, Coutp) f32

    # Row-halves of <=128 rows keep the f32 accumulator + bf16 LHS well under
    # the 64-vreg budget.
    Hc = max(1, LANE // W)
    while H % Hc:
        Hc -= 1
    RB = Hc * W

    s = jnp.zeros((1, Coutp), jnp.float32)
    q = jnp.zeros((1, Coutp), jnp.float32)
    for h0 in range(0, H, Hc):
        lhs = im_ref[h0 * W:h0 * W + RB, :]                        # (RB, K) bf16
        acc = jnp.dot(lhs, w, preferred_element_type=jnp.float32) + bias
        # ELU (alpha=1); clamp so the unselected exp branch never overflows.
        y = jnp.where(acc > 0.0, acc, jnp.exp(jnp.minimum(acc, 0.0)) - 1.0)
        s = s + jnp.sum(y, axis=0, keepdims=True)
        q = q + jnp.sum(y * y, axis=0, keepdims=True)
        y_ref[0, h0:h0 + Hc, :, :] = (
            y[:, 0:Cout].reshape(Hc, W, Cout).astype(y_ref.dtype))

    # Single (2, Coutp) store of the BatchNorm partials (padded channels have
    # zero weight/bias -> zero stats; they are sliced away outside).
    # TODO(synk): E[y^2]-E[y]^2 from f32 sums is fine at this size; use a
    # centered / Welford accumulation for production-scale N*H*W.
    st_ref[0] = jnp.concatenate([s, q], axis=0)


def _bn_pool_kernel(y_ref, sc_ref, sh_ref, x_ref, p_ref):
    """Apply the BatchNorm affine once and 2x2 max-pool the normalized tile
    via a window reshape + max (no strided ref reads; single block stores)."""
    Th, W, C = y_ref.shape[1], y_ref.shape[2], y_ref.shape[3]
    z = y_ref[0].astype(jnp.float32) * sc_ref[...] + sh_ref[...]     # (Th, W, C)
    x_ref[0] = z
    zw = z.reshape(Th // 2, 2, W // 2, 2, C)
    p_ref[0] = jnp.max(jnp.max(zw, axis=3), axis=1)                  # (Th//2, W//2, C)


# -------------------------------- wrappers ----------------------------------

def _conv_elu_stats(x, scale, shift, w_packed, bias, cout):
    N, H, W, Cin = x.shape
    K, Coutp = w_packed.shape
    assert K == 9 * Cin
    flops = 2 * N * H * W * K * Coutp
    bytes_acc = (x.size * x.dtype.itemsize + w_packed.size * 2 + bias.size * 4
                 + N * H * W * cout * 2 + N * 2 * Coutp * 4)
    return pl.pallas_call(
        _conv_elu_stats_kernel,
        out_shape=(jax.ShapeDtypeStruct((N, H, W, cout), jnp.bfloat16),
                   jax.ShapeDtypeStruct((N, 2, Coutp), jnp.float32)),
        grid=(N,),
        in_specs=[
            pl.BlockSpec((1, H, W, Cin), lambda n: (n, 0, 0, 0)),
            pl.BlockSpec((1, Cin), lambda n: (0, 0)),      # input-affine scale
            pl.BlockSpec((1, Cin), lambda n: (0, 0)),      # input-affine shift
            pl.BlockSpec((K, Coutp), lambda n: (0, 0)),    # packed weights
            pl.BlockSpec((1, Coutp), lambda n: (0, 0)),    # bias
        ],
        out_specs=(
            pl.BlockSpec((1, H, W, cout), lambda n: (n, 0, 0, 0)),
            pl.BlockSpec((1, 2, Coutp), lambda n: (n, 0, 0)),
        ),
        scratch_shapes=[
            pltpu.VMEM((H + 2, W + 2, Cin), jnp.bfloat16),   # padded activations
            pltpu.VMEM((H * W, K), jnp.bfloat16),            # compact im2col
        ],
        compiler_params=pltpu.CompilerParams(
            dimension_semantics=("parallel",),
            vmem_limit_bytes=48 * 1024 * 1024),
        cost_estimate=pl.CostEstimate(
            flops=flops, transcendentals=N * H * W * Coutp,
            bytes_accessed=bytes_acc),
    )(x, scale, shift, w_packed, bias)


def _bn_apply_pool(y, scale, shift):
    N, H, W, C = y.shape
    Th = 8 if H % 8 == 0 else 2
    flops = 4 * N * H * W * C
    bytes_acc = (y.size * y.dtype.itemsize
                 + 4 * (N * H * W * C + N * (H // 2) * (W // 2) * C))
    return pl.pallas_call(
        _bn_pool_kernel,
        out_shape=(jax.ShapeDtypeStruct((N, H, W, C), jnp.float32),
                   jax.ShapeDtypeStruct((N, H // 2, W // 2, C), jnp.float32)),
        grid=(N, H // Th),
        in_specs=[
            pl.BlockSpec((1, Th, W, C), lambda n, h: (n, h, 0, 0)),
            pl.BlockSpec((1, C), lambda n, h: (0, 0)),
            pl.BlockSpec((1, C), lambda n, h: (0, 0)),
        ],
        out_specs=(
            pl.BlockSpec((1, Th, W, C), lambda n, h: (n, h, 0, 0)),
            pl.BlockSpec((1, Th // 2, W // 2, C), lambda n, h: (n, h, 0, 0)),
        ),
        compiler_params=pltpu.CompilerParams(
            dimension_semantics=("parallel", "parallel"),
            vmem_limit_bytes=48 * 1024 * 1024),
        cost_estimate=pl.CostEstimate(
            flops=flops, transcendentals=0, bytes_accessed=bytes_acc),
    )(y, scale, shift)


# ------------------------------ param plumbing ------------------------------

def _pack_conv_weights(w_oihw, coutp):
    # (O, I, 3, 3) -> rows ordered (ky*3+kx)*I + c to match the im2col columns.
    O, I, KH, KW = w_oihw.shape
    w = jnp.transpose(w_oihw, (2, 3, 1, 0)).reshape(KH * KW * I, O)
    w = jnp.pad(w, ((0, 0), (0, coutp - O)))
    return w.astype(jnp.bfloat16)


def _bn_scale_shift(stats, gamma, beta, count, cout):
    # stats: (N, 2, Coutp) per-block [sum, sumsq] -> fused affine (scale, shift).
    s = jnp.sum(stats[:, 0, :cout], axis=0)
    q = jnp.sum(stats[:, 1, :cout], axis=0)
    mean = s / count
    var = jnp.maximum(q / count - mean * mean, 0.0)
    scale = gamma * jax.lax.rsqrt(var + BN_EPS)
    shift = beta - mean * scale
    return scale[None, :], shift[None, :]


@jax.jit
def encoder_block_forward(x_nchw, params):
    x = jnp.transpose(x_nchw, (0, 2, 3, 1)).astype(jnp.float32)     # NHWC
    N, H, W, Cin = x.shape
    Cout = params["w1"].shape[0]
    assert H % 2 == 0 and W % 2 == 0, "2x2 max-pool expects even H, W"

    Coutp = _round_up(Cout, LANE)                 # lane-dense matmul/stats width
    w1 = _pack_conv_weights(params["w1"], Coutp)  # (9*Cin,  Coutp) bf16
    w2 = _pack_conv_weights(params["w2"], Coutp)  # (9*Cout, Coutp) bf16
    b1 = jnp.pad(params["b1"], (0, Coutp - Cout))[None, :]
    b2 = jnp.pad(params["b2"], (0, Coutp - Cout))[None, :]

    count = N * H * W

    # conv1 + ELU (+ BN1 partial stats); input affine is identity.
    one = jnp.ones((1, Cin), jnp.float32)
    zero = jnp.zeros((1, Cin), jnp.float32)
    y1, st1 = _conv_elu_stats(x, one, zero, w1, b1, Cout)
    sc1, sh1 = _bn_scale_shift(st1, params["bn1_w"], params["bn1_b"], count, Cout)

    # BN1 folded into conv2's input affine; conv2 + ELU (+ BN2 partial stats).
    y2, st2 = _conv_elu_stats(y1, sc1, sh1, w2, b2, Cout)
    sc2, sh2 = _bn_scale_shift(st2, params["bn2_w"], params["bn2_b"], count, Cout)

    # BN2 apply fused with the 2x2 max-pool.
    x_out, p_out = _bn_apply_pool(y2, sc2, sh2)

    return (jnp.transpose(x_out, (0, 3, 1, 2)),
            jnp.transpose(p_out, (0, 3, 1, 2)))


# ---------------------- pure-JAX reference (for checking) -------------------

def _ref_forward(x_nchw, params):
    x = jnp.transpose(x_nchw, (0, 2, 3, 1)).astype(jnp.float32)

    def conv(x, w_oihw, b):
        w_hwio = jnp.transpose(w_oihw, (2, 3, 1, 0))
        y = jax.lax.conv_general_dilated(
            x, w_hwio, (1, 1), "SAME",
            dimension_numbers=("NHWC", "HWIO", "NHWC"),
            precision=jax.lax.Precision.HIGHEST)
        return y + b

    def elu(y):
        return jnp.where(y > 0, y, jnp.exp(jnp.minimum(y, 0.0)) - 1.0)

    def bn(y, g, be):
        m = jnp.mean(y, axis=(0, 1, 2), keepdims=True)
        v = jnp.mean((y - m) ** 2, axis=(0, 1, 2), keepdims=True)
        return g * (y - m) * jax.lax.rsqrt(v + BN_EPS) + be

    y = bn(elu(conv(x, params["w1"], params["b1"])), params["bn1_w"], params["bn1_b"])
    y = bn(elu(conv(y, params["w2"], params["b2"])), params["bn2_w"], params["bn2_b"])
    p = jnp.max(jnp.stack([y[:, 0::2, 0::2, :], y[:, 0::2, 1::2, :],
                           y[:, 1::2, 0::2, :], y[:, 1::2, 1::2, :]]), axis=0)
    return jnp.transpose(y, (0, 3, 1, 2)), jnp.transpose(p, (0, 3, 1, 2))


# ----------------------------------- main ------------------------------------

def _init_params(key, in_c, out_c):
    ks = jax.random.split(key, 4)
    return {
        "w1": 0.1 * jax.random.normal(ks[0], (out_c, in_c, 3, 3), jnp.float32),
        "b1": 0.05 * jax.random.normal(ks[1], (out_c,), jnp.float32),
        "bn1_w": jnp.ones((out_c,), jnp.float32),
        "bn1_b": jnp.zeros((out_c,), jnp.float32),
        "w2": 0.1 * jax.random.normal(ks[2], (out_c, out_c, 3, 3), jnp.float32),
        "b2": 0.05 * jax.random.normal(ks[3], (out_c,), jnp.float32),
        "bn2_w": jnp.ones((out_c,), jnp.float32),
        "bn2_b": jnp.zeros((out_c,), jnp.float32),
    }


if __name__ == "__main__":
    key = jax.random.PRNGKey(0)
    kx, kp = jax.random.split(key)
    N, in_c, out_c, H, W = 2, 4, 8, 16, 16

    x = jax.random.normal(kx, (N, in_c, H, W), jnp.float32)
    params = _init_params(kp, in_c, out_c)

    x_out, p_out = encoder_block_forward(x, params)
    jax.block_until_ready((x_out, p_out))

    assert x_out.shape == (N, out_c, H, W)
    assert p_out.shape == (N, out_c, H // 2, W // 2)

    x_ref, p_ref = _ref_forward(x, params)
    # bf16 MXU operands + bf16 inter-stage activations (f32 accumulation)
    # -> slightly looser tolerance vs the f32-HIGHEST reference.
    assert jnp.allclose(x_out, x_ref, rtol=3e-2, atol=4e-2)
    assert jnp.allclose(p_out, p_ref, rtol=3e-2, atol=4e-2)

    print("KERNEL_OK")
</pallas_src>

<mosaic_0001>
module attributes {stable_mosaic.version = 11 : i64} {
  func.func @_conv_elu_stats_kernel(%arg0: i32, %arg1: memref<1x16x16x4xf32, #tpu.memory_space<vmem>>, %arg2: memref<1x4xf32, #tpu.memory_space<vmem>>, %arg3: memref<1x4xf32, #tpu.memory_space<vmem>>, %arg4: memref<36x128xbf16, #tpu.memory_space<vmem>>, %arg5: memref<1x128xf32, #tpu.memory_space<vmem>>, %arg6: memref<1x16x16x8xbf16, #tpu.memory_space<vmem>>, %arg7: memref<1x2x128xf32, #tpu.memory_space<vmem>>, %arg8: memref<18x18x4xbf16, #tpu.memory_space<vmem>>, %arg9: memref<256x36xbf16, #tpu.memory_space<vmem>>) attributes {dimension_semantics = [#tpu.dimension_semantics<parallel>], iteration_bounds = array<i64: 2>, scalar_prefetch = 0 : i64, scratch_operands = 2 : i64, tpu.core_type = #tpu.core_type<tc>, window_params = [{transform_indices = @transform_0, window_bounds = array<i64: 1, 16, 16, 4>}, {pipeline_mode = #tpu.pipeline_mode<synchronous>, transform_indices = @transform_1, window_bounds = array<i64: 1, 4>}, {pipeline_mode = #tpu.pipeline_mode<synchronous>, transform_indices = @transform_2, window_bounds = array<i64: 1, 4>}, {pipeline_mode = #tpu.pipeline_mode<synchronous>, transform_indices = @transform_3, window_bounds = array<i64: 36, 128>}, {pipeline_mode = #tpu.pipeline_mode<synchronous>, transform_indices = @transform_4, window_bounds = array<i64: 1, 128>}, {transform_indices = @transform_5, window_bounds = array<i64: 1, 16, 16, 8>}, {transform_indices = @transform_6, window_bounds = array<i64: 1, 2, 128>}]} {
    %c0 = arith.constant 0 : index
    %c0_0 = arith.constant 0 : index
    %c0_1 = arith.constant 0 : index
    %c0_2 = arith.constant 0 : index
    %0 = vector.load %arg1[%c0, %c0_0, %c0_1, %c0_2] : memref<1x16x16x4xf32, #tpu.memory_space<vmem>>, vector<1x16x16x4xf32>
    %1 = vector.shape_cast %0 : vector<1x16x16x4xf32> to vector<16x16x4xf32>
    %c0_3 = arith.constant 0 : index
    %c0_4 = arith.constant 0 : index
    %2 = vector.load %arg2[%c0_3, %c0_4] : memref<1x4xf32, #tpu.memory_space<vmem>>, vector<1x4xf32>
    %3 = vector.shape_cast %2 : vector<1x4xf32> to vector<1x1x4xf32>
    %4 = vector.broadcast %3 : vector<1x1x4xf32> to vector<16x16x4xf32>
    %5 = arith.mulf %1, %4 : vector<16x16x4xf32>
    %c0_5 = arith.constant 0 : index
    %c0_6 = arith.constant 0 : index
    %6 = vector.load %arg3[%c0_5, %c0_6] : memref<1x4xf32, #tpu.memory_space<vmem>>, vector<1x4xf32>
    %7 = vector.shape_cast %6 : vector<1x4xf32> to vector<1x1x4xf32>
    %8 = vector.broadcast %7 : vector<1x1x4xf32> to vector<16x16x4xf32>
    %9 = arith.addf %5, %8 : vector<16x16x4xf32>
    %10 = arith.truncf %9 : vector<16x16x4xf32> to vector<16x16x4xbf16>
    %cst = arith.constant 0.000000e+00 : bf16
    %11 = vector.broadcast %cst : bf16 to vector<18x18x4xbf16>
    %c0_7 = arith.constant 0 : index
    %c0_8 = arith.constant 0 : index
    %c0_9 = arith.constant 0 : index
    %12 = vector.load %arg8[%c0_7, %c0_8, %c0_9] : memref<18x18x4xbf16, #tpu.memory_space<vmem>>, vector<18x18x4xbf16>
    tpu.vector_store %arg8[%c0_7, %c0_8, %c0_9], %11 {strides = array<i32>} : memref<18x18x4xbf16, #tpu.memory_space<vmem>>, vector<18x18x4xbf16>,
    %c1 = arith.constant 1 : index
    %c1_10 = arith.constant 1 : index
    %c0_11 = arith.constant 0 : index
    %13 = vector.load %arg8[%c1, %c1_10, %c0_11] : memref<18x18x4xbf16, #tpu.memory_space<vmem>>, vector<16x16x4xbf16>
    tpu.vector_store %arg8[%c1, %c1_10, %c0_11], %10 {strides = array<i32>} : memref<18x18x4xbf16, #tpu.memory_space<vmem>>, vector<16x16x4xbf16>,
    %c0_12 = arith.constant 0 : index
    %c0_13 = arith.constant 0 : index
    %c0_14 = arith.constant 0 : index
    %14 = vector.load %arg8[%c0_12, %c0_13, %c0_14] : memref<18x18x4xbf16, #tpu.memory_space<vmem>>, vector<16x16x4xbf16>
    %15 = vector.shape_cast %14 : vector<16x16x4xbf16> to vector<256x4xbf16>
    %c0_15 = arith.constant 0 : index
    %c0_16 = arith.constant 0 : index
    %16 = vector.load %arg9[%c0_15, %c0_16] : memref<256x36xbf16, #tpu.memory_space<vmem>>, vector<256x4xbf16>
    tpu.vector_store %arg9[%c0_15, %c0_16], %15 {strides = array<i32>} : memref<256x36xbf16, #tpu.memory_space<vmem>>, vector<256x4xbf16>,
    %c0_17 = arith.constant 0 : index
    %c1_18 = arith.constant 1 : index
    %c0_19 = arith.constant 0 : index
    %17 = vector.load %arg8[%c0_17, %c1_18, %c0_19] : memref<18x18x4xbf16, #tpu.memory_space<vmem>>, vector<16x16x4xbf16>
    %18 = vector.shape_cast %17 : vector<16x16x4xbf16> to vector<256x4xbf16>
    %c0_20 = arith.constant 0 : index
    %c4 = arith.constant 4 : index
    %19 = vector.load %arg9[%c0_20, %c4] : memref<256x36xbf16, #tpu.memory_space<vmem>>, vector<256x4xbf16>
    tpu.vector_store %arg9[%c0_20, %c4], %18 {strides = array<i32>} : memref<256x36xbf16, #tpu.memory_space<vmem>>, vector<256x4xbf16>,
    %c0_21 = arith.constant 0 : index
    %c2 = arith.constant 2 : index
    %c0_22 = arith.constant 0 : index
    %20 = vector.load %arg8[%c0_21, %c2, %c0_22] : memref<18x18x4xbf16, #tpu.memory_space<vmem>>, vector<16x16x4xbf16>
    %21 = vector.shape_cast %20 : vector<16x16x4xbf16> to vector<256x4xbf16>
    %c0_23 = arith.constant 0 : index
    %c8 = arith.constant 8 : index
    %22 = vector.load %arg9[%c0_23, %c8] : memref<256x36xbf16, #tpu.memory_space<vmem>>, vector<256x4xbf16>
    tpu.vector_store %arg9[%c0_23, %c8], %21 {strides = array<i32>} : memref<256x36xbf16, #tpu.memory_space<vmem>>, vector<256x4xbf16>,
    %c1_24 = arith.constant 1 : index
    %c0_25 = arith.constant 0 : index
    %c0_26 = arith.constant 0 : index
    %23 = vector.load %arg8[%c1_24, %c0_25, %c0_26] : memref<18x18x4xbf16, #tpu.memory_space<vmem>>, vector<16x16x4xbf16>
    %24 = vector.shape_cast %23 : vector<16x16x4xbf16> to vector<256x4xbf16>
    %c0_27 = arith.constant 0 : index
    %c12 = arith.constant 12 : index
    %25 = vector.load %arg9[%c0_27, %c12] : memref<256x36xbf16, #tpu.memory_space<vmem>>, vector<256x4xbf16>
    tpu.vector_store %arg9[%c0_27, %c12], %24 {strides = array<i32>} : memref<256x36xbf16, #tpu.memory_space<vmem>>, vector<256x4xbf16>,
    %c1_28 = arith.constant 1 : index
    %c1_29 = arith.constant 1 : index
    %c0_30 = arith.constant 0 : index
    %26 = vector.load %arg8[%c1_28, %c1_29, %c0_30] : memref<18x18x4xbf16, #tpu.memory_space<vmem>>, vector<16x16x4xbf16>
    %27 = vector.shape_cast %26 : vector<16x16x4xbf16> to vector<256x4xbf16>
    %c0_31 = arith.constant 0 : index
    %c16 = arith.constant 16 : index
    %28 = vector.load %arg9[%c0_31, %c16] : memref<256x36xbf16, #tpu.memory_space<vmem>>, vector<256x4xbf16>
    tpu.vector_store %arg9[%c0_31, %c16], %27 {strides = array<i32>} : memref<256x36xbf16, #tpu.memory_space<vmem>>, vector<256x4xbf16>,
    %c1_32 = arith.constant 1 : index
    %c2_33 = arith.constant 2 : index
    %c0_34 = arith.constant 0 : index
    %29 = vector.load %arg8[%c1_32, %c2_33, %c0_34] : memref<18x18x4xbf16, #tpu.memory_space<vmem>>, vector<16x16x4xbf16>
    %30 = vector.shape_cast %29 : vector<16x16x4xbf16> to vector<256x4xbf16>
    %c0_35 = arith.constant 0 : index
    %c20 = arith.constant 20 : index
    %31 = vector.load %arg9[%c0_35, %c20] : memref<256x36xbf16, #tpu.memory_space<vmem>>, vector<256x4xbf16>
    tpu.vector_store %arg9[%c0_35, %c20], %30 {strides = array<i32>} : memref<256x36xbf16, #tpu.memory_space<vmem>>, vector<256x4xbf16>,
    %c2_36 = arith.constant 2 : index
    %c0_37 = arith.constant 0 : index
    %c0_38 = arith.constant 0 : index
    %32 = vector.load %arg8[%c2_36, %c0_37, %c0_38] : memref<18x18x4xbf16, #tpu.memory_space<vmem>>, vector<16x16x4xbf16>
    %33 = vector.shape_cast %32 : vector<16x16x4xbf16> to vector<256x4xbf16>
    %c0_39 = arith.constant 0 : index
    %c24 = arith.constant 24 : index
    %34 = vector.load %arg9[%c0_39, %c24] : memref<256x36xbf16, #tpu.memory_space<vmem>>, vector<256x4xbf16>
    tpu.vector_store %arg9[%c0_39, %c24], %33 {strides = array<i32>} : memref<256x36xbf16, #tpu.memory_space<vmem>>, vector<256x4xbf16>,
    %c2_40 = arith.constant 2 : index
    %c1_41 = arith.constant 1 : index
    %c0_42 = arith.constant 0 : index
    %35 = vector.load %arg8[%c2_40, %c1_41, %c0_42] : memref<18x18x4xbf16, #tpu.memory_space<vmem>>, vector<16x16x4xbf16>
    %36 = vector.shape_cast %35 : vector<16x16x4xbf16> to vector<256x4xbf16>
    %c0_43 = arith.constant 0 : index
    %c28 = arith.constant 28 : index
    %37 = vector.load %arg9[%c0_43, %c28] : memref<256x36xbf16, #tpu.memory_space<vmem>>, vector<256x4xbf16>
    tpu.vector_store %arg9[%c0_43, %c28], %36 {strides = array<i32>} : memref<256x36xbf16, #tpu.memory_space<vmem>>, vector<256x4xbf16>,
    %c2_44 = arith.constant 2 : index
    %c2_45 = arith.constant 2 : index
    %c0_46 = arith.constant 0 : index
    %38 = vector.load %arg8[%c2_44, %c2_45, %c0_46] : memref<18x18x4xbf16, #tpu.memory_space<vmem>>, vector<16x16x4xbf16>
    %39 = vector.shape_cast %38 : vector<16x16x4xbf16> to vector<256x4xbf16>
    %c0_47 = arith.constant 0 : index
    %c32 = arith.constant 32 : index
    %40 = vector.load %arg9[%c0_47, %c32] : memref<256x36xbf16, #tpu.memory_space<vmem>>, vector<256x4xbf16>
    tpu.vector_store %arg9[%c0_47, %c32], %39 {strides = array<i32>} : memref<256x36xbf16, #tpu.memory_space<vmem>>, vector<256x4xbf16>,
    %c0_48 = arith.constant 0 : index
    %c0_49 = arith.constant 0 : index
    %41 = vector.load %arg4[%c0_48, %c0_49] : memref<36x128xbf16, #tpu.memory_space<vmem>>, vector<36x128xbf16>
    %c0_50 = arith.constant 0 : index
    %c0_51 = arith.constant 0 : index
    %42 = vector.load %arg5[%c0_50, %c0_51] : memref<1x128xf32, #tpu.memory_space<vmem>>, vector<1x128xf32>
    %cst_52 = arith.constant 0.000000e+00 : f32
    %43 = vector.broadcast %cst_52 : f32 to vector<1x128xf32>
    %cst_53 = arith.constant 0.000000e+00 : f32
    %44 = vector.broadcast %cst_53 : f32 to vector<1x128xf32>
    %c0_54 = arith.constant 0 : index
    %c0_55 = arith.constant 0 : index
    %45 = vector.load %arg9[%c0_54, %c0_55] : memref<256x36xbf16, #tpu.memory_space<vmem>>, vector<128x36xbf16>
    %cst_56 = arith.constant dense<0.000000e+00> : vector<128x128xf32>
    %46 = tpu.matmul %45, %41, %cst_56 {dimension_numbers = #tpu.dot_dimension_numbers<[1], [0], [0], [1], [0, 0, 1, 1], [], []>} : vector<128x36xbf16>, vector<36x128xbf16>, vector<128x128xf32> -> vector<128x128xf32>
    %47 = vector.broadcast %42 : vector<1x128xf32> to vector<128x128xf32>
    %48 = arith.addf %46, %47 : vector<128x128xf32>
    %cst_57 = arith.constant 0.000000e+00 : f32
    %49 = vector.broadcast %cst_57 : f32 to vector<128x128xf32>
    %50 = arith.cmpf ogt, %48, %49 : vector<128x128xf32>
    %cst_58 = arith.constant 0.000000e+00 : f32
    %51 = vector.broadcast %cst_58 : f32 to vector<128x128xf32>
    %52 = arith.minimumf %48, %51 : vector<128x128xf32>
    %53 = math.exp %52 : vector<128x128xf32>
    %cst_59 = arith.constant 1.000000e+00 : f32
    %54 = vector.broadcast %cst_59 : f32 to vector<128x128xf32>
    %55 = arith.subf %53, %54 : vector<128x128xf32>
    %56 = arith.select %50, %48, %55 : vector<128x128xi1>, vector<128x128xf32>
    %cst_60 = arith.constant dense<0.000000e+00> : vector<128xf32>
    %57 = vector.multi_reduction <add>, %56, %cst_60 [0] : vector<128x128xf32> to vector<128xf32>
    %58 = vector.shape_cast %57 : vector<128xf32> to vector<1x128xf32>
    %59 = arith.addf %43, %58 : vector<1x128xf32>
    %60 = arith.mulf %56, %56 : vector<128x128xf32>
    %cst_61 = arith.constant dense<0.000000e+00> : vector<128xf32>
    %61 = vector.multi_reduction <add>, %60, %cst_61 [0] : vector<128x128xf32> to vector<128xf32>
    %62 = vector.shape_cast %61 : vector<128xf32> to vector<1x128xf32>
    %63 = arith.addf %44, %62 : vector<1x128xf32>
    %64 = vector.extract_strided_slice %56 {offsets = [0, 0], sizes = [128, 8], strides = [1, 1]} : vector<128x128xf32> to vector<128x8xf32>
    %65 = vector.shape_cast %64 : vector<128x8xf32> to vector<8x16x8xf32>
    %66 = arith.truncf %65 : vector<8x16x8xf32> to vector<8x16x8xbf16>
    %c0_62 = arith.constant 0 : index
    %c0_63 = arith.constant 0 : index
    %c0_64 = arith.constant 0 : index
    %c0_65 = arith.constant 0 : index
    %67 = vector.load %arg6[%c0_62, %c0_63, %c0_64, %c0_65] : memref<1x16x16x8xbf16, #tpu.memory_space<vmem>>, vector<1x8x16x8xbf16>
    %68 = vector.shape_cast %67 : vector<1x8x16x8xbf16> to vector<8x16x8xbf16>
    %69 = vector.shape_cast %66 : vector<8x16x8xbf16> to vector<1x8x16x8xbf16>
    tpu.vector_store %arg6[%c0_62, %c0_63, %c0_64, %c0_65], %69 {strides = array<i32>} : memref<1x16x16x8xbf16, #tpu.memory_space<vmem>>, vector<1x8x16x8xbf16>,
    %c128 = arith.constant 128 : index
    %c0_66 = arith.constant 0 : index
    %70 = vector.load %arg9[%c128, %c0_66] : memref<256x36xbf16, #tpu.memory_space<vmem>>, vector<128x36xbf16>
    %cst_67 = arith.constant dense<0.000000e+00> : vector<128x128xf32>
    %71 = tpu.matmul %70, %41, %cst_67 {dimension_numbers = #tpu.dot_dimension_numbers<[1], [0], [0], [1], [0, 0, 1, 1], [], []>} : vector<128x36xbf16>, vector<36x128xbf16>, vector<128x128xf32> -> vector<128x128xf32>
    %72 = vector.broadcast %42 : vector<1x128xf32> to vector<128x128xf32>
    %73 = arith.addf %71, %72 : vector<128x128xf32>
    %cst_68 = arith.constant 0.000000e+00 : f32
    %74 = vector.broadcast %cst_68 : f32 to vector<128x128xf32>
    %75 = arith.cmpf ogt, %73, %74 : vector<128x128xf32>
    %cst_69 = arith.constant 0.000000e+00 : f32
    %76 = vector.broadcast %cst_69 : f32 to vector<128x128xf32>
    %77 = arith.minimumf %73, %76 : vector<128x128xf32>
    %78 = math.exp %77 : vector<128x128xf32>
    %cst_70 = arith.constant 1.000000e+00 : f32
    %79 = vector.broadcast %cst_70 : f32 to vector<128x128xf32>
    %80 = arith.subf %78, %79 : vector<128x128xf32>
    %81 = arith.select %75, %73, %80 : vector<128x128xi1>, vector<128x128xf32>
    %cst_71 = arith.constant dense<0.000000e+00> : vector<128xf32>
    %82 = vector.multi_reduction <add>, %81, %cst_71 [0] : vector<128x128xf32> to vector<128xf32>
    %83 = vector.shape_cast %82 : vector<128xf32> to vector<1x128xf32>
    %84 = arith.addf %59, %83 : vector<1x128xf32>
    %85 = arith.mulf %81, %81 : vector<128x128xf32>
    %cst_72 = arith.constant dense<0.000000e+00> : vector<128xf32>
    %86 = vector.multi_reduction <add>, %85, %cst_72 [0] : vector<128x128xf32> to vector<128xf32>
    %87 = vector.shape_cast %86 : vector<128xf32> to vector<1x128xf32>
    %88 = arith.addf %63, %87 : vector<1x128xf32>
    %89 = vector.extract_strided_slice %81 {offsets = [0, 0], sizes = [128, 8], strides = [1, 1]} : vector<128x128xf32> to vector<128x8xf32>
    %90 = vector.shape_cast %89 : vector<128x8xf32> to vector<8x16x8xf32>
    %91 = arith.truncf %90 : vector<8x16x8xf32> to vector<8x16x8xbf16>
    %c0_73 = arith.constant 0 : index
    %c8_74 = arith.constant 8 : index
    %c0_75 = arith.constant 0 : index
    %c0_76 = arith.constant 0 : index
    %92 = vector.load %arg6[%c0_73, %c8_74, %c0_75, %c0_76] : memref<1x16x16x8xbf16, #tpu.memory_space<vmem>>, vector<1x8x16x8xbf16>
    %93 = vector.shape_cast %92 : vector<1x8x16x8xbf16> to vector<8x16x8xbf16>
    %94 = vector.shape_cast %91 : vector<8x16x8xbf16> to vector<1x8x16x8xbf16>
    tpu.vector_store %arg6[%c0_73, %c8_74, %c0_75, %c0_76], %94 {strides = array<i32>} : memref<1x16x16x8xbf16, #tpu.memory_space<vmem>>, vector<1x8x16x8xbf16>,
    %95 = tpu.concatenate %84, %88 in 0 : vector<1x128xf32>, vector<1x128xf32> -> vector<2x128xf32>
    %c0_77 = arith.constant 0 : index
    %c0_78 = arith.constant 0 : index
    %c0_79 = arith.constant 0 : index
    %96 = vector.load %arg7[%c0_77, %c0_78, %c0_79] : memref<1x2x128xf32, #tpu.memory_space<vmem>>, vector<1x2x128xf32>
    %97 = vector.shape_cast %96 : vector<1x2x128xf32> to vector<2x128xf32>
    %98 = vector.shape_cast %95 : vector<2x128xf32> to vector<1x2x128xf32>
    tpu.vector_store %arg7[%c0_77, %c0_78, %c0_79], %98 {strides = array<i32>} : memref<1x2x128xf32, #tpu.memory_space<vmem>>, vector<1x2x128xf32>,
    return
  }
  func.func @transform_0(%arg0: i32) -> (i32, i32, i32, i32) {
    %c0_i32 = arith.constant 0 : i32
    %c0_i32_0 = arith.constant 0 : i32
    %c0_i32_1 = arith.constant 0 : i32
    %c0_i32_2 = arith.constant 0 : i32
    return %arg0, %c0_i32, %c0_i32_0, %c0_i32_1 : i32, i32, i32, i32
  }
  func.func @transform_1(%arg0: i32) -> (i32, i32) {
    %c0_i32 = arith.constant 0 : i32
    %c0_i32_0 = arith.constant 0 : i32
    %c0_i32_1 = arith.constant 0 : i32
    return %c0_i32, %c0_i32_0 : i32, i32
  }
  func.func @transform_2(%arg0: i32) -> (i32, i32) {
    %c0_i32 = arith.constant 0 : i32
    %c0_i32_0 = arith.constant 0 : i32
    %c0_i32_1 = arith.constant 0 : i32
    return %c0_i32, %c0_i32_0 : i32, i32
  }
  func.func @transform_3(%arg0: i32) -> (i32, i32) {
    %c0_i32 = arith.constant 0 : i32
    %c0_i32_0 = arith.constant 0 : i32
    %c0_i32_1 = arith.constant 0 : i32
    return %c0_i32, %c0_i32_0 : i32, i32
  }
  func.func @transform_4(%arg0: i32) -> (i32, i32) {
    %c0_i32 = arith.constant 0 : i32
    %c0_i32_0 = arith.constant 0 : i32
    %c0_i32_1 = arith.constant 0 : i32
    return %c0_i32, %c0_i32_0 : i32, i32
  }
  func.func @transform_5(%arg0: i32) -> (i32, i32, i32, i32) {
    %c0_i32 = arith.constant 0 : i32
    %c0_i32_0 = arith.constant 0 : i32
    %c0_i32_1 = arith.constant 0 : i32
    %c0_i32_2 = arith.constant 0 : i32
    return %arg0, %c0_i32, %c0_i32_0, %c0_i32_1 : i32, i32, i32, i32
  }
  func.func @transform_6(%arg0: i32) -> (i32, i32, i32) {
    %c0_i32 = arith.constant 0 : i32
    %c0_i32_0 = arith.constant 0 : i32
    %c0_i32_1 = arith.constant 0 : i32
    return %arg0, %c0_i32, %c0_i32_0 : i32, i32, i32
  }
}

module attributes {stable_mosaic.version = 11 : i64} {
  func.func @_bn_pool_kernel(%arg0: i32, %arg1: i32, %arg2: memref<1x8x16x8xbf16, #tpu.memory_space<vmem>>, %arg3: memref<1x8xf32, #tpu.memory_space<vmem>>, %arg4: memref<1x8xf32, #tpu.memory_space<vmem>>, %arg5: memref<1x8x16x8xf32, #tpu.memory_space<vmem>>, %arg6: memref<1x4x8x8xf32, #tpu.memory_space<vmem>>) attributes {dimension_semantics = [#tpu.dimension_semantics<parallel>, #tpu.dimension_semantics<parallel>], iteration_bounds = array<i64: 2, 2>, scalar_prefetch = 0 : i64, scratch_operands = 0 : i64, tpu.core_type = #tpu.core_type<tc>, window_params = [{transform_indices = @transform_0, window_bounds = array<i64: 1, 8, 16, 8>}, {pipeline_mode = #tpu.pipeline_mode<synchronous>, transform_indices = @transform_1, window_bounds = array<i64: 1, 8>}, {pipeline_mode = #tpu.pipeline_mode<synchronous>, transform_indices = @transform_2, window_bounds = array<i64: 1, 8>}, {transform_indices = @transform_3, window_bounds = array<i64: 1, 8, 16, 8>}, {transform_indices = @transform_4, window_bounds = array<i64: 1, 4, 8, 8>}]} {
    %c0 = arith.constant 0 : index
    %c0_0 = arith.constant 0 : index
    %c0_1 = arith.constant 0 : index
    %c0_2 = arith.constant 0 : index
    %0 = vector.load %arg2[%c0, %c0_0, %c0_1, %c0_2] : memref<1x8x16x8xbf16, #tpu.memory_space<vmem>>, vector<1x8x16x8xbf16>
    %1 = vector.shape_cast %0 : vector<1x8x16x8xbf16> to vector<8x16x8xbf16>
    %2 = arith.extf %1 : vector<8x16x8xbf16> to vector<8x16x8xf32>
    %c0_3 = arith.constant 0 : index
    %c0_4 = arith.constant 0 : index
    %3 = vector.load %arg3[%c0_3, %c0_4] : memref<1x8xf32, #tpu.memory_space<vmem>>, vector<1x8xf32>
    %4 = vector.shape_cast %3 : vector<1x8xf32> to vector<1x1x8xf32>
    %5 = vector.broadcast %4 : vector<1x1x8xf32> to vector<8x16x8xf32>
    %6 = arith.mulf %2, %5 : vector<8x16x8xf32>
    %c0_5 = arith.constant 0 : index
    %c0_6 = arith.constant 0 : index
    %7 = vector.load %arg4[%c0_5, %c0_6] : memref<1x8xf32, #tpu.memory_space<vmem>>, vector<1x8xf32>
    %8 = vector.shape_cast %7 : vector<1x8xf32> to vector<1x1x8xf32>
    %9 = vector.broadcast %8 : vector<1x1x8xf32> to vector<8x16x8xf32>
    %10 = arith.addf %6, %9 : vector<8x16x8xf32>
    %c0_7 = arith.constant 0 : index
    %c0_8 = arith.constant 0 : index
    %c0_9 = arith.constant 0 : index
    %c0_10 = arith.constant 0 : index
    %11 = vector.load %arg5[%c0_7, %c0_8, %c0_9, %c0_10] : memref<1x8x16x8xf32, #tpu.memory_space<vmem>>, vector<1x8x16x8xf32>
    %12 = vector.shape_cast %11 : vector<1x8x16x8xf32> to vector<8x16x8xf32>
    %13 = vector.shape_cast %10 : vector<8x16x8xf32> to vector<1x8x16x8xf32>
    tpu.vector_store %arg5[%c0_7, %c0_8, %c0_9, %c0_10], %13 {strides = array<i32>} : memref<1x8x16x8xf32, #tpu.memory_space<vmem>>, vector<1x8x16x8xf32>,
    %14 = vector.shape_cast %10 : vector<8x16x8xf32> to vector<4x2x8x2x8xf32>
    %cst = arith.constant dense<0xFF800000> : vector<4x2x8x8xf32>
    %15 = vector.multi_reduction <maximumf>, %14, %cst [3] : vector<4x2x8x2x8xf32> to vector<4x2x8x8xf32>
    %cst_11 = arith.constant dense<0xFF800000> : vector<4x8x8xf32>
    %16 = vector.multi_reduction <maximumf>, %15, %cst_11 [1] : vector<4x2x8x8xf32> to vector<4x8x8xf32>
    %c0_12 = arith.constant 0 : index
    %c0_13 = arith.constant 0 : index
    %c0_14 = arith.constant 0 : index
    %c0_15 = arith.constant 0 : index
    %17 = vector.load %arg6[%c0_12, %c0_13, %c0_14, %c0_15] : memref<1x4x8x8xf32, #tpu.memory_space<vmem>>, vector<1x4x8x8xf32>
    %18 = vector.shape_cast %17 : vector<1x4x8x8xf32> to vector<4x8x8xf32>
    %19 = vector.shape_cast %16 : vector<4x8x8xf32> to vector<1x4x8x8xf32>
    tpu.vector_store %arg6[%c0_12, %c0_13, %c0_14, %c0_15], %19 {strides = array<i32>} : memref<1x4x8x8xf32, #tpu.memory_space<vmem>>, vector<1x4x8x8xf32>,
    return
  }
  func.func @transform_0(%arg0: i32, %arg1: i32) -> (i32, i32, i32, i32) {
    %c0_i32 = arith.constant 0 : i32
    %c0_i32_0 = arith.constant 0 : i32
    %c0_i32_1 = arith.constant 0 : i32
    return %arg0, %arg1, %c0_i32, %c0_i32_0 : i32, i32, i32, i32
  }
  func.func @transform_1(%arg0: i32, %arg1: i32) -> (i32, i32) {
    %c0_i32 = arith.constant 0 : i32
    %c0_i32_0 = arith.constant 0 : i32
    %c0_i32_1 = arith.constant 0 : i32
    return %c0_i32, %c0_i32_0 : i32, i32
  }
  func.func @transform_2(%arg0: i32, %arg1: i32) -> (i32, i32) {
    %c0_i32 = arith.constant 0 : i32
    %c0_i32_0 = arith.constant 0 : i32
    %c0_i32_1 = arith.constant 0 : i32
    return %c0_i32, %c0_i32_0 : i32, i32
  }
  func.func @transform_3(%arg0: i32, %arg1: i32) -> (i32, i32, i32, i32) {
    %c0_i32 = arith.constant 0 : i32
    %c0_i32_0 = arith.constant 0 : i32
    %c0_i32_1 = arith.constant 0 : i32
    return %arg0, %arg1, %c0_i32, %c0_i32_0 : i32, i32, i32, i32
  }
  func.func @transform_4(%arg0: i32, %arg1: i32) -> (i32, i32, i32, i32) {
    %c0_i32 = arith.constant 0 : i32
    %c0_i32_0 = arith.constant 0 : i32
    %c0_i32_1 = arith.constant 0 : i32
    return %arg0, %arg1, %c0_i32, %c0_i32_0 : i32, i32, i32, i32
  }
}

module attributes {stable_mosaic.version = 11 : i64} {
  func.func @_conv_elu_stats_kernel(%arg0: i32, %arg1: memref<1x16x16x8xbf16, #tpu.memory_space<vmem>>, %arg2: memref<1x8xf32, #tpu.memory_space<vmem>>, %arg3: memref<1x8xf32, #tpu.memory_space<vmem>>, %arg4: memref<72x128xbf16, #tpu.memory_space<vmem>>, %arg5: memref<1x128xf32, #tpu.memory_space<vmem>>, %arg6: memref<1x16x16x8xbf16, #tpu.memory_space<vmem>>, %arg7: memref<1x2x128xf32, #tpu.memory_space<vmem>>, %arg8: memref<18x18x8xbf16, #tpu.memory_space<vmem>>, %arg9: memref<256x72xbf16, #tpu.memory_space<vmem>>) attributes {dimension_semantics = [#tpu.dimension_semantics<parallel>], iteration_bounds = array<i64: 2>, scalar_prefetch = 0 : i64, scratch_operands = 2 : i64, tpu.core_type = #tpu.core_type<tc>, window_params = [{transform_indices = @transform_0, window_bounds = array<i64: 1, 16, 16, 8>}, {pipeline_mode = #tpu.pipeline_mode<synchronous>, transform_indices = @transform_1, window_bounds = array<i64: 1, 8>}, {pipeline_mode = #tpu.pipeline_mode<synchronous>, transform_indices = @transform_2, window_bounds = array<i64: 1, 8>}, {pipeline_mode = #tpu.pipeline_mode<synchronous>, transform_indices = @transform_3, window_bounds = array<i64: 72, 128>}, {pipeline_mode = #tpu.pipeline_mode<synchronous>, transform_indices = @transform_4, window_bounds = array<i64: 1, 128>}, {transform_indices = @transform_5, window_bounds = array<i64: 1, 16, 16, 8>}, {transform_indices = @transform_6, window_bounds = array<i64: 1, 2, 128>}]} {
    %c0 = arith.constant 0 : index
    %c0_0 = arith.constant 0 : index
    %c0_1 = arith.constant 0 : index
    %c0_2 = arith.constant 0 : index
    %0 = vector.load %arg1[%c0, %c0_0, %c0_1, %c0_2] : memref<1x16x16x8xbf16, #tpu.memory_space<vmem>>, vector<1x16x16x8xbf16>
    %1 = vector.shape_cast %0 : vector<1x16x16x8xbf16> to vector<16x16x8xbf16>
    %c0_3 = arith.constant 0 : index
    %c0_4 = arith.constant 0 : index
    %2 = vector.load %arg2[%c0_3, %c0_4] : memref<1x8xf32, #tpu.memory_space<vmem>>, vector<1x8xf32>
    %3 = arith.extf %1 : vector<16x16x8xbf16> to vector<16x16x8xf32>
    %4 = vector.shape_cast %2 : vector<1x8xf32> to vector<1x1x8xf32>
    %5 = vector.broadcast %4 : vector<1x1x8xf32> to vector<16x16x8xf32>
    %6 = arith.mulf %3, %5 : vector<16x16x8xf32>
    %c0_5 = arith.constant 0 : index
    %c0_6 = arith.constant 0 : index
    %7 = vector.load %arg3[%c0_5, %c0_6] : memref<1x8xf32, #tpu.memory_space<vmem>>, vector<1x8xf32>
    %8 = vector.shape_cast %7 : vector<1x8xf32> to vector<1x1x8xf32>
    %9 = vector.broadcast %8 : vector<1x1x8xf32> to vector<16x16x8xf32>
    %10 = arith.addf %6, %9 : vector<16x16x8xf32>
    %11 = arith.truncf %10 : vector<16x16x8xf32> to vector<16x16x8xbf16>
    %cst = arith.constant 0.000000e+00 : bf16
    %12 = vector.broadcast %cst : bf16 to vector<18x18x8xbf16>
    %c0_7 = arith.constant 0 : index
    %c0_8 = arith.constant 0 : index
    %c0_9 = arith.constant 0 : index
    %13 = vector.load %arg8[%c0_7, %c0_8, %c0_9] : memref<18x18x8xbf16, #tpu.memory_space<vmem>>, vector<18x18x8xbf16>
    tpu.vector_store %arg8[%c0_7, %c0_8, %c0_9], %12 {strides = array<i32>} : memref<18x18x8xbf16, #tpu.memory_space<vmem>>, vector<18x18x8xbf16>,
    %c1 = arith.constant 1 : index
    %c1_10 = arith.constant 1 : index
    %c0_11 = arith.constant 0 : index
    %14 = vector.load %arg8[%c1, %c1_10, %c0_11] : memref<18x18x8xbf16, #tpu.memory_space<vmem>>, vector<16x16x8xbf16>
    tpu.vector_store %arg8[%c1, %c1_10, %c0_11], %11 {strides = array<i32>} : memref<18x18x8xbf16, #tpu.memory_space<vmem>>, vector<16x16x8xbf16>,
    %c0_12 = arith.constant 0 : index
    %c0_13 = arith.constant 0 : index
    %c0_14 = arith.constant 0 : index
    %15 = vector.load %arg8[%c0_12, %c0_13, %c0_14] : memref<18x18x8xbf16, #tpu.memory_space<vmem>>, vector<16x16x8xbf16>
    %16 = vector.shape_cast %15 : vector<16x16x8xbf16> to vector<256x8xbf16>
    %c0_15 = arith.constant 0 : index
    %c0_16 = arith.constant 0 : index
    %17 = vector.load %arg9[%c0_15, %c0_16] : memref<256x72xbf16, #tpu.memory_space<vmem>>, vector<256x8xbf16>
    tpu.vector_store %arg9[%c0_15, %c0_16], %16 {strides = array<i32>} : memref<256x72xbf16, #tpu.memory_space<vmem>>, vector<256x8xbf16>,
    %c0_17 = arith.constant 0 : index
    %c1_18 = arith.constant 1 : index
    %c0_19 = arith.constant 0 : index
    %18 = vector.load %arg8[%c0_17, %c1_18, %c0_19] : memref<18x18x8xbf16, #tpu.memory_space<vmem>>, vector<16x16x8xbf16>
    %19 = vector.shape_cast %18 : vector<16x16x8xbf16> to vector<256x8xbf16>
    %c0_20 = arith.constant 0 : index
    %c8 = arith.constant 8 : index
    %20 = vector.load %arg9[%c0_20, %c8] : memref<256x72xbf16, #tpu.memory_space<vmem>>, vector<256x8xbf16>
    tpu.vector_store %arg9[%c0_20, %c8], %19 {strides = array<i32>} : memref<256x72xbf16, #tpu.memory_space<vmem>>, vector<256x8xbf16>,
    %c0_21 = arith.constant 0 : index
    %c2 = arith.constant 2 : index
    %c0_22 = arith.constant 0 : index
    %21 = vector.load %arg8[%c0_21, %c2, %c0_22] : memref<18x18x8xbf16, #tpu.memory_space<vmem>>, vector<16x16x8xbf16>
    %22 = vector.shape_cast %21 : vector<16x16x8xbf16> to vector<256x8xbf16>
    %c0_23 = arith.constant 0 : index
    %c16 = arith.constant 16 : index
    %23 = vector.load %arg9[%c0_23, %c16] : memref<256x72xbf16, #tpu.memory_space<vmem>>, vector<256x8xbf16>
    tpu.vector_store %arg9[%c0_23, %c16], %22 {strides = array<i32>} : memref<256x72xbf16, #tpu.memory_space<vmem>>, vector<256x8xbf16>,
    %c1_24 = arith.constant 1 : index
    %c0_25 = arith.constant 0 : index
    %c0_26 = arith.constant 0 : index
    %24 = vector.load %arg8[%c1_24, %c0_25, %c0_26] : memref<18x18x8xbf16, #tpu.memory_space<vmem>>, vector<16x16x8xbf16>
    %25 = vector.shape_cast %24 : vector<16x16x8xbf16> to vector<256x8xbf16>
    %c0_27 = arith.constant 0 : index
    %c24 = arith.constant 24 : index
    %26 = vector.load %arg9[%c0_27, %c24] : memref<256x72xbf16, #tpu.memory_space<vmem>>, vector<256x8xbf16>
    tpu.vector_store %arg9[%c0_27, %c24], %25 {strides = array<i32>} : memref<256x72xbf16, #tpu.memory_space<vmem>>, vector<256x8xbf16>,
    %c1_28 = arith.constant 1 : index
    %c1_29 = arith.constant 1 : index
    %c0_30 = arith.constant 0 : index
    %27 = vector.load %arg8[%c1_28, %c1_29, %c0_30] : memref<18x18x8xbf16, #tpu.memory_space<vmem>>, vector<16x16x8xbf16>
    %28 = vector.shape_cast %27 : vector<16x16x8xbf16> to vector<256x8xbf16>
    %c0_31 = arith.constant 0 : index
    %c32 = arith.constant 32 : index
    %29 = vector.load %arg9[%c0_31, %c32] : memref<256x72xbf16, #tpu.memory_space<vmem>>, vector<256x8xbf16>
    tpu.vector_store %arg9[%c0_31, %c32], %28 {strides = array<i32>} : memref<256x72xbf16, #tpu.memory_space<vmem>>, vector<256x8xbf16>,
    %c1_32 = arith.constant 1 : index
    %c2_33 = arith.constant 2 : index
    %c0_34 = arith.constant 0 : index
    %30 = vector.load %arg8[%c1_32, %c2_33, %c0_34] : memref<18x18x8xbf16, #tpu.memory_space<vmem>>, vector<16x16x8xbf16>
    %31 = vector.shape_cast %30 : vector<16x16x8xbf16> to vector<256x8xbf16>
    %c0_35 = arith.constant 0 : index
    %c40 = arith.constant 40 : index
    %32 = vector.load %arg9[%c0_35, %c40] : memref<256x72xbf16, #tpu.memory_space<vmem>>, vector<256x8xbf16>
    tpu.vector_store %arg9[%c0_35, %c40], %31 {strides = array<i32>} : memref<256x72xbf16, #tpu.memory_space<vmem>>, vector<256x8xbf16>,
    %c2_36 = arith.constant 2 : index
    %c0_37 = arith.constant 0 : index
    %c0_38 = arith.constant 0 : index
    %33 = vector.load %arg8[%c2_36, %c0_37, %c0_38] : memref<18x18x8xbf16, #tpu.memory_space<vmem>>, vector<16x16x8xbf16>
    %34 = vector.shape_cast %33 : vector<16x16x8xbf16> to vector<256x8xbf16>
    %c0_39 = arith.constant 0 : index
    %c48 = arith.constant 48 : index
    %35 = vector.load %arg9[%c0_39, %c48] : memref<256x72xbf16, #tpu.memory_space<vmem>>, vector<256x8xbf16>
    tpu.vector_store %arg9[%c0_39, %c48], %34 {strides = array<i32>} : memref<256x72xbf16, #tpu.memory_space<vmem>>, vector<256x8xbf16>,
    %c2_40 = arith.constant 2 : index
    %c1_41 = arith.constant 1 : index
    %c0_42 = arith.constant 0 : index
    %36 = vector.load %arg8[%c2_40, %c1_41, %c0_42] : memref<18x18x8xbf16, #tpu.memory_space<vmem>>, vector<16x16x8xbf16>
    %37 = vector.shape_cast %36 : vector<16x16x8xbf16> to vector<256x8xbf16>
    %c0_43 = arith.constant 0 : index
    %c56 = arith.constant 56 : index
    %38 = vector.load %arg9[%c0_43, %c56] : memref<256x72xbf16, #tpu.memory_space<vmem>>, vector<256x8xbf16>
    tpu.vector_store %arg9[%c0_43, %c56], %37 {strides = array<i32>} : memref<256x72xbf16, #tpu.memory_space<vmem>>, vector<256x8xbf16>,
    %c2_44 = arith.constant 2 : index
    %c2_45 = arith.constant 2 : index
    %c0_46 = arith.constant 0 : index
    %39 = vector.load %arg8[%c2_44, %c2_45, %c0_46] : memref<18x18x8xbf16, #tpu.memory_space<vmem>>, vector<16x16x8xbf16>
    %40 = vector.shape_cast %39 : vector<16x16x8xbf16> to vector<256x8xbf16>
    %c0_47 = arith.constant 0 : index
    %c64 = arith.constant 64 : index
    %41 = vector.load %arg9[%c0_47, %c64] : memref<256x72xbf16, #tpu.memory_space<vmem>>, vector<256x8xbf16>
    tpu.vector_store %arg9[%c0_47, %c64], %40 {strides = array<i32>} : memref<256x72xbf16, #tpu.memory_space<vmem>>, vector<256x8xbf16>,
    %c0_48 = arith.constant 0 : index
    %c0_49 = arith.constant 0 : index
    %42 = vector.load %arg4[%c0_48, %c0_49] : memref<72x128xbf16, #tpu.memory_space<vmem>>, vector<72x128xbf16>
    %c0_50 = arith.constant 0 : index
    %c0_51 = arith.constant 0 : index
    %43 = vector.load %arg5[%c0_50, %c0_51] : memref<1x128xf32, #tpu.memory_space<vmem>>, vector<1x128xf32>
    %cst_52 = arith.constant 0.000000e+00 : f32
    %44 = vector.broadcast %cst_52 : f32 to vector<1x128xf32>
    %cst_53 = arith.constant 0.000000e+00 : f32
    %45 = vector.broadcast %cst_53 : f32 to vector<1x128xf32>
    %c0_54 = arith.constant 0 : index
    %c0_55 = arith.constant 0 : index
    %46 = vector.load %arg9[%c0_54, %c0_55] : memref<256x72xbf16, #tpu.memory_space<vmem>>, vector<128x72xbf16>
    %cst_56 = arith.constant dense<0.000000e+00> : vector<128x128xf32>
    %47 = tpu.matmul %46, %42, %cst_56 {dimension_numbers = #tpu.dot_dimension_numbers<[1], [0], [0], [1], [0, 0, 1, 1], [], []>} : vector<128x72xbf16>, vector<72x128xbf16>, vector<128x128xf32> -> vector<128x128xf32>
    %48 = vector.broadcast %43 : vector<1x128xf32> to vector<128x128xf32>
    %49 = arith.addf %47, %48 : vector<128x128xf32>
    %cst_57 = arith.constant 0.000000e+00 : f32
    %50 = vector.broadcast %cst_57 : f32 to vector<128x128xf32>
    %51 = arith.cmpf ogt, %49, %50 : vector<128x128xf32>
    %cst_58 = arith.constant 0.000000e+00 : f32
    %52 = vector.broadcast %cst_58 : f32 to vector<128x128xf32>
    %53 = arith.minimumf %49, %52 : vector<128x128xf32>
    %54 = math.exp %53 : vector<128x128xf32>
    %cst_59 = arith.constant 1.000000e+00 : f32
    %55 = vector.broadcast %cst_59 : f32 to vector<128x128xf32>
    %56 = arith.subf %54, %55 : vector<128x128xf32>
    %57 = arith.select %51, %49, %56 : vector<128x128xi1>, vector<128x128xf32>
    %cst_60 = arith.constant dense<0.000000e+00> : vector<128xf32>
    %58 = vector.multi_reduction <add>, %57, %cst_60 [0] : vector<128x128xf32> to vector<128xf32>
    %59 = vector.shape_cast %58 : vector<128xf32> to vector<1x128xf32>
    %60 = arith.addf %44, %59 : vector<1x128xf32>
    %61 = arith.mulf %57, %57 : vector<128x128xf32>
    %cst_61 = arith.constant dense<0.000000e+00> : vector<128xf32>
    %62 = vector.multi_reduction <add>, %61, %cst_61 [0] : vector<128x128xf32> to vector<128xf32>
    %63 = vector.shape_cast %62 : vector<128xf32> to vector<1x128xf32>
    %64 = arith.addf %45, %63 : vector<1x128xf32>
    %65 = vector.extract_strided_slice %57 {offsets = [0, 0], sizes = [128, 8], strides = [1, 1]} : vector<128x128xf32> to vector<128x8xf32>
    %66 = vector.shape_cast %65 : vector<128x8xf32> to vector<8x16x8xf32>
    %67 = arith.truncf %66 : vector<8x16x8xf32> to vector<8x16x8xbf16>
    %c0_62 = arith.constant 0 : index
    %c0_63 = arith.constant 0 : index
    %c0_64 = arith.constant 0 : index
    %c0_65 = arith.constant 0 : index
    %68 = vector.load %arg6[%c0_62, %c0_63, %c0_64, %c0_65] : memref<1x16x16x8xbf16, #tpu.memory_space<vmem>>, vector<1x8x16x8xbf16>
    %69 = vector.shape_cast %68 : vector<1x8x16x8xbf16> to vector<8x16x8xbf16>
    %70 = vector.shape_cast %67 : vector<8x16x8xbf16> to vector<1x8x16x8xbf16>
    tpu.vector_store %arg6[%c0_62, %c0_63, %c0_64, %c0_65], %70 {strides = array<i32>} : memref<1x16x16x8xbf16, #tpu.memory_space<vmem>>, vector<1x8x16x8xbf16>,
    %c128 = arith.constant 128 : index
    %c0_66 = arith.constant 0 : index
    %71 = vector.load %arg9[%c128, %c0_66] : memref<256x72xbf16, #tpu.memory_space<vmem>>, vector<128x72xbf16>
    %cst_67 = arith.constant dense<0.000000e+00> : vector<128x128xf32>
    %72 = tpu.matmul %71, %42, %cst_67 {dimension_numbers = #tpu.dot_dimension_numbers<[1], [0], [0], [1], [0, 0, 1, 1], [], []>} : vector<128x72xbf16>, vector<72x128xbf16>, vector<128x128xf32> -> vector<128x128xf32>
    %73 = vector.broadcast %43 : vector<1x128xf32> to vector<128x128xf32>
    %74 = arith.addf %72, %73 : vector<128x128xf32>
    %cst_68 = arith.constant 0.000000e+00 : f32
    %75 = vector.broadcast %cst_68 : f32 to vector<128x128xf32>
    %76 = arith.cmpf ogt, %74, %75 : vector<128x128xf32>
    %cst_69 = arith.constant 0.000000e+00 : f32
    %77 = vector.broadcast %cst_69 : f32 to vector<128x128xf32>
    %78 = arith.minimumf %74, %77 : vector<128x128xf32>
    %79 = math.exp %78 : vector<128x128xf32>
    %cst_70 = arith.constant 1.000000e+00 : f32
    %80 = vector.broadcast %cst_70 : f32 to vector<128x128xf32>
    %81 = arith.subf %79, %80 : vector<128x128xf32>
    %82 = arith.select %76, %74, %81 : vector<128x128xi1>, vector<128x128xf32>
    %cst_71 = arith.constant dense<0.000000e+00> : vector<128xf32>
    %83 = vector.multi_reduction <add>, %82, %cst_71 [0] : vector<128x128xf32> to vector<128xf32>
    %84 = vector.shape_cast %83 : vector<128xf32> to vector<1x128xf32>
    %85 = arith.addf %60, %84 : vector<1x128xf32>
    %86 = arith.mulf %82, %82 : vector<128x128xf32>
    %cst_72 = arith.constant dense<0.000000e+00> : vector<128xf32>
    %87 = vector.multi_reduction <add>, %86, %cst_72 [0] : vector<128x128xf32> to vector<128xf32>
    %88 = vector.shape_cast %87 : vector<128xf32> to vector<1x128xf32>
    %89 = arith.addf %64, %88 : vector<1x128xf32>
    %90 = vector.extract_strided_slice %82 {offsets = [0, 0], sizes = [128, 8], strides = [1, 1]} : vector<128x128xf32> to vector<128x8xf32>
    %91 = vector.shape_cast %90 : vector<128x8xf32> to vector<8x16x8xf32>
    %92 = arith.truncf %91 : vector<8x16x8xf32> to vector<8x16x8xbf16>
    %c0_73 = arith.constant 0 : index
    %c8_74 = arith.constant 8 : index
    %c0_75 = arith.constant 0 : index
    %c0_76 = arith.constant 0 : index
    %93 = vector.load %arg6[%c0_73, %c8_74, %c0_75, %c0_76] : memref<1x16x16x8xbf16, #tpu.memory_space<vmem>>, vector<1x8x16x8xbf16>
    %94 = vector.shape_cast %93 : vector<1x8x16x8xbf16> to vector<8x16x8xbf16>
    %95 = vector.shape_cast %92 : vector<8x16x8xbf16> to vector<1x8x16x8xbf16>
    tpu.vector_store %arg6[%c0_73, %c8_74, %c0_75, %c0_76], %95 {strides = array<i32>} : memref<1x16x16x8xbf16, #tpu.memory_space<vmem>>, vector<1x8x16x8xbf16>,
    %96 = tpu.concatenate %85, %89 in 0 : vector<1x128xf32>, vector<1x128xf32> -> vector<2x128xf32>
    %c0_77 = arith.constant 0 : index
    %c0_78 = arith.constant 0 : index
    %c0_79 = arith.constant 0 : index
    %97 = vector.load %arg7[%c0_77, %c0_78, %c0_79] : memref<1x2x128xf32, #tpu.memory_space<vmem>>, vector<1x2x128xf32>
    %98 = vector.shape_cast %97 : vector<1x2x128xf32> to vector<2x128xf32>
    %99 = vector.shape_cast %96 : vector<2x128xf32> to vector<1x2x128xf32>
    tpu.vector_store %arg7[%c0_77, %c0_78, %c0_79], %99 {strides = array<i32>} : memref<1x2x128xf32, #tpu.memory_space<vmem>>, vector<1x2x128xf32>,
    return
  }
  func.func @transform_0(%arg0: i32) -> (i32, i32, i32, i32) {
    %c0_i32 = arith.constant 0 : i32
    %c0_i32_0 = arith.constant 0 : i32
    %c0_i32_1 = arith.constant 0 : i32
    %c0_i32_2 = arith.constant 0 : i32
    return %arg0, %c0_i32, %c0_i32_0, %c0_i32_1 : i32, i32, i32, i32
  }
  func.func @transform_1(%arg0: i32) -> (i32, i32) {
    %c0_i32 = arith.constant 0 : i32
    %c0_i32_0 = arith.constant 0 : i32
    %c0_i32_1 = arith.constant 0 : i32
    return %c0_i32, %c0_i32_0 : i32, i32
  }
  func.func @transform_2(%arg0: i32) -> (i32, i32) {
    %c0_i32 = arith.constant 0 : i32
    %c0_i32_0 = arith.constant 0 : i32
    %c0_i32_1 = arith.constant 0 : i32
    return %c0_i32, %c0_i32_0 : i32, i32
  }
  func.func @transform_3(%arg0: i32) -> (i32, i32) {
    %c0_i32 = arith.constant 0 : i32
    %c0_i32_0 = arith.constant 0 : i32
    %c0_i32_1 = arith.constant 0 : i32
    return %c0_i32, %c0_i32_0 : i32, i32
  }
  func.func @transform_4(%arg0: i32) -> (i32, i32) {
    %c0_i32 = arith.constant 0 : i32
    %c0_i32_0 = arith.constant 0 : i32
    %c0_i32_1 = arith.constant 0 : i32
    return %c0_i32, %c0_i32_0 : i32, i32
  }
  func.func @transform_5(%arg0: i32) -> (i32, i32, i32, i32) {
    %c0_i32 = arith.constant 0 : i32
    %c0_i32_0 = arith.constant 0 : i32
    %c0_i32_1 = arith.constant 0 : i32
    %c0_i32_2 = arith.constant 0 : i32
    return %arg0, %c0_i32, %c0_i32_0, %c0_i32_1 : i32, i32, i32, i32
  }
  func.func @transform_6(%arg0: i32) -> (i32, i32, i32) {
    %c0_i32 = arith.constant 0 : i32
    %c0_i32_0 = arith.constant 0 : i32
    %c0_i32_1 = arith.constant 0 : i32
    return %arg0, %c0_i32, %c0_i32_0 : i32, i32, i32
  }
}

</mosaic_0001>

<llo_original>
// kernel: encoder_block_forward.5
$region0: #{encoder_block_forward.5}
  #allocation0 [shape = 'u32[]', space=smem, size = 0x4, offset = 0x4, fixed_abs, tag = 'smem constant byte address 0x4 - core index']
  #allocation1 [shape = 'u32[72,128]{1,0:T(1,128)}', space=vmem, size = 0x9000, scoped, tag = 'internal scratch']
  %s0 = inlined_call_operand.vmem [shape: bf16[2,16,16,8], index: 0, kind: input, shape index: {}]
  %s1 = inlined_call_operand.vmem [shape: f32[1,8], index: 1, kind: input, shape index: {}]
  %s2 = inlined_call_operand.vmem [shape: f32[1,8], index: 2, kind: input, shape index: {}]
  %s3 = inlined_call_operand.vmem [shape: f32[2,16,16,8], index: 3, kind: output, shape index: {0}]
  %s4 = inlined_call_operand.vmem [shape: f32[2,8,8,8], index: 4, kind: output, shape index: {1}]
  %5 = xla_tuple %s3, %s4
  %s6 = sld [smem:[#allocation0]]
  $region53: #{encoder_block_forward.5} parent=0
    _
  %s8 = ssub.s32 1, %s6
  %s9 = scalar_select 0, %s8, %s6
  loop: start=0, step=1, limit=6
  $region2: #{encoder_block_forward.5} parent=0 // loop_pre_header
    _
  $region3: #{encoder_block_forward.5} parent=0 // loop_header
    %s11 = sphi 0, %s15
    %p12 = scmp.ge.s32.totalorder %s11, 6
    %s18 = sphi 0, %s30
    %s19 = sphi 0, %s26
    %s20 = sphi 0, %s18
    %s21 = sphi 0, %s19
    %s22 = sphi 0, %s20
    %s23 = sphi 0, %s21
    %s35 = sphi 0, %s37
    %s38 = sphi 0, %s35
    %s39 = sphi 0, %s38
    %s55 = sphi 0, %s39
    %s59 = sphi 0, %s59
    %s61 = sphi 0, %s59
    %s62 = sphi 0, %s61
    %s76 = sphi 0, %s62
    %s80 = sphi 0, %s80
    %s82 = sphi 0, %s80
    %s83 = sphi 0, %s82
    %s97 = sphi 0, %s83
    %s105 = sphi 0, %s107
    %s108 = sphi 0, %s105
    %s109 = sphi 0, %s108
    %s125 = sphi 0, %s109
    %s133 = sphi 0, %s135
    %s136 = sphi 0, %s133
    %s137 = sphi 0, %s136
    %s153 = sphi 0, %s137
  $region4: #{encoder_block_forward.5} parent=0 // loop_header_branch
    %14 = sbr.rel (%p12) target = $region8
  $region5: #{encoder_block_forward.5} parent=0 // loop_body
    %s16 = ssub.s32 %s11, 1
    %s17 = ssub.s32 %s11, 2
    %s24 = sadd.s32 1, %s19
    %p25 = scmp.ge.s32.totalorder %s24, 2
    %s26 = scalar_select %p25, 0, %s24
    %s27 = sadd.s32 1, %s18
    %s28 = scalar_select %p25, %s27, %s18
    %p29 = scmp.ge.s32.totalorder %s28, 2
    %s30 = scalar_select %p29, 0, %s28
    %s31 = ssub.s32 %s18, %s30
    %s32 = ssub.s32 %s19, %s26
    %s33 = sor.u32 %s31, %s32
    %p34 = scmp.eq.s32.totalorder %s33, 0
    %s36 = sadd.s32 %s35, 1
    %s37 = scalar_select %p34, %s35, %s36
    %p40 = pneg %p34
    %p41 = scmp.eq.s32.totalorder %s11, 3
    %p42 = por %p40, %p41
    %p43 = scmp.ne.s32.totalorder %s35, %s38
    %p44 = scmp.eq.s32.totalorder %s11, 0
    %p45 = por %p43, %p44
    %p46 = scmp.ne.s32.totalorder %s35, %s38
    %p47 = scmp.eq.s32.totalorder %s16, 3
    %p48 = por %p46, %p47
    %p49 = scmp.ne.s32.totalorder %s38, %s39
    %p50 = scmp.eq.s32.totalorder %s16, 0
    %p51 = por %p49, %p50
    %p52 = scmp.ne.s32.totalorder %s38, %s39
    %p53 = scmp.eq.s32.totalorder %s17, 3
    %p54 = por %p52, %p53
    %p56 = scmp.ne.s32.totalorder %s39, %s55
    %p57 = scmp.eq.s32.totalorder %s17, 0
    %p58 = por %p56, %p57
    %s60 = sadd.s32 %s59, 1
    %p63 = scmp.eq.s32.totalorder %s11, 3
    %p64 = scmp.ne.s32.totalorder %s59, %s61
    %p65 = scmp.eq.s32.totalorder %s11, 0
    %p66 = por %p64, %p65
    %p67 = scmp.ne.s32.totalorder %s59, %s61
    %p68 = scmp.eq.s32.totalorder %s16, 3
    %p69 = por %p67, %p68
    %p70 = scmp.ne.s32.totalorder %s61, %s62
    %p71 = scmp.eq.s32.totalorder %s16, 0
    %p72 = por %p70, %p71
    %p73 = scmp.ne.s32.totalorder %s61, %s62
    %p74 = scmp.eq.s32.totalorder %s17, 3
    %p75 = por %p73, %p74
    %p77 = scmp.ne.s32.totalorder %s62, %s76
    %p78 = scmp.eq.s32.totalorder %s17, 0
    %p79 = por %p77, %p78
    %s81 = sadd.s32 %s80, 1
    %p84 = scmp.eq.s32.totalorder %s11, 3
    %p85 = scmp.ne.s32.totalorder %s80, %s82
    %p86 = scmp.eq.s32.totalorder %s11, 0
    %p87 = por %p85, %p86
    %p88 = scmp.ne.s32.totalorder %s80, %s82
    %p89 = scmp.eq.s32.totalorder %s16, 3
    %p90 = por %p88, %p89
    %p91 = scmp.ne.s32.totalorder %s82, %s83
    %p92 = scmp.eq.s32.totalorder %s16, 0
    %p93 = por %p91, %p92
    %p94 = scmp.ne.s32.totalorder %s82, %s83
    %p95 = scmp.eq.s32.totalorder %s17, 3
    %p96 = por %p94, %p95
    %p98 = scmp.ne.s32.totalorder %s83, %s97
    %p99 = scmp.eq.s32.totalorder %s17, 0
    %p100 = por %p98, %p99
    %s101 = ssub.s32 %s18, %s30
    %s102 = ssub.s32 %s19, %s26
    %s103 = sor.u32 %s101, %s102
    %p104 = scmp.eq.s32.totalorder %s103, 0
    %s106 = sadd.s32 %s105, 1
    %s107 = scalar_select %p104, %s105, %s106
    %p110 = pneg %p104
    %p111 = scmp.eq.s32.totalorder %s11, 3
    %p112 = por %p110, %p111
    %p113 = scmp.ne.s32.totalorder %s105, %s108
    %p114 = scmp.eq.s32.totalorder %s11, 0
    %p115 = por %p113, %p114
    %p116 = scmp.ne.s32.totalorder %s105, %s108
    %p117 = scmp.eq.s32.totalorder %s16, 3
    %p118 = por %p116, %p117
    %p119 = scmp.ne.s32.totalorder %s108, %s109
    %p120 = scmp.eq.s32.totalorder %s16, 0
    %p121 = por %p119, %p120
    %p122 = scmp.ne.s32.totalorder %s108, %s109
    %p123 = scmp.eq.s32.totalorder %s17, 3
    %p124 = por %p122, %p123
    %p126 = scmp.ne.s32.totalorder %s109, %s125
    %p127 = scmp.eq.s32.totalorder %s17, 0
    %p128 = por %p126, %p127
    %s129 = ssub.s32 %s18, %s30
    %s130 = ssub.s32 %s19, %s26
    %s131 = sor.u32 %s129, %s130
    %p132 = scmp.eq.s32.totalorder %s131, 0
    %s134 = sadd.s32 %s133, 1
    %s135 = scalar_select %p132, %s133, %s134
    %p138 = pneg %p132
    %p139 = scmp.eq.s32.totalorder %s11, 3
    %p140 = por %p138, %p139
    %p141 = scmp.ne.s32.totalorder %s133, %s136
    %p142 = scmp.eq.s32.totalorder %s11, 0
    %p143 = por %p141, %p142
    %p144 = scmp.ne.s32.totalorder %s133, %s136
    %p145 = scmp.eq.s32.totalorder %s16, 3
    %p146 = por %p144, %p145
    %p147 = scmp.ne.s32.totalorder %s136, %s137
    %p148 = scmp.eq.s32.totalorder %s16, 0
    %p149 = por %p147, %p148
    %p150 = scmp.ne.s32.totalorder %s136, %s137
    %p151 = scmp.eq.s32.totalorder %s17, 3
    %p152 = por %p150, %p151
    %p154 = scmp.ne.s32.totalorder %s137, %s153
    %p155 = scmp.eq.s32.totalorder %s17, 0
    %p156 = por %p154, %p155
    %p157 = scmp.le.s32.totalorder 1, %s11
    %p158 = scmp.lt.s32.totalorder %s11, 5
    %p159 = pnand %p157, %p158
    %p160 = pneg %p159
    // Predicated region
    $region9: #{encoder_block_forward.5} parent=5 // pred_check
      _
    $region10: #{encoder_block_forward.5} parent=5 // pred_check_branch
      %162 = sbr.rel (%p159) target = $region12
    $region11: #{encoder_block_forward.5} parent=5 // pred_region
      %s163 = ssub.s32 %s11, 1
      // Predicated region
      $region13: #{encoder_block_forward.5} parent=11 // pred_check
        %p164 = pneg %p72
      $region14: #{encoder_block_forward.5} parent=11 // pred_check_branch
        %166 = sbr.rel (%p164) target = $region16
      $region15: #{encoder_block_forward.5} parent=11 // pred_region
        _
      $region16: #{encoder_block_forward.5} parent=11 // pred_fallthru
        _
      // Predicated region
      $region17: #{encoder_block_forward.5} parent=11 // pred_check
        %p167 = pneg %p93
      $region18: #{encoder_block_forward.5} parent=11 // pred_check_branch
        %169 = sbr.rel (%p167) target = $region20
      $region19: #{encoder_block_forward.5} parent=11 // pred_region
        _
      $region20: #{encoder_block_forward.5} parent=11 // pred_fallthru
        _
    $region12: #{encoder_block_forward.5} parent=5 // pred_fallthru
      _
    %p170 = scmp.lt.s32.totalorder %s11, 4
    // Predicated region
    $region21: #{encoder_block_forward.5} parent=5 // pred_check
      %p171 = pneg %p170
    $region22: #{encoder_block_forward.5} parent=5 // pred_check_branch
      %173 = sbr.rel (%p171) target = $region24
    $region23: #{encoder_block_forward.5} parent=5 // pred_region
      // Predicated region
      $region25: #{encoder_block_forward.5} parent=23 // pred_check
        %p174 = pneg %p45
      $region26: #{encoder_block_forward.5} parent=23 // pred_check_branch
        %176 = sbr.rel (%p174) target = $region28
      $region27: #{encoder_block_forward.5} parent=23 // pred_region
        %s177 = smul.u32 8, %s19
        %p178 = scmp.lt.s32.totalorder %s18, 1
        %s179 = scalar_select %p178, %s18, 1
        %p180 = scmp.lt.s32.totalorder %s177, 15
        %s181 = scalar_select %p180, %s177, 15
        %s182 = smul.addr %s181, 2
        %s183 = smul.addr %s179, 32
        %s184 = sadd.s32 %s182, %s183
        %s185 = smul.addr %s184, 4
        %s186 = scalar_lea.vmem %s0, %s185
        %s187 = smul.u32 8, %s19
      $region28: #{encoder_block_forward.5} parent=23 // pred_fallthru
        _
    $region24: #{encoder_block_forward.5} parent=5 // pred_fallthru
      _
    %p188 = scmp.le.s32.totalorder 1, %s11
    %p189 = scmp.lt.s32.totalorder %s11, 5
    %p190 = pnand %p188, %p189
    %p191 = pneg %p190
    // Predicated region
    $region29: #{encoder_block_forward.5} parent=5 // pred_check
      _
    $region30: #{encoder_block_forward.5} parent=5 // pred_check_branch
      %193 = sbr.rel (%p190) target = $region32
    $region31: #{encoder_block_forward.5} parent=5 // pred_region
      %s194 = ssub.s32 %s11, 1
      %s195 = smul.u32 8, %s21
      %p196 = scmp.lt.s32.totalorder %s20, 1
      %s197 = scalar_select %p196, %s20, 1
      %p198 = scmp.lt.s32.totalorder %s195, 15
      %s199 = scalar_select %p198, %s195, 15
      %s200 = smul.addr %s199, 2
      %s201 = smul.addr %s197, 32
      %s202 = sadd.s32 %s200, %s201
      %s203 = smul.addr %s202, 4
      %s204 = scalar_lea.vmem %s0, %s203
      %p205 = pneg %p51
      %p206 = pneg %p48
      %p207 = pneg %p72
      %p208 = pneg %p69
      %p209 = pneg %p93
      %p210 = pneg %p90
      %p211 = pneg %p121
      %p212 = pneg %p118
      %s213 = smul.u32 8, %s21
      %p214 = scmp.lt.s32.totalorder %s20, 1
      %s215 = scalar_select %p214, %s20, 1
      %p216 = scmp.lt.s32.totalorder %s213, 15
      %s217 = scalar_select %p216, %s213, 15
      %s218 = smul.addr %s217, 2
      %s219 = smul.addr %s215, 32
      %s220 = sadd.s32 %s218, %s219
      %s221 = smul.addr %s220, 8
      %s222 = scalar_lea.vmem %s3, %s221
      %p223 = pneg %p149
      %p224 = pneg %p146
      %s225 = smul.u32 4, %s21
      %p226 = scmp.lt.s32.totalorder %s20, 1
      %s227 = scalar_select %p226, %s20, 1
      %p228 = scmp.lt.s32.totalorder %s225, 7
      %s229 = scalar_select %p228, %s225, 7
      %s230 = smul.addr %s227, 8
      %s231 = sadd.s32 %s229, %s230
      %s232 = smul.addr %s231, 8
      %s233 = scalar_lea.vmem %s4, %s232
      %s234 = smul.u32 8, %s21
      %p235 = scmp.lt.s32.totalorder %s20, 1
      %s236 = scalar_select %p235, %s20, 1
      %p237 = scmp.lt.s32.totalorder %s234, 15
      %s238 = scalar_select %p237, %s234, 15
      %s239 = smul.addr %s238, 2
      %s240 = smul.addr %s236, 32
      %s241 = sadd.s32 %s239, %s240
      %s242 = smul.addr %s241, 4
      %s243 = scalar_lea.vmem %s0, %s242
      %s244 = smul.u32 8, %s21
      %s245 = smul.u32 8, %s21
      %p246 = scmp.lt.s32.totalorder %s20, 1
      %s247 = scalar_select %p246, %s20, 1
      %p248 = scmp.lt.s32.totalorder %s245, 15
      %s249 = scalar_select %p248, %s245, 15
      %s250 = smul.addr %s249, 2
      %s251 = smul.addr %s247, 32
      %s252 = sadd.s32 %s250, %s251
      %s253 = smul.addr %s252, 8
      %s254 = scalar_lea.vmem %s3, %s253
      %s255 = smul.u32 8, %s21
      %s256 = smul.u32 4, %s21
      %p257 = scmp.lt.s32.totalorder %s20, 1
      %s258 = scalar_select %p257, %s20, 1
      %p259 = scmp.lt.s32.totalorder %s256, 7
      %s260 = scalar_select %p259, %s256, 7
      %s261 = smul.addr %s258, 8
      %s262 = sadd.s32 %s260, %s261
      %s263 = smul.addr %s262, 8
      %s264 = scalar_lea.vmem %s4, %s263
      %s265 = smul.u32 4, %s21
      %v266 = vld [vmem:[%s243] sm:$0xf]
      %v267 = vld [vmem:[%s243 + $0x4] sm:$0xf]
      %v268 = vld [vmem:[%s243 + $0x8] sm:$0xf]
      %v269 = vld [vmem:[%s243 + $0xc] sm:$0xf]
      %v270 = vld [vmem:[%s243 + $0x10] sm:$0xf]
      %v271 = vld [vmem:[%s243 + $0x14] sm:$0xf]
      %v272 = vld [vmem:[%s243 + $0x18] sm:$0xf]
      %v273 = vld [vmem:[%s243 + $0x1c] sm:$0xf]
      %v274 = vld [vmem:[%s243 + $0x20] sm:$0xf]
      %v275 = vld [vmem:[%s243 + $0x24] sm:$0xf]
      %v276 = vld [vmem:[%s243 + $0x28] sm:$0xf]
      %v277 = vld [vmem:[%s243 + $0x2c] sm:$0xf]
      %v278 = vld [vmem:[%s243 + $0x30] sm:$0xf]
      %v279 = vld [vmem:[%s243 + $0x34] sm:$0xf]
      %v280 = vld [vmem:[%s243 + $0x38] sm:$0xf]
      %v281 = vld [vmem:[%s243 + $0x3c] sm:$0xf]
      %v282 = vunpack.c.l.bf16 %v266
      %v283 = vunpack.c.l.bf16 %v267
      %v284 = vunpack.c.l.bf16 %v268
      %v285 = vunpack.c.l.bf16 %v269
      %v286 = vunpack.c.l.bf16 %v270
      %v287 = vunpack.c.l.bf16 %v271
      %v288 = vunpack.c.l.bf16 %v272
      %v289 = vunpack.c.l.bf16 %v273
      %v290 = vunpack.c.l.bf16 %v274
      %v291 = vunpack.c.l.bf16 %v275
      %v292 = vunpack.c.l.bf16 %v276
      %v293 = vunpack.c.l.bf16 %v277
      %v294 = vunpack.c.l.bf16 %v278
      %v295 = vunpack.c.l.bf16 %v279
      %v296 = vunpack.c.l.bf16 %v280
      %v297 = vunpack.c.l.bf16 %v281
      %v298 = vld [vmem:[%s1] sm:$0x1]
      %v300 = vperm.slane %v298, 0
      %v302 = vmul.f32 %v282, %v300
      %v303 = vmul.f32 %v283, %v300
      %v304 = vmul.f32 %v284, %v300
      %v305 = vmul.f32 %v285, %v300
      %v306 = vmul.f32 %v286, %v300
      %v307 = vmul.f32 %v287, %v300
      %v308 = vmul.f32 %v288, %v300
      %v309 = vmul.f32 %v289, %v300
      %v310 = vmul.f32 %v290, %v300
      %v311 = vmul.f32 %v291, %v300
      %v312 = vmul.f32 %v292, %v300
      %v313 = vmul.f32 %v293, %v300
      %v314 = vmul.f32 %v294, %v300
      %v315 = vmul.f32 %v295, %v300
      %v316 = vmul.f32 %v296, %v300
      %v317 = vmul.f32 %v297, %v300
      %v318 = vld [vmem:[%s2] sm:$0x1]
      %v320 = vperm.slane %v318, 0
      %v322 = vadd.f32 %v302, %v320
      %v323 = vadd.f32 %v303, %v320
      %v324 = vadd.f32 %v304, %v320
      %v325 = vadd.f32 %v305, %v320
      %v326 = vadd.f32 %v306, %v320
      %v327 = vadd.f32 %v307, %v320
      %v328 = vadd.f32 %v308, %v320
      %v329 = vadd.f32 %v309, %v320
      %v330 = vadd.f32 %v310, %v320
      %v331 = vadd.f32 %v311, %v320
      %v332 = vadd.f32 %v312, %v320
      %v333 = vadd.f32 %v313, %v320
      %v334 = vadd.f32 %v314, %v320
      %v335 = vadd.f32 %v315, %v320
      %v336 = vadd.f32 %v316, %v320
      %v337 = vadd.f32 %v317, %v320
      %vm338 = vcmask 64512
      %339 = vst.msk [vmem:[%s254] sm:$0xff] %vm338, %v322
      %340 = vst.msk [vmem:[%s254 + $0x8] sm:$0xff] %vm338, %v323
      %341 = vst.msk [vmem:[%s254 + $0x10] sm:$0xff] %vm338, %v324
      %342 = vst.msk [vmem:[%s254 + $0x18] sm:$0xff] %vm338, %v325
      %343 = vst.msk [vmem:[%s254 + $0x20] sm:$0xff] %vm338, %v326
      %344 = vst.msk [vmem:[%s254 + $0x28] sm:$0xff] %vm338, %v327
      %345 = vst.msk [vmem:[%s254 + $0x30] sm:$0xff] %vm338, %v328
      %346 = vst.msk [vmem:[%s254 + $0x38] sm:$0xff] %vm338, %v329
      %347 = vst.msk [vmem:[%s254 + $0x40] sm:$0xff] %vm338, %v330
      %348 = vst.msk [vmem:[%s254 + $0x48] sm:$0xff] %vm338, %v331
      %349 = vst.msk [vmem:[%s254 + $0x50] sm:$0xff] %vm338, %v332
      %350 = vst.msk [vmem:[%s254 + $0x58] sm:$0xff] %vm338, %v333
      %351 = vst.msk [vmem:[%s254 + $0x60] sm:$0xff] %vm338, %v334
      %352 = vst.msk [vmem:[%s254 + $0x68] sm:$0xff] %vm338, %v335
      %353 = vst.msk [vmem:[%s254 + $0x70] sm:$0xff] %vm338, %v336
      %354 = vst.msk [vmem:[%s254 + $0x78] sm:$0xff] %vm338, %v337
      %v371 = vrot.slane %v322, 2
      %v372 = vrot.slane %v322, 4
      %v373 = vrot.slane %v322, 6
      %v374 = vrot.slane %v323, 2
      %v375 = vrot.slane %v323, 4
      %v376 = vrot.slane %v323, 6
      %v377 = vrot.slane %v324, 2
      %v378 = vrot.slane %v324, 4
      %v379 = vrot.slane %v324, 6
      %v380 = vrot.slane %v325, 2
      %v381 = vrot.slane %v325, 4
      %v382 = vrot.slane %v325, 6
      %v383 = vrot.slane %v326, 2
      %v384 = vrot.slane %v326, 4
      %v385 = vrot.slane %v326, 6
      %v386 = vrot.slane %v327, 2
      %v387 = vrot.slane %v327, 4
      %v388 = vrot.slane %v327, 6
      %v389 = vrot.slane %v328, 2
      %v390 = vrot.slane %v328, 4
      %v391 = vrot.slane %v328, 6
      %v392 = vrot.slane %v329, 2
      %v393 = vrot.slane %v329, 4
      %v394 = vrot.slane %v329, 6
      %v395 = vrot.slane %v330, 2
      %v396 = vrot.slane %v330, 4
      %v397 = vrot.slane %v330, 6
      %v398 = vrot.slane %v331, 2
      %v399 = vrot.slane %v331, 4
      %v400 = vrot.slane %v331, 6
      %v401 = vrot.slane %v332, 2
      %v402 = vrot.slane %v332, 4
      %v403 = vrot.slane %v332, 6
      %v404 = vrot.slane %v333, 2
      %v405 = vrot.slane %v333, 4
      %v406 = vrot.slane %v333, 6
      %v407 = vrot.slane %v334, 2
      %v408 = vrot.slane %v334, 4
      %v409 = vrot.slane %v334, 6
      %v410 = vrot.slane %v335, 2
      %v411 = vrot.slane %v335, 4
      %v412 = vrot.slane %v335, 6
      %v413 = vrot.slane %v336, 2
      %v414 = vrot.slane %v336, 4
      %v415 = vrot.slane %v336, 6
      %v416 = vrot.slane %v337, 2
      %v417 = vrot.slane %v337, 4
      %v418 = vrot.slane %v337, 6
      %vm467 = vcmask 58368
      %v468 = vsel %vm467, %v322, -inf
      %v469 = vrot.slane %v468, 4
      %v470 = vmax.f32 %v468, %v469
      %v471 = vrot.slane %v470, 2
      %v472 = vmax.f32 %v470, %v471
      %v473 = vrot.slane %v472, 1
      %v474 = vmax.f32 %v472, %v473
      %v475 = vsel %vm467, %v371, -inf
      %v476 = vrot.slane %v475, 4
      %v477 = vmax.f32 %v475, %v476
      %v478 = vrot.slane %v477, 2
      %v479 = vmax.f32 %v477, %v478
      %v480 = vrot.slane %v479, 1
      %v481 = vmax.f32 %v479, %v480
      %v482 = vsel %vm467, %v372, -inf
      %v483 = vrot.slane %v482, 4
      %v484 = vmax.f32 %v482, %v483
      %v485 = vrot.slane %v484, 2
      %v486 = vmax.f32 %v484, %v485
      %v487 = vrot.slane %v486, 1
      %v488 = vmax.f32 %v486, %v487
      %v489 = vsel %vm467, %v373, -inf
      %v490 = vrot.slane %v489, 4
      %v491 = vmax.f32 %v489, %v490
      %v492 = vrot.slane %v491, 2
      %v493 = vmax.f32 %v491, %v492
      %v494 = vrot.slane %v493, 1
      %v495 = vmax.f32 %v493, %v494
      %v496 = vsel %vm467, %v323, -inf
      %v497 = vrot.slane %v496, 4
      %v498 = vmax.f32 %v496, %v497
      %v499 = vrot.slane %v498, 2
      %v500 = vmax.f32 %v498, %v499
      %v501 = vrot.slane %v500, 1
      %v502 = vmax.f32 %v500, %v501
      %v503 = vsel %vm467, %v374, -inf
      %v504 = vrot.slane %v503, 4
      %v505 = vmax.f32 %v503, %v504
      %v506 = vrot.slane %v505, 2
      %v507 = vmax.f32 %v505, %v506
      %v508 = vrot.slane %v507, 1
      %v509 = vmax.f32 %v507, %v508
      %v510 = vsel %vm467, %v375, -inf
      %v511 = vrot.slane %v510, 4
      %v512 = vmax.f32 %v510, %v511
      %v513 = vrot.slane %v512, 2
      %v514 = vmax.f32 %v512, %v513
      %v515 = vrot.slane %v514, 1
      %v516 = vmax.f32 %v514, %v515
      %v517 = vsel %vm467, %v376, -inf
      %v518 = vrot.slane %v517, 4
      %v519 = vmax.f32 %v517, %v518
      %v520 = vrot.slane %v519, 2
      %v521 = vmax.f32 %v519, %v520
      %v522 = vrot.slane %v521, 1
      %v523 = vmax.f32 %v521, %v522
      %v524 = vsel %vm467, %v324, -inf
      %v525 = vrot.slane %v524, 4
      %v526 = vmax.f32 %v524, %v525
      %v527 = vrot.slane %v526, 2
      %v528 = vmax.f32 %v526, %v527
      %v529 = vrot.slane %v528, 1
      %v530 = vmax.f32 %v528, %v529
      %v531 = vsel %vm467, %v377, -inf
      %v532 = vrot.slane %v531, 4
      %v533 = vmax.f32 %v531, %v532
      %v534 = vrot.slane %v533, 2
      %v535 = vmax.f32 %v533, %v534
      %v536 = vrot.slane %v535, 1
      %v537 = vmax.f32 %v535, %v536
      %v538 = vsel %vm467, %v378, -inf
      %v539 = vrot.slane %v538, 4
      %v540 = vmax.f32 %v538, %v539
      %v541 = vrot.slane %v540, 2
      %v542 = vmax.f32 %v540, %v541
      %v543 = vrot.slane %v542, 1
      %v544 = vmax.f32 %v542, %v543
      %v545 = vsel %vm467, %v379, -inf
      %v546 = vrot.slane %v545, 4
      %v547 = vmax.f32 %v545, %v546
      %v548 = vrot.slane %v547, 2
      %v549 = vmax.f32 %v547, %v548
      %v550 = vrot.slane %v549, 1
      %v551 = vmax.f32 %v549, %v550
      %v552 = vsel %vm467, %v325, -inf
      %v553 = vrot.slane %v552, 4
      %v554 = vmax.f32 %v552, %v553
      %v555 = vrot.slane %v554, 2
      %v556 = vmax.f32 %v554, %v555
      %v557 = vrot.slane %v556, 1
      %v558 = vmax.f32 %v556, %v557
      %v559 = vsel %vm467, %v380, -inf
      %v560 = vrot.slane %v559, 4
      %v561 = vmax.f32 %v559, %v560
      %v562 = vrot.slane %v561, 2
      %v563 = vmax.f32 %v561, %v562
      %v564 = vrot.slane %v563, 1
      %v565 = vmax.f32 %v563, %v564
      %v566 = vsel %vm467, %v381, -inf
      %v567 = vrot.slane %v566, 4
      %v568 = vmax.f32 %v566, %v567
      %v569 = vrot.slane %v568, 2
      %v570 = vmax.f32 %v568, %v569
      %v571 = vrot.slane %v570, 1
      %v572 = vmax.f32 %v570, %v571
      %v573 = vsel %vm467, %v382, -inf
      %v574 = vrot.slane %v573, 4
      %v575 = vmax.f32 %v573, %v574
      %v576 = vrot.slane %v575, 2
      %v577 = vmax.f32 %v575, %v576
      %v578 = vrot.slane %v577, 1
      %v579 = vmax.f32 %v577, %v578
      %v580 = vsel %vm467, %v326, -inf
      %v581 = vrot.slane %v580, 4
      %v582 = vmax.f32 %v580, %v581
      %v583 = vrot.slane %v582, 2
      %v584 = vmax.f32 %v582, %v583
      %v585 = vrot.slane %v584, 1
      %v586 = vmax.f32 %v584, %v585
      %v587 = vsel %vm467, %v383, -inf
      %v588 = vrot.slane %v587, 4
      %v589 = vmax.f32 %v587, %v588
      %v590 = vrot.slane %v589, 2
      %v591 = vmax.f32 %v589, %v590
      %v592 = vrot.slane %v591, 1
      %v593 = vmax.f32 %v591, %v592
      %v594 = vsel %vm467, %v384, -inf
      %v595 = vrot.slane %v594, 4
      %v596 = vmax.f32 %v594, %v595
      %v597 = vrot.slane %v596, 2
      %v598 = vmax.f32 %v596, %v597
      %v599 = vrot.slane %v598, 1
      %v600 = vmax.f32 %v598, %v599
      %v601 = vsel %vm467, %v385, -inf
      %v602 = vrot.slane %v601, 4
      %v603 = vmax.f32 %v601, %v602
      %v604 = vrot.slane %v603, 2
      %v605 = vmax.f32 %v603, %v604
      %v606 = vrot.slane %v605, 1
      %v607 = vmax.f32 %v605, %v606
      %v608 = vsel %vm467, %v327, -inf
      %v609 = vrot.slane %v608, 4
      %v610 = vmax.f32 %v608, %v609
      %v611 = vrot.slane %v610, 2
      %v612 = vmax.f32 %v610, %v611
      %v613 = vrot.slane %v612, 1
      %v614 = vmax.f32 %v612, %v613
      %v615 = vsel %vm467, %v386, -inf
      %v616 = vrot.slane %v615, 4
      %v617 = vmax.f32 %v615, %v616
      %v618 = vrot.slane %v617, 2
      %v619 = vmax.f32 %v617, %v618
      %v620 = vrot.slane %v619, 1
      %v621 = vmax.f32 %v619, %v620
      %v622 = vsel %vm467, %v387, -inf
      %v623 = vrot.slane %v622, 4
      %v624 = vmax.f32 %v622, %v623
      %v625 = vrot.slane %v624, 2
      %v626 = vmax.f32 %v624, %v625
      %v627 = vrot.slane %v626, 1
      %v628 = vmax.f32 %v626, %v627
      %v629 = vsel %vm467, %v388, -inf
      %v630 = vrot.slane %v629, 4
      %v631 = vmax.f32 %v629, %v630
      %v632 = vrot.slane %v631, 2
      %v633 = vmax.f32 %v631, %v632
      %v634 = vrot.slane %v633, 1
      %v635 = vmax.f32 %v633, %v634
      %v636 = vsel %vm467, %v328, -inf
      %v637 = vrot.slane %v636, 4
      %v638 = vmax.f32 %v636, %v637
      %v639 = vrot.slane %v638, 2
      %v640 = vmax.f32 %v638, %v639
      %v641 = vrot.slane %v640, 1
      %v642 = vmax.f32 %v640, %v641
      %v643 = vsel %vm467, %v389, -inf
      %v644 = vrot.slane %v643, 4
      %v645 = vmax.f32 %v643, %v644
      %v646 = vrot.slane %v645, 2
      %v647 = vmax.f32 %v645, %v646
      %v648 = vrot.slane %v647, 1
      %v649 = vmax.f32 %v647, %v648
      %v650 = vsel %vm467, %v390, -inf
      %v651 = vrot.slane %v650, 4
      %v652 = vmax.f32 %v650, %v651
      %v653 = vrot.slane %v652, 2
      %v654 = vmax.f32 %v652, %v653
      %v655 = vrot.slane %v654, 1
      %v656 = vmax.f32 %v654, %v655
      %v657 = vsel %vm467, %v391, -inf
      %v658 = vrot.slane %v657, 4
      %v659 = vmax.f32 %v657, %v658
      %v660 = vrot.slane %v659, 2
      %v661 = vmax.f32 %v659, %v660
      %v662 = vrot.slane %v661, 1
      %v663 = vmax.f32 %v661, %v662
      %v664 = vsel %vm467, %v329, -inf
      %v665 = vrot.slane %v664, 4
      %v666 = vmax.f32 %v664, %v665
      %v667 = vrot.slane %v666, 2
      %v668 = vmax.f32 %v666, %v667
      %v669 = vrot.slane %v668, 1
      %v670 = vmax.f32 %v668, %v669
      %v671 = vsel %vm467, %v392, -inf
      %v672 = vrot.slane %v671, 4
      %v673 = vmax.f32 %v671, %v672
      %v674 = vrot.slane %v673, 2
      %v675 = vmax.f32 %v673, %v674
      %v676 = vrot.slane %v675, 1
      %v677 = vmax.f32 %v675, %v676
      %v678 = vsel %vm467, %v393, -inf
      %v679 = vrot.slane %v678, 4
      %v680 = vmax.f32 %v678, %v679
      %v681 = vrot.slane %v680, 2
      %v682 = vmax.f32 %v680, %v681
      %v683 = vrot.slane %v682, 1
      %v684 = vmax.f32 %v682, %v683
      %v685 = vsel %vm467, %v394, -inf
      %v686 = vrot.slane %v685, 4
      %v687 = vmax.f32 %v685, %v686
      %v688 = vrot.slane %v687, 2
      %v689 = vmax.f32 %v687, %v688
      %v690 = vrot.slane %v689, 1
      %v691 = vmax.f32 %v689, %v690
      %v692 = vsel %vm467, %v330, -inf
      %v693 = vrot.slane %v692, 4
      %v694 = vmax.f32 %v692, %v693
      %v695 = vrot.slane %v694, 2
      %v696 = vmax.f32 %v694, %v695
      %v697 = vrot.slane %v696, 1
      %v698 = vmax.f32 %v696, %v697
      %v699 = vsel %vm467, %v395, -inf
      %v700 = vrot.slane %v699, 4
      %v701 = vmax.f32 %v699, %v700
      %v702 = vrot.slane %v701, 2
      %v703 = vmax.f32 %v701, %v702
      %v704 = vrot.slane %v703, 1
      %v705 = vmax.f32 %v703, %v704
      %v706 = vsel %vm467, %v396, -inf
      %v707 = vrot.slane %v706, 4
      %v708 = vmax.f32 %v706, %v707
      %v709 = vrot.slane %v708, 2
      %v710 = vmax.f32 %v708, %v709
      %v711 = vrot.slane %v710, 1
      %v712 = vmax.f32 %v710, %v711
      %v713 = vsel %vm467, %v397, -inf
      %v714 = vrot.slane %v713, 4
      %v715 = vmax.f32 %v713, %v714
      %v716 = vrot.slane %v715, 2
      %v717 = vmax.f32 %v715, %v716
      %v718 = vrot.slane %v717, 1
      %v719 = vmax.f32 %v717, %v718
      %v720 = vsel %vm467, %v331, -inf
      %v721 = vrot.slane %v720, 4
      %v722 = vmax.f32 %v720, %v721
      %v723 = vrot.slane %v722, 2
      %v724 = vmax.f32 %v722, %v723
      %v725 = vrot.slane %v724, 1
      %v726 = vmax.f32 %v724, %v725
      %v727 = vsel %vm467, %v398, -inf
      %v728 = vrot.slane %v727, 4
      %v729 = vmax.f32 %v727, %v728
      %v730 = vrot.slane %v729, 2
      %v731 = vmax.f32 %v729, %v730
      %v732 = vrot.slane %v731, 1
      %v733 = vmax.f32 %v731, %v732
      %v734 = vsel %vm467, %v399, -inf
      %v735 = vrot.slane %v734, 4
      %v736 = vmax.f32 %v734, %v735
      %v737 = vrot.slane %v736, 2
      %v738 = vmax.f32 %v736, %v737
      %v739 = vrot.slane %v738, 1
      %v740 = vmax.f32 %v738, %v739
      %v741 = vsel %vm467, %v400, -inf
      %v742 = vrot.slane %v741, 4
      %v743 = vmax.f32 %v741, %v742
      %v744 = vrot.slane %v743, 2
      %v745 = vmax.f32 %v743, %v744
      %v746 = vrot.slane %v745, 1
      %v747 = vmax.f32 %v745, %v746
      %v748 = vsel %vm467, %v332, -inf
      %v749 = vrot.slane %v748, 4
      %v750 = vmax.f32 %v748, %v749
      %v751 = vrot.slane %v750, 2
      %v752 = vmax.f32 %v750, %v751
      %v753 = vrot.slane %v752, 1
      %v754 = vmax.f32 %v752, %v753
      %v755 = vsel %vm467, %v401, -inf
      %v756 = vrot.slane %v755, 4
      %v757 = vmax.f32 %v755, %v756
      %v758 = vrot.slane %v757, 2
      %v759 = vmax.f32 %v757, %v758
      %v760 = vrot.slane %v759, 1
      %v761 = vmax.f32 %v759, %v760
      %v762 = vsel %vm467, %v402, -inf
      %v763 = vrot.slane %v762, 4
      %v764 = vmax.f32 %v762, %v763
      %v765 = vrot.slane %v764, 2
      %v766 = vmax.f32 %v764, %v765
      %v767 = vrot.slane %v766, 1
      %v768 = vmax.f32 %v766, %v767
      %v769 = vsel %vm467, %v403, -inf
      %v770 = vrot.slane %v769, 4
      %v771 = vmax.f32 %v769, %v770
      %v772 = vrot.slane %v771, 2
      %v773 = vmax.f32 %v771, %v772
      %v774 = vrot.slane %v773, 1
      %v775 = vmax.f32 %v773, %v774
      %v776 = vsel %vm467, %v333, -inf
      %v777 = vrot.slane %v776, 4
      %v778 = vmax.f32 %v776, %v777
      %v779 = vrot.slane %v778, 2
      %v780 = vmax.f32 %v778, %v779
      %v781 = vrot.slane %v780, 1
      %v782 = vmax.f32 %v780, %v781
      %v783 = vsel %vm467, %v404, -inf
      %v784 = vrot.slane %v783, 4
      %v785 = vmax.f32 %v783, %v784
      %v786 = vrot.slane %v785, 2
      %v787 = vmax.f32 %v785, %v786
      %v788 = vrot.slane %v787, 1
      %v789 = vmax.f32 %v787, %v788
      %v790 = vsel %vm467, %v405, -inf
      %v791 = vrot.slane %v790, 4
      %v792 = vmax.f32 %v790, %v791
      %v793 = vrot.slane %v792, 2
      %v794 = vmax.f32 %v792, %v793
      %v795 = vrot.slane %v794, 1
      %v796 = vmax.f32 %v794, %v795
      %v797 = vsel %vm467, %v406, -inf
      %v798 = vrot.slane %v797, 4
      %v799 = vmax.f32 %v797, %v798
      %v800 = vrot.slane %v799, 2
      %v801 = vmax.f32 %v799, %v800
      %v802 = vrot.slane %v801, 1
      %v803 = vmax.f32 %v801, %v802
      %v804 = vsel %vm467, %v334, -inf
      %v805 = vrot.slane %v804, 4
      %v806 = vmax.f32 %v804, %v805
      %v807 = vrot.slane %v806, 2
      %v808 = vmax.f32 %v806, %v807
      %v809 = vrot.slane %v808, 1
      %v810 = vmax.f32 %v808, %v809
      %v811 = vsel %vm467, %v407, -inf
      %v812 = vrot.slane %v811, 4
      %v813 = vmax.f32 %v811, %v812
      %v814 = vrot.slane %v813, 2
      %v815 = vmax.f32 %v813, %v814
      %v816 = vrot.slane %v815, 1
      %v817 = vmax.f32 %v815, %v816
      %v818 = vsel %vm467, %v408, -inf
      %v819 = vrot.slane %v818, 4
      %v820 = vmax.f32 %v818, %v819
      %v821 = vrot.slane %v820, 2
      %v822 = vmax.f32 %v820, %v821
      %v823 = vrot.slane %v822, 1
      %v824 = vmax.f32 %v822, %v823
      %v825 = vsel %vm467, %v409, -inf
      %v826 = vrot.slane %v825, 4
      %v827 = vmax.f32 %v825, %v826
      %v828 = vrot.slane %v827, 2
      %v829 = vmax.f32 %v827, %v828
      %v830 = vrot.slane %v829, 1
      %v831 = vmax.f32 %v829, %v830
      %v832 = vsel %vm467, %v335, -inf
      %v833 = vrot.slane %v832, 4
      %v834 = vmax.f32 %v832, %v833
      %v835 = vrot.slane %v834, 2
      %v836 = vmax.f32 %v834, %v835
      %v837 = vrot.slane %v836, 1
      %v838 = vmax.f32 %v836, %v837
      %v839 = vsel %vm467, %v410, -inf
      %v840 = vrot.slane %v839, 4
      %v841 = vmax.f32 %v839, %v840
      %v842 = vrot.slane %v841, 2
      %v843 = vmax.f32 %v841, %v842
      %v844 = vrot.slane %v843, 1
      %v845 = vmax.f32 %v843, %v844
      %v846 = vsel %vm467, %v411, -inf
      %v847 = vrot.slane %v846, 4
      %v848 = vmax.f32 %v846, %v847
      %v849 = vrot.slane %v848, 2
      %v850 = vmax.f32 %v848, %v849
      %v851 = vrot.slane %v850, 1
      %v852 = vmax.f32 %v850, %v851
      %v853 = vsel %vm467, %v412, -inf
      %v854 = vrot.slane %v853, 4
      %v855 = vmax.f32 %v853, %v854
      %v856 = vrot.slane %v855, 2
      %v857 = vmax.f32 %v855, %v856
      %v858 = vrot.slane %v857, 1
      %v859 = vmax.f32 %v857, %v858
      %v860 = vsel %vm467, %v336, -inf
      %v861 = vrot.slane %v860, 4
      %v862 = vmax.f32 %v860, %v861
      %v863 = vrot.slane %v862, 2
      %v864 = vmax.f32 %v862, %v863
      %v865 = vrot.slane %v864, 1
      %v866 = vmax.f32 %v864, %v865
      %v867 = vsel %vm467, %v413, -inf
      %v868 = vrot.slane %v867, 4
      %v869 = vmax.f32 %v867, %v868
      %v870 = vrot.slane %v869, 2
      %v871 = vmax.f32 %v869, %v870
      %v872 = vrot.slane %v871, 1
      %v873 = vmax.f32 %v871, %v872
      %v874 = vsel %vm467, %v414, -inf
      %v875 = vrot.slane %v874, 4
      %v876 = vmax.f32 %v874, %v875
      %v877 = vrot.slane %v876, 2
      %v878 = vmax.f32 %v876, %v877
      %v879 = vrot.slane %v878, 1
      %v880 = vmax.f32 %v878, %v879
      %v881 = vsel %vm467, %v415, -inf
      %v882 = vrot.slane %v881, 4
      %v883 = vmax.f32 %v881, %v882
      %v884 = vrot.slane %v883, 2
      %v885 = vmax.f32 %v883, %v884
      %v886 = vrot.slane %v885, 1
      %v887 = vmax.f32 %v885, %v886
      %v888 = vsel %vm467, %v337, -inf
      %v889 = vrot.slane %v888, 4
      %v890 = vmax.f32 %v888, %v889
      %v891 = vrot.slane %v890, 2
      %v892 = vmax.f32 %v890, %v891
      %v893 = vrot.slane %v892, 1
      %v894 = vmax.f32 %v892, %v893
      %v895 = vsel %vm467, %v416, -inf
      %v896 = vrot.slane %v895, 4
      %v897 = vmax.f32 %v895, %v896
      %v898 = vrot.slane %v897, 2
      %v899 = vmax.f32 %v897, %v898
      %v900 = vrot.slane %v899, 1
      %v901 = vmax.f32 %v899, %v900
      %v902 = vsel %vm467, %v417, -inf
      %v903 = vrot.slane %v902, 4
      %v904 = vmax.f32 %v902, %v903
      %v905 = vrot.slane %v904, 2
      %v906 = vmax.f32 %v904, %v905
      %v907 = vrot.slane %v906, 1
      %v908 = vmax.f32 %v906, %v907
      %v909 = vsel %vm467, %v418, -inf
      %v910 = vrot.slane %v909, 4
      %v911 = vmax.f32 %v909, %v910
      %v912 = vrot.slane %v911, 2
      %v913 = vmax.f32 %v911, %v912
      %v914 = vrot.slane %v913, 1
      %v915 = vmax.f32 %v913, %v914
      %v916 = vsel %vm338, %v474, -inf
      %v917 = vsel %vm338, %v530, -inf
      %v918 = vmax.f32 %v916, %v917
      %v919 = vsel %vm338, %v481, -inf
      %v920 = vsel %vm338, %v537, -inf
      %v921 = vmax.f32 %v919, %v920
      %v922 = vsel %vm338, %v488, -inf
      %v923 = vsel %vm338, %v544, -inf
      %v924 = vmax.f32 %v922, %v923
      %v925 = vsel %vm338, %v495, -inf
      %v926 = vsel %vm338, %v551, -inf
      %v927 = vmax.f32 %v925, %v926
      %v928 = vsel %vm338, %v502, -inf
      %v929 = vsel %vm338, %v558, -inf
      %v930 = vmax.f32 %v928, %v929
      %v931 = vsel %vm338, %v509, -inf
      %v932 = vsel %vm338, %v565, -inf
      %v933 = vmax.f32 %v931, %v932
      %v934 = vsel %vm338, %v516, -inf
      %v935 = vsel %vm338, %v572, -inf
      %v936 = vmax.f32 %v934, %v935
      %v937 = vsel %vm338, %v523, -inf
      %v938 = vsel %vm338, %v579, -inf
      %v939 = vmax.f32 %v937, %v938
      %v940 = vsel %vm338, %v586, -inf
      %v941 = vsel %vm338, %v642, -inf
      %v942 = vmax.f32 %v940, %v941
      %v943 = vsel %vm338, %v593, -inf
      %v944 = vsel %vm338, %v649, -inf
      %v945 = vmax.f32 %v943, %v944
      %v946 = vsel %vm338, %v600, -inf
      %v947 = vsel %vm338, %v656, -inf
      %v948 = vmax.f32 %v946, %v947
      %v949 = vsel %vm338, %v607, -inf
      %v950 = vsel %vm338, %v663, -inf
      %v951 = vmax.f32 %v949, %v950
      %v952 = vsel %vm338, %v614, -inf
      %v953 = vsel %vm338, %v670, -inf
      %v954 = vmax.f32 %v952, %v953
      %v955 = vsel %vm338, %v621, -inf
      %v956 = vsel %vm338, %v677, -inf
      %v957 = vmax.f32 %v955, %v956
      %v958 = vsel %vm338, %v628, -inf
      %v959 = vsel %vm338, %v684, -inf
      %v960 = vmax.f32 %v958, %v959
      %v961 = vsel %vm338, %v635, -inf
      %v962 = vsel %vm338, %v691, -inf
      %v963 = vmax.f32 %v961, %v962
      %v964 = vsel %vm338, %v698, -inf
      %v965 = vsel %vm338, %v754, -inf
      %v966 = vmax.f32 %v964, %v965
      %v967 = vsel %vm338, %v705, -inf
      %v968 = vsel %vm338, %v761, -inf
      %v969 = vmax.f32 %v967, %v968
      %v970 = vsel %vm338, %v712, -inf
      %v971 = vsel %vm338, %v768, -inf
      %v972 = vmax.f32 %v970, %v971
      %v973 = vsel %vm338, %v719, -inf
      %v974 = vsel %vm338, %v775, -inf
      %v975 = vmax.f32 %v973, %v974
      %v976 = vsel %vm338, %v726, -inf
      %v977 = vsel %vm338, %v782, -inf
      %v978 = vmax.f32 %v976, %v977
      %v979 = vsel %vm338, %v733, -inf
      %v980 = vsel %vm338, %v789, -inf
      %v981 = vmax.f32 %v979, %v980
      %v982 = vsel %vm338, %v740, -inf
      %v983 = vsel %vm338, %v796, -inf
      %v984 = vmax.f32 %v982, %v983
      %v985 = vsel %vm338, %v747, -inf
      %v986 = vsel %vm338, %v803, -inf
      %v987 = vmax.f32 %v985, %v986
      %v988 = vsel %vm338, %v810, -inf
      %v989 = vsel %vm338, %v866, -inf
      %v990 = vmax.f32 %v988, %v989
      %v991 = vsel %vm338, %v817, -inf
      %v992 = vsel %vm338, %v873, -inf
      %v993 = vmax.f32 %v991, %v992
      %v994 = vsel %vm338, %v824, -inf
      %v995 = vsel %vm338, %v880, -inf
      %v996 = vmax.f32 %v994, %v995
      %v997 = vsel %vm338, %v831, -inf
      %v998 = vsel %vm338, %v887, -inf
      %v999 = vmax.f32 %v997, %v998
      %v1000 = vsel %vm338, %v838, -inf
      %v1001 = vsel %vm338, %v894, -inf
      %v1002 = vmax.f32 %v1000, %v1001
      %v1003 = vsel %vm338, %v845, -inf
      %v1004 = vsel %vm338, %v901, -inf
      %v1005 = vmax.f32 %v1003, %v1004
      %v1006 = vsel %vm338, %v852, -inf
      %v1007 = vsel %vm338, %v908, -inf
      %v1008 = vmax.f32 %v1006, %v1007
      %v1009 = vsel %vm338, %v859, -inf
      %v1010 = vsel %vm338, %v915, -inf
      %v1011 = vmax.f32 %v1009, %v1010
      %vm1044 = vcmask 1041409
      %v1045 = vsel %vm1044, %v921, %v918
      %vm1046 = vcmask 1042434
      %v1047 = vsel %vm1046, %v924, %v1045
      %vm1048 = vcmask 1043459
      %v1049 = vsel %vm1048, %v927, %v1047
      %vm1050 = vcmask 1044484
      %v1051 = vsel %vm1050, %v930, %v1049
      %vm1052 = vcmask 1045509
      %v1053 = vsel %vm1052, %v933, %v1051
      %vm1054 = vcmask 1046534
      %v1055 = vsel %vm1054, %v936, %v1053
      %vm1056 = vcmask 1047559
      %v1057 = vsel %vm1056, %v939, %v1055
      %v1058 = vsel %vm1044, %v945, %v942
      %v1059 = vsel %vm1046, %v948, %v1058
      %v1060 = vsel %vm1048, %v951, %v1059
      %v1061 = vsel %vm1050, %v954, %v1060
      %v1062 = vsel %vm1052, %v957, %v1061
      %v1063 = vsel %vm1054, %v960, %v1062
      %v1064 = vsel %vm1056, %v963, %v1063
      %v1065 = vsel %vm1044, %v969, %v966
      %v1066 = vsel %vm1046, %v972, %v1065
      %v1067 = vsel %vm1048, %v975, %v1066
      %v1068 = vsel %vm1050, %v978, %v1067
      %v1069 = vsel %vm1052, %v981, %v1068
      %v1070 = vsel %vm1054, %v984, %v1069
      %v1071 = vsel %vm1056, %v987, %v1070
      %v1072 = vsel %vm1044, %v993, %v990
      %v1073 = vsel %vm1046, %v996, %v1072
      %v1074 = vsel %vm1048, %v999, %v1073
      %v1075 = vsel %vm1050, %v1002, %v1074
      %v1076 = vsel %vm1052, %v1005, %v1075
      %v1077 = vsel %vm1054, %v1008, %v1076
      %v1078 = vsel %vm1056, %v1011, %v1077
      %1083 = vst.msk [vmem:[%s264] sm:$0xff] %vm338, %v1057
      %1084 = vst.msk [vmem:[%s264 + $0x8] sm:$0xff] %vm338, %v1064
      %1085 = vst.msk [vmem:[%s264 + $0x10] sm:$0xff] %vm338, %v1071
      %1086 = vst.msk [vmem:[%s264 + $0x18] sm:$0xff] %vm338, %v1078
      %s1087 = smul.u32 8, %s21
      %p1088 = scmp.lt.s32.totalorder %s20, 1
      %s1089 = scalar_select %p1088, %s20, 1
      %p1090 = scmp.lt.s32.totalorder %s1087, 15
      %s1091 = scalar_select %p1090, %s1087, 15
      %s1092 = smul.addr %s1091, 2
      %s1093 = smul.addr %s1089, 32
      %s1094 = sadd.s32 %s1092, %s1093
      %s1095 = smul.addr %s1094, 8
      %s1096 = scalar_lea.vmem %s3, %s1095
      %s1097 = smul.u32 4, %s21
      %p1098 = scmp.lt.s32.totalorder %s20, 1
      %s1099 = scalar_select %p1098, %s20, 1
      %p1100 = scmp.lt.s32.totalorder %s1097, 7
      %s1101 = scalar_select %p1100, %s1097, 7
      %s1102 = smul.addr %s1099, 8
      %s1103 = sadd.s32 %s1101, %s1102
      %s1104 = smul.addr %s1103, 8
      %s1105 = scalar_lea.vmem %s4, %s1104
      // Predicated region
      $region33: #{encoder_block_forward.5} parent=31 // pred_check
        %p1106 = pneg %p118
      $region34: #{encoder_block_forward.5} parent=31 // pred_check_branch
        %1108 = sbr.rel (%p1106) target = $region36
      $region35: #{encoder_block_forward.5} parent=31 // pred_region
        %s1109 = smul.u32 8, %s21
      $region36: #{encoder_block_forward.5} parent=31 // pred_fallthru
        _
      // Predicated region
      $region37: #{encoder_block_forward.5} parent=31 // pred_check
        %p1110 = pneg %p146
      $region38: #{encoder_block_forward.5} parent=31 // pred_check_branch
        %1112 = sbr.rel (%p1110) target = $region40
      $region39: #{encoder_block_forward.5} parent=31 // pred_region
        %s1113 = smul.u32 4, %s21
      $region40: #{encoder_block_forward.5} parent=31 // pred_fallthru
        _
    $region32: #{encoder_block_forward.5} parent=5 // pred_fallthru
      _
    %p1114 = scmp.le.s32.totalorder 2, %s11
    // Predicated region
    $region41: #{encoder_block_forward.5} parent=5 // pred_check
      %p1115 = pneg %p1114
    $region42: #{encoder_block_forward.5} parent=5 // pred_check_branch
      %1117 = sbr.rel (%p1115) target = $region44
    $region43: #{encoder_block_forward.5} parent=5 // pred_region
      %s1118 = ssub.s32 %s11, 2
      // Predicated region
      $region45: #{encoder_block_forward.5} parent=43 // pred_check
        %p1119 = pneg %p124
      $region46: #{encoder_block_forward.5} parent=43 // pred_check_branch
        %1121 = sbr.rel (%p1119) target = $region48
      $region47: #{encoder_block_forward.5} parent=43 // pred_region
        %s1122 = smul.u32 8, %s23
        %p1123 = scmp.lt.s32.totalorder %s22, 1
        %s1124 = scalar_select %p1123, %s22, 1
        %p1125 = scmp.lt.s32.totalorder %s1122, 15
        %s1126 = scalar_select %p1125, %s1122, 15
        %s1127 = smul.addr %s1126, 2
        %s1128 = smul.addr %s1124, 32
        %s1129 = sadd.s32 %s1127, %s1128
        %s1130 = smul.addr %s1129, 8
        %s1131 = scalar_lea.vmem %s3, %s1130
      $region48: #{encoder_block_forward.5} parent=43 // pred_fallthru
        _
      // Predicated region
      $region49: #{encoder_block_forward.5} parent=43 // pred_check
        %p1132 = pneg %p152
      $region50: #{encoder_block_forward.5} parent=43 // pred_check_branch
        %1134 = sbr.rel (%p1132) target = $region52
      $region51: #{encoder_block_forward.5} parent=43 // pred_region
        %s1135 = smul.u32 4, %s23
        %p1136 = scmp.lt.s32.totalorder %s22, 1
        %s1137 = scalar_select %p1136, %s22, 1
        %p1138 = scmp.lt.s32.totalorder %s1135, 7
        %s1139 = scalar_select %p1138, %s1135, 7
        %s1140 = smul.addr %s1137, 8
        %s1141 = sadd.s32 %s1139, %s1140
        %s1142 = smul.addr %s1141, 8
        %s1143 = scalar_lea.vmem %s4, %s1142
      $region52: #{encoder_block_forward.5} parent=43 // pred_fallthru
        _
    $region44: #{encoder_block_forward.5} parent=5 // pred_fallthru
      _
  $region6: #{encoder_block_forward.5} parent=0 // loop_footer
    %s15 = sadd.s32 1, %s11
  $region7: #{encoder_block_forward.5} parent=0 // loop_footer_branch
    %10 = sbr.rel target = $region3
  $region8: #{encoder_block_forward.5} parent=0 // loop_exit
    _

// kernel: encoder_block_forward.4
$region0: #{encoder_block_forward.4}
  #allocation0 [shape = 'u32[]', space=smem, size = 0x4, offset = 0x4, fixed_abs, tag = 'smem constant byte address 0x4 - core index']
  #allocation1 [shape = 'u32[72,128]{1,0:T(1,128)}', space=vmem, size = 0x9000, scoped, tag = 'internal scratch']
  #allocation2 [shape = 'bf16[18,18,8]{2,1,0:T(8,128)(2,1)}', space=vmem, size = 0x1b000, scoped, tag = 'scratch operand']
  #allocation3 [shape = 'bf16[256,72]{1,0:T(8,128)(2,1)}', space=vmem, size = 0x10000, scoped, tag = 'scratch operand']
  %s0 = inlined_call_operand.vmem [shape: bf16[2,16,16,8], index: 0, kind: input, shape index: {}]
  %s1 = inlined_call_operand.vmem [shape: f32[1,8], index: 1, kind: input, shape index: {}]
  %s2 = inlined_call_operand.vmem [shape: f32[1,8], index: 2, kind: input, shape index: {}]
  %s3 = inlined_call_operand.vmem [shape: bf16[72,128], index: 3, kind: input, shape index: {}]
  %s4 = inlined_call_operand.vmem [shape: f32[1,128], index: 4, kind: input, shape index: {}]
  %s5 = inlined_call_operand.vmem [shape: bf16[2,16,16,8], index: 5, kind: output, shape index: {0}]
  %s6 = inlined_call_operand.vmem [shape: f32[2,2,128], index: 6, kind: output, shape index: {1}]
  %7 = xla_tuple %s5, %s6
  %s8 = sld [smem:[#allocation0]]
  $region61: #{encoder_block_forward.4} parent=0
    _
  %s10 = ssub.s32 1, %s8
  %s11 = scalar_select 0, %s10, %s8
  loop: start=0, step=1, limit=4
  $region2: #{encoder_block_forward.4} parent=0 // loop_pre_header
    _
  $region3: #{encoder_block_forward.4} parent=0 // loop_header
    %s13 = sphi 0, %s17
    %p14 = scmp.ge.s32.totalorder %s13, 4
    %s23 = sphi 0, %s25
    %s26 = sphi 0, %s23
    %s27 = sphi 0, %s26
    %s43 = sphi 0, %s27
    %s47 = sphi 0, %s47
    %s49 = sphi 0, %s47
    %s50 = sphi 0, %s49
    %s64 = sphi 0, %s50
    %s68 = sphi 0, %s68
    %s70 = sphi 0, %s68
    %s71 = sphi 0, %s70
    %s85 = sphi 0, %s71
    %s89 = sphi 0, %s89
    %s91 = sphi 0, %s89
    %s92 = sphi 0, %s91
    %s106 = sphi 0, %s92
    %s110 = sphi 0, %s110
    %s112 = sphi 0, %s110
    %s113 = sphi 0, %s112
    %s127 = sphi 0, %s113
    %s133 = sphi 0, %s135
    %s136 = sphi 0, %s133
    %s137 = sphi 0, %s136
    %s153 = sphi 0, %s137
    %s159 = sphi 0, %s161
    %s162 = sphi 0, %s159
    %s163 = sphi 0, %s162
    %s179 = sphi 0, %s163
  $region4: #{encoder_block_forward.4} parent=0 // loop_header_branch
    %16 = sbr.rel (%p14) target = $region8
  $region5: #{encoder_block_forward.4} parent=0 // loop_body
    %s18 = ssub.s32 %s13, 1
    %s19 = ssub.s32 %s13, 2
    %s20 = sadd.s32 %s13, 1
    %s21 = ssub.s32 %s13, %s20
    %p22 = scmp.eq.s32.totalorder %s21, 0
    %s24 = sadd.s32 %s23, 1
    %s25 = scalar_select %p22, %s23, %s24
    %p28 = pneg %p22
    %p29 = scmp.eq.s32.totalorder %s13, 1
    %p30 = por %p28, %p29
    %p31 = scmp.ne.s32.totalorder %s23, %s26
    %p32 = scmp.eq.s32.totalorder %s13, 0
    %p33 = por %p31, %p32
    %p34 = scmp.ne.s32.totalorder %s23, %s26
    %p35 = scmp.eq.s32.totalorder %s18, 1
    %p36 = por %p34, %p35
    %p37 = scmp.ne.s32.totalorder %s26, %s27
    %p38 = scmp.eq.s32.totalorder %s18, 0
    %p39 = por %p37, %p38
    %p40 = scmp.ne.s32.totalorder %s26, %s27
    %p41 = scmp.eq.s32.totalorder %s19, 1
    %p42 = por %p40, %p41
    %p44 = scmp.ne.s32.totalorder %s27, %s43
    %p45 = scmp.eq.s32.totalorder %s19, 0
    %p46 = por %p44, %p45
    %s48 = sadd.s32 %s47, 1
    %p51 = scmp.eq.s32.totalorder %s13, 1
    %p52 = scmp.ne.s32.totalorder %s47, %s49
    %p53 = scmp.eq.s32.totalorder %s13, 0
    %p54 = por %p52, %p53
    %p55 = scmp.ne.s32.totalorder %s47, %s49
    %p56 = scmp.eq.s32.totalorder %s18, 1
    %p57 = por %p55, %p56
    %p58 = scmp.ne.s32.totalorder %s49, %s50
    %p59 = scmp.eq.s32.totalorder %s18, 0
    %p60 = por %p58, %p59
    %p61 = scmp.ne.s32.totalorder %s49, %s50
    %p62 = scmp.eq.s32.totalorder %s19, 1
    %p63 = por %p61, %p62
    %p65 = scmp.ne.s32.totalorder %s50, %s64
    %p66 = scmp.eq.s32.totalorder %s19, 0
    %p67 = por %p65, %p66
    %s69 = sadd.s32 %s68, 1
    %p72 = scmp.eq.s32.totalorder %s13, 1
    %p73 = scmp.ne.s32.totalorder %s68, %s70
    %p74 = scmp.eq.s32.totalorder %s13, 0
    %p75 = por %p73, %p74
    %p76 = scmp.ne.s32.totalorder %s68, %s70
    %p77 = scmp.eq.s32.totalorder %s18, 1
    %p78 = por %p76, %p77
    %p79 = scmp.ne.s32.totalorder %s70, %s71
    %p80 = scmp.eq.s32.totalorder %s18, 0
    %p81 = por %p79, %p80
    %p82 = scmp.ne.s32.totalorder %s70, %s71
    %p83 = scmp.eq.s32.totalorder %s19, 1
    %p84 = por %p82, %p83
    %p86 = scmp.ne.s32.totalorder %s71, %s85
    %p87 = scmp.eq.s32.totalorder %s19, 0
    %p88 = por %p86, %p87
    %s90 = sadd.s32 %s89, 1
    %p93 = scmp.eq.s32.totalorder %s13, 1
    %p94 = scmp.ne.s32.totalorder %s89, %s91
    %p95 = scmp.eq.s32.totalorder %s13, 0
    %p96 = por %p94, %p95
    %p97 = scmp.ne.s32.totalorder %s89, %s91
    %p98 = scmp.eq.s32.totalorder %s18, 1
    %p99 = por %p97, %p98
    %p100 = scmp.ne.s32.totalorder %s91, %s92
    %p101 = scmp.eq.s32.totalorder %s18, 0
    %p102 = por %p100, %p101
    %p103 = scmp.ne.s32.totalorder %s91, %s92
    %p104 = scmp.eq.s32.totalorder %s19, 1
    %p105 = por %p103, %p104
    %p107 = scmp.ne.s32.totalorder %s92, %s106
    %p108 = scmp.eq.s32.totalorder %s19, 0
    %p109 = por %p107, %p108
    %s111 = sadd.s32 %s110, 1
    %p114 = scmp.eq.s32.totalorder %s13, 1
    %p115 = scmp.ne.s32.totalorder %s110, %s112
    %p116 = scmp.eq.s32.totalorder %s13, 0
    %p117 = por %p115, %p116
    %p118 = scmp.ne.s32.totalorder %s110, %s112
    %p119 = scmp.eq.s32.totalorder %s18, 1
    %p120 = por %p118, %p119
    %p121 = scmp.ne.s32.totalorder %s112, %s113
    %p122 = scmp.eq.s32.totalorder %s18, 0
    %p123 = por %p121, %p122
    %p124 = scmp.ne.s32.totalorder %s112, %s113
    %p125 = scmp.eq.s32.totalorder %s19, 1
    %p126 = por %p124, %p125
    %p128 = scmp.ne.s32.totalorder %s113, %s127
    %p129 = scmp.eq.s32.totalorder %s19, 0
    %p130 = por %p128, %p129
    %s131 = ssub.s32 %s13, %s20
    %p132 = scmp.eq.s32.totalorder %s131, 0
    %s134 = sadd.s32 %s133, 1
    %s135 = scalar_select %p132, %s133, %s134
    %p138 = pneg %p132
    %p139 = scmp.eq.s32.totalorder %s13, 1
    %p140 = por %p138, %p139
    %p141 = scmp.ne.s32.totalorder %s133, %s136
    %p142 = scmp.eq.s32.totalorder %s13, 0
    %p143 = por %p141, %p142
    %p144 = scmp.ne.s32.totalorder %s133, %s136
    %p145 = scmp.eq.s32.totalorder %s18, 1
    %p146 = por %p144, %p145
    %p147 = scmp.ne.s32.totalorder %s136, %s137
    %p148 = scmp.eq.s32.totalorder %s18, 0
    %p149 = por %p147, %p148
    %p150 = scmp.ne.s32.totalorder %s136, %s137
    %p151 = scmp.eq.s32.totalorder %s19, 1
    %p152 = por %p150, %p151
    %p154 = scmp.ne.s32.totalorder %s137, %s153
    %p155 = scmp.eq.s32.totalorder %s19, 0
    %p156 = por %p154, %p155
    %s157 = ssub.s32 %s13, %s20
    %p158 = scmp.eq.s32.totalorder %s157, 0
    %s160 = sadd.s32 %s159, 1
    %s161 = scalar_select %p158, %s159, %s160
    %p164 = pneg %p158
    %p165 = scmp.eq.s32.totalorder %s13, 1
    %p166 = por %p164, %p165
    %p167 = scmp.ne.s32.totalorder %s159, %s162
    %p168 = scmp.eq.s32.totalorder %s13, 0
    %p169 = por %p167, %p168
    %p170 = scmp.ne.s32.totalorder %s159, %s162
    %p171 = scmp.eq.s32.totalorder %s18, 1
    %p172 = por %p170, %p171
    %p173 = scmp.ne.s32.totalorder %s162, %s163
    %p174 = scmp.eq.s32.totalorder %s18, 0
    %p175 = por %p173, %p174
    %p176 = scmp.ne.s32.totalorder %s162, %s163
    %p177 = scmp.eq.s32.totalorder %s19, 1
    %p178 = por %p176, %p177
    %p180 = scmp.ne.s32.totalorder %s163, %s179
    %p181 = scmp.eq.s32.totalorder %s19, 0
    %p182 = por %p180, %p181
    %p183 = scmp.le.s32.totalorder 1, %s13
    %p184 = scmp.lt.s32.totalorder %s13, 3
    %p185 = pnand %p183, %p184
    %p186 = pneg %p185
    // Predicated region
    $region9: #{encoder_block_forward.4} parent=5 // pred_check
      _
    $region10: #{encoder_block_forward.4} parent=5 // pred_check_branch
      %188 = sbr.rel (%p185) target = $region12
    $region11: #{encoder_block_forward.4} parent=5 // pred_region
      %s189 = ssub.s32 %s13, 1
      // Predicated region
      $region13: #{encoder_block_forward.4} parent=11 // pred_check
        %p190 = pneg %p60
      $region14: #{encoder_block_forward.4} parent=11 // pred_check_branch
        %192 = sbr.rel (%p190) target = $region16
      $region15: #{encoder_block_forward.4} parent=11 // pred_region
        _
      $region16: #{encoder_block_forward.4} parent=11 // pred_fallthru
        _
      // Predicated region
      $region17: #{encoder_block_forward.4} parent=11 // pred_check
        %p193 = pneg %p81
      $region18: #{encoder_block_forward.4} parent=11 // pred_check_branch
        %195 = sbr.rel (%p193) target = $region20
      $region19: #{encoder_block_forward.4} parent=11 // pred_region
        _
      $region20: #{encoder_block_forward.4} parent=11 // pred_fallthru
        _
      // Predicated region
      $region21: #{encoder_block_forward.4} parent=11 // pred_check
        %p196 = pneg %p102
      $region22: #{encoder_block_forward.4} parent=11 // pred_check_branch
        %198 = sbr.rel (%p196) target = $region24
      $region23: #{encoder_block_forward.4} parent=11 // pred_region
        _
      $region24: #{encoder_block_forward.4} parent=11 // pred_fallthru
        _
      // Predicated region
      $region25: #{encoder_block_forward.4} parent=11 // pred_check
        %p199 = pneg %p123
      $region26: #{encoder_block_forward.4} parent=11 // pred_check_branch
        %201 = sbr.rel (%p199) target = $region28
      $region27: #{encoder_block_forward.4} parent=11 // pred_region
        _
      $region28: #{encoder_block_forward.4} parent=11 // pred_fallthru
        _
    $region12: #{encoder_block_forward.4} parent=5 // pred_fallthru
      _
    %p202 = scmp.lt.s32.totalorder %s13, 2
    // Predicated region
    $region29: #{encoder_block_forward.4} parent=5 // pred_check
      %p203 = pneg %p202
    $region30: #{encoder_block_forward.4} parent=5 // pred_check_branch
      %205 = sbr.rel (%p203) target = $region32
    $region31: #{encoder_block_forward.4} parent=5 // pred_region
      // Predicated region
      $region33: #{encoder_block_forward.4} parent=31 // pred_check
        %p206 = pneg %p33
      $region34: #{encoder_block_forward.4} parent=31 // pred_check_branch
        %208 = sbr.rel (%p206) target = $region36
      $region35: #{encoder_block_forward.4} parent=31 // pred_region
        %p209 = scmp.lt.s32.totalorder %s13, 1
        %s210 = scalar_select %p209, %s13, 1
        %s211 = smul.addr %s210, 32
        %s212 = smul.addr %s211, 4
        %s213 = scalar_lea.vmem %s0, %s212
      $region36: #{encoder_block_forward.4} parent=31 // pred_fallthru
        _
    $region32: #{encoder_block_forward.4} parent=5 // pred_fallthru
      _
    %p214 = scmp.le.s32.totalorder 1, %s13
    %p215 = scmp.lt.s32.totalorder %s13, 3
    %p216 = pnand %p214, %p215
    %p217 = pneg %p216
    // Predicated region
    $region37: #{encoder_block_forward.4} parent=5 // pred_check
      _
    $region38: #{encoder_block_forward.4} parent=5 // pred_check_branch
      %219 = sbr.rel (%p216) target = $region40
    $region39: #{encoder_block_forward.4} parent=5 // pred_region
      %s220 = ssub.s32 %s13, 1
      %p221 = scmp.lt.s32.totalorder %s18, 1
      %s222 = scalar_select %p221, %s18, 1
      %s223 = smul.addr %s222, 32
      %s224 = smul.addr %s223, 4
      %s225 = scalar_lea.vmem %s0, %s224
      %p226 = pneg %p39
      %p227 = pneg %p36
      %p228 = pneg %p60
      %p229 = pneg %p57
      %p230 = pneg %p81
      %p231 = pneg %p78
      %p232 = pneg %p102
      %p233 = pneg %p99
      %p234 = pneg %p123
      %p235 = pneg %p120
      %p236 = pneg %p149
      %p237 = pneg %p146
      %p238 = scmp.lt.s32.totalorder %s18, 1
      %s239 = scalar_select %p238, %s18, 1
      %s240 = smul.addr %s239, 32
      %s241 = smul.addr %s240, 4
      %s242 = scalar_lea.vmem %s5, %s241
      %p243 = pneg %p175
      %p244 = pneg %p172
      %p245 = scmp.lt.s32.totalorder %s18, 1
      %s246 = scalar_select %p245, %s18, 1
      %s247 = smul.addr %s246, 2
      %s248 = scalar_lea.vmem %s6, %s247
      %p249 = scmp.lt.s32.totalorder %s18, 1
      %s250 = scalar_select %p249, %s18, 1
      %s251 = smul.addr %s250, 32
      %s252 = smul.addr %s251, 4
      %s253 = scalar_lea.vmem %s0, %s252
      %p254 = scmp.lt.s32.totalorder %s18, 1
      %s255 = scalar_select %p254, %s18, 1
      %s256 = smul.addr %s255, 32
      %s257 = smul.addr %s256, 4
      %s258 = scalar_lea.vmem %s5, %s257
      %p259 = scmp.lt.s32.totalorder %s18, 1
      %s260 = scalar_select %p259, %s18, 1
      %s261 = smul.addr %s260, 2
      %s262 = scalar_lea.vmem %s6, %s261
      %v264 = vld [vmem:[%s253] sm:$0xf]
      %v265 = vld [vmem:[%s253 + $0x4] sm:$0xf]
      %v266 = vld [vmem:[%s253 + $0x8] sm:$0xf]
      %v267 = vld [vmem:[%s253 + $0xc] sm:$0xf]
      %v268 = vld [vmem:[%s253 + $0x10] sm:$0xf]
      %v269 = vld [vmem:[%s253 + $0x14] sm:$0xf]
      %v270 = vld [vmem:[%s253 + $0x18] sm:$0xf]
      %v271 = vld [vmem:[%s253 + $0x1c] sm:$0xf]
      %v272 = vld [vmem:[%s253 + $0x20] sm:$0xf]
      %v273 = vld [vmem:[%s253 + $0x24] sm:$0xf]
      %v274 = vld [vmem:[%s253 + $0x28] sm:$0xf]
      %v275 = vld [vmem:[%s253 + $0x2c] sm:$0xf]
      %v276 = vld [vmem:[%s253 + $0x30] sm:$0xf]
      %v277 = vld [vmem:[%s253 + $0x34] sm:$0xf]
      %v278 = vld [vmem:[%s253 + $0x38] sm:$0xf]
      %v279 = vld [vmem:[%s253 + $0x3c] sm:$0xf]
      %v280 = vld [vmem:[%s253 + $0x40] sm:$0xf]
      %v281 = vld [vmem:[%s253 + $0x44] sm:$0xf]
      %v282 = vld [vmem:[%s253 + $0x48] sm:$0xf]
      %v283 = vld [vmem:[%s253 + $0x4c] sm:$0xf]
      %v284 = vld [vmem:[%s253 + $0x50] sm:$0xf]
      %v285 = vld [vmem:[%s253 + $0x54] sm:$0xf]
      %v286 = vld [vmem:[%s253 + $0x58] sm:$0xf]
      %v287 = vld [vmem:[%s253 + $0x5c] sm:$0xf]
      %v288 = vld [vmem:[%s253 + $0x60] sm:$0xf]
      %v289 = vld [vmem:[%s253 + $0x64] sm:$0xf]
      %v290 = vld [vmem:[%s253 + $0x68] sm:$0xf]
      %v291 = vld [vmem:[%s253 + $0x6c] sm:$0xf]
      %v292 = vld [vmem:[%s253 + $0x70] sm:$0xf]
      %v293 = vld [vmem:[%s253 + $0x74] sm:$0xf]
      %v294 = vld [vmem:[%s253 + $0x78] sm:$0xf]
      %v295 = vld [vmem:[%s253 + $0x7c] sm:$0xf]
      %v296 = vld [vmem:[%s1] sm:$0x1]
      %v297 = vunpack.c.l.bf16 %v264
      %v298 = vunpack.c.l.bf16 %v265
      %v299 = vunpack.c.l.bf16 %v266
      %v300 = vunpack.c.l.bf16 %v267
      %v301 = vunpack.c.l.bf16 %v268
      %v302 = vunpack.c.l.bf16 %v269
      %v303 = vunpack.c.l.bf16 %v270
      %v304 = vunpack.c.l.bf16 %v271
      %v305 = vunpack.c.l.bf16 %v272
      %v306 = vunpack.c.l.bf16 %v273
      %v307 = vunpack.c.l.bf16 %v274
      %v308 = vunpack.c.l.bf16 %v275
      %v309 = vunpack.c.l.bf16 %v276
      %v310 = vunpack.c.l.bf16 %v277
      %v311 = vunpack.c.l.bf16 %v278
      %v312 = vunpack.c.l.bf16 %v279
      %v313 = vunpack.c.l.bf16 %v280
      %v314 = vunpack.c.l.bf16 %v281
      %v315 = vunpack.c.l.bf16 %v282
      %v316 = vunpack.c.l.bf16 %v283
      %v317 = vunpack.c.l.bf16 %v284
      %v318 = vunpack.c.l.bf16 %v285
      %v319 = vunpack.c.l.bf16 %v286
      %v320 = vunpack.c.l.bf16 %v287
      %v321 = vunpack.c.l.bf16 %v288
      %v322 = vunpack.c.l.bf16 %v289
      %v323 = vunpack.c.l.bf16 %v290
      %v324 = vunpack.c.l.bf16 %v291
      %v325 = vunpack.c.l.bf16 %v292
      %v326 = vunpack.c.l.bf16 %v293
      %v327 = vunpack.c.l.bf16 %v294
      %v328 = vunpack.c.l.bf16 %v295
      %v330 = vperm.slane %v296, 0
      %v332 = vmul.f32 %v297, %v330
      %v333 = vmul.f32 %v298, %v330
      %v334 = vmul.f32 %v299, %v330
      %v335 = vmul.f32 %v300, %v330
      %v336 = vmul.f32 %v301, %v330
      %v337 = vmul.f32 %v302, %v330
      %v338 = vmul.f32 %v303, %v330
      %v339 = vmul.f32 %v304, %v330
      %v340 = vmul.f32 %v305, %v330
      %v341 = vmul.f32 %v306, %v330
      %v342 = vmul.f32 %v307, %v330
      %v343 = vmul.f32 %v308, %v330
      %v344 = vmul.f32 %v309, %v330
      %v345 = vmul.f32 %v310, %v330
      %v346 = vmul.f32 %v311, %v330
      %v347 = vmul.f32 %v312, %v330
      %v348 = vmul.f32 %v313, %v330
      %v349 = vmul.f32 %v314, %v330
      %v350 = vmul.f32 %v315, %v330
      %v351 = vmul.f32 %v316, %v330
      %v352 = vmul.f32 %v317, %v330
      %v353 = vmul.f32 %v318, %v330
      %v354 = vmul.f32 %v319, %v330
      %v355 = vmul.f32 %v320, %v330
      %v356 = vmul.f32 %v321, %v330
      %v357 = vmul.f32 %v322, %v330
      %v358 = vmul.f32 %v323, %v330
      %v359 = vmul.f32 %v324, %v330
      %v360 = vmul.f32 %v325, %v330
      %v361 = vmul.f32 %v326, %v330
      %v362 = vmul.f32 %v327, %v330
      %v363 = vmul.f32 %v328, %v330
      %v364 = vld [vmem:[%s2] sm:$0x1]
      %v366 = vperm.slane %v364, 0
      %v368 = vadd.f32 %v332, %v366
      %v369 = vadd.f32 %v333, %v366
      %v370 = vadd.f32 %v334, %v366
      %v371 = vadd.f32 %v335, %v366
      %v372 = vadd.f32 %v336, %v366
      %v373 = vadd.f32 %v337, %v366
      %v374 = vadd.f32 %v338, %v366
      %v375 = vadd.f32 %v339, %v366
      %v376 = vadd.f32 %v340, %v366
      %v377 = vadd.f32 %v341, %v366
      %v378 = vadd.f32 %v342, %v366
      %v379 = vadd.f32 %v343, %v366
      %v380 = vadd.f32 %v344, %v366
      %v381 = vadd.f32 %v345, %v366
      %v382 = vadd.f32 %v346, %v366
      %v383 = vadd.f32 %v347, %v366
      %v384 = vadd.f32 %v348, %v366
      %v385 = vadd.f32 %v349, %v366
      %v386 = vadd.f32 %v350, %v366
      %v387 = vadd.f32 %v351, %v366
      %v388 = vadd.f32 %v352, %v366
      %v389 = vadd.f32 %v353, %v366
      %v390 = vadd.f32 %v354, %v366
      %v391 = vadd.f32 %v355, %v366
      %v392 = vadd.f32 %v356, %v366
      %v393 = vadd.f32 %v357, %v366
      %v394 = vadd.f32 %v358, %v366
      %v395 = vadd.f32 %v359, %v366
      %v396 = vadd.f32 %v360, %v366
      %v397 = vadd.f32 %v361, %v366
      %v398 = vadd.f32 %v362, %v366
      %v399 = vadd.f32 %v363, %v366
      %v400 = vpack.c.bf16 %v368, %v368
      %v401 = vpack.c.bf16 %v369, %v369
      %v402 = vpack.c.bf16 %v370, %v370
      %v403 = vpack.c.bf16 %v371, %v371
      %v404 = vpack.c.bf16 %v372, %v372
      %v405 = vpack.c.bf16 %v373, %v373
      %v406 = vpack.c.bf16 %v374, %v374
      %v407 = vpack.c.bf16 %v375, %v375
      %v408 = vpack.c.bf16 %v376, %v376
      %v409 = vpack.c.bf16 %v377, %v377
      %v410 = vpack.c.bf16 %v378, %v378
      %v411 = vpack.c.bf16 %v379, %v379
      %v412 = vpack.c.bf16 %v380, %v380
      %v413 = vpack.c.bf16 %v381, %v381
      %v414 = vpack.c.bf16 %v382, %v382
      %v415 = vpack.c.bf16 %v383, %v383
      %v416 = vpack.c.bf16 %v384, %v384
      %v417 = vpack.c.bf16 %v385, %v385
      %v418 = vpack.c.bf16 %v386, %v386
      %v419 = vpack.c.bf16 %v387, %v387
      %v420 = vpack.c.bf16 %v388, %v388
      %v421 = vpack.c.bf16 %v389, %v389
      %v422 = vpack.c.bf16 %v390, %v390
      %v423 = vpack.c.bf16 %v391, %v391
      %v424 = vpack.c.bf16 %v392, %v392
      %v425 = vpack.c.bf16 %v393, %v393
      %v426 = vpack.c.bf16 %v394, %v394
      %v427 = vpack.c.bf16 %v395, %v395
      %v428 = vpack.c.bf16 %v396, %v396
      %v429 = vpack.c.bf16 %v397, %v397
      %v430 = vpack.c.bf16 %v398, %v398
      %v431 = vpack.c.bf16 %v399, %v399
      %vm432 = vcmask 60416
      %433 = vst.msk [vmem:[#allocation2] sm:$0xf] %vm432, 0
      %434 = vst.msk [vmem:[#allocation2 + $0x4] sm:$0xf] %vm432, 0
      %vm435 = vcmask 57344
      %436 = vst.msk [vmem:[#allocation2 + $0x8] sm:$0x1] %vm435, 0
      %437 = vst.msk [vmem:[#allocation2 + $0xc] sm:$0xf] %vm432, 0
      %438 = vst.msk [vmem:[#allocation2 + $0x10] sm:$0xf] %vm432, 0
      %439 = vst.msk [vmem:[#allocation2 + $0x14] sm:$0x1] %vm435, 0
      %440 = vst.msk [vmem:[#allocation2 + $0x18] sm:$0xf] %vm432, 0
      %441 = vst.msk [vmem:[#allocation2 + $0x1c] sm:$0xf] %vm432, 0
      %442 = vst.msk [vmem:[#allocation2 + $0x20] sm:$0x1] %vm435, 0
      %443 = vst.msk [vmem:[#allocation2 + $0x24] sm:$0xf] %vm432, 0
      %444 = vst.msk [vmem:[#allocation2 + $0x28] sm:$0xf] %vm432, 0
      %445 = vst.msk [vmem:[#allocation2 + $0x2c] sm:$0x1] %vm435, 0
      %446 = vst.msk [vmem:[#allocation2 + $0x30] sm:$0xf] %vm432, 0
      %447 = vst.msk [vmem:[#allocation2 + $0x34] sm:$0xf] %vm432, 0
      %448 = vst.msk [vmem:[#allocation2 + $0x38] sm:$0x1] %vm435, 0
      %449 = vst.msk [vmem:[#allocation2 + $0x3c] sm:$0xf] %vm432, 0
      %450 = vst.msk [vmem:[#allocation2 + $0x40] sm:$0xf] %vm432, 0
      %451 = vst.msk [vmem:[#allocation2 + $0x44] sm:$0x1] %vm435, 0
      %452 = vst.msk [vmem:[#allocation2 + $0x48] sm:$0xf] %vm432, 0
      %453 = vst.msk [vmem:[#allocation2 + $0x4c] sm:$0xf] %vm432, 0
      %454 = vst.msk [vmem:[#allocation2 + $0x50] sm:$0x1] %vm435, 0
      %455 = vst.msk [vmem:[#allocation2 + $0x54] sm:$0xf] %vm432, 0
      %456 = vst.msk [vmem:[#allocation2 + $0x58] sm:$0xf] %vm432, 0
      %457 = vst.msk [vmem:[#allocation2 + $0x5c] sm:$0x1] %vm435, 0
      %458 = vst.msk [vmem:[#allocation2 + $0x60] sm:$0xf] %vm432, 0
      %459 = vst.msk [vmem:[#allocation2 + $0x64] sm:$0xf] %vm432, 0
      %460 = vst.msk [vmem:[#allocation2 + $0x68] sm:$0x1] %vm435, 0
      %461 = vst.msk [vmem:[#allocation2 + $0x6c] sm:$0xf] %vm432, 0
      %462 = vst.msk [vmem:[#allocation2 + $0x70] sm:$0xf] %vm432, 0
      %463 = vst.msk [vmem:[#allocation2 + $0x74] sm:$0x1] %vm435, 0
      %464 = vst.msk [vmem:[#allocation2 + $0x78] sm:$0xf] %vm432, 0
      %465 = vst.msk [vmem:[#allocation2 + $0x7c] sm:$0xf] %vm432, 0
      %466 = vst.msk [vmem:[#allocation2 + $0x80] sm:$0x1] %vm435, 0
      %467 = vst.msk [vmem:[#allocation2 + $0x84] sm:$0xf] %vm432, 0
      %468 = vst.msk [vmem:[#allocation2 + $0x88] sm:$0xf] %vm432, 0
      %469 = vst.msk [vmem:[#allocation2 + $0x8c] sm:$0x1] %vm435, 0
      %470 = vst.msk [vmem:[#allocation2 + $0x90] sm:$0xf] %vm432, 0
      %471 = vst.msk [vmem:[#allocation2 + $0x94] sm:$0xf] %vm432, 0
      %472 = vst.msk [vmem:[#allocation2 + $0x98] sm:$0x1] %vm435, 0
      %473 = vst.msk [vmem:[#allocation2 + $0x9c] sm:$0xf] %vm432, 0
      %474 = vst.msk [vmem:[#allocation2 + $0xa0] sm:$0xf] %vm432, 0
      %475 = vst.msk [vmem:[#allocation2 + $0xa4] sm:$0x1] %vm435, 0
      %476 = vst.msk [vmem:[#allocation2 + $0xa8] sm:$0xf] %vm432, 0
      %477 = vst.msk [vmem:[#allocation2 + $0xac] sm:$0xf] %vm432, 0
      %478 = vst.msk [vmem:[#allocation2 + $0xb0] sm:$0x1] %vm435, 0
      %479 = vst.msk [vmem:[#allocation2 + $0xb4] sm:$0xf] %vm432, 0
      %480 = vst.msk [vmem:[#allocation2 + $0xb8] sm:$0xf] %vm432, 0
      %481 = vst.msk [vmem:[#allocation2 + $0xbc] sm:$0x1] %vm435, 0
      %482 = vst.msk [vmem:[#allocation2 + $0xc0] sm:$0xf] %vm432, 0
      %483 = vst.msk [vmem:[#allocation2 + $0xc4] sm:$0xf] %vm432, 0
      %484 = vst.msk [vmem:[#allocation2 + $0xc8] sm:$0x1] %vm435, 0
      %485 = vst.msk [vmem:[#allocation2 + $0xcc] sm:$0xf] %vm432, 0
      %486 = vst.msk [vmem:[#allocation2 + $0xd0] sm:$0xf] %vm432, 0
      %487 = vst.msk [vmem:[#allocation2 + $0xd4] sm:$0x1] %vm435, 0
      %vm488 = vsmask.f32 256
      %vm489 = vsmask.f32 4368
      %vm490 = vmor %vm488, %vm489
      %v492 = vshrl.u32 %v400, 16
      %v494 = vrot.slane %v492, 7
      %v495 = vshll.u32 %v400, 16
      %v497 = vor.u32 %v494, %v495
      %v498 = vrot.slane %v494, 4
      %v500 = vshrl.u32 %v401, 16
      %v502 = vrot.slane %v500, 7
      %v503 = vshll.u32 %v401, 16
      %v505 = vor.u32 %v502, %v503
      %v506 = vsel %vm490, %v498, %v505
      %v507 = vrot.slane %v502, 4
      %v509 = vshrl.u32 %v402, 16
      %v511 = vrot.slane %v509, 7
      %v512 = vshll.u32 %v402, 16
      %v514 = vor.u32 %v511, %v512
      %v515 = vrot.slane %v511, 4
      %v517 = vshrl.u32 %v403, 16
      %v519 = vrot.slane %v517, 7
      %v520 = vshll.u32 %v403, 16
      %v522 = vor.u32 %v519, %v520
      %v523 = vsel %vm490, %v515, %v522
      %v524 = vrot.slane %v519, 4
      %v526 = vshrl.u32 %v404, 16
      %v528 = vrot.slane %v526, 7
      %v529 = vshll.u32 %v404, 16
      %v531 = vor.u32 %v528, %v529
      %v532 = vrot.slane %v528, 4
      %v534 = vshrl.u32 %v405, 16
      %v536 = vrot.slane %v534, 7
      %v537 = vshll.u32 %v405, 16
      %v539 = vor.u32 %v536, %v537
      %v540 = vsel %vm490, %v532, %v539
      %v541 = vrot.slane %v536, 4
      %v543 = vshrl.u32 %v406, 16
      %v545 = vrot.slane %v543, 7
      %v546 = vshll.u32 %v406, 16
      %v548 = vor.u32 %v545, %v546
      %v549 = vrot.slane %v545, 4
      %v551 = vshrl.u32 %v407, 16
      %v553 = vrot.slane %v551, 7
      %v554 = vshll.u32 %v407, 16
      %v556 = vor.u32 %v553, %v554
      %v557 = vsel %vm490, %v549, %v556
      %v558 = vrot.slane %v553, 4
      %v560 = vshrl.u32 %v408, 16
      %v562 = vrot.slane %v560, 7
      %v563 = vshll.u32 %v408, 16
      %v565 = vor.u32 %v562, %v563
      %v566 = vrot.slane %v562, 4
      %v568 = vshrl.u32 %v409, 16
      %v570 = vrot.slane %v568, 7
      %v571 = vshll.u32 %v409, 16
      %v573 = vor.u32 %v570, %v571
      %v574 = vsel %vm490, %v566, %v573
      %v575 = vrot.slane %v570, 4
      %v577 = vshrl.u32 %v410, 16
      %v579 = vrot.slane %v577, 7
      %v580 = vshll.u32 %v410, 16
      %v582 = vor.u32 %v579, %v580
      %v583 = vrot.slane %v579, 4
      %v585 = vshrl.u32 %v411, 16
      %v587 = vrot.slane %v585, 7
      %v588 = vshll.u32 %v411, 16
      %v590 = vor.u32 %v587, %v588
      %v591 = vsel %vm490, %v583, %v590
      %v592 = vrot.slane %v587, 4
      %v594 = vshrl.u32 %v412, 16
      %v596 = vrot.slane %v594, 7
      %v597 = vshll.u32 %v412, 16
      %v599 = vor.u32 %v596, %v597
      %v600 = vrot.slane %v596, 4
      %v602 = vshrl.u32 %v413, 16
      %v604 = vrot.slane %v602, 7
      %v605 = vshll.u32 %v413, 16
      %v607 = vor.u32 %v604, %v605
      %v608 = vsel %vm490, %v600, %v607
      %v609 = vrot.slane %v604, 4
      %v611 = vshrl.u32 %v414, 16
      %v613 = vrot.slane %v611, 7
      %v614 = vshll.u32 %v414, 16
      %v616 = vor.u32 %v613, %v614
      %v617 = vrot.slane %v613, 4
      %v619 = vshrl.u32 %v415, 16
      %v621 = vrot.slane %v619, 7
      %v622 = vshll.u32 %v415, 16
      %v624 = vor.u32 %v621, %v622
      %v625 = vsel %vm490, %v617, %v624
      %v626 = vrot.slane %v621, 4
      %v628 = vshrl.u32 %v416, 16
      %v630 = vrot.slane %v628, 7
      %v631 = vshll.u32 %v416, 16
      %v633 = vor.u32 %v630, %v631
      %v634 = vrot.slane %v630, 4
      %v636 = vshrl.u32 %v417, 16
      %v638 = vrot.slane %v636, 7
      %v639 = vshll.u32 %v417, 16
      %v641 = vor.u32 %v638, %v639
      %v642 = vsel %vm490, %v634, %v641
      %v643 = vrot.slane %v638, 4
      %v645 = vshrl.u32 %v418, 16
      %v647 = vrot.slane %v645, 7
      %v648 = vshll.u32 %v418, 16
      %v650 = vor.u32 %v647, %v648
      %v651 = vrot.slane %v647, 4
      %v653 = vshrl.u32 %v419, 16
      %v655 = vrot.slane %v653, 7
      %v656 = vshll.u32 %v419, 16
      %v658 = vor.u32 %v655, %v656
      %v659 = vsel %vm490, %v651, %v658
      %v660 = vrot.slane %v655, 4
      %v662 = vshrl.u32 %v420, 16
      %v664 = vrot.slane %v662, 7
      %v665 = vshll.u32 %v420, 16
      %v667 = vor.u32 %v664, %v665
      %v668 = vrot.slane %v664, 4
      %v670 = vshrl.u32 %v421, 16
      %v672 = vrot.slane %v670, 7
      %v673 = vshll.u32 %v421, 16
      %v675 = vor.u32 %v672, %v673
      %v676 = vsel %vm490, %v668, %v675
      %v677 = vrot.slane %v672, 4
      %v679 = vshrl.u32 %v422, 16
      %v681 = vrot.slane %v679, 7
      %v682 = vshll.u32 %v422, 16
      %v684 = vor.u32 %v681, %v682
      %v685 = vrot.slane %v681, 4
      %v687 = vshrl.u32 %v423, 16
      %v689 = vrot.slane %v687, 7
      %v690 = vshll.u32 %v423, 16
      %v692 = vor.u32 %v689, %v690
      %v693 = vsel %vm490, %v685, %v692
      %v694 = vrot.slane %v689, 4
      %v696 = vshrl.u32 %v424, 16
      %v698 = vrot.slane %v696, 7
      %v699 = vshll.u32 %v424, 16
      %v701 = vor.u32 %v698, %v699
      %v702 = vrot.slane %v698, 4
      %v704 = vshrl.u32 %v425, 16
      %v706 = vrot.slane %v704, 7
      %v707 = vshll.u32 %v425, 16
      %v709 = vor.u32 %v706, %v707
      %v710 = vsel %vm490, %v702, %v709
      %v711 = vrot.slane %v706, 4
      %v713 = vshrl.u32 %v426, 16
      %v715 = vrot.slane %v713, 7
      %v716 = vshll.u32 %v426, 16
      %v718 = vor.u32 %v715, %v716
      %v719 = vrot.slane %v715, 4
      %v721 = vshrl.u32 %v427, 16
      %v723 = vrot.slane %v721, 7
      %v724 = vshll.u32 %v427, 16
      %v726 = vor.u32 %v723, %v724
      %v727 = vsel %vm490, %v719, %v726
      %v728 = vrot.slane %v723, 4
      %v730 = vshrl.u32 %v428, 16
      %v732 = vrot.slane %v730, 7
      %v733 = vshll.u32 %v428, 16
      %v735 = vor.u32 %v732, %v733
      %v736 = vrot.slane %v732, 4
      %v738 = vshrl.u32 %v429, 16
      %v740 = vrot.slane %v738, 7
      %v741 = vshll.u32 %v429, 16
      %v743 = vor.u32 %v740, %v741
      %v744 = vsel %vm490, %v736, %v743
      %v745 = vrot.slane %v740, 4
      %v747 = vshrl.u32 %v430, 16
      %v749 = vrot.slane %v747, 7
      %v750 = vshll.u32 %v430, 16
      %v752 = vor.u32 %v749, %v750
      %v753 = vrot.slane %v749, 4
      %v755 = vshrl.u32 %v431, 16
      %v757 = vrot.slane %v755, 7
      %v758 = vshll.u32 %v431, 16
      %v760 = vor.u32 %v757, %v758
      %v761 = vsel %vm490, %v753, %v760
      %v762 = vrot.slane %v757, 4
      %s811 = scalar_lea.vmem [#allocation2], 12
      %vm812 = vcmask 60416
      %vm813 = vsmask.f32 7938
      %vm814 = vmand %vm812, %vm813
      %v815 = vld [vmem:[%s811] sm:$0xf]
      %v816 = vsel %vm814, %v497, %v815
      %817 = vst [vmem:[%s811] sm:$0xf] %v816
      %818 = vst.msk [vmem:[%s811 + $0x4] sm:$0xf] %vm432, %v506
      %vm819 = vcmask 57344
      %vm820 = vmand %vm819, %vm488
      %v821 = vld [vmem:[%s811 + $0x8] sm:$0x1]
      %v822 = vsel %vm820, %v507, %v821
      %823 = vst [vmem:[%s811 + $0x8] sm:$0x1] %v822
      %v824 = vld [vmem:[%s811 + $0xc] sm:$0xf]
      %v825 = vsel %vm814, %v514, %v824
      %826 = vst [vmem:[%s811 + $0xc] sm:$0xf] %v825
      %827 = vst.msk [vmem:[%s811 + $0x10] sm:$0xf] %vm432, %v523
      %v828 = vld [vmem:[%s811 + $0x14] sm:$0x1]
      %v829 = vsel %vm820, %v524, %v828
      %830 = vst [vmem:[%s811 + $0x14] sm:$0x1] %v829
      %v831 = vld [vmem:[%s811 + $0x18] sm:$0xf]
      %v832 = vsel %vm814, %v531, %v831
      %833 = vst [vmem:[%s811 + $0x18] sm:$0xf] %v832
      %834 = vst.msk [vmem:[%s811 + $0x1c] sm:$0xf] %vm432, %v540
      %v835 = vld [vmem:[%s811 + $0x20] sm:$0x1]
      %v836 = vsel %vm820, %v541, %v835
      %837 = vst [vmem:[%s811 + $0x20] sm:$0x1] %v836
      %v838 = vld [vmem:[%s811 + $0x24] sm:$0xf]
      %v839 = vsel %vm814, %v548, %v838
      %840 = vst [vmem:[%s811 + $0x24] sm:$0xf] %v839
      %841 = vst.msk [vmem:[%s811 + $0x28] sm:$0xf] %vm432, %v557
      %v842 = vld [vmem:[%s811 + $0x2c] sm:$0x1]
      %v843 = vsel %vm820, %v558, %v842
      %844 = vst [vmem:[%s811 + $0x2c] sm:$0x1] %v843
      %v845 = vld [vmem:[%s811 + $0x30] sm:$0xf]
      %v846 = vsel %vm814, %v565, %v845
      %847 = vst [vmem:[%s811 + $0x30] sm:$0xf] %v846
      %848 = vst.msk [vmem:[%s811 + $0x34] sm:$0xf] %vm432, %v574
      %v849 = vld [vmem:[%s811 + $0x38] sm:$0x1]
      %v850 = vsel %vm820, %v575, %v849
      %851 = vst [vmem:[%s811 + $0x38] sm:$0x1] %v850
      %v852 = vld [vmem:[%s811 + $0x3c] sm:$0xf]
      %v853 = vsel %vm814, %v582, %v852
      %854 = vst [vmem:[%s811 + $0x3c] sm:$0xf] %v853
      %855 = vst.msk [vmem:[%s811 + $0x40] sm:$0xf] %vm432, %v591
      %v856 = vld [vmem:[%s811 + $0x44] sm:$0x1]
      %v857 = vsel %vm820, %v592, %v856
      %858 = vst [vmem:[%s811 + $0x44] sm:$0x1] %v857
      %v859 = vld [vmem:[%s811 + $0x48] sm:$0xf]
      %v860 = vsel %vm814, %v599, %v859
      %861 = vst [vmem:[%s811 + $0x48] sm:$0xf] %v860
      %862 = vst.msk [vmem:[%s811 + $0x4c] sm:$0xf] %vm432, %v608
      %v863 = vld [vmem:[%s811 + $0x50] sm:$0x1]
      %v864 = vsel %vm820, %v609, %v863
      %865 = vst [vmem:[%s811 + $0x50] sm:$0x1] %v864
      %v866 = vld [vmem:[%s811 + $0x54] sm:$0xf]
      %v867 = vsel %vm814, %v616, %v866
      %868 = vst [vmem:[%s811 + $0x54] sm:$0xf] %v867
      %869 = vst.msk [vmem:[%s811 + $0x58] sm:$0xf] %vm432, %v625
      %v870 = vld [vmem:[%s811 + $0x5c] sm:$0x1]
      %v871 = vsel %vm820, %v626, %v870
      %872 = vst [vmem:[%s811 + $0x5c] sm:$0x1] %v871
      %v873 = vld [vmem:[%s811 + $0x60] sm:$0xf]
      %v874 = vsel %vm814, %v633, %v873
      %875 = vst [vmem:[%s811 + $0x60] sm:$0xf] %v874
      %876 = vst.msk [vmem:[%s811 + $0x64] sm:$0xf] %vm432, %v642
      %v877 = vld [vmem:[%s811 + $0x68] sm:$0x1]
      %v878 = vsel %vm820, %v643, %v877
      %879 = vst [vmem:[%s811 + $0x68] sm:$0x1] %v878
      %v880 = vld [vmem:[%s811 + $0x6c] sm:$0xf]
      %v881 = vsel %vm814, %v650, %v880
      %882 = vst [vmem:[%s811 + $0x6c] sm:$0xf] %v881
      %883 = vst.msk [vmem:[%s811 + $0x70] sm:$0xf] %vm432, %v659
      %v884 = vld [vmem:[%s811 + $0x74] sm:$0x1]
      %v885 = vsel %vm820, %v660, %v884
      %886 = vst [vmem:[%s811 + $0x74] sm:$0x1] %v885
      %v887 = vld [vmem:[%s811 + $0x78] sm:$0xf]
      %v888 = vsel %vm814, %v667, %v887
      %889 = vst [vmem:[%s811 + $0x78] sm:$0xf] %v888
      %890 = vst.msk [vmem:[%s811 + $0x7c] sm:$0xf] %vm432, %v676
      %v891 = vld [vmem:[%s811 + $0x80] sm:$0x1]
      %v892 = vsel %vm820, %v677, %v891
      %893 = vst [vmem:[%s811 + $0x80] sm:$0x1] %v892
      %v894 = vld [vmem:[%s811 + $0x84] sm:$0xf]
      %v895 = vsel %vm814, %v684, %v894
      %896 = vst [vmem:[%s811 + $0x84] sm:$0xf] %v895
      %897 = vst.msk [vmem:[%s811 + $0x88] sm:$0xf] %vm432, %v693
      %v898 = vld [vmem:[%s811 + $0x8c] sm:$0x1]
      %v899 = vsel %vm820, %v694, %v898
      %900 = vst [vmem:[%s811 + $0x8c] sm:$0x1] %v899
      %v901 = vld [vmem:[%s811 + $0x90] sm:$0xf]
      %v902 = vsel %vm814, %v701, %v901
      %903 = vst [vmem:[%s811 + $0x90] sm:$0xf] %v902
      %904 = vst.msk [vmem:[%s811 + $0x94] sm:$0xf] %vm432, %v710
      %v905 = vld [vmem:[%s811 + $0x98] sm:$0x1]
      %v906 = vsel %vm820, %v711, %v905
      %907 = vst [vmem:[%s811 + $0x98] sm:$0x1] %v906
      %v908 = vld [vmem:[%s811 + $0x9c] sm:$0xf]
      %v909 = vsel %vm814, %v718, %v908
      %910 = vst [vmem:[%s811 + $0x9c] sm:$0xf] %v909
      %911 = vst.msk [vmem:[%s811 + $0xa0] sm:$0xf] %vm432, %v727
      %v912 = vld [vmem:[%s811 + $0xa4] sm:$0x1]
      %v913 = vsel %vm820, %v728, %v912
      %914 = vst [vmem:[%s811 + $0xa4] sm:$0x1] %v913
      %v915 = vld [vmem:[%s811 + $0xa8] sm:$0xf]
      %v916 = vsel %vm814, %v735, %v915
      %917 = vst [vmem:[%s811 + $0xa8] sm:$0xf] %v916
      %918 = vst.msk [vmem:[%s811 + $0xac] sm:$0xf] %vm432, %v744
      %v919 = vld [vmem:[%s811 + $0xb0] sm:$0x1]
      %v920 = vsel %vm820, %v745, %v919
      %921 = vst [vmem:[%s811 + $0xb0] sm:$0x1] %v920
      %v922 = vld [vmem:[%s811 + $0xb4] sm:$0xf]
      %v923 = vsel %vm814, %v752, %v922
      %924 = vst [vmem:[%s811 + $0xb4] sm:$0xf] %v923
      %925 = vst.msk [vmem:[%s811 + $0xb8] sm:$0xf] %vm432, %v761
      %v926 = vld [vmem:[%s811 + $0xbc] sm:$0x1]
      %v927 = vsel %vm820, %v762, %v926
      %928 = vst [vmem:[%s811 + $0xbc] sm:$0x1] %v927
      %v929 = vld [vmem:[#allocation2] sm:$0xf]
      %v930 = vld [vmem:[#allocation2 + $0x4] sm:$0xf]
      %v931 = vld [vmem:[#allocation2 + $0xc] sm:$0xf]
      %v932 = vld [vmem:[#allocation2 + $0x10] sm:$0xf]
      %v933 = vld [vmem:[#allocation2 + $0x18] sm:$0xf]
      %v934 = vld [vmem:[#allocation2 + $0x1c] sm:$0xf]
      %v935 = vld [vmem:[#allocation2 + $0x24] sm:$0xf]
      %v936 = vld [vmem:[#allocation2 + $0x28] sm:$0xf]
      %v937 = vld [vmem:[#allocation2 + $0x30] sm:$0xf]
      %v938 = vld [vmem:[#allocation2 + $0x34] sm:$0xf]
      %v939 = vld [vmem:[#allocation2 + $0x3c] sm:$0xf]
      %v940 = vld [vmem:[#allocation2 + $0x40] sm:$0xf]
      %v941 = vld [vmem:[#allocation2 + $0x48] sm:$0xf]
      %v942 = vld [vmem:[#allocation2 + $0x4c] sm:$0xf]
      %v943 = vld [vmem:[#allocation2 + $0x54] sm:$0xf]
      %v944 = vld [vmem:[#allocation2 + $0x58] sm:$0xf]
      %v945 = vld [vmem:[#allocation2 + $0x60] sm:$0xf]
      %v946 = vld [vmem:[#allocation2 + $0x64] sm:$0xf]
      %v947 = vld [vmem:[#allocation2 + $0x6c] sm:$0xf]
      %v948 = vld [vmem:[#allocation2 + $0x70] sm:$0xf]
      %v949 = vld [vmem:[#allocation2 + $0x78] sm:$0xf]
      %v950 = vld [vmem:[#allocation2 + $0x7c] sm:$0xf]
      %v951 = vld [vmem:[#allocation2 + $0x84] sm:$0xf]
      %v952 = vld [vmem:[#allocation2 + $0x88] sm:$0xf]
      %v953 = vld [vmem:[#allocation2 + $0x90] sm:$0xf]
      %v954 = vld [vmem:[#allocation2 + $0x94] sm:$0xf]
      %v955 = vld [vmem:[#allocation2 + $0x9c] sm:$0xf]
      %v956 = vld [vmem:[#allocation2 + $0xa0] sm:$0xf]
      %v957 = vld [vmem:[#allocation2 + $0xa8] sm:$0xf]
      %v958 = vld [vmem:[#allocation2 + $0xac] sm:$0xf]
      %v959 = vld [vmem:[#allocation2 + $0xb4] sm:$0xf]
      %v960 = vld [vmem:[#allocation2 + $0xb8] sm:$0xf]
      %961 = vst.msk [vmem:[#allocation3] sm:$0xf] %vm432, %v929
      %962 = vst.msk [vmem:[#allocation3 + $0x4] sm:$0xf] %vm432, %v930
      %963 = vst.msk [vmem:[#allocation3 + $0x8] sm:$0xf] %vm432, %v931
      %964 = vst.msk [vmem:[#allocation3 + $0xc] sm:$0xf] %vm432, %v932
      %965 = vst.msk [vmem:[#allocation3 + $0x10] sm:$0xf] %vm432, %v933
      %966 = vst.msk [vmem:[#allocation3 + $0x14] sm:$0xf] %vm432, %v934
      %967 = vst.msk [vmem:[#allocation3 + $0x18] sm:$0xf] %vm432, %v935
      %968 = vst.msk [vmem:[#allocation3 + $0x1c] sm:$0xf] %vm432, %v936
      %969 = vst.msk [vmem:[#allocation3 + $0x20] sm:$0xf] %vm432, %v937
      %970 = vst.msk [vmem:[#allocation3 + $0x24] sm:$0xf] %vm432, %v938
      %971 = vst.msk [vmem:[#allocation3 + $0x28] sm:$0xf] %vm432, %v939
      %972 = vst.msk [vmem:[#allocation3 + $0x2c] sm:$0xf] %vm432, %v940
      %973 = vst.msk [vmem:[#allocation3 + $0x30] sm:$0xf] %vm432, %v941
      %974 = vst.msk [vmem:[#allocation3 + $0x34] sm:$0xf] %vm432, %v942
      %975 = vst.msk [vmem:[#allocation3 + $0x38] sm:$0xf] %vm432, %v943
      %976 = vst.msk [vmem:[#allocation3 + $0x3c] sm:$0xf] %vm432, %v944
      %977 = vst.msk [vmem:[#allocation3 + $0x40] sm:$0xf] %vm432, %v945
      %978 = vst.msk [vmem:[#allocation3 + $0x44] sm:$0xf] %vm432, %v946
      %979 = vst.msk [vmem:[#allocation3 + $0x48] sm:$0xf] %vm432, %v947
      %980 = vst.msk [vmem:[#allocation3 + $0x4c] sm:$0xf] %vm432, %v948
      %981 = vst.msk [vmem:[#allocation3 + $0x50] sm:$0xf] %vm432, %v949
      %982 = vst.msk [vmem:[#allocation3 + $0x54] sm:$0xf] %vm432, %v950
      %983 = vst.msk [vmem:[#allocation3 + $0x58] sm:$0xf] %vm432, %v951
      %984 = vst.msk [vmem:[#allocation3 + $0x5c] sm:$0xf] %vm432, %v952
      %985 = vst.msk [vmem:[#allocation3 + $0x60] sm:$0xf] %vm432, %v953
      %986 = vst.msk [vmem:[#allocation3 + $0x64] sm:$0xf] %vm432, %v954
      %987 = vst.msk [vmem:[#allocation3 + $0x68] sm:$0xf] %vm432, %v955
      %988 = vst.msk [vmem:[#allocation3 + $0x6c] sm:$0xf] %vm432, %v956
      %989 = vst.msk [vmem:[#allocation3 + $0x70] sm:$0xf] %vm432, %v957
      %990 = vst.msk [vmem:[#allocation3 + $0x74] sm:$0xf] %vm432, %v958
      %991 = vst.msk [vmem:[#allocation3 + $0x78] sm:$0xf] %vm432, %v959
      %992 = vst.msk [vmem:[#allocation3 + $0x7c] sm:$0xf] %vm432, %v960
      %v993 = vld [vmem:[#allocation2] sm:$0xf]
      %v994 = vld [vmem:[#allocation2 + $0x4] sm:$0xf]
      %v995 = vld [vmem:[#allocation2 + $0x8] sm:$0x1]
      %v996 = vld [vmem:[#allocation2 + $0xc] sm:$0xf]
      %v997 = vld [vmem:[#allocation2 + $0x10] sm:$0xf]
      %v998 = vld [vmem:[#allocation2 + $0x14] sm:$0x1]
      %v999 = vld [vmem:[#allocation2 + $0x18] sm:$0xf]
      %v1000 = vld [vmem:[#allocation2 + $0x1c] sm:$0xf]
      %v1001 = vld [vmem:[#allocation2 + $0x20] sm:$0x1]
      %v1002 = vld [vmem:[#allocation2 + $0x24] sm:$0xf]
      %v1003 = vld [vmem:[#allocation2 + $0x28] sm:$0xf]
      %v1004 = vld [vmem:[#allocation2 + $0x2c] sm:$0x1]
      %v1005 = vld [vmem:[#allocation2 + $0x30] sm:$0xf]
      %v1006 = vld [vmem:[#allocation2 + $0x34] sm:$0xf]
      %v1007 = vld [vmem:[#allocation2 + $0x38] sm:$0x1]
      %v1008 = vld [vmem:[#allocation2 + $0x3c] sm:$0xf]
      %v1009 = vld [vmem:[#allocation2 + $0x40] sm:$0xf]
      %v1010 = vld [vmem:[#allocation2 + $0x44] sm:$0x1]
      %v1011 = vld [vmem:[#allocation2 + $0x48] sm:$0xf]
      %v1012 = vld [vmem:[#allocation2 + $0x4c] sm:$0xf]
      %v1013 = vld [vmem:[#allocation2 + $0x50] sm:$0x1]
      %v1014 = vld [vmem:[#allocation2 + $0x54] sm:$0xf]
      %v1015 = vld [vmem:[#allocation2 + $0x58] sm:$0xf]
      %v1016 = vld [vmem:[#allocation2 + $0x5c] sm:$0x1]
      %v1017 = vld [vmem:[#allocation2 + $0x60] sm:$0xf]
      %v1018 = vld [vmem:[#allocation2 + $0x64] sm:$0xf]
      %v1019 = vld [vmem:[#allocation2 + $0x68] sm:$0x1]
      %v1020 = vld [vmem:[#allocation2 + $0x6c] sm:$0xf]
      %v1021 = vld [vmem:[#allocation2 + $0x70] sm:$0xf]
      %v1022 = vld [vmem:[#allocation2 + $0x74] sm:$0x1]
      %v1023 = vld [vmem:[#allocation2 + $0x78] sm:$0xf]
      %v1024 = vld [vmem:[#allocation2 + $0x7c] sm:$0xf]
      %v1025 = vld [vmem:[#allocation2 + $0x80] sm:$0x1]
      %v1026 = vld [vmem:[#allocation2 + $0x84] sm:$0xf]
      %v1027 = vld [vmem:[#allocation2 + $0x88] sm:$0xf]
      %v1028 = vld [vmem:[#allocation2 + $0x8c] sm:$0x1]
      %v1029 = vld [vmem:[#allocation2 + $0x90] sm:$0xf]
      %v1030 = vld [vmem:[#allocation2 + $0x94] sm:$0xf]
      %v1031 = vld [vmem:[#allocation2 + $0x98] sm:$0x1]
      %v1032 = vld [vmem:[#allocation2 + $0x9c] sm:$0xf]
      %v1033 = vld [vmem:[#allocation2 + $0xa0] sm:$0xf]
      %v1034 = vld [vmem:[#allocation2 + $0xa4] sm:$0x1]
      %v1035 = vld [vmem:[#allocation2 + $0xa8] sm:$0xf]
      %v1036 = vld [vmem:[#allocation2 + $0xac] sm:$0xf]
      %v1037 = vld [vmem:[#allocation2 + $0xb0] sm:$0x1]
      %v1038 = vld [vmem:[#allocation2 + $0xb4] sm:$0xf]
      %v1039 = vld [vmem:[#allocation2 + $0xb8] sm:$0xf]
      %v1040 = vld [vmem:[#allocation2 + $0xbc] sm:$0x1]
      %vm1041 = vsmask.f32 3328
      %vm1042 = vsmask.f32 7440
      %vm1043 = vmor %vm1041, %vm1042
      %v1045 = vshrl.u32 %v993, 16
      %v1047 = vrot.slane %v1045, 4
      %v1048 = vshll.u32 %v993, 16
      %v1050 = vrot.slane %v1048, 5
      %v1051 = vor.u32 %v1047, %v1050
      %v1052 = vrot.slane %v1051, 4
      %v1054 = vshll.u32 %v994, 16
      %v1056 = vrot.slane %v1054, 5
      %v1057 = vsel %vm1043, %v1052, %v1056
      %v1058 = vshrl.u32 %v994, 16
      %v1060 = vrot.slane %v1058, 4
      %v1061 = vor.u32 %v1060, %v1056
      %v1062 = vrot.slane %v1061, 4
      %v1064 = vshll.u32 %v995, 16
      %v1066 = vrot.slane %v1064, 5
      %v1067 = vsel %vm1043, %v1062, %v1066
      %v1069 = vshrl.u32 %v996, 16
      %v1071 = vrot.slane %v1069, 4
      %v1072 = vshll.u32 %v996, 16
      %v1074 = vrot.slane %v1072, 5
      %v1075 = vor.u32 %v1071, %v1074
      %v1076 = vrot.slane %v1075, 4
      %v1078 = vshll.u32 %v997, 16
      %v1080 = vrot.slane %v1078, 5
      %v1081 = vsel %vm1043, %v1076, %v1080
      %v1082 = vshrl.u32 %v997, 16
      %v1084 = vrot.slane %v1082, 4
      %v1085 = vor.u32 %v1084, %v1080
      %v1086 = vrot.slane %v1085, 4
      %v1088 = vshll.u32 %v998, 16
      %v1090 = vrot.slane %v1088, 5
      %v1091 = vsel %vm1043, %v1086, %v1090
      %v1093 = vshrl.u32 %v999, 16
      %v1095 = vrot.slane %v1093, 4
      %v1096 = vshll.u32 %v999, 16
      %v1098 = vrot.slane %v1096, 5
      %v1099 = vor.u32 %v1095, %v1098
      %v1100 = vrot.slane %v1099, 4
      %v1102 = vshll.u32 %v1000, 16
      %v1104 = vrot.slane %v1102, 5
      %v1105 = vsel %vm1043, %v1100, %v1104
      %v1106 = vshrl.u32 %v1000, 16
      %v1108 = vrot.slane %v1106, 4
      %v1109 = vor.u32 %v1108, %v1104
      %v1110 = vrot.slane %v1109, 4
      %v1112 = vshll.u32 %v1001, 16
      %v1114 = vrot.slane %v1112, 5
      %v1115 = vsel %vm1043, %v1110, %v1114
      %v1117 = vshrl.u32 %v1002, 16
      %v1119 = vrot.slane %v1117, 4
      %v1120 = vshll.u32 %v1002, 16
      %v1122 = vrot.slane %v1120, 5
      %v1123 = vor.u32 %v1119, %v1122
      %v1124 = vrot.slane %v1123, 4
      %v1126 = vshll.u32 %v1003, 16
      %v1128 = vrot.slane %v1126, 5
      %v1129 = vsel %vm1043, %v1124, %v1128
      %v1130 = vshrl.u32 %v1003, 16
      %v1132 = vrot.slane %v1130, 4
      %v1133 = vor.u32 %v1132, %v1128
      %v1134 = vrot.slane %v1133, 4
      %v1136 = vshll.u32 %v1004, 16
      %v1138 = vrot.slane %v1136, 5
      %v1139 = vsel %vm1043, %v1134, %v1138
      %v1141 = vshrl.u32 %v1005, 16
      %v1143 = vrot.slane %v1141, 4
      %v1144 = vshll.u32 %v1005, 16
      %v1146 = vrot.slane %v1144, 5
      %v1147 = vor.u32 %v1143, %v1146
      %v1148 = vrot.slane %v1147, 4
      %v1150 = vshll.u32 %v1006, 16
      %v1152 = vrot.slane %v1150, 5
      %v1153 = vsel %vm1043, %v1148, %v1152
      %v1154 = vshrl.u32 %v1006, 16
      %v1156 = vrot.slane %v1154, 4
      %v1157 = vor.u32 %v1156, %v1152
      %v1158 = vrot.slane %v1157, 4
      %v1160 = vshll.u32 %v1007, 16
      %v1162 = vrot.slane %v1160, 5
      %v1163 = vsel %vm1043, %v1158, %v1162
      %v1165 = vshrl.u32 %v1008, 16
      %v1167 = vrot.slane %v1165, 4
      %v1168 = vshll.u32 %v1008, 16
      %v1170 = vrot.slane %v1168, 5
      %v1171 = vor.u32 %v1167, %v1170
      %v1172 = vrot.slane %v1171, 4
      %v1174 = vshll.u32 %v1009, 16
      %v1176 = vrot.slane %v1174, 5
      %v1177 = vsel %vm1043, %v1172, %v1176
      %v1178 = vshrl.u32 %v1009, 16
      %v1180 = vrot.slane %v1178, 4
      %v1181 = vor.u32 %v1180, %v1176
      %v1182 = vrot.slane %v1181, 4
      %v1184 = vshll.u32 %v1010, 16
      %v1186 = vrot.slane %v1184, 5
      %v1187 = vsel %vm1043, %v1182, %v1186
      %v1189 = vshrl.u32 %v1011, 16
      %v1191 = vrot.slane %v1189, 4
      %v1192 = vshll.u32 %v1011, 16
      %v1194 = vrot.slane %v1192, 5
      %v1195 = vor.u32 %v1191, %v1194
      %v1196 = vrot.slane %v1195, 4
      %v1198 = vshll.u32 %v1012, 16
      %v1200 = vrot.slane %v1198, 5
      %v1201 = vsel %vm1043, %v1196, %v1200
      %v1202 = vshrl.u32 %v1012, 16
      %v1204 = vrot.slane %v1202, 4
      %v1205 = vor.u32 %v1204, %v1200
      %v1206 = vrot.slane %v1205, 4
      %v1208 = vshll.u32 %v1013, 16
      %v1210 = vrot.slane %v1208, 5
      %v1211 = vsel %vm1043, %v1206, %v1210
      %v1213 = vshrl.u32 %v1014, 16
      %v1215 = vrot.slane %v1213, 4
      %v1216 = vshll.u32 %v1014, 16
      %v1218 = vrot.slane %v1216, 5
      %v1219 = vor.u32 %v1215, %v1218
      %v1220 = vrot.slane %v1219, 4
      %v1222 = vshll.u32 %v1015, 16
      %v1224 = vrot.slane %v1222, 5
      %v1225 = vsel %vm1043, %v1220, %v1224
      %v1226 = vshrl.u32 %v1015, 16
      %v1228 = vrot.slane %v1226, 4
      %v1229 = vor.u32 %v1228, %v1224
      %v1230 = vrot.slane %v1229, 4
      %v1232 = vshll.u32 %v1016, 16
      %v1234 = vrot.slane %v1232, 5
      %v1235 = vsel %vm1043, %v1230, %v1234
      %v1237 = vshrl.u32 %v1017, 16
      %v1239 = vrot.slane %v1237, 4
      %v1240 = vshll.u32 %v1017, 16
      %v1242 = vrot.slane %v1240, 5
      %v1243 = vor.u32 %v1239, %v1242
      %v1244 = vrot.slane %v1243, 4
      %v1246 = vshll.u32 %v1018, 16
      %v1248 = vrot.slane %v1246, 5
      %v1249 = vsel %vm1043, %v1244, %v1248
      %v1250 = vshrl.u32 %v1018, 16
      %v1252 = vrot.slane %v1250, 4
      %v1253 = vor.u32 %v1252, %v1248
      %v1254 = vrot.slane %v1253, 4
      %v1256 = vshll.u32 %v1019, 16
      %v1258 = vrot.slane %v1256, 5
      %v1259 = vsel %vm1043, %v1254, %v1258
      %v1261 = vshrl.u32 %v1020, 16
      %v1263 = vrot.slane %v1261, 4
      %v1264 = vshll.u32 %v1020, 16
      %v1266 = vrot.slane %v1264, 5
      %v1267 = vor.u32 %v1263, %v1266
      %v1268 = vrot.slane %v1267, 4
      %v1270 = vshll.u32 %v1021, 16
      %v1272 = vrot.slane %v1270, 5
      %v1273 = vsel %vm1043, %v1268, %v1272
      %v1274 = vshrl.u32 %v1021, 16
      %v1276 = vrot.slane %v1274, 4
      %v1277 = vor.u32 %v1276, %v1272
      %v1278 = vrot.slane %v1277, 4
      %v1280 = vshll.u32 %v1022, 16
      %v1282 = vrot.slane %v1280, 5
      %v1283 = vsel %vm1043, %v1278, %v1282
      %v1285 = vshrl.u32 %v1023, 16
      %v1287 = vrot.slane %v1285, 4
      %v1288 = vshll.u32 %v1023, 16
      %v1290 = vrot.slane %v1288, 5
      %v1291 = vor.u32 %v1287, %v1290
      %v1292 = vrot.slane %v1291, 4
      %v1294 = vshll.u32 %v1024, 16
      %v1296 = vrot.slane %v1294, 5
      %v1297 = vsel %vm1043, %v1292, %v1296
      %v1298 = vshrl.u32 %v1024, 16
      %v1300 = vrot.slane %v1298, 4
      %v1301 = vor.u32 %v1300, %v1296
      %v1302 = vrot.slane %v1301, 4
      %v1304 = vshll.u32 %v1025, 16
      %v1306 = vrot.slane %v1304, 5
      %v1307 = vsel %vm1043, %v1302, %v1306
      %v1309 = vshrl.u32 %v1026, 16
      %v1311 = vrot.slane %v1309, 4
      %v1312 = vshll.u32 %v1026, 16
      %v1314 = vrot.slane %v1312, 5
      %v1315 = vor.u32 %v1311, %v1314
      %v1316 = vrot.slane %v1315, 4
      %v1318 = vshll.u32 %v1027, 16
      %v1320 = vrot.slane %v1318, 5
      %v1321 = vsel %vm1043, %v1316, %v1320
      %v1322 = vshrl.u32 %v1027, 16
      %v1324 = vrot.slane %v1322, 4
      %v1325 = vor.u32 %v1324, %v1320
      %v1326 = vrot.slane %v1325, 4
      %v1328 = vshll.u32 %v1028, 16
      %v1330 = vrot.slane %v1328, 5
      %v1331 = vsel %vm1043, %v1326, %v1330
      %v1333 = vshrl.u32 %v1029, 16
      %v1335 = vrot.slane %v1333, 4
      %v1336 = vshll.u32 %v1029, 16
      %v1338 = vrot.slane %v1336, 5
      %v1339 = vor.u32 %v1335, %v1338
      %v1340 = vrot.slane %v1339, 4
      %v1342 = vshll.u32 %v1030, 16
      %v1344 = vrot.slane %v1342, 5
      %v1345 = vsel %vm1043, %v1340, %v1344
      %v1346 = vshrl.u32 %v1030, 16
      %v1348 = vrot.slane %v1346, 4
      %v1349 = vor.u32 %v1348, %v1344
      %v1350 = vrot.slane %v1349, 4
      %v1352 = vshll.u32 %v1031, 16
      %v1354 = vrot.slane %v1352, 5
      %v1355 = vsel %vm1043, %v1350, %v1354
      %v1357 = vshrl.u32 %v1032, 16
      %v1359 = vrot.slane %v1357, 4
      %v1360 = vshll.u32 %v1032, 16
      %v1362 = vrot.slane %v1360, 5
      %v1363 = vor.u32 %v1359, %v1362
      %v1364 = vrot.slane %v1363, 4
      %v1366 = vshll.u32 %v1033, 16
      %v1368 = vrot.slane %v1366, 5
      %v1369 = vsel %vm1043, %v1364, %v1368
      %v1370 = vshrl.u32 %v1033, 16
      %v1372 = vrot.slane %v1370, 4
      %v1373 = vor.u32 %v1372, %v1368
      %v1374 = vrot.slane %v1373, 4
      %v1376 = vshll.u32 %v1034, 16
      %v1378 = vrot.slane %v1376, 5
      %v1379 = vsel %vm1043, %v1374, %v1378
      %v1381 = vshrl.u32 %v1035, 16
      %v1383 = vrot.slane %v1381, 4
      %v1384 = vshll.u32 %v1035, 16
      %v1386 = vrot.slane %v1384, 5
      %v1387 = vor.u32 %v1383, %v1386
      %v1388 = vrot.slane %v1387, 4
      %v1390 = vshll.u32 %v1036, 16
      %v1392 = vrot.slane %v1390, 5
      %v1393 = vsel %vm1043, %v1388, %v1392
      %v1394 = vshrl.u32 %v1036, 16
      %v1396 = vrot.slane %v1394, 4
      %v1397 = vor.u32 %v1396, %v1392
      %v1398 = vrot.slane %v1397, 4
      %v1400 = vshll.u32 %v1037, 16
      %v1402 = vrot.slane %v1400, 5
      %v1403 = vsel %vm1043, %v1398, %v1402
      %v1405 = vshrl.u32 %v1038, 16
      %v1407 = vrot.slane %v1405, 4
      %v1408 = vshll.u32 %v1038, 16
      %v1410 = vrot.slane %v1408, 5
      %v1411 = vor.u32 %v1407, %v1410
      %v1412 = vrot.slane %v1411, 4
      %v1414 = vshll.u32 %v1039, 16
      %v1416 = vrot.slane %v1414, 5
      %v1417 = vsel %vm1043, %v1412, %v1416
      %v1418 = vshrl.u32 %v1039, 16
      %v1420 = vrot.slane %v1418, 4
      %v1421 = vor.u32 %v1420, %v1416
      %v1422 = vrot.slane %v1421, 4
      %v1424 = vshll.u32 %v1040, 16
      %v1426 = vrot.slane %v1424, 5
      %v1427 = vsel %vm1043, %v1422, %v1426
      %1428 = vrot.lane.b32.xlu0 %v1057, 8
      %v1429 = vpop.permute.xlu0 %1428
      %1430 = vrot.lane.b32.xlu0 %v1067, 8
      %v1431 = vpop.permute.xlu0 %1430
      %1432 = vrot.lane.b32.xlu0 %v1081, 8
      %v1433 = vpop.permute.xlu0 %1432
      %1434 = vrot.lane.b32.xlu0 %v1091, 8
      %v1435 = vpop.permute.xlu0 %1434
      %1436 = vrot.lane.b32.xlu0 %v1105, 8
      %v1437 = vpop.permute.xlu0 %1436
      %1438 = vrot.lane.b32.xlu0 %v1115, 8
      %v1439 = vpop.permute.xlu0 %1438
      %1440 = vrot.lane.b32.xlu0 %v1129, 8
      %v1441 = vpop.permute.xlu0 %1440
      %1442 = vrot.lane.b32.xlu0 %v1139, 8
      %v1443 = vpop.permute.xlu0 %1442
      %1444 = vrot.lane.b32.xlu0 %v1153, 8
      %v1445 = vpop.permute.xlu0 %1444
      %1446 = vrot.lane.b32.xlu0 %v1163, 8
      %v1447 = vpop.permute.xlu0 %1446
      %1448 = vrot.lane.b32.xlu0 %v1177, 8
      %v1449 = vpop.permute.xlu0 %1448
      %1450 = vrot.lane.b32.xlu0 %v1187, 8
      %v1451 = vpop.permute.xlu0 %1450
      %1452 = vrot.lane.b32.xlu0 %v1201, 8
      %v1453 = vpop.permute.xlu0 %1452
      %1454 = vrot.lane.b32.xlu0 %v1211, 8
      %v1455 = vpop.permute.xlu0 %1454
      %1456 = vrot.lane.b32.xlu0 %v1225, 8
      %v1457 = vpop.permute.xlu0 %1456
      %1458 = vrot.lane.b32.xlu0 %v1235, 8
      %v1459 = vpop.permute.xlu0 %1458
      %1460 = vrot.lane.b32.xlu0 %v1249, 8
      %v1461 = vpop.permute.xlu0 %1460
      %1462 = vrot.lane.b32.xlu0 %v1259, 8
      %v1463 = vpop.permute.xlu0 %1462
      %1464 = vrot.lane.b32.xlu0 %v1273, 8
      %v1465 = vpop.permute.xlu0 %1464
      %1466 = vrot.lane.b32.xlu0 %v1283, 8
      %v1467 = vpop.permute.xlu0 %1466
      %1468 = vrot.lane.b32.xlu0 %v1297, 8
      %v1469 = vpop.permute.xlu0 %1468
      %1470 = vrot.lane.b32.xlu0 %v1307, 8
      %v1471 = vpop.permute.xlu0 %1470
      %1472 = vrot.lane.b32.xlu0 %v1321, 8
      %v1473 = vpop.permute.xlu0 %1472
      %1474 = vrot.lane.b32.xlu0 %v1331, 8
      %v1475 = vpop.permute.xlu0 %1474
      %1476 = vrot.lane.b32.xlu0 %v1345, 8
      %v1477 = vpop.permute.xlu0 %1476
      %1478 = vrot.lane.b32.xlu0 %v1355, 8
      %v1479 = vpop.permute.xlu0 %1478
      %1480 = vrot.lane.b32.xlu0 %v1369, 8
      %v1481 = vpop.permute.xlu0 %1480
      %1482 = vrot.lane.b32.xlu0 %v1379, 8
      %v1483 = vpop.permute.xlu0 %1482
      %1484 = vrot.lane.b32.xlu0 %v1393, 8
      %v1485 = vpop.permute.xlu0 %1484
      %1486 = vrot.lane.b32.xlu0 %v1403, 8
      %v1487 = vpop.permute.xlu0 %1486
      %1488 = vrot.lane.b32.xlu0 %v1417, 8
      %v1489 = vpop.permute.xlu0 %1488
      %1490 = vrot.lane.b32.xlu0 %v1427, 8
      %v1491 = vpop.permute.xlu0 %1490
      %vm1524 = vcmask 126016
      %1525 = vst.msk [vmem:[#allocation3] sm:$0xf] %vm1524, %v1429
      %1526 = vst.msk [vmem:[#allocation3 + $0x4] sm:$0xf] %vm1524, %v1431
      %1527 = vst.msk [vmem:[#allocation3 + $0x8] sm:$0xf] %vm1524, %v1433
      %1528 = vst.msk [vmem:[#allocation3 + $0xc] sm:$0xf] %vm1524, %v1435
      %1529 = vst.msk [vmem:[#allocation3 + $0x10] sm:$0xf] %vm1524, %v1437
      %1530 = vst.msk [vmem:[#allocation3 + $0x14] sm:$0xf] %vm1524, %v1439
      %1531 = vst.msk [vmem:[#allocation3 + $0x18] sm:$0xf] %vm1524, %v1441
      %1532 = vst.msk [vmem:[#allocation3 + $0x1c] sm:$0xf] %vm1524, %v1443
      %1533 = vst.msk [vmem:[#allocation3 + $0x20] sm:$0xf] %vm1524, %v1445
      %1534 = vst.msk [vmem:[#allocation3 + $0x24] sm:$0xf] %vm1524, %v1447
      %1535 = vst.msk [vmem:[#allocation3 + $0x28] sm:$0xf] %vm1524, %v1449
      %1536 = vst.msk [vmem:[#allocation3 + $0x2c] sm:$0xf] %vm1524, %v1451
      %1537 = vst.msk [vmem:[#allocation3 + $0x30] sm:$0xf] %vm1524, %v1453
      %1538 = vst.msk [vmem:[#allocation3 + $0x34] sm:$0xf] %vm1524, %v1455
      %1539 = vst.msk [vmem:[#allocation3 + $0x38] sm:$0xf] %vm1524, %v1457
      %1540 = vst.msk [vmem:[#allocation3 + $0x3c] sm:$0xf] %vm1524, %v1459
      %1541 = vst.msk [vmem:[#allocation3 + $0x40] sm:$0xf] %vm1524, %v1461
      %1542 = vst.msk [vmem:[#allocation3 + $0x44] sm:$0xf] %vm1524, %v1463
      %1543 = vst.msk [vmem:[#allocation3 + $0x48] sm:$0xf] %vm1524, %v1465
      %1544 = vst.msk [vmem:[#allocation3 + $0x4c] sm:$0xf] %vm1524, %v1467
      %1545 = vst.msk [vmem:[#allocation3 + $0x50] sm:$0xf] %vm1524, %v1469
      %1546 = vst.msk [vmem:[#allocation3 + $0x54] sm:$0xf] %vm1524, %v1471
      %1547 = vst.msk [vmem:[#allocation3 + $0x58] sm:$0xf] %vm1524, %v1473
      %1548 = vst.msk [vmem:[#allocation3 + $0x5c] sm:$0xf] %vm1524, %v1475
      %1549 = vst.msk [vmem:[#allocation3 + $0x60] sm:$0xf] %vm1524, %v1477
      %1550 = vst.msk [vmem:[#allocation3 + $0x64] sm:$0xf] %vm1524, %v1479
      %1551 = vst.msk [vmem:[#allocation3 + $0x68] sm:$0xf] %vm1524, %v1481
      %1552 = vst.msk [vmem:[#allocation3 + $0x6c] sm:$0xf] %vm1524, %v1483
      %1553 = vst.msk [vmem:[#allocation3 + $0x70] sm:$0xf] %vm1524, %v1485
      %1554 = vst.msk [vmem:[#allocation3 + $0x74] sm:$0xf] %vm1524, %v1487
      %1555 = vst.msk [vmem:[#allocation3 + $0x78] sm:$0xf] %vm1524, %v1489
      %1556 = vst.msk [vmem:[#allocation3 + $0x7c] sm:$0xf] %vm1524, %v1491
      %v1557 = vld [vmem:[#allocation2] sm:$0xe]
      %v1558 = vld [vmem:[#allocation2 + $0x4] sm:$0xf]
      %v1559 = vld [vmem:[#allocation2 + $0x8] sm:$0x1]
      %v1560 = vld [vmem:[#allocation2 + $0xc] sm:$0xe]
      %v1561 = vld [vmem:[#allocation2 + $0x10] sm:$0xf]
      %v1562 = vld [vmem:[#allocation2 + $0x14] sm:$0x1]
      %v1563 = vld [vmem:[#allocation2 + $0x18] sm:$0xe]
      %v1564 = vld [vmem:[#allocation2 + $0x1c] sm:$0xf]
      %v1565 = vld [vmem:[#allocation2 + $0x20] sm:$0x1]
      %v1566 = vld [vmem:[#allocation2 + $0x24] sm:$0xe]
      %v1567 = vld [vmem:[#allocation2 + $0x28] sm:$0xf]
      %v1568 = vld [vmem:[#allocation2 + $0x2c] sm:$0x1]
      %v1569 = vld [vmem:[#allocation2 + $0x30] sm:$0xe]
      %v1570 = vld [vmem:[#allocation2 + $0x34] sm:$0xf]
      %v1571 = vld [vmem:[#allocation2 + $0x38] sm:$0x1]
      %v1572 = vld [vmem:[#allocation2 + $0x3c] sm:$0xe]
      %v1573 = vld [vmem:[#allocation2 + $0x40] sm:$0xf]
      %v1574 = vld [vmem:[#allocation2 + $0x44] sm:$0x1]
      %v1575 = vld [vmem:[#allocation2 + $0x48] sm:$0xe]
      %v1576 = vld [vmem:[#allocation2 + $0x4c] sm:$0xf]
      %v1577 = vld [vmem:[#allocation2 + $0x50] sm:$0x1]
      %v1578 = vld [vmem:[#allocation2 + $0x54] sm:$0xe]
      %v1579 = vld [vmem:[#allocation2 + $0x58] sm:$0xf]
      %v1580 = vld [vmem:[#allocation2 + $0x5c] sm:$0x1]
      %v1581 = vld [vmem:[#allocation2 + $0x60] sm:$0xe]
      %v1582 = vld [vmem:[#allocation2 + $0x64] sm:$0xf]
      %v1583 = vld [vmem:[#allocation2 + $0x68] sm:$0x1]
      %v1584 = vld [vmem:[#allocation2 + $0x6c] sm:$0xe]
      %v1585 = vld [vmem:[#allocation2 + $0x70] sm:$0xf]
      %v1586 = vld [vmem:[#allocation2 + $0x74] sm:$0x1]
      %v1587 = vld [vmem:[#allocation2 + $0x78] sm:$0xe]
      %v1588 = vld [vmem:[#allocation2 + $0x7c] sm:$0xf]
      %v1589 = vld [vmem:[#allocation2 + $0x80] sm:$0x1]
      %v1590 = vld [vmem:[#allocation2 + $0x84] sm:$0xe]
      %v1591 = vld [vmem:[#allocation2 + $0x88] sm:$0xf]
      %v1592 = vld [vmem:[#allocation2 + $0x8c] sm:$0x1]
      %v1593 = vld [vmem:[#allocation2 + $0x90] sm:$0xe]
      %v1594 = vld [vmem:[#allocation2 + $0x94] sm:$0xf]
      %v1595 = vld [vmem:[#allocation2 + $0x98] sm:$0x1]
      %v1596 = vld [vmem:[#allocation2 + $0x9c] sm:$0xe]
      %v1597 = vld [vmem:[#allocation2 + $0xa0] sm:$0xf]
      %v1598 = vld [vmem:[#allocation2 + $0xa4] sm:$0x1]
      %v1599 = vld [vmem:[#allocation2 + $0xa8] sm:$0xe]
      %v1600 = vld [vmem:[#allocation2 + $0xac] sm:$0xf]
      %v1601 = vld [vmem:[#allocation2 + $0xb0] sm:$0x1]
      %v1602 = vld [vmem:[#allocation2 + $0xb4] sm:$0xe]
      %v1603 = vld [vmem:[#allocation2 + $0xb8] sm:$0xf]
      %v1604 = vld [vmem:[#allocation2 + $0xbc] sm:$0x1]
      %vm1653 = vcmask 1042432
      %vm1654 = vcmask 1046532
      %vm1655 = vmor %vm1653, %vm1654
      %v1656 = vrot.slane %v1557, 5
      %v1657 = vrot.slane %v1656, 4
      %v1658 = vrot.slane %v1558, 5
      %v1659 = vsel %vm1655, %v1657, %v1658
      %v1660 = vrot.slane %v1658, 4
      %v1661 = vrot.slane %v1559, 5
      %v1662 = vsel %vm1655, %v1660, %v1661
      %v1663 = vrot.slane %v1560, 5
      %v1664 = vrot.slane %v1663, 4
      %v1665 = vrot.slane %v1561, 5
      %v1666 = vsel %vm1655, %v1664, %v1665
      %v1667 = vrot.slane %v1665, 4
      %v1668 = vrot.slane %v1562, 5
      %v1669 = vsel %vm1655, %v1667, %v1668
      %v1670 = vrot.slane %v1563, 5
      %v1671 = vrot.slane %v1670, 4
      %v1672 = vrot.slane %v1564, 5
      %v1673 = vsel %vm1655, %v1671, %v1672
      %v1674 = vrot.slane %v1672, 4
      %v1675 = vrot.slane %v1565, 5
      %v1676 = vsel %vm1655, %v1674, %v1675
      %v1677 = vrot.slane %v1566, 5
      %v1678 = vrot.slane %v1677, 4
      %v1679 = vrot.slane %v1567, 5
      %v1680 = vsel %vm1655, %v1678, %v1679
      %v1681 = vrot.slane %v1679, 4
      %v1682 = vrot.slane %v1568, 5
      %v1683 = vsel %vm1655, %v1681, %v1682
      %v1684 = vrot.slane %v1569, 5
      %v1685 = vrot.slane %v1684, 4
      %v1686 = vrot.slane %v1570, 5
      %v1687 = vsel %vm1655, %v1685, %v1686
      %v1688 = vrot.slane %v1686, 4
      %v1689 = vrot.slane %v1571, 5
      %v1690 = vsel %vm1655, %v1688, %v1689
      %v1691 = vrot.slane %v1572, 5
      %v1692 = vrot.slane %v1691, 4
      %v1693 = vrot.slane %v1573, 5
      %v1694 = vsel %vm1655, %v1692, %v1693
      %v1695 = vrot.slane %v1693, 4
      %v1696 = vrot.slane %v1574, 5
      %v1697 = vsel %vm1655, %v1695, %v1696
      %v1698 = vrot.slane %v1575, 5
      %v1699 = vrot.slane %v1698, 4
      %v1700 = vrot.slane %v1576, 5
      %v1701 = vsel %vm1655, %v1699, %v1700
      %v1702 = vrot.slane %v1700, 4
      %v1703 = vrot.slane %v1577, 5
      %v1704 = vsel %vm1655, %v1702, %v1703
      %v1705 = vrot.slane %v1578, 5
      %v1706 = vrot.slane %v1705, 4
      %v1707 = vrot.slane %v1579, 5
      %v1708 = vsel %vm1655, %v1706, %v1707
      %v1709 = vrot.slane %v1707, 4
      %v1710 = vrot.slane %v1580, 5
      %v1711 = vsel %vm1655, %v1709, %v1710
      %v1712 = vrot.slane %v1581, 5
      %v1713 = vrot.slane %v1712, 4
      %v1714 = vrot.slane %v1582, 5
      %v1715 = vsel %vm1655, %v1713, %v1714
      %v1716 = vrot.slane %v1714, 4
      %v1717 = vrot.slane %v1583, 5
      %v1718 = vsel %vm1655, %v1716, %v1717
      %v1719 = vrot.slane %v1584, 5
      %v1720 = vrot.slane %v1719, 4
      %v1721 = vrot.slane %v1585, 5
      %v1722 = vsel %vm1655, %v1720, %v1721
      %v1723 = vrot.slane %v1721, 4
      %v1724 = vrot.slane %v1586, 5
      %v1725 = vsel %vm1655, %v1723, %v1724
      %v1726 = vrot.slane %v1587, 5
      %v1727 = vrot.slane %v1726, 4
      %v1728 = vrot.slane %v1588, 5
      %v1729 = vsel %vm1655, %v1727, %v1728
      %v1730 = vrot.slane %v1728, 4
      %v1731 = vrot.slane %v1589, 5
      %v1732 = vsel %vm1655, %v1730, %v1731
      %v1733 = vrot.slane %v1590, 5
      %v1734 = vrot.slane %v1733, 4
      %v1735 = vrot.slane %v1591, 5
      %v1736 = vsel %vm1655, %v1734, %v1735
      %v1737 = vrot.slane %v1735, 4
      %v1738 = vrot.slane %v1592, 5
      %v1739 = vsel %vm1655, %v1737, %v1738
      %v1740 = vrot.slane %v1593, 5
      %v1741 = vrot.slane %v1740, 4
      %v1742 = vrot.slane %v1594, 5
      %v1743 = vsel %vm1655, %v1741, %v1742
      %v1744 = vrot.slane %v1742, 4
      %v1745 = vrot.slane %v1595, 5
      %v1746 = vsel %vm1655, %v1744, %v1745
      %v1747 = vrot.slane %v1596, 5
      %v1748 = vrot.slane %v1747, 4
      %v1749 = vrot.slane %v1597, 5
      %v1750 = vsel %vm1655, %v1748, %v1749
      %v1751 = vrot.slane %v1749, 4
      %v1752 = vrot.slane %v1598, 5
      %v1753 = vsel %vm1655, %v1751, %v1752
      %v1754 = vrot.slane %v1599, 5
      %v1755 = vrot.slane %v1754, 4
      %v1756 = vrot.slane %v1600, 5
      %v1757 = vsel %vm1655, %v1755, %v1756
      %v1758 = vrot.slane %v1756, 4
      %v1759 = vrot.slane %v1601, 5
      %v1760 = vsel %vm1655, %v1758, %v1759
      %v1761 = vrot.slane %v1602, 5
      %v1762 = vrot.slane %v1761, 4
      %v1763 = vrot.slane %v1603, 5
      %v1764 = vsel %vm1655, %v1762, %v1763
      %v1765 = vrot.slane %v1763, 4
      %v1766 = vrot.slane %v1604, 5
      %v1767 = vsel %vm1655, %v1765, %v1766
      %1768 = vrot.lane.b32.xlu0 %v1659, 16
      %v1769 = vpop.permute.xlu0 %1768
      %1770 = vrot.lane.b32.xlu0 %v1662, 16
      %v1771 = vpop.permute.xlu0 %1770
      %1772 = vrot.lane.b32.xlu0 %v1666, 16
      %v1773 = vpop.permute.xlu0 %1772
      %1774 = vrot.lane.b32.xlu0 %v1669, 16
      %v1775 = vpop.permute.xlu0 %1774
      %1776 = vrot.lane.b32.xlu0 %v1673, 16
      %v1777 = vpop.permute.xlu0 %1776
      %1778 = vrot.lane.b32.xlu0 %v1676, 16
      %v1779 = vpop.permute.xlu0 %1778
      %1780 = vrot.lane.b32.xlu0 %v1680, 16
      %v1781 = vpop.permute.xlu0 %1780
      %1782 = vrot.lane.b32.xlu0 %v1683, 16
      %v1783 = vpop.permute.xlu0 %1782
      %1784 = vrot.lane.b32.xlu0 %v1687, 16
      %v1785 = vpop.permute.xlu0 %1784
      %1786 = vrot.lane.b32.xlu0 %v1690, 16
      %v1787 = vpop.permute.xlu0 %1786
      %1788 = vrot.lane.b32.xlu0 %v1694, 16
      %v1789 = vpop.permute.xlu0 %1788
      %1790 = vrot.lane.b32.xlu0 %v1697, 16
      %v1791 = vpop.permute.xlu0 %1790
      %1792 = vrot.lane.b32.xlu0 %v1701, 16
      %v1793 = vpop.permute.xlu0 %1792
      %1794 = vrot.lane.b32.xlu0 %v1704, 16
      %v1795 = vpop.permute.xlu0 %1794
      %1796 = vrot.lane.b32.xlu0 %v1708, 16
      %v1797 = vpop.permute.xlu0 %1796
      %1798 = vrot.lane.b32.xlu0 %v1711, 16
      %v1799 = vpop.permute.xlu0 %1798
      %1800 = vrot.lane.b32.xlu0 %v1715, 16
      %v1801 = vpop.permute.xlu0 %1800
      %1802 = vrot.lane.b32.xlu0 %v1718, 16
      %v1803 = vpop.permute.xlu0 %1802
      %1804 = vrot.lane.b32.xlu0 %v1722, 16
      %v1805 = vpop.permute.xlu0 %1804
      %1806 = vrot.lane.b32.xlu0 %v1725, 16
      %v1807 = vpop.permute.xlu0 %1806
      %1808 = vrot.lane.b32.xlu0 %v1729, 16
      %v1809 = vpop.permute.xlu0 %1808
      %1810 = vrot.lane.b32.xlu0 %v1732, 16
      %v1811 = vpop.permute.xlu0 %1810
      %1812 = vrot.lane.b32.xlu0 %v1736, 16
      %v1813 = vpop.permute.xlu0 %1812
      %1814 = vrot.lane.b32.xlu0 %v1739, 16
      %v1815 = vpop.permute.xlu0 %1814
      %1816 = vrot.lane.b32.xlu0 %v1743, 16
      %v1817 = vpop.permute.xlu0 %1816
      %1818 = vrot.lane.b32.xlu0 %v1746, 16
      %v1819 = vpop.permute.xlu0 %1818
      %1820 = vrot.lane.b32.xlu0 %v1750, 16
      %v1821 = vpop.permute.xlu0 %1820
      %1822 = vrot.lane.b32.xlu0 %v1753, 16
      %v1823 = vpop.permute.xlu0 %1822
      %1824 = vrot.lane.b32.xlu0 %v1757, 16
      %v1825 = vpop.permute.xlu0 %1824
      %1826 = vrot.lane.b32.xlu0 %v1760, 16
      %v1827 = vpop.permute.xlu0 %1826
      %1828 = vrot.lane.b32.xlu0 %v1764, 16
      %v1829 = vpop.permute.xlu0 %1828
      %1830 = vrot.lane.b32.xlu0 %v1767, 16
      %v1831 = vpop.permute.xlu0 %1830
      %vm1864 = vcmask 191616
      %1865 = vst.msk [vmem:[#allocation3] sm:$0xf] %vm1864, %v1769
      %1866 = vst.msk [vmem:[#allocation3 + $0x4] sm:$0xf] %vm1864, %v1771
      %1867 = vst.msk [vmem:[#allocation3 + $0x8] sm:$0xf] %vm1864, %v1773
      %1868 = vst.msk [vmem:[#allocation3 + $0xc] sm:$0xf] %vm1864, %v1775
      %1869 = vst.msk [vmem:[#allocation3 + $0x10] sm:$0xf] %vm1864, %v1777
      %1870 = vst.msk [vmem:[#allocation3 + $0x14] sm:$0xf] %vm1864, %v1779
      %1871 = vst.msk [vmem:[#allocation3 + $0x18] sm:$0xf] %vm1864, %v1781
      %1872 = vst.msk [vmem:[#allocation3 + $0x1c] sm:$0xf] %vm1864, %v1783
      %1873 = vst.msk [vmem:[#allocation3 + $0x20] sm:$0xf] %vm1864, %v1785
      %1874 = vst.msk [vmem:[#allocation3 + $0x24] sm:$0xf] %vm1864, %v1787
      %1875 = vst.msk [vmem:[#allocation3 + $0x28] sm:$0xf] %vm1864, %v1789
      %1876 = vst.msk [vmem:[#allocation3 + $0x2c] sm:$0xf] %vm1864, %v1791
      %1877 = vst.msk [vmem:[#allocation3 + $0x30] sm:$0xf] %vm1864, %v1793
      %1878 = vst.msk [vmem:[#allocation3 + $0x34] sm:$0xf] %vm1864, %v1795
      %1879 = vst.msk [vmem:[#allocation3 + $0x38] sm:$0xf] %vm1864, %v1797
      %1880 = vst.msk [vmem:[#allocation3 + $0x3c] sm:$0xf] %vm1864, %v1799
      %1881 = vst.msk [vmem:[#allocation3 + $0x40] sm:$0xf] %vm1864, %v1801
      %1882 = vst.msk [vmem:[#allocation3 + $0x44] sm:$0xf] %vm1864, %v1803
      %1883 = vst.msk [vmem:[#allocation3 + $0x48] sm:$0xf] %vm1864, %v1805
      %1884 = vst.msk [vmem:[#allocation3 + $0x4c] sm:$0xf] %vm1864, %v1807
      %1885 = vst.msk [vmem:[#allocation3 + $0x50] sm:$0xf] %vm1864, %v1809
      %1886 = vst.msk [vmem:[#allocation3 + $0x54] sm:$0xf] %vm1864, %v1811
      %1887 = vst.msk [vmem:[#allocation3 + $0x58] sm:$0xf] %vm1864, %v1813
      %1888 = vst.msk [vmem:[#allocation3 + $0x5c] sm:$0xf] %vm1864, %v1815
      %1889 = vst.msk [vmem:[#allocation3 + $0x60] sm:$0xf] %vm1864, %v1817
      %1890 = vst.msk [vmem:[#allocation3 + $0x64] sm:$0xf] %vm1864, %v1819
      %1891 = vst.msk [vmem:[#allocation3 + $0x68] sm:$0xf] %vm1864, %v1821
      %1892 = vst.msk [vmem:[#allocation3 + $0x6c] sm:$0xf] %vm1864, %v1823
      %1893 = vst.msk [vmem:[#allocation3 + $0x70] sm:$0xf] %vm1864, %v1825
      %1894 = vst.msk [vmem:[#allocation3 + $0x74] sm:$0xf] %vm1864, %v1827
      %1895 = vst.msk [vmem:[#allocation3 + $0x78] sm:$0xf] %vm1864, %v1829
      %1896 = vst.msk [vmem:[#allocation3 + $0x7c] sm:$0xf] %vm1864, %v1831
      %v1897 = vld [vmem:[%s811] sm:$0xf]
      %v1898 = vld [vmem:[%s811 + $0x4] sm:$0xf]
      %v1899 = vld [vmem:[%s811 + $0xc] sm:$0xf]
      %v1900 = vld [vmem:[%s811 + $0x10] sm:$0xf]
      %v1901 = vld [vmem:[%s811 + $0x18] sm:$0xf]
      %v1902 = vld [vmem:[%s811 + $0x1c] sm:$0xf]
      %v1903 = vld [vmem:[%s811 + $0x24] sm:$0xf]
      %v1904 = vld [vmem:[%s811 + $0x28] sm:$0xf]
      %v1905 = vld [vmem:[%s811 + $0x30] sm:$0xf]
      %v1906 = vld [vmem:[%s811 + $0x34] sm:$0xf]
      %v1907 = vld [vmem:[%s811 + $0x3c] sm:$0xf]
      %v1908 = vld [vmem:[%s811 + $0x40] sm:$0xf]
      %v1909 = vld [vmem:[%s811 + $0x48] sm:$0xf]
      %v1910 = vld [vmem:[%s811 + $0x4c] sm:$0xf]
      %v1911 = vld [vmem:[%s811 + $0x54] sm:$0xf]
      %v1912 = vld [vmem:[%s811 + $0x58] sm:$0xf]
      %v1913 = vld [vmem:[%s811 + $0x60] sm:$0xf]
      %v1914 = vld [vmem:[%s811 + $0x64] sm:$0xf]
      %v1915 = vld [vmem:[%s811 + $0x6c] sm:$0xf]
      %v1916 = vld [vmem:[%s811 + $0x70] sm:$0xf]
      %v1917 = vld [vmem:[%s811 + $0x78] sm:$0xf]
      %v1918 = vld [vmem:[%s811 + $0x7c] sm:$0xf]
      %v1919 = vld [vmem:[%s811 + $0x84] sm:$0xf]
      %v1920 = vld [vmem:[%s811 + $0x88] sm:$0xf]
      %v1921 = vld [vmem:[%s811 + $0x90] sm:$0xf]
      %v1922 = vld [vmem:[%s811 + $0x94] sm:$0xf]
      %v1923 = vld [vmem:[%s811 + $0x9c] sm:$0xf]
      %v1924 = vld [vmem:[%s811 + $0xa0] sm:$0xf]
      %v1925 = vld [vmem:[%s811 + $0xa8] sm:$0xf]
      %v1926 = vld [vmem:[%s811 + $0xac] sm:$0xf]
      %v1927 = vld [vmem:[%s811 + $0xb4] sm:$0xf]
      %v1928 = vld [vmem:[%s811 + $0xb8] sm:$0xf]
      %1961 = vrot.lane.b32.xlu0 %v1897, 24
      %v1962 = vpop.permute.xlu0 %1961
      %1963 = vrot.lane.b32.xlu0 %v1898, 24
      %v1964 = vpop.permute.xlu0 %1963
      %1965 = vrot.lane.b32.xlu0 %v1899, 24
      %v1966 = vpop.permute.xlu0 %1965
      %1967 = vrot.lane.b32.xlu0 %v1900, 24
      %v1968 = vpop.permute.xlu0 %1967
      %1969 = vrot.lane.b32.xlu0 %v1901, 24
      %v1970 = vpop.permute.xlu0 %1969
      %1971 = vrot.lane.b32.xlu0 %v1902, 24
      %v1972 = vpop.permute.xlu0 %1971
      %1973 = vrot.lane.b32.xlu0 %v1903, 24
      %v1974 = vpop.permute.xlu0 %1973
      %1975 = vrot.lane.b32.xlu0 %v1904, 24
      %v1976 = vpop.permute.xlu0 %1975
      %1977 = vrot.lane.b32.xlu0 %v1905, 24
      %v1978 = vpop.permute.xlu0 %1977
      %1979 = vrot.lane.b32.xlu0 %v1906, 24
      %v1980 = vpop.permute.xlu0 %1979
      %1981 = vrot.lane.b32.xlu0 %v1907, 24
      %v1982 = vpop.permute.xlu0 %1981
      %1983 = vrot.lane.b32.xlu0 %v1908, 24
      %v1984 = vpop.permute.xlu0 %1983
      %1985 = vrot.lane.b32.xlu0 %v1909, 24
      %v1986 = vpop.permute.xlu0 %1985
      %1987 = vrot.lane.b32.xlu0 %v1910, 24
      %v1988 = vpop.permute.xlu0 %1987
      %1989 = vrot.lane.b32.xlu0 %v1911, 24
      %v1990 = vpop.permute.xlu0 %1989
      %1991 = vrot.lane.b32.xlu0 %v1912, 24
      %v1992 = vpop.permute.xlu0 %1991
      %1993 = vrot.lane.b32.xlu0 %v1913, 24
      %v1994 = vpop.permute.xlu0 %1993
      %1995 = vrot.lane.b32.xlu0 %v1914, 24
      %v1996 = vpop.permute.xlu0 %1995
      %1997 = vrot.lane.b32.xlu0 %v1915, 24
      %v1998 = vpop.permute.xlu0 %1997
      %1999 = vrot.lane.b32.xlu0 %v1916, 24
      %v2000 = vpop.permute.xlu0 %1999
      %2001 = vrot.lane.b32.xlu0 %v1917, 24
      %v2002 = vpop.permute.xlu0 %2001
      %2003 = vrot.lane.b32.xlu0 %v1918, 24
      %v2004 = vpop.permute.xlu0 %2003
      %2005 = vrot.lane.b32.xlu0 %v1919, 24
      %v2006 = vpop.permute.xlu0 %2005
      %2007 = vrot.lane.b32.xlu0 %v1920, 24
      %v2008 = vpop.permute.xlu0 %2007
      %2009 = vrot.lane.b32.xlu0 %v1921, 24
      %v2010 = vpop.permute.xlu0 %2009
      %2011 = vrot.lane.b32.xlu0 %v1922, 24
      %v2012 = vpop.permute.xlu0 %2011
      %2013 = vrot.lane.b32.xlu0 %v1923, 24
      %v2014 = vpop.permute.xlu0 %2013
      %2015 = vrot.lane.b32.xlu0 %v1924, 24
      %v2016 = vpop.permute.xlu0 %2015
      %2017 = vrot.lane.b32.xlu0 %v1925, 24
      %v2018 = vpop.permute.xlu0 %2017
      %2019 = vrot.lane.b32.xlu0 %v1926, 24
      %v2020 = vpop.permute.xlu0 %2019
      %2021 = vrot.lane.b32.xlu0 %v1927, 24
      %v2022 = vpop.permute.xlu0 %2021
      %2023 = vrot.lane.b32.xlu0 %v1928, 24
      %v2024 = vpop.permute.xlu0 %2023
      %vm2057 = vcmask 257216
      %2058 = vst.msk [vmem:[#allocation3] sm:$0xf] %vm2057, %v1962
      %2059 = vst.msk [vmem:[#allocation3 + $0x4] sm:$0xf] %vm2057, %v1964
      %2060 = vst.msk [vmem:[#allocation3 + $0x8] sm:$0xf] %vm2057, %v1966
      %2061 = vst.msk [vmem:[#allocation3 + $0xc] sm:$0xf] %vm2057, %v1968
      %2062 = vst.msk [vmem:[#allocation3 + $0x10] sm:$0xf] %vm2057, %v1970
      %2063 = vst.msk [vmem:[#allocation3 + $0x14] sm:$0xf] %vm2057, %v1972
      %2064 = vst.msk [vmem:[#allocation3 + $0x18] sm:$0xf] %vm2057, %v1974
      %2065 = vst.msk [vmem:[#allocation3 + $0x1c] sm:$0xf] %vm2057, %v1976
      %2066 = vst.msk [vmem:[#allocation3 + $0x20] sm:$0xf] %vm2057, %v1978
      %2067 = vst.msk [vmem:[#allocation3 + $0x24] sm:$0xf] %vm2057, %v1980
      %2068 = vst.msk [vmem:[#allocation3 + $0x28] sm:$0xf] %vm2057, %v1982
      %2069 = vst.msk [vmem:[#allocation3 + $0x2c] sm:$0xf] %vm2057, %v1984
      %2070 = vst.msk [vmem:[#allocation3 + $0x30] sm:$0xf] %vm2057, %v1986
      %2071 = vst.msk [vmem:[#allocation3 + $0x34] sm:$0xf] %vm2057, %v1988
      %2072 = vst.msk [vmem:[#allocation3 + $0x38] sm:$0xf] %vm2057, %v1990
      %2073 = vst.msk [vmem:[#allocation3 + $0x3c] sm:$0xf] %vm2057, %v1992
      %2074 = vst.msk [vmem:[#allocation3 + $0x40] sm:$0xf] %vm2057, %v1994
      %2075 = vst.msk [vmem:[#allocation3 + $0x44] sm:$0xf] %vm2057, %v1996
      %2076 = vst.msk [vmem:[#allocation3 + $0x48] sm:$0xf] %vm2057, %v1998
      %2077 = vst.msk [vmem:[#allocation3 + $0x4c] sm:$0xf] %vm2057, %v2000
      %2078 = vst.msk [vmem:[#allocation3 + $0x50] sm:$0xf] %vm2057, %v2002
      %2079 = vst.msk [vmem:[#allocation3 + $0x54] sm:$0xf] %vm2057, %v2004
      %2080 = vst.msk [vmem:[#allocation3 + $0x58] sm:$0xf] %vm2057, %v2006
      %2081 = vst.msk [vmem:[#allocation3 + $0x5c] sm:$0xf] %vm2057, %v2008
      %2082 = vst.msk [vmem:[#allocation3 + $0x60] sm:$0xf] %vm2057, %v2010
      %2083 = vst.msk [vmem:[#allocation3 + $0x64] sm:$0xf] %vm2057, %v2012
      %2084 = vst.msk [vmem:[#allocation3 + $0x68] sm:$0xf] %vm2057, %v2014
      %2085 = vst.msk [vmem:[#allocation3 + $0x6c] sm:$0xf] %vm2057, %v2016
      %2086 = vst.msk [vmem:[#allocation3 + $0x70] sm:$0xf] %vm2057, %v2018
      %2087 = vst.msk [vmem:[#allocation3 + $0x74] sm:$0xf] %vm2057, %v2020
      %2088 = vst.msk [vmem:[#allocation3 + $0x78] sm:$0xf] %vm2057, %v2022
      %2089 = vst.msk [vmem:[#allocation3 + $0x7c] sm:$0xf] %vm2057, %v2024
      %v2090 = vld [vmem:[%s811] sm:$0xf]
      %v2091 = vld [vmem:[%s811 + $0x4] sm:$0xf]
      %v2092 = vld [vmem:[%s811 + $0x8] sm:$0x1]
      %v2093 = vld [vmem:[%s811 + $0xc] sm:$0xf]
      %v2094 = vld [vmem:[%s811 + $0x10] sm:$0xf]
      %v2095 = vld [vmem:[%s811 + $0x14] sm:$0x1]
      %v2096 = vld [vmem:[%s811 + $0x18] sm:$0xf]
      %v2097 = vld [vmem:[%s811 + $0x1c] sm:$0xf]
      %v2098 = vld [vmem:[%s811 + $0x20] sm:$0x1]
      %v2099 = vld [vmem:[%s811 + $0x24] sm:$0xf]
      %v2100 = vld [vmem:[%s811 + $0x28] sm:$0xf]
      %v2101 = vld [vmem:[%s811 + $0x2c] sm:$0x1]
      %v2102 = vld [vmem:[%s811 + $0x30] sm:$0xf]
      %v2103 = vld [vmem:[%s811 + $0x34] sm:$0xf]
      %v2104 = vld [vmem:[%s811 + $0x38] sm:$0x1]
      %v2105 = vld [vmem:[%s811 + $0x3c] sm:$0xf]
      %v2106 = vld [vmem:[%s811 + $0x40] sm:$0xf]
      %v2107 = vld [vmem:[%s811 + $0x44] sm:$0x1]
      %v2108 = vld [vmem:[%s811 + $0x48] sm:$0xf]
      %v2109 = vld [vmem:[%s811 + $0x4c] sm:$0xf]
      %v2110 = vld [vmem:[%s811 + $0x50] sm:$0x1]
      %v2111 = vld [vmem:[%s811 + $0x54] sm:$0xf]
      %v2112 = vld [vmem:[%s811 + $0x58] sm:$0xf]
      %v2113 = vld [vmem:[%s811 + $0x5c] sm:$0x1]
      %v2114 = vld [vmem:[%s811 + $0x60] sm:$0xf]
      %v2115 = vld [vmem:[%s811 + $0x64] sm:$0xf]
      %v2116 = vld [vmem:[%s811 + $0x68] sm:$0x1]
      %v2117 = vld [vmem:[%s811 + $0x6c] sm:$0xf]
      %v2118 = vld [vmem:[%s811 + $0x70] sm:$0xf]
      %v2119 = vld [vmem:[%s811 + $0x74] sm:$0x1]
      %v2120 = vld [vmem:[%s811 + $0x78] sm:$0xf]
      %v2121 = vld [vmem:[%s811 + $0x7c] sm:$0xf]
      %v2122 = vld [vmem:[%s811 + $0x80] sm:$0x1]
      %v2123 = vld [vmem:[%s811 + $0x84] sm:$0xf]
      %v2124 = vld [vmem:[%s811 + $0x88] sm:$0xf]
      %v2125 = vld [vmem:[%s811 + $0x8c] sm:$0x1]
      %v2126 = vld [vmem:[%s811 + $0x90] sm:$0xf]
      %v2127 = vld [vmem:[%s811 + $0x94] sm:$0xf]
      %v2128 = vld [vmem:[%s811 + $0x98] sm:$0x1]
      %v2129 = vld [vmem:[%s811 + $0x9c] sm:$0xf]
      %v2130 = vld [vmem:[%s811 + $0xa0] sm:$0xf]
      %v2131 = vld [vmem:[%s811 + $0xa4] sm:$0x1]
      %v2132 = vld [vmem:[%s811 + $0xa8] sm:$0xf]
      %v2133 = vld [vmem:[%s811 + $0xac] sm:$0xf]
      %v2134 = vld [vmem:[%s811 + $0xb0] sm:$0x1]
      %v2135 = vld [vmem:[%s811 + $0xb4] sm:$0xf]
      %v2136 = vld [vmem:[%s811 + $0xb8] sm:$0xf]
      %v2137 = vld [vmem:[%s811 + $0xbc] sm:$0x1]
      %v2139 = vshrl.u32 %v2090, 16
      %v2141 = vrot.slane %v2139, 4
      %v2142 = vshll.u32 %v2090, 16
      %v2144 = vrot.slane %v2142, 5
      %v2145 = vor.u32 %v2141, %v2144
      %v2146 = vrot.slane %v2145, 4
      %v2148 = vshll.u32 %v2091, 16
      %v2150 = vrot.slane %v2148, 5
      %v2151 = vsel %vm1043, %v2146, %v2150
      %v2152 = vshrl.u32 %v2091, 16
      %v2154 = vrot.slane %v2152, 4
      %v2155 = vor.u32 %v2154, %v2150
      %v2156 = vrot.slane %v2155, 4
      %v2158 = vshll.u32 %v2092, 16
      %v2160 = vrot.slane %v2158, 5
      %v2161 = vsel %vm1043, %v2156, %v2160
      %v2163 = vshrl.u32 %v2093, 16
      %v2165 = vrot.slane %v2163, 4
      %v2166 = vshll.u32 %v2093, 16
      %v2168 = vrot.slane %v2166, 5
      %v2169 = vor.u32 %v2165, %v2168
      %v2170 = vrot.slane %v2169, 4
      %v2172 = vshll.u32 %v2094, 16
      %v2174 = vrot.slane %v2172, 5
      %v2175 = vsel %vm1043, %v2170, %v2174
      %v2176 = vshrl.u32 %v2094, 16
      %v2178 = vrot.slane %v2176, 4
      %v2179 = vor.u32 %v2178, %v2174
      %v2180 = vrot.slane %v2179, 4
      %v2182 = vshll.u32 %v2095, 16
      %v2184 = vrot.slane %v2182, 5
      %v2185 = vsel %vm1043, %v2180, %v2184
      %v2187 = vshrl.u32 %v2096, 16
      %v2189 = vrot.slane %v2187, 4
      %v2190 = vshll.u32 %v2096, 16
      %v2192 = vrot.slane %v2190, 5
      %v2193 = vor.u32 %v2189, %v2192
      %v2194 = vrot.slane %v2193, 4
      %v2196 = vshll.u32 %v2097, 16
      %v2198 = vrot.slane %v2196, 5
      %v2199 = vsel %vm1043, %v2194, %v2198
      %v2200 = vshrl.u32 %v2097, 16
      %v2202 = vrot.slane %v2200, 4
      %v2203 = vor.u32 %v2202, %v2198
      %v2204 = vrot.slane %v2203, 4
      %v2206 = vshll.u32 %v2098, 16
      %v2208 = vrot.slane %v2206, 5
      %v2209 = vsel %vm1043, %v2204, %v2208
      %v2211 = vshrl.u32 %v2099, 16
      %v2213 = vrot.slane %v2211, 4
      %v2214 = vshll.u32 %v2099, 16
      %v2216 = vrot.slane %v2214, 5
      %v2217 = vor.u32 %v2213, %v2216
      %v2218 = vrot.slane %v2217, 4
      %v2220 = vshll.u32 %v2100, 16
      %v2222 = vrot.slane %v2220, 5
      %v2223 = vsel %vm1043, %v2218, %v2222
      %v2224 = vshrl.u32 %v2100, 16
      %v2226 = vrot.slane %v2224, 4
      %v2227 = vor.u32 %v2226, %v2222
      %v2228 = vrot.slane %v2227, 4
      %v2230 = vshll.u32 %v2101, 16
      %v2232 = vrot.slane %v2230, 5
      %v2233 = vsel %vm1043, %v2228, %v2232
      %v2235 = vshrl.u32 %v2102, 16
      %v2237 = vrot.slane %v2235, 4
      %v2238 = vshll.u32 %v2102, 16
      %v2240 = vrot.slane %v2238, 5
      %v2241 = vor.u32 %v2237, %v2240
      %v2242 = vrot.slane %v2241, 4
      %v2244 = vshll.u32 %v2103, 16
      %v2246 = vrot.slane %v2244, 5
      %v2247 = vsel %vm1043, %v2242, %v2246
      %v2248 = vshrl.u32 %v2103, 16
      %v2250 = vrot.slane %v2248, 4
      %v2251 = vor.u32 %v2250, %v2246
      %v2252 = vrot.slane %v2251, 4
      %v2254 = vshll.u32 %v2104, 16
      %v2256 = vrot.slane %v2254, 5
      %v2257 = vsel %vm1043, %v2252, %v2256
      %v2259 = vshrl.u32 %v2105, 16
      %v2261 = vrot.slane %v2259, 4
      %v2262 = vshll.u32 %v2105, 16
      %v2264 = vrot.slane %v2262, 5
      %v2265 = vor.u32 %v2261, %v2264
      %v2266 = vrot.slane %v2265, 4
      %v2268 = vshll.u32 %v2106, 16
      %v2270 = vrot.slane %v2268, 5
      %v2271 = vsel %vm1043, %v2266, %v2270
      %v2272 = vshrl.u32 %v2106, 16
      %v2274 = vrot.slane %v2272, 4
      %v2275 = vor.u32 %v2274, %v2270
      %v2276 = vrot.slane %v2275, 4
      %v2278 = vshll.u32 %v2107, 16
      %v2280 = vrot.slane %v2278, 5
      %v2281 = vsel %vm1043, %v2276, %v2280
      %v2283 = vshrl.u32 %v2108, 16
      %v2285 = vrot.slane %v2283, 4
      %v2286 = vshll.u32 %v2108, 16
      %v2288 = vrot.slane %v2286, 5
      %v2289 = vor.u32 %v2285, %v2288
      %v2290 = vrot.slane %v2289, 4
      %v2292 = vshll.u32 %v2109, 16
      %v2294 = vrot.slane %v2292, 5
      %v2295 = vsel %vm1043, %v2290, %v2294
      %v2296 = vshrl.u32 %v2109, 16
      %v2298 = vrot.slane %v2296, 4
      %v2299 = vor.u32 %v2298, %v2294
      %v2300 = vrot.slane %v2299, 4
      %v2302 = vshll.u32 %v2110, 16
      %v2304 = vrot.slane %v2302, 5
      %v2305 = vsel %vm1043, %v2300, %v2304
      %v2307 = vshrl.u32 %v2111, 16
      %v2309 = vrot.slane %v2307, 4
      %v2310 = vshll.u32 %v2111, 16
      %v2312 = vrot.slane %v2310, 5
      %v2313 = vor.u32 %v2309, %v2312
      %v2314 = vrot.slane %v2313, 4
      %v2316 = vshll.u32 %v2112, 16
      %v2318 = vrot.slane %v2316, 5
      %v2319 = vsel %vm1043, %v2314, %v2318
      %v2320 = vshrl.u32 %v2112, 16
      %v2322 = vrot.slane %v2320, 4
      %v2323 = vor.u32 %v2322, %v2318
      %v2324 = vrot.slane %v2323, 4
      %v2326 = vshll.u32 %v2113, 16
      %v2328 = vrot.slane %v2326, 5
      %v2329 = vsel %vm1043, %v2324, %v2328
      %v2331 = vshrl.u32 %v2114, 16
      %v2333 = vrot.slane %v2331, 4
      %v2334 = vshll.u32 %v2114, 16
      %v2336 = vrot.slane %v2334, 5
      %v2337 = vor.u32 %v2333, %v2336
      %v2338 = vrot.slane %v2337, 4
      %v2340 = vshll.u32 %v2115, 16
      %v2342 = vrot.slane %v2340, 5
      %v2343 = vsel %vm1043, %v2338, %v2342
      %v2344 = vshrl.u32 %v2115, 16
      %v2346 = vrot.slane %v2344, 4
      %v2347 = vor.u32 %v2346, %v2342
      %v2348 = vrot.slane %v2347, 4
      %v2350 = vshll.u32 %v2116, 16
      %v2352 = vrot.slane %v2350, 5
      %v2353 = vsel %vm1043, %v2348, %v2352
      %v2355 = vshrl.u32 %v2117, 16
      %v2357 = vrot.slane %v2355, 4
      %v2358 = vshll.u32 %v2117, 16
      %v2360 = vrot.slane %v2358, 5
      %v2361 = vor.u32 %v2357, %v2360
      %v2362 = vrot.slane %v2361, 4
      %v2364 = vshll.u32 %v2118, 16
      %v2366 = vrot.slane %v2364, 5
      %v2367 = vsel %vm1043, %v2362, %v2366
      %v2368 = vshrl.u32 %v2118, 16
      %v2370 = vrot.slane %v2368, 4
      %v2371 = vor.u32 %v2370, %v2366
      %v2372 = vrot.slane %v2371, 4
      %v2374 = vshll.u32 %v2119, 16
      %v2376 = vrot.slane %v2374, 5
      %v2377 = vsel %vm1043, %v2372, %v2376
      %v2379 = vshrl.u32 %v2120, 16
      %v2381 = vrot.slane %v2379, 4
      %v2382 = vshll.u32 %v2120, 16
      %v2384 = vrot.slane %v2382, 5
      %v2385 = vor.u32 %v2381, %v2384
      %v2386 = vrot.slane %v2385, 4
      %v2388 = vshll.u32 %v2121, 16
      %v2390 = vrot.slane %v2388, 5
      %v2391 = vsel %vm1043, %v2386, %v2390
      %v2392 = vshrl.u32 %v2121, 16
      %v2394 = vrot.slane %v2392, 4
      %v2395 = vor.u32 %v2394, %v2390
      %v2396 = vrot.slane %v2395, 4
      %v2398 = vshll.u32 %v2122, 16
      %v2400 = vrot.slane %v2398, 5
      %v2401 = vsel %vm1043, %v2396, %v2400
      %v2403 = vshrl.u32 %v2123, 16
      %v2405 = vrot.slane %v2403, 4
      %v2406 = vshll.u32 %v2123, 16
      %v2408 = vrot.slane %v2406, 5
      %v2409 = vor.u32 %v2405, %v2408
      %v2410 = vrot.slane %v2409, 4
      %v2412 = vshll.u32 %v2124, 16
      %v2414 = vrot.slane %v2412, 5
      %v2415 = vsel %vm1043, %v2410, %v2414
      %v2416 = vshrl.u32 %v2124, 16
      %v2418 = vrot.slane %v2416, 4
      %v2419 = vor.u32 %v2418, %v2414
      %v2420 = vrot.slane %v2419, 4
      %v2422 = vshll.u32 %v2125, 16
      %v2424 = vrot.slane %v2422, 5
      %v2425 = vsel %vm1043, %v2420, %v2424
      %v2427 = vshrl.u32 %v2126, 16
      %v2429 = vrot.slane %v2427, 4
      %v2430 = vshll.u32 %v2126, 16
      %v2432 = vrot.slane %v2430, 5
      %v2433 = vor.u32 %v2429, %v2432
      %v2434 = vrot.slane %v2433, 4
      %v2436 = vshll.u32 %v2127, 16
      %v2438 = vrot.slane %v2436, 5
      %v2439 = vsel %vm1043, %v2434, %v2438
      %v2440 = vshrl.u32 %v2127, 16
      %v2442 = vrot.slane %v2440, 4
      %v2443 = vor.u32 %v2442, %v2438
      %v2444 = vrot.slane %v2443, 4
      %v2446 = vshll.u32 %v2128, 16
      %v2448 = vrot.slane %v2446, 5
      %v2449 = vsel %vm1043, %v2444, %v2448
      %v2451 = vshrl.u32 %v2129, 16
      %v2453 = vrot.slane %v2451, 4
      %v2454 = vshll.u32 %v2129, 16
      %v2456 = vrot.slane %v2454, 5
      %v2457 = vor.u32 %v2453, %v2456
      %v2458 = vrot.slane %v2457, 4
      %v2460 = vshll.u32 %v2130, 16
      %v2462 = vrot.slane %v2460, 5
      %v2463 = vsel %vm1043, %v2458, %v2462
      %v2464 = vshrl.u32 %v2130, 16
      %v2466 = vrot.slane %v2464, 4
      %v2467 = vor.u32 %v2466, %v2462
      %v2468 = vrot.slane %v2467, 4
      %v2470 = vshll.u32 %v2131, 16
      %v2472 = vrot.slane %v2470, 5
      %v2473 = vsel %vm1043, %v2468, %v2472
      %v2475 = vshrl.u32 %v2132, 16
      %v2477 = vrot.slane %v2475, 4
      %v2478 = vshll.u32 %v2132, 16
      %v2480 = vrot.slane %v2478, 5
      %v2481 = vor.u32 %v2477, %v2480
      %v2482 = vrot.slane %v2481, 4
      %v2484 = vshll.u32 %v2133, 16
      %v2486 = vrot.slane %v2484, 5
      %v2487 = vsel %vm1043, %v2482, %v2486
      %v2488 = vshrl.u32 %v2133, 16
      %v2490 = vrot.slane %v2488, 4
      %v2491 = vor.u32 %v2490, %v2486
      %v2492 = vrot.slane %v2491, 4
      %v2494 = vshll.u32 %v2134, 16
      %v2496 = vrot.slane %v2494, 5
      %v2497 = vsel %vm1043, %v2492, %v2496
      %v2499 = vshrl.u32 %v2135, 16
      %v2501 = vrot.slane %v2499, 4
      %v2502 = vshll.u32 %v2135, 16
      %v2504 = vrot.slane %v2502, 5
      %v2505 = vor.u32 %v2501, %v2504
      %v2506 = vrot.slane %v2505, 4
      %v2508 = vshll.u32 %v2136, 16
      %v2510 = vrot.slane %v2508, 5
      %v2511 = vsel %vm1043, %v2506, %v2510
      %v2512 = vshrl.u32 %v2136, 16
      %v2514 = vrot.slane %v2512, 4
      %v2515 = vor.u32 %v2514, %v2510
      %v2516 = vrot.slane %v2515, 4
      %v2518 = vshll.u32 %v2137, 16
      %v2520 = vrot.slane %v2518, 5
      %v2521 = vsel %vm1043, %v2516, %v2520
      %2522 = vrot.lane.b32.xlu0 %v2151, 32
      %v2523 = vpop.permute.xlu0 %2522
      %2524 = vrot.lane.b32.xlu0 %v2161, 32
      %v2525 = vpop.permute.xlu0 %2524
      %2526 = vrot.lane.b32.xlu0 %v2175, 32
      %v2527 = vpop.permute.xlu0 %2526
      %2528 = vrot.lane.b32.xlu0 %v2185, 32
      %v2529 = vpop.permute.xlu0 %2528
      %2530 = vrot.lane.b32.xlu0 %v2199, 32
      %v2531 = vpop.permute.xlu0 %2530
      %2532 = vrot.lane.b32.xlu0 %v2209, 32
      %v2533 = vpop.permute.xlu0 %2532
      %2534 = vrot.lane.b32.xlu0 %v2223, 32
      %v2535 = vpop.permute.xlu0 %2534
      %2536 = vrot.lane.b32.xlu0 %v2233, 32
      %v2537 = vpop.permute.xlu0 %2536
      %2538 = vrot.lane.b32.xlu0 %v2247, 32
      %v2539 = vpop.permute.xlu0 %2538
      %2540 = vrot.lane.b32.xlu0 %v2257, 32
      %v2541 = vpop.permute.xlu0 %2540
      %2542 = vrot.lane.b32.xlu0 %v2271, 32
      %v2543 = vpop.permute.xlu0 %2542
      %2544 = vrot.lane.b32.xlu0 %v2281, 32
      %v2545 = vpop.permute.xlu0 %2544
      %2546 = vrot.lane.b32.xlu0 %v2295, 32
      %v2547 = vpop.permute.xlu0 %2546
      %2548 = vrot.lane.b32.xlu0 %v2305, 32
      %v2549 = vpop.permute.xlu0 %2548
      %2550 = vrot.lane.b32.xlu0 %v2319, 32
      %v2551 = vpop.permute.xlu0 %2550
      %2552 = vrot.lane.b32.xlu0 %v2329, 32
      %v2553 = vpop.permute.xlu0 %2552
      %2554 = vrot.lane.b32.xlu0 %v2343, 32
      %v2555 = vpop.permute.xlu0 %2554
      %2556 = vrot.lane.b32.xlu0 %v2353, 32
      %v2557 = vpop.permute.xlu0 %2556
      %2558 = vrot.lane.b32.xlu0 %v2367, 32
      %v2559 = vpop.permute.xlu0 %2558
      %2560 = vrot.lane.b32.xlu0 %v2377, 32
      %v2561 = vpop.permute.xlu0 %2560
      %2562 = vrot.lane.b32.xlu0 %v2391, 32
      %v2563 = vpop.permute.xlu0 %2562
      %2564 = vrot.lane.b32.xlu0 %v2401, 32
      %v2565 = vpop.permute.xlu0 %2564
      %2566 = vrot.lane.b32.xlu0 %v2415, 32
      %v2567 = vpop.permute.xlu0 %2566
      %2568 = vrot.lane.b32.xlu0 %v2425, 32
      %v2569 = vpop.permute.xlu0 %2568
      %2570 = vrot.lane.b32.xlu0 %v2439, 32
      %v2571 = vpop.permute.xlu0 %2570
      %2572 = vrot.lane.b32.xlu0 %v2449, 32
      %v2573 = vpop.permute.xlu0 %2572
      %2574 = vrot.lane.b32.xlu0 %v2463, 32
      %v2575 = vpop.permute.xlu0 %2574
      %2576 = vrot.lane.b32.xlu0 %v2473, 32
      %v2577 = vpop.permute.xlu0 %2576
      %2578 = vrot.lane.b32.xlu0 %v2487, 32
      %v2579 = vpop.permute.xlu0 %2578
      %2580 = vrot.lane.b32.xlu0 %v2497, 32
      %v2581 = vpop.permute.xlu0 %2580
      %2582 = vrot.lane.b32.xlu0 %v2511, 32
      %v2583 = vpop.permute.xlu0 %2582
      %2584 = vrot.lane.b32.xlu0 %v2521, 32
      %v2585 = vpop.permute.xlu0 %2584
      %vm2618 = vcmask 322816
      %2619 = vst.msk [vmem:[#allocation3] sm:$0xf] %vm2618, %v2523
      %2620 = vst.msk [vmem:[#allocation3 + $0x4] sm:$0xf] %vm2618, %v2525
      %2621 = vst.msk [vmem:[#allocation3 + $0x8] sm:$0xf] %vm2618, %v2527
      %2622 = vst.msk [vmem:[#allocation3 + $0xc] sm:$0xf] %vm2618, %v2529
      %2623 = vst.msk [vmem:[#allocation3 + $0x10] sm:$0xf] %vm2618, %v2531
      %2624 = vst.msk [vmem:[#allocation3 + $0x14] sm:$0xf] %vm2618, %v2533
      %2625 = vst.msk [vmem:[#allocation3 + $0x18] sm:$0xf] %vm2618, %v2535
      %2626 = vst.msk [vmem:[#allocation3 + $0x1c] sm:$0xf] %vm2618, %v2537
      %2627 = vst.msk [vmem:[#allocation3 + $0x20] sm:$0xf] %vm2618, %v2539
      %2628 = vst.msk [vmem:[#allocation3 + $0x24] sm:$0xf] %vm2618, %v2541
      %2629 = vst.msk [vmem:[#allocation3 + $0x28] sm:$0xf] %vm2618, %v2543
      %2630 = vst.msk [vmem:[#allocation3 + $0x2c] sm:$0xf] %vm2618, %v2545
      %2631 = vst.msk [vmem:[#allocation3 + $0x30] sm:$0xf] %vm2618, %v2547
      %2632 = vst.msk [vmem:[#allocation3 + $0x34] sm:$0xf] %vm2618, %v2549
      %2633 = vst.msk [vmem:[#allocation3 + $0x38] sm:$0xf] %vm2618, %v2551
      %2634 = vst.msk [vmem:[#allocation3 + $0x3c] sm:$0xf] %vm2618, %v2553
      %2635 = vst.msk [vmem:[#allocation3 + $0x40] sm:$0xf] %vm2618, %v2555
      %2636 = vst.msk [vmem:[#allocation3 + $0x44] sm:$0xf] %vm2618, %v2557
      %2637 = vst.msk [vmem:[#allocation3 + $0x48] sm:$0xf] %vm2618, %v2559
      %2638 = vst.msk [vmem:[#allocation3 + $0x4c] sm:$0xf] %vm2618, %v2561
      %2639 = vst.msk [vmem:[#allocation3 + $0x50] sm:$0xf] %vm2618, %v2563
      %2640 = vst.msk [vmem:[#allocation3 + $0x54] sm:$0xf] %vm2618, %v2565
      %2641 = vst.msk [vmem:[#allocation3 + $0x58] sm:$0xf] %vm2618, %v2567
      %2642 = vst.msk [vmem:[#allocation3 + $0x5c] sm:$0xf] %vm2618, %v2569
      %2643 = vst.msk [vmem:[#allocation3 + $0x60] sm:$0xf] %vm2618, %v2571
      %2644 = vst.msk [vmem:[#allocation3 + $0x64] sm:$0xf] %vm2618, %v2573
      %2645 = vst.msk [vmem:[#allocation3 + $0x68] sm:$0xf] %vm2618, %v2575
      %2646 = vst.msk [vmem:[#allocation3 + $0x6c] sm:$0xf] %vm2618, %v2577
      %2647 = vst.msk [vmem:[#allocation3 + $0x70] sm:$0xf] %vm2618, %v2579
      %2648 = vst.msk [vmem:[#allocation3 + $0x74] sm:$0xf] %vm2618, %v2581
      %2649 = vst.msk [vmem:[#allocation3 + $0x78] sm:$0xf] %vm2618, %v2583
      %2650 = vst.msk [vmem:[#allocation3 + $0x7c] sm:$0xf] %vm2618, %v2585
      %v2651 = vld [vmem:[%s811] sm:$0xe]
      %v2652 = vld [vmem:[%s811 + $0x4] sm:$0xf]
      %v2653 = vld [vmem:[%s811 + $0x8] sm:$0x1]
      %v2654 = vld [vmem:[%s811 + $0xc] sm:$0xe]
      %v2655 = vld [vmem:[%s811 + $0x10] sm:$0xf]
      %v2656 = vld [vmem:[%s811 + $0x14] sm:$0x1]
      %v2657 = vld [vmem:[%s811 + $0x18] sm:$0xe]
      %v2658 = vld [vmem:[%s811 + $0x1c] sm:$0xf]
      %v2659 = vld [vmem:[%s811 + $0x20] sm:$0x1]
      %v2660 = vld [vmem:[%s811 + $0x24] sm:$0xe]
      %v2661 = vld [vmem:[%s811 + $0x28] sm:$0xf]
      %v2662 = vld [vmem:[%s811 + $0x2c] sm:$0x1]
      %v2663 = vld [vmem:[%s811 + $0x30] sm:$0xe]
      %v2664 = vld [vmem:[%s811 + $0x34] sm:$0xf]
      %v2665 = vld [vmem:[%s811 + $0x38] sm:$0x1]
      %v2666 = vld [vmem:[%s811 + $0x3c] sm:$0xe]
      %v2667 = vld [vmem:[%s811 + $0x40] sm:$0xf]
      %v2668 = vld [vmem:[%s811 + $0x44] sm:$0x1]
      %v2669 = vld [vmem:[%s811 + $0x48] sm:$0xe]
      %v2670 = vld [vmem:[%s811 + $0x4c] sm:$0xf]
      %v2671 = vld [vmem:[%s811 + $0x50] sm:$0x1]
      %v2672 = vld [vmem:[%s811 + $0x54] sm:$0xe]
      %v2673 = vld [vmem:[%s811 + $0x58] sm:$0xf]
      %v2674 = vld [vmem:[%s811 + $0x5c] sm:$0x1]
      %v2675 = vld [vmem:[%s811 + $0x60] sm:$0xe]
      %v2676 = vld [vmem:[%s811 + $0x64] sm:$0xf]
      %v2677 = vld [vmem:[%s811 + $0x68] sm:$0x1]
      %v2678 = vld [vmem:[%s811 + $0x6c] sm:$0xe]
      %v2679 = vld [vmem:[%s811 + $0x70] sm:$0xf]
      %v2680 = vld [vmem:[%s811 + $0x74] sm:$0x1]
      %v2681 = vld [vmem:[%s811 + $0x78] sm:$0xe]
      %v2682 = vld [vmem:[%s811 + $0x7c] sm:$0xf]
      %v2683 = vld [vmem:[%s811 + $0x80] sm:$0x1]
      %v2684 = vld [vmem:[%s811 + $0x84] sm:$0xe]
      %v2685 = vld [vmem:[%s811 + $0x88] sm:$0xf]
      %v2686 = vld [vmem:[%s811 + $0x8c] sm:$0x1]
      %v2687 = vld [vmem:[%s811 + $0x90] sm:$0xe]
      %v2688 = vld [vmem:[%s811 + $0x94] sm:$0xf]
      %v2689 = vld [vmem:[%s811 + $0x98] sm:$0x1]
      %v2690 = vld [vmem:[%s811 + $0x9c] sm:$0xe]
      %v2691 = vld [vmem:[%s811 + $0xa0] sm:$0xf]
      %v2692 = vld [vmem:[%s811 + $0xa4] sm:$0x1]
      %v2693 = vld [vmem:[%s811 + $0xa8] sm:$0xe]
      %v2694 = vld [vmem:[%s811 + $0xac] sm:$0xf]
      %v2695 = vld [vmem:[%s811 + $0xb0] sm:$0x1]
      %v2696 = vld [vmem:[%s811 + $0xb4] sm:$0xe]
      %v2697 = vld [vmem:[%s811 + $0xb8] sm:$0xf]
      %v2698 = vld [vmem:[%s811 + $0xbc] sm:$0x1]
      %v2747 = vrot.slane %v2651, 5
      %v2748 = vrot.slane %v2747, 4
      %v2749 = vrot.slane %v2652, 5
      %v2750 = vsel %vm1655, %v2748, %v2749
      %v2751 = vrot.slane %v2749, 4
      %v2752 = vrot.slane %v2653, 5
      %v2753 = vsel %vm1655, %v2751, %v2752
      %v2754 = vrot.slane %v2654, 5
      %v2755 = vrot.slane %v2754, 4
      %v2756 = vrot.slane %v2655, 5
      %v2757 = vsel %vm1655, %v2755, %v2756
      %v2758 = vrot.slane %v2756, 4
      %v2759 = vrot.slane %v2656, 5
      %v2760 = vsel %vm1655, %v2758, %v2759
      %v2761 = vrot.slane %v2657, 5
      %v2762 = vrot.slane %v2761, 4
      %v2763 = vrot.slane %v2658, 5
      %v2764 = vsel %vm1655, %v2762, %v2763
      %v2765 = vrot.slane %v2763, 4
      %v2766 = vrot.slane %v2659, 5
      %v2767 = vsel %vm1655, %v2765, %v2766
      %v2768 = vrot.slane %v2660, 5
      %v2769 = vrot.slane %v2768, 4
      %v2770 = vrot.slane %v2661, 5
      %v2771 = vsel %vm1655, %v2769, %v2770
      %v2772 = vrot.slane %v2770, 4
      %v2773 = vrot.slane %v2662, 5
      %v2774 = vsel %vm1655, %v2772, %v2773
      %v2775 = vrot.slane %v2663, 5
      %v2776 = vrot.slane %v2775, 4
      %v2777 = vrot.slane %v2664, 5
      %v2778 = vsel %vm1655, %v2776, %v2777
      %v2779 = vrot.slane %v2777, 4
      %v2780 = vrot.slane %v2665, 5
      %v2781 = vsel %vm1655, %v2779, %v2780
      %v2782 = vrot.slane %v2666, 5
      %v2783 = vrot.slane %v2782, 4
      %v2784 = vrot.slane %v2667, 5
      %v2785 = vsel %vm1655, %v2783, %v2784
      %v2786 = vrot.slane %v2784, 4
      %v2787 = vrot.slane %v2668, 5
      %v2788 = vsel %vm1655, %v2786, %v2787
      %v2789 = vrot.slane %v2669, 5
      %v2790 = vrot.slane %v2789, 4
      %v2791 = vrot.slane %v2670, 5
      %v2792 = vsel %vm1655, %v2790, %v2791
      %v2793 = vrot.slane %v2791, 4
      %v2794 = vrot.slane %v2671, 5
      %v2795 = vsel %vm1655, %v2793, %v2794
      %v2796 = vrot.slane %v2672, 5
      %v2797 = vrot.slane %v2796, 4
      %v2798 = vrot.slane %v2673, 5
      %v2799 = vsel %vm1655, %v2797, %v2798
      %v2800 = vrot.slane %v2798, 4
      %v2801 = vrot.slane %v2674, 5
      %v2802 = vsel %vm1655, %v2800, %v2801
      %v2803 = vrot.slane %v2675, 5
      %v2804 = vrot.slane %v2803, 4
      %v2805 = vrot.slane %v2676, 5
      %v2806 = vsel %vm1655, %v2804, %v2805
      %v2807 = vrot.slane %v2805, 4
      %v2808 = vrot.slane %v2677, 5
      %v2809 = vsel %vm1655, %v2807, %v2808
      %v2810 = vrot.slane %v2678, 5
      %v2811 = vrot.slane %v2810, 4
      %v2812 = vrot.slane %v2679, 5
      %v2813 = vsel %vm1655, %v2811, %v2812
      %v2814 = vrot.slane %v2812, 4
      %v2815 = vrot.slane %v2680, 5
      %v2816 = vsel %vm1655, %v2814, %v2815
      %v2817 = vrot.slane %v2681, 5
      %v2818 = vrot.slane %v2817, 4
      %v2819 = vrot.slane %v2682, 5
      %v2820 = vsel %vm1655, %v2818, %v2819
      %v2821 = vrot.slane %v2819, 4
      %v2822 = vrot.slane %v2683, 5
      %v2823 = vsel %vm1655, %v2821, %v2822
      %v2824 = vrot.slane %v2684, 5
      %v2825 = vrot.slane %v2824, 4
      %v2826 = vrot.slane %v2685, 5
      %v2827 = vsel %vm1655, %v2825, %v2826
      %v2828 = vrot.slane %v2826, 4
      %v2829 = vrot.slane %v2686, 5
      %v2830 = vsel %vm1655, %v2828, %v2829
      %v2831 = vrot.slane %v2687, 5
      %v2832 = vrot.slane %v2831, 4
      %v2833 = vrot.slane %v2688, 5
      %v2834 = vsel %vm1655, %v2832, %v2833
      %v2835 = vrot.slane %v2833, 4
      %v2836 = vrot.slane %v2689, 5
      %v2837 = vsel %vm1655, %v2835, %v2836
      %v2838 = vrot.slane %v2690, 5
      %v2839 = vrot.slane %v2838, 4
      %v2840 = vrot.slane %v2691, 5
      %v2841 = vsel %vm1655, %v2839, %v2840
      %v2842 = vrot.slane %v2840, 4
      %v2843 = vrot.slane %v2692, 5
      %v2844 = vsel %vm1655, %v2842, %v2843
      %v2845 = vrot.slane %v2693, 5
      %v2846 = vrot.slane %v2845, 4
      %v2847 = vrot.slane %v2694, 5
      %v2848 = vsel %vm1655, %v2846, %v2847
      %v2849 = vrot.slane %v2847, 4
      %v2850 = vrot.slane %v2695, 5
      %v2851 = vsel %vm1655, %v2849, %v2850
      %v2852 = vrot.slane %v2696, 5
      %v2853 = vrot.slane %v2852, 4
      %v2854 = vrot.slane %v2697, 5
      %v2855 = vsel %vm1655, %v2853, %v2854
      %v2856 = vrot.slane %v2854, 4
      %v2857 = vrot.slane %v2698, 5
      %v2858 = vsel %vm1655, %v2856, %v2857
      %2859 = vrot.lane.b32.xlu0 %v2750, 40
      %v2860 = vpop.permute.xlu0 %2859
      %2861 = vrot.lane.b32.xlu0 %v2753, 40
      %v2862 = vpop.permute.xlu0 %2861
      %2863 = vrot.lane.b32.xlu0 %v2757, 40
      %v2864 = vpop.permute.xlu0 %2863
      %2865 = vrot.lane.b32.xlu0 %v2760, 40
      %v2866 = vpop.permute.xlu0 %2865
      %2867 = vrot.lane.b32.xlu0 %v2764, 40
      %v2868 = vpop.permute.xlu0 %2867
      %2869 = vrot.lane.b32.xlu0 %v2767, 40
      %v2870 = vpop.permute.xlu0 %2869
      %2871 = vrot.lane.b32.xlu0 %v2771, 40
      %v2872 = vpop.permute.xlu0 %2871
      %2873 = vrot.lane.b32.xlu0 %v2774, 40
      %v2874 = vpop.permute.xlu0 %2873
      %2875 = vrot.lane.b32.xlu0 %v2778, 40
      %v2876 = vpop.permute.xlu0 %2875
      %2877 = vrot.lane.b32.xlu0 %v2781, 40
      %v2878 = vpop.permute.xlu0 %2877
      %2879 = vrot.lane.b32.xlu0 %v2785, 40
      %v2880 = vpop.permute.xlu0 %2879
      %2881 = vrot.lane.b32.xlu0 %v2788, 40
      %v2882 = vpop.permute.xlu0 %2881
      %2883 = vrot.lane.b32.xlu0 %v2792, 40
      %v2884 = vpop.permute.xlu0 %2883
      %2885 = vrot.lane.b32.xlu0 %v2795, 40
      %v2886 = vpop.permute.xlu0 %2885
      %2887 = vrot.lane.b32.xlu0 %v2799, 40
      %v2888 = vpop.permute.xlu0 %2887
      %2889 = vrot.lane.b32.xlu0 %v2802, 40
      %v2890 = vpop.permute.xlu0 %2889
      %2891 = vrot.lane.b32.xlu0 %v2806, 40
      %v2892 = vpop.permute.xlu0 %2891
      %2893 = vrot.lane.b32.xlu0 %v2809, 40
      %v2894 = vpop.permute.xlu0 %2893
      %2895 = vrot.lane.b32.xlu0 %v2813, 40
      %v2896 = vpop.permute.xlu0 %2895
      %2897 = vrot.lane.b32.xlu0 %v2816, 40
      %v2898 = vpop.permute.xlu0 %2897
      %2899 = vrot.lane.b32.xlu0 %v2820, 40
      %v2900 = vpop.permute.xlu0 %2899
      %2901 = vrot.lane.b32.xlu0 %v2823, 40
      %v2902 = vpop.permute.xlu0 %2901
      %2903 = vrot.lane.b32.xlu0 %v2827, 40
      %v2904 = vpop.permute.xlu0 %2903
      %2905 = vrot.lane.b32.xlu0 %v2830, 40
      %v2906 = vpop.permute.xlu0 %2905
      %2907 = vrot.lane.b32.xlu0 %v2834, 40
      %v2908 = vpop.permute.xlu0 %2907
      %2909 = vrot.lane.b32.xlu0 %v2837, 40
      %v2910 = vpop.permute.xlu0 %2909
      %2911 = vrot.lane.b32.xlu0 %v2841, 40
      %v2912 = vpop.permute.xlu0 %2911
      %2913 = vrot.lane.b32.xlu0 %v2844, 40
      %v2914 = vpop.permute.xlu0 %2913
      %2915 = vrot.lane.b32.xlu0 %v2848, 40
      %v2916 = vpop.permute.xlu0 %2915
      %2917 = vrot.lane.b32.xlu0 %v2851, 40
      %v2918 = vpop.permute.xlu0 %2917
      %2919 = vrot.lane.b32.xlu0 %v2855, 40
      %v2920 = vpop.permute.xlu0 %2919
      %2921 = vrot.lane.b32.xlu0 %v2858, 40
      %v2922 = vpop.permute.xlu0 %2921
      %vm2955 = vcmask 388416
      %2956 = vst.msk [vmem:[#allocation3] sm:$0xf] %vm2955, %v2860
      %2957 = vst.msk [vmem:[#allocation3 + $0x4] sm:$0xf] %vm2955, %v2862
      %2958 = vst.msk [vmem:[#allocation3 + $0x8] sm:$0xf] %vm2955, %v2864
      %2959 = vst.msk [vmem:[#allocation3 + $0xc] sm:$0xf] %vm2955, %v2866
      %2960 = vst.msk [vmem:[#allocation3 + $0x10] sm:$0xf] %vm2955, %v2868
      %2961 = vst.msk [vmem:[#allocation3 + $0x14] sm:$0xf] %vm2955, %v2870
      %2962 = vst.msk [vmem:[#allocation3 + $0x18] sm:$0xf] %vm2955, %v2872
      %2963 = vst.msk [vmem:[#allocation3 + $0x1c] sm:$0xf] %vm2955, %v2874
      %2964 = vst.msk [vmem:[#allocation3 + $0x20] sm:$0xf] %vm2955, %v2876
      %2965 = vst.msk [vmem:[#allocation3 + $0x24] sm:$0xf] %vm2955, %v2878
      %2966 = vst.msk [vmem:[#allocation3 + $0x28] sm:$0xf] %vm2955, %v2880
      %2967 = vst.msk [vmem:[#allocation3 + $0x2c] sm:$0xf] %vm2955, %v2882
      %2968 = vst.msk [vmem:[#allocation3 + $0x30] sm:$0xf] %vm2955, %v2884
      %2969 = vst.msk [vmem:[#allocation3 + $0x34] sm:$0xf] %vm2955, %v2886
      %2970 = vst.msk [vmem:[#allocation3 + $0x38] sm:$0xf] %vm2955, %v2888
      %2971 = vst.msk [vmem:[#allocation3 + $0x3c] sm:$0xf] %vm2955, %v2890
      %2972 = vst.msk [vmem:[#allocation3 + $0x40] sm:$0xf] %vm2955, %v2892
      %2973 = vst.msk [vmem:[#allocation3 + $0x44] sm:$0xf] %vm2955, %v2894
      %2974 = vst.msk [vmem:[#allocation3 + $0x48] sm:$0xf] %vm2955, %v2896
      %2975 = vst.msk [vmem:[#allocation3 + $0x4c] sm:$0xf] %vm2955, %v2898
      %2976 = vst.msk [vmem:[#allocation3 + $0x50] sm:$0xf] %vm2955, %v2900
      %2977 = vst.msk [vmem:[#allocation3 + $0x54] sm:$0xf] %vm2955, %v2902
      %2978 = vst.msk [vmem:[#allocation3 + $0x58] sm:$0xf] %vm2955, %v2904
      %2979 = vst.msk [vmem:[#allocation3 + $0x5c] sm:$0xf] %vm2955, %v2906
      %2980 = vst.msk [vmem:[#allocation3 + $0x60] sm:$0xf] %vm2955, %v2908
      %2981 = vst.msk [vmem:[#allocation3 + $0x64] sm:$0xf] %vm2955, %v2910
      %2982 = vst.msk [vmem:[#allocation3 + $0x68] sm:$0xf] %vm2955, %v2912
      %2983 = vst.msk [vmem:[#allocation3 + $0x6c] sm:$0xf] %vm2955, %v2914
      %2984 = vst.msk [vmem:[#allocation3 + $0x70] sm:$0xf] %vm2955, %v2916
      %2985 = vst.msk [vmem:[#allocation3 + $0x74] sm:$0xf] %vm2955, %v2918
      %2986 = vst.msk [vmem:[#allocation3 + $0x78] sm:$0xf] %vm2955, %v2920
      %2987 = vst.msk [vmem:[#allocation3 + $0x7c] sm:$0xf] %vm2955, %v2922
      %s2988 = scalar_lea.vmem [#allocation2], 24
      %v2989 = vld [vmem:[%s2988] sm:$0xf]
      %v2990 = vld [vmem:[%s2988 + $0x4] sm:$0xf]
      %v2991 = vld [vmem:[%s2988 + $0xc] sm:$0xf]
      %v2992 = vld [vmem:[%s2988 + $0x10] sm:$0xf]
      %v2993 = vld [vmem:[%s2988 + $0x18] sm:$0xf]
      %v2994 = vld [vmem:[%s2988 + $0x1c] sm:$0xf]
      %v2995 = vld [vmem:[%s2988 + $0x24] sm:$0xf]
      %v2996 = vld [vmem:[%s2988 + $0x28] sm:$0xf]
      %v2997 = vld [vmem:[%s2988 + $0x30] sm:$0xf]
      %v2998 = vld [vmem:[%s2988 + $0x34] sm:$0xf]
      %v2999 = vld [vmem:[%s2988 + $0x3c] sm:$0xf]
      %v3000 = vld [vmem:[%s2988 + $0x40] sm:$0xf]
      %v3001 = vld [vmem:[%s2988 + $0x48] sm:$0xf]
      %v3002 = vld [vmem:[%s2988 + $0x4c] sm:$0xf]
      %v3003 = vld [vmem:[%s2988 + $0x54] sm:$0xf]
      %v3004 = vld [vmem:[%s2988 + $0x58] sm:$0xf]
      %v3005 = vld [vmem:[%s2988 + $0x60] sm:$0xf]
      %v3006 = vld [vmem:[%s2988 + $0x64] sm:$0xf]
      %v3007 = vld [vmem:[%s2988 + $0x6c] sm:$0xf]
      %v3008 = vld [vmem:[%s2988 + $0x70] sm:$0xf]
      %v3009 = vld [vmem:[%s2988 + $0x78] sm:$0xf]
      %v3010 = vld [vmem:[%s2988 + $0x7c] sm:$0xf]
      %v3011 = vld [vmem:[%s2988 + $0x84] sm:$0xf]
      %v3012 = vld [vmem:[%s2988 + $0x88] sm:$0xf]
      %v3013 = vld [vmem:[%s2988 + $0x90] sm:$0xf]
      %v3014 = vld [vmem:[%s2988 + $0x94] sm:$0xf]
      %v3015 = vld [vmem:[%s2988 + $0x9c] sm:$0xf]
      %v3016 = vld [vmem:[%s2988 + $0xa0] sm:$0xf]
      %v3017 = vld [vmem:[%s2988 + $0xa8] sm:$0xf]
      %v3018 = vld [vmem:[%s2988 + $0xac] sm:$0xf]
      %v3019 = vld [vmem:[%s2988 + $0xb4] sm:$0xf]
      %v3020 = vld [vmem:[%s2988 + $0xb8] sm:$0xf]
      %3053 = vrot.lane.b32.xlu0 %v2989, 48
      %v3054 = vpop.permute.xlu0 %3053
      %3055 = vrot.lane.b32.xlu0 %v2990, 48
      %v3056 = vpop.permute.xlu0 %3055
      %3057 = vrot.lane.b32.xlu0 %v2991, 48
      %v3058 = vpop.permute.xlu0 %3057
      %3059 = vrot.lane.b32.xlu0 %v2992, 48
      %v3060 = vpop.permute.xlu0 %3059
      %3061 = vrot.lane.b32.xlu0 %v2993, 48
      %v3062 = vpop.permute.xlu0 %3061
      %3063 = vrot.lane.b32.xlu0 %v2994, 48
      %v3064 = vpop.permute.xlu0 %3063
      %3065 = vrot.lane.b32.xlu0 %v2995, 48
      %v3066 = vpop.permute.xlu0 %3065
      %3067 = vrot.lane.b32.xlu0 %v2996, 48
      %v3068 = vpop.permute.xlu0 %3067
      %3069 = vrot.lane.b32.xlu0 %v2997, 48
      %v3070 = vpop.permute.xlu0 %3069
      %3071 = vrot.lane.b32.xlu0 %v2998, 48
      %v3072 = vpop.permute.xlu0 %3071
      %3073 = vrot.lane.b32.xlu0 %v2999, 48
      %v3074 = vpop.permute.xlu0 %3073
      %3075 = vrot.lane.b32.xlu0 %v3000, 48
      %v3076 = vpop.permute.xlu0 %3075
      %3077 = vrot.lane.b32.xlu0 %v3001, 48
      %v3078 = vpop.permute.xlu0 %3077
      %3079 = vrot.lane.b32.xlu0 %v3002, 48
      %v3080 = vpop.permute.xlu0 %3079
      %3081 = vrot.lane.b32.xlu0 %v3003, 48
      %v3082 = vpop.permute.xlu0 %3081
      %3083 = vrot.lane.b32.xlu0 %v3004, 48
      %v3084 = vpop.permute.xlu0 %3083
      %3085 = vrot.lane.b32.xlu0 %v3005, 48
      %v3086 = vpop.permute.xlu0 %3085
      %3087 = vrot.lane.b32.xlu0 %v3006, 48
      %v3088 = vpop.permute.xlu0 %3087
      %3089 = vrot.lane.b32.xlu0 %v3007, 48
      %v3090 = vpop.permute.xlu0 %3089
      %3091 = vrot.lane.b32.xlu0 %v3008, 48
      %v3092 = vpop.permute.xlu0 %3091
      %3093 = vrot.lane.b32.xlu0 %v3009, 48
      %v3094 = vpop.permute.xlu0 %3093
      %3095 = vrot.lane.b32.xlu0 %v3010, 48
      %v3096 = vpop.permute.xlu0 %3095
      %3097 = vrot.lane.b32.xlu0 %v3011, 48
      %v3098 = vpop.permute.xlu0 %3097
      %3099 = vrot.lane.b32.xlu0 %v3012, 48
      %v3100 = vpop.permute.xlu0 %3099
      %3101 = vrot.lane.b32.xlu0 %v3013, 48
      %v3102 = vpop.permute.xlu0 %3101
      %3103 = vrot.lane.b32.xlu0 %v3014, 48
      %v3104 = vpop.permute.xlu0 %3103
      %3105 = vrot.lane.b32.xlu0 %v3015, 48
      %v3106 = vpop.permute.xlu0 %3105
      %3107 = vrot.lane.b32.xlu0 %v3016, 48
      %v3108 = vpop.permute.xlu0 %3107
      %3109 = vrot.lane.b32.xlu0 %v3017, 48
      %v3110 = vpop.permute.xlu0 %3109
      %3111 = vrot.lane.b32.xlu0 %v3018, 48
      %v3112 = vpop.permute.xlu0 %3111
      %3113 = vrot.lane.b32.xlu0 %v3019, 48
      %v3114 = vpop.permute.xlu0 %3113
      %3115 = vrot.lane.b32.xlu0 %v3020, 48
      %v3116 = vpop.permute.xlu0 %3115
      %vm3149 = vcmask 454016
      %3150 = vst.msk [vmem:[#allocation3] sm:$0xf] %vm3149, %v3054
      %3151 = vst.msk [vmem:[#allocation3 + $0x4] sm:$0xf] %vm3149, %v3056
      %3152 = vst.msk [vmem:[#allocation3 + $0x8] sm:$0xf] %vm3149, %v3058
      %3153 = vst.msk [vmem:[#allocation3 + $0xc] sm:$0xf] %vm3149, %v3060
      %3154 = vst.msk [vmem:[#allocation3 + $0x10] sm:$0xf] %vm3149, %v3062
      %3155 = vst.msk [vmem:[#allocation3 + $0x14] sm:$0xf] %vm3149, %v3064
      %3156 = vst.msk [vmem:[#allocation3 + $0x18] sm:$0xf] %vm3149, %v3066
      %3157 = vst.msk [vmem:[#allocation3 + $0x1c] sm:$0xf] %vm3149, %v3068
      %3158 = vst.msk [vmem:[#allocation3 + $0x20] sm:$0xf] %vm3149, %v3070
      %3159 = vst.msk [vmem:[#allocation3 + $0x24] sm:$0xf] %vm3149, %v3072
      %3160 = vst.msk [vmem:[#allocation3 + $0x28] sm:$0xf] %vm3149, %v3074
      %3161 = vst.msk [vmem:[#allocation3 + $0x2c] sm:$0xf] %vm3149, %v3076
      %3162 = vst.msk [vmem:[#allocation3 + $0x30] sm:$0xf] %vm3149, %v3078
      %3163 = vst.msk [vmem:[#allocation3 + $0x34] sm:$0xf] %vm3149, %v3080
      %3164 = vst.msk [vmem:[#allocation3 + $0x38] sm:$0xf] %vm3149, %v3082
      %3165 = vst.msk [vmem:[#allocation3 + $0x3c] sm:$0xf] %vm3149, %v3084
      %3166 = vst.msk [vmem:[#allocation3 + $0x40] sm:$0xf] %vm3149, %v3086
      %3167 = vst.msk [vmem:[#allocation3 + $0x44] sm:$0xf] %vm3149, %v3088
      %3168 = vst.msk [vmem:[#allocation3 + $0x48] sm:$0xf] %vm3149, %v3090
      %3169 = vst.msk [vmem:[#allocation3 + $0x4c] sm:$0xf] %vm3149, %v3092
      %3170 = vst.msk [vmem:[#allocation3 + $0x50] sm:$0xf] %vm3149, %v3094
      %3171 = vst.msk [vmem:[#allocation3 + $0x54] sm:$0xf] %vm3149, %v3096
      %3172 = vst.msk [vmem:[#allocation3 + $0x58] sm:$0xf] %vm3149, %v3098
      %3173 = vst.msk [vmem:[#allocation3 + $0x5c] sm:$0xf] %vm3149, %v3100
      %3174 = vst.msk [vmem:[#allocation3 + $0x60] sm:$0xf] %vm3149, %v3102
      %3175 = vst.msk [vmem:[#allocation3 + $0x64] sm:$0xf] %vm3149, %v3104
      %3176 = vst.msk [vmem:[#allocation3 + $0x68] sm:$0xf] %vm3149, %v3106
      %3177 = vst.msk [vmem:[#allocation3 + $0x6c] sm:$0xf] %vm3149, %v3108
      %3178 = vst.msk [vmem:[#allocation3 + $0x70] sm:$0xf] %vm3149, %v3110
      %3179 = vst.msk [vmem:[#allocation3 + $0x74] sm:$0xf] %vm3149, %v3112
      %3180 = vst.msk [vmem:[#allocation3 + $0x78] sm:$0xf] %vm3149, %v3114
      %3181 = vst.msk [vmem:[#allocation3 + $0x7c] sm:$0xf] %vm3149, %v3116
      %v3182 = vld [vmem:[%s2988] sm:$0xf]
      %v3183 = vld [vmem:[%s2988 + $0x4] sm:$0xf]
      %v3184 = vld [vmem:[%s2988 + $0x8] sm:$0x1]
      %v3185 = vld [vmem:[%s2988 + $0xc] sm:$0xf]
      %v3186 = vld [vmem:[%s2988 + $0x10] sm:$0xf]
      %v3187 = vld [vmem:[%s2988 + $0x14] sm:$0x1]
      %v3188 = vld [vmem:[%s2988 + $0x18] sm:$0xf]
      %v3189 = vld [vmem:[%s2988 + $0x1c] sm:$0xf]
      %v3190 = vld [vmem:[%s2988 + $0x20] sm:$0x1]
      %v3191 = vld [vmem:[%s2988 + $0x24] sm:$0xf]
      %v3192 = vld [vmem:[%s2988 + $0x28] sm:$0xf]
      %v3193 = vld [vmem:[%s2988 + $0x2c] sm:$0x1]
      %v3194 = vld [vmem:[%s2988 + $0x30] sm:$0xf]
      %v3195 = vld [vmem:[%s2988 + $0x34] sm:$0xf]
      %v3196 = vld [vmem:[%s2988 + $0x38] sm:$0x1]
      %v3197 = vld [vmem:[%s2988 + $0x3c] sm:$0xf]
      %v3198 = vld [vmem:[%s2988 + $0x40] sm:$0xf]
      %v3199 = vld [vmem:[%s2988 + $0x44] sm:$0x1]
      %v3200 = vld [vmem:[%s2988 + $0x48] sm:$0xf]
      %v3201 = vld [vmem:[%s2988 + $0x4c] sm:$0xf]
      %v3202 = vld [vmem:[%s2988 + $0x50] sm:$0x1]
      %v3203 = vld [vmem:[%s2988 + $0x54] sm:$0xf]
      %v3204 = vld [vmem:[%s2988 + $0x58] sm:$0xf]
      %v3205 = vld [vmem:[%s2988 + $0x5c] sm:$0x1]
      %v3206 = vld [vmem:[%s2988 + $0x60] sm:$0xf]
      %v3207 = vld [vmem:[%s2988 + $0x64] sm:$0xf]
      %v3208 = vld [vmem:[%s2988 + $0x68] sm:$0x1]
      %v3209 = vld [vmem:[%s2988 + $0x6c] sm:$0xf]
      %v3210 = vld [vmem:[%s2988 + $0x70] sm:$0xf]
      %v3211 = vld [vmem:[%s2988 + $0x74] sm:$0x1]
      %v3212 = vld [vmem:[%s2988 + $0x78] sm:$0xf]
      %v3213 = vld [vmem:[%s2988 + $0x7c] sm:$0xf]
      %v3214 = vld [vmem:[%s2988 + $0x80] sm:$0x1]
      %v3215 = vld [vmem:[%s2988 + $0x84] sm:$0xf]
      %v3216 = vld [vmem:[%s2988 + $0x88] sm:$0xf]
      %v3217 = vld [vmem:[%s2988 + $0x8c] sm:$0x1]
      %v3218 = vld [vmem:[%s2988 + $0x90] sm:$0xf]
      %v3219 = vld [vmem:[%s2988 + $0x94] sm:$0xf]
      %v3220 = vld [vmem:[%s2988 + $0x98] sm:$0x1]
      %v3221 = vld [vmem:[%s2988 + $0x9c] sm:$0xf]
      %v3222 = vld [vmem:[%s2988 + $0xa0] sm:$0xf]
      %v3223 = vld [vmem:[%s2988 + $0xa4] sm:$0x1]
      %v3224 = vld [vmem:[%s2988 + $0xa8] sm:$0xf]
      %v3225 = vld [vmem:[%s2988 + $0xac] sm:$0xf]
      %v3226 = vld [vmem:[%s2988 + $0xb0] sm:$0x1]
      %v3227 = vld [vmem:[%s2988 + $0xb4] sm:$0xf]
      %v3228 = vld [vmem:[%s2988 + $0xb8] sm:$0xf]
      %v3229 = vld [vmem:[%s2988 + $0xbc] sm:$0x1]
      %v3231 = vshrl.u32 %v3182, 16
      %v3233 = vrot.slane %v3231, 4
      %v3234 = vshll.u32 %v3182, 16
      %v3236 = vrot.slane %v3234, 5
      %v3237 = vor.u32 %v3233, %v3236
      %v3238 = vrot.slane %v3237, 4
      %v3240 = vshll.u32 %v3183, 16
      %v3242 = vrot.slane %v3240, 5
      %v3243 = vsel %vm1043, %v3238, %v3242
      %v3244 = vshrl.u32 %v3183, 16
      %v3246 = vrot.slane %v3244, 4
      %v3247 = vor.u32 %v3246, %v3242
      %v3248 = vrot.slane %v3247, 4
      %v3250 = vshll.u32 %v3184, 16
      %v3252 = vrot.slane %v3250, 5
      %v3253 = vsel %vm1043, %v3248, %v3252
      %v3255 = vshrl.u32 %v3185, 16
      %v3257 = vrot.slane %v3255, 4
      %v3258 = vshll.u32 %v3185, 16
      %v3260 = vrot.slane %v3258, 5
      %v3261 = vor.u32 %v3257, %v3260
      %v3262 = vrot.slane %v3261, 4
      %v3264 = vshll.u32 %v3186, 16
      %v3266 = vrot.slane %v3264, 5
      %v3267 = vsel %vm1043, %v3262, %v3266
      %v3268 = vshrl.u32 %v3186, 16
      %v3270 = vrot.slane %v3268, 4
      %v3271 = vor.u32 %v3270, %v3266
      %v3272 = vrot.slane %v3271, 4
      %v3274 = vshll.u32 %v3187, 16
      %v3276 = vrot.slane %v3274, 5
      %v3277 = vsel %vm1043, %v3272, %v3276
      %v3279 = vshrl.u32 %v3188, 16
      %v3281 = vrot.slane %v3279, 4
      %v3282 = vshll.u32 %v3188, 16
      %v3284 = vrot.slane %v3282, 5
      %v3285 = vor.u32 %v3281, %v3284
      %v3286 = vrot.slane %v3285, 4
      %v3288 = vshll.u32 %v3189, 16
      %v3290 = vrot.slane %v3288, 5
      %v3291 = vsel %vm1043, %v3286, %v3290
      %v3292 = vshrl.u32 %v3189, 16
      %v3294 = vrot.slane %v3292, 4
      %v3295 = vor.u32 %v3294, %v3290
      %v3296 = vrot.slane %v3295, 4
      %v3298 = vshll.u32 %v3190, 16
      %v3300 = vrot.slane %v3298, 5
      %v3301 = vsel %vm1043, %v3296, %v3300
      %v3303 = vshrl.u32 %v3191, 16
      %v3305 = vrot.slane %v3303, 4
      %v3306 = vshll.u32 %v3191, 16
      %v3308 = vrot.slane %v3306, 5
      %v3309 = vor.u32 %v3305, %v3308
      %v3310 = vrot.slane %v3309, 4
      %v3312 = vshll.u32 %v3192, 16
      %v3314 = vrot.slane %v3312, 5
      %v3315 = vsel %vm1043, %v3310, %v3314
      %v3316 = vshrl.u32 %v3192, 16
      %v3318 = vrot.slane %v3316, 4
      %v3319 = vor.u32 %v3318, %v3314
      %v3320 = vrot.slane %v3319, 4
      %v3322 = vshll.u32 %v3193, 16
      %v3324 = vrot.slane %v3322, 5
      %v3325 = vsel %vm1043, %v3320, %v3324
      %v3327 = vshrl.u32 %v3194, 16
      %v3329 = vrot.slane %v3327, 4
      %v3330 = vshll.u32 %v3194, 16
      %v3332 = vrot.slane %v3330, 5
      %v3333 = vor.u32 %v3329, %v3332
      %v3334 = vrot.slane %v3333, 4
      %v3336 = vshll.u32 %v3195, 16
      %v3338 = vrot.slane %v3336, 5
      %v3339 = vsel %vm1043, %v3334, %v3338
      %v3340 = vshrl.u32 %v3195, 16
      %v3342 = vrot.slane %v3340, 4
      %v3343 = vor.u32 %v3342, %v3338
      %v3344 = vrot.slane %v3343, 4
      %v3346 = vshll.u32 %v3196, 16
      %v3348 = vrot.slane %v3346, 5
      %v3349 = vsel %vm1043, %v3344, %v3348
      %v3351 = vshrl.u32 %v3197, 16
      %v3353 = vrot.slane %v3351, 4
      %v3354 = vshll.u32 %v3197, 16
      %v3356 = vrot.slane %v3354, 5
      %v3357 = vor.u32 %v3353, %v3356
      %v3358 = vrot.slane %v3357, 4
      %v3360 = vshll.u32 %v3198, 16
      %v3362 = vrot.slane %v3360, 5
      %v3363 = vsel %vm1043, %v3358, %v3362
      %v3364 = vshrl.u32 %v3198, 16
      %v3366 = vrot.slane %v3364, 4
      %v3367 = vor.u32 %v3366, %v3362
      %v3368 = vrot.slane %v3367, 4
      %v3370 = vshll.u32 %v3199, 16
      %v3372 = vrot.slane %v3370, 5
      %v3373 = vsel %vm1043, %v3368, %v3372
      %v3375 = vshrl.u32 %v3200, 16
      %v3377 = vrot.slane %v3375, 4
      %v3378 = vshll.u32 %v3200, 16
      %v3380 = vrot.slane %v3378, 5
      %v3381 = vor.u32 %v3377, %v3380
      %v3382 = vrot.slane %v3381, 4
      %v3384 = vshll.u32 %v3201, 16
      %v3386 = vrot.slane %v3384, 5
      %v3387 = vsel %vm1043, %v3382, %v3386
      %v3388 = vshrl.u32 %v3201, 16
      %v3390 = vrot.slane %v3388, 4
      %v3391 = vor.u32 %v3390, %v3386
      %v3392 = vrot.slane %v3391, 4
      %v3394 = vshll.u32 %v3202, 16
      %v3396 = vrot.slane %v3394, 5
      %v3397 = vsel %vm1043, %v3392, %v3396
      %v3399 = vshrl.u32 %v3203, 16
      %v3401 = vrot.slane %v3399, 4
      %v3402 = vshll.u32 %v3203, 16
      %v3404 = vrot.slane %v3402, 5
      %v3405 = vor.u32 %v3401, %v3404
      %v3406 = vrot.slane %v3405, 4
      %v3408 = vshll.u32 %v3204, 16
      %v3410 = vrot.slane %v3408, 5
      %v3411 = vsel %vm1043, %v3406, %v3410
      %v3412 = vshrl.u32 %v3204, 16
      %v3414 = vrot.slane %v3412, 4
      %v3415 = vor.u32 %v3414, %v3410
      %v3416 = vrot.slane %v3415, 4
      %v3418 = vshll.u32 %v3205, 16
      %v3420 = vrot.slane %v3418, 5
      %v3421 = vsel %vm1043, %v3416, %v3420
      %v3423 = vshrl.u32 %v3206, 16
      %v3425 = vrot.slane %v3423, 4
      %v3426 = vshll.u32 %v3206, 16
      %v3428 = vrot.slane %v3426, 5
      %v3429 = vor.u32 %v3425, %v3428
      %v3430 = vrot.slane %v3429, 4
      %v3432 = vshll.u32 %v3207, 16
      %v3434 = vrot.slane %v3432, 5
      %v3435 = vsel %vm1043, %v3430, %v3434
      %v3436 = vshrl.u32 %v3207, 16
      %v3438 = vrot.slane %v3436, 4
      %v3439 = vor.u32 %v3438, %v3434
      %v3440 = vrot.slane %v3439, 4
      %v3442 = vshll.u32 %v3208, 16
      %v3444 = vrot.slane %v3442, 5
      %v3445 = vsel %vm1043, %v3440, %v3444
      %v3447 = vshrl.u32 %v3209, 16
      %v3449 = vrot.slane %v3447, 4
      %v3450 = vshll.u32 %v3209, 16
      %v3452 = vrot.slane %v3450, 5
      %v3453 = vor.u32 %v3449, %v3452
      %v3454 = vrot.slane %v3453, 4
      %v3456 = vshll.u32 %v3210, 16
      %v3458 = vrot.slane %v3456, 5
      %v3459 = vsel %vm1043, %v3454, %v3458
      %v3460 = vshrl.u32 %v3210, 16
      %v3462 = vrot.slane %v3460, 4
      %v3463 = vor.u32 %v3462, %v3458
      %v3464 = vrot.slane %v3463, 4
      %v3466 = vshll.u32 %v3211, 16
      %v3468 = vrot.slane %v3466, 5
      %v3469 = vsel %vm1043, %v3464, %v3468
      %v3471 = vshrl.u32 %v3212, 16
      %v3473 = vrot.slane %v3471, 4
      %v3474 = vshll.u32 %v3212, 16
      %v3476 = vrot.slane %v3474, 5
      %v3477 = vor.u32 %v3473, %v3476
      %v3478 = vrot.slane %v3477, 4
      %v3480 = vshll.u32 %v3213, 16
      %v3482 = vrot.slane %v3480, 5
      %v3483 = vsel %vm1043, %v3478, %v3482
      %v3484 = vshrl.u32 %v3213, 16
      %v3486 = vrot.slane %v3484, 4
      %v3487 = vor.u32 %v3486, %v3482
      %v3488 = vrot.slane %v3487, 4
      %v3490 = vshll.u32 %v3214, 16
      %v3492 = vrot.slane %v3490, 5
      %v3493 = vsel %vm1043, %v3488, %v3492
      %v3495 = vshrl.u32 %v3215, 16
      %v3497 = vrot.slane %v3495, 4
      %v3498 = vshll.u32 %v3215, 16
      %v3500 = vrot.slane %v3498, 5
      %v3501 = vor.u32 %v3497, %v3500
      %v3502 = vrot.slane %v3501, 4
      %v3504 = vshll.u32 %v3216, 16
      %v3506 = vrot.slane %v3504, 5
      %v3507 = vsel %vm1043, %v3502, %v3506
      %v3508 = vshrl.u32 %v3216, 16
      %v3510 = vrot.slane %v3508, 4
      %v3511 = vor.u32 %v3510, %v3506
      %v3512 = vrot.slane %v3511, 4
      %v3514 = vshll.u32 %v3217, 16
      %v3516 = vrot.slane %v3514, 5
      %v3517 = vsel %vm1043, %v3512, %v3516
      %v3519 = vshrl.u32 %v3218, 16
      %v3521 = vrot.slane %v3519, 4
      %v3522 = vshll.u32 %v3218, 16
      %v3524 = vrot.slane %v3522, 5
      %v3525 = vor.u32 %v3521, %v3524
      %v3526 = vrot.slane %v3525, 4
      %v3528 = vshll.u32 %v3219, 16
      %v3530 = vrot.slane %v3528, 5
      %v3531 = vsel %vm1043, %v3526, %v3530
      %v3532 = vshrl.u32 %v3219, 16
      %v3534 = vrot.slane %v3532, 4
      %v3535 = vor.u32 %v3534, %v3530
      %v3536 = vrot.slane %v3535, 4
      %v3538 = vshll.u32 %v3220, 16
      %v3540 = vrot.slane %v3538, 5
      %v3541 = vsel %vm1043, %v3536, %v3540
      %v3543 = vshrl.u32 %v3221, 16
      %v3545 = vrot.slane %v3543, 4
      %v3546 = vshll.u32 %v3221, 16
      %v3548 = vrot.slane %v3546, 5
      %v3549 = vor.u32 %v3545, %v3548
      %v3550 = vrot.slane %v3549, 4
      %v3552 = vshll.u32 %v3222, 16
      %v3554 = vrot.slane %v3552, 5
      %v3555 = vsel %vm1043, %v3550, %v3554
      %v3556 = vshrl.u32 %v3222, 16
      %v3558 = vrot.slane %v3556, 4
      %v3559 = vor.u32 %v3558, %v3554
      %v3560 = vrot.slane %v3559, 4
      %v3562 = vshll.u32 %v3223, 16
      %v3564 = vrot.slane %v3562, 5
      %v3565 = vsel %vm1043, %v3560, %v3564
      %v3567 = vshrl.u32 %v3224, 16
      %v3569 = vrot.slane %v3567, 4
      %v3570 = vshll.u32 %v3224, 16
      %v3572 = vrot.slane %v3570, 5
      %v3573 = vor.u32 %v3569, %v3572
      %v3574 = vrot.slane %v3573, 4
      %v3576 = vshll.u32 %v3225, 16
      %v3578 = vrot.slane %v3576, 5
      %v3579 = vsel %vm1043, %v3574, %v3578
      %v3580 = vshrl.u32 %v3225, 16
      %v3582 = vrot.slane %v3580, 4
      %v3583 = vor.u32 %v3582, %v3578
      %v3584 = vrot.slane %v3583, 4
      %v3586 = vshll.u32 %v3226, 16
      %v3588 = vrot.slane %v3586, 5
      %v3589 = vsel %vm1043, %v3584, %v3588
      %v3591 = vshrl.u32 %v3227, 16
      %v3593 = vrot.slane %v3591, 4
      %v3594 = vshll.u32 %v3227, 16
      %v3596 = vrot.slane %v3594, 5
      %v3597 = vor.u32 %v3593, %v3596
      %v3598 = vrot.slane %v3597, 4
      %v3600 = vshll.u32 %v3228, 16
      %v3602 = vrot.slane %v3600, 5
      %v3603 = vsel %vm1043, %v3598, %v3602
      %v3604 = vshrl.u32 %v3228, 16
      %v3606 = vrot.slane %v3604, 4
      %v3607 = vor.u32 %v3606, %v3602
      %v3608 = vrot.slane %v3607, 4
      %v3610 = vshll.u32 %v3229, 16
      %v3612 = vrot.slane %v3610, 5
      %v3613 = vsel %vm1043, %v3608, %v3612
      %3614 = vrot.lane.b32.xlu0 %v3243, 56
      %v3615 = vpop.permute.xlu0 %3614
      %3616 = vrot.lane.b32.xlu0 %v3253, 56
      %v3617 = vpop.permute.xlu0 %3616
      %3618 = vrot.lane.b32.xlu0 %v3267, 56
      %v3619 = vpop.permute.xlu0 %3618
      %3620 = vrot.lane.b32.xlu0 %v3277, 56
      %v3621 = vpop.permute.xlu0 %3620
      %3622 = vrot.lane.b32.xlu0 %v3291, 56
      %v3623 = vpop.permute.xlu0 %3622
      %3624 = vrot.lane.b32.xlu0 %v3301, 56
      %v3625 = vpop.permute.xlu0 %3624
      %3626 = vrot.lane.b32.xlu0 %v3315, 56
      %v3627 = vpop.permute.xlu0 %3626
      %3628 = vrot.lane.b32.xlu0 %v3325, 56
      %v3629 = vpop.permute.xlu0 %3628
      %3630 = vrot.lane.b32.xlu0 %v3339, 56
      %v3631 = vpop.permute.xlu0 %3630
      %3632 = vrot.lane.b32.xlu0 %v3349, 56
      %v3633 = vpop.permute.xlu0 %3632
      %3634 = vrot.lane.b32.xlu0 %v3363, 56
      %v3635 = vpop.permute.xlu0 %3634
      %3636 = vrot.lane.b32.xlu0 %v3373, 56
      %v3637 = vpop.permute.xlu0 %3636
      %3638 = vrot.lane.b32.xlu0 %v3387, 56
      %v3639 = vpop.permute.xlu0 %3638
      %3640 = vrot.lane.b32.xlu0 %v3397, 56
      %v3641 = vpop.permute.xlu0 %3640
      %3642 = vrot.lane.b32.xlu0 %v3411, 56
      %v3643 = vpop.permute.xlu0 %3642
      %3644 = vrot.lane.b32.xlu0 %v3421, 56
      %v3645 = vpop.permute.xlu0 %3644
      %3646 = vrot.lane.b32.xlu0 %v3435, 56
      %v3647 = vpop.permute.xlu0 %3646
      %3648 = vrot.lane.b32.xlu0 %v3445, 56
      %v3649 = vpop.permute.xlu0 %3648
      %3650 = vrot.lane.b32.xlu0 %v3459, 56
      %v3651 = vpop.permute.xlu0 %3650
      %3652 = vrot.lane.b32.xlu0 %v3469, 56
      %v3653 = vpop.permute.xlu0 %3652
      %3654 = vrot.lane.b32.xlu0 %v3483, 56
      %v3655 = vpop.permute.xlu0 %3654
      %3656 = vrot.lane.b32.xlu0 %v3493, 56
      %v3657 = vpop.permute.xlu0 %3656
      %3658 = vrot.lane.b32.xlu0 %v3507, 56
      %v3659 = vpop.permute.xlu0 %3658
      %3660 = vrot.lane.b32.xlu0 %v3517, 56
      %v3661 = vpop.permute.xlu0 %3660
      %3662 = vrot.lane.b32.xlu0 %v3531, 56
      %v3663 = vpop.permute.xlu0 %3662
      %3664 = vrot.lane.b32.xlu0 %v3541, 56
      %v3665 = vpop.permute.xlu0 %3664
      %3666 = vrot.lane.b32.xlu0 %v3555, 56
      %v3667 = vpop.permute.xlu0 %3666
      %3668 = vrot.lane.b32.xlu0 %v3565, 56
      %v3669 = vpop.permute.xlu0 %3668
      %3670 = vrot.lane.b32.xlu0 %v3579, 56
      %v3671 = vpop.permute.xlu0 %3670
      %3672 = vrot.lane.b32.xlu0 %v3589, 56
      %v3673 = vpop.permute.xlu0 %3672
      %3674 = vrot.lane.b32.xlu0 %v3603, 56
      %v3675 = vpop.permute.xlu0 %3674
      %3676 = vrot.lane.b32.xlu0 %v3613, 56
      %v3677 = vpop.permute.xlu0 %3676
      %vm3710 = vcmask 519616
      %3711 = vst.msk [vmem:[#allocation3] sm:$0xf] %vm3710, %v3615
      %3712 = vst.msk [vmem:[#allocation3 + $0x4] sm:$0xf] %vm3710, %v3617
      %3713 = vst.msk [vmem:[#allocation3 + $0x8] sm:$0xf] %vm3710, %v3619
      %3714 = vst.msk [vmem:[#allocation3 + $0xc] sm:$0xf] %vm3710, %v3621
      %3715 = vst.msk [vmem:[#allocation3 + $0x10] sm:$0xf] %vm3710, %v3623
      %3716 = vst.msk [vmem:[#allocation3 + $0x14] sm:$0xf] %vm3710, %v3625
      %3717 = vst.msk [vmem:[#allocation3 + $0x18] sm:$0xf] %vm3710, %v3627
      %3718 = vst.msk [vmem:[#allocation3 + $0x1c] sm:$0xf] %vm3710, %v3629
      %3719 = vst.msk [vmem:[#allocation3 + $0x20] sm:$0xf] %vm3710, %v3631
      %3720 = vst.msk [vmem:[#allocation3 + $0x24] sm:$0xf] %vm3710, %v3633
      %3721 = vst.msk [vmem:[#allocation3 + $0x28] sm:$0xf] %vm3710, %v3635
      %3722 = vst.msk [vmem:[#allocation3 + $0x2c] sm:$0xf] %vm3710, %v3637
      %3723 = vst.msk [vmem:[#allocation3 + $0x30] sm:$0xf] %vm3710, %v3639
      %3724 = vst.msk [vmem:[#allocation3 + $0x34] sm:$0xf] %vm3710, %v3641
      %3725 = vst.msk [vmem:[#allocation3 + $0x38] sm:$0xf] %vm3710, %v3643
      %3726 = vst.msk [vmem:[#allocation3 + $0x3c] sm:$0xf] %vm3710, %v3645
      %3727 = vst.msk [vmem:[#allocation3 + $0x40] sm:$0xf] %vm3710, %v3647
      %3728 = vst.msk [vmem:[#allocation3 + $0x44] sm:$0xf] %vm3710, %v3649
      %3729 = vst.msk [vmem:[#allocation3 + $0x48] sm:$0xf] %vm3710, %v3651
      %3730 = vst.msk [vmem:[#allocation3 + $0x4c] sm:$0xf] %vm3710, %v3653
      %3731 = vst.msk [vmem:[#allocation3 + $0x50] sm:$0xf] %vm3710, %v3655
      %3732 = vst.msk [vmem:[#allocation3 + $0x54] sm:$0xf] %vm3710, %v3657
      %3733 = vst.msk [vmem:[#allocation3 + $0x58] sm:$0xf] %vm3710, %v3659
      %3734 = vst.msk [vmem:[#allocation3 + $0x5c] sm:$0xf] %vm3710, %v3661
      %3735 = vst.msk [vmem:[#allocation3 + $0x60] sm:$0xf] %vm3710, %v3663
      %3736 = vst.msk [vmem:[#allocation3 + $0x64] sm:$0xf] %vm3710, %v3665
      %3737 = vst.msk [vmem:[#allocation3 + $0x68] sm:$0xf] %vm3710, %v3667
      %3738 = vst.msk [vmem:[#allocation3 + $0x6c] sm:$0xf] %vm3710, %v3669
      %3739 = vst.msk [vmem:[#allocation3 + $0x70] sm:$0xf] %vm3710, %v3671
      %3740 = vst.msk [vmem:[#allocation3 + $0x74] sm:$0xf] %vm3710, %v3673
      %3741 = vst.msk [vmem:[#allocation3 + $0x78] sm:$0xf] %vm3710, %v3675
      %3742 = vst.msk [vmem:[#allocation3 + $0x7c] sm:$0xf] %vm3710, %v3677
      %v3743 = vld [vmem:[%s2988] sm:$0xe]
      %v3744 = vld [vmem:[%s2988 + $0x4] sm:$0xf]
      %v3745 = vld [vmem:[%s2988 + $0x8] sm:$0x1]
      %v3746 = vld [vmem:[%s2988 + $0xc] sm:$0xe]
      %v3747 = vld [vmem:[%s2988 + $0x10] sm:$0xf]
      %v3748 = vld [vmem:[%s2988 + $0x14] sm:$0x1]
      %v3749 = vld [vmem:[%s2988 + $0x18] sm:$0xe]
      %v3750 = vld [vmem:[%s2988 + $0x1c] sm:$0xf]
      %v3751 = vld [vmem:[%s2988 + $0x20] sm:$0x1]
      %v3752 = vld [vmem:[%s2988 + $0x24] sm:$0xe]
      %v3753 = vld [vmem:[%s2988 + $0x28] sm:$0xf]
      %v3754 = vld [vmem:[%s2988 + $0x2c] sm:$0x1]
      %v3755 = vld [vmem:[%s2988 + $0x30] sm:$0xe]
      %v3756 = vld [vmem:[%s2988 + $0x34] sm:$0xf]
      %v3757 = vld [vmem:[%s2988 + $0x38] sm:$0x1]
      %v3758 = vld [vmem:[%s2988 + $0x3c] sm:$0xe]
      %v3759 = vld [vmem:[%s2988 + $0x40] sm:$0xf]
      %v3760 = vld [vmem:[%s2988 + $0x44] sm:$0x1]
      %v3761 = vld [vmem:[%s2988 + $0x48] sm:$0xe]
      %v3762 = vld [vmem:[%s2988 + $0x4c] sm:$0xf]
      %v3763 = vld [vmem:[%s2988 + $0x50] sm:$0x1]
      %v3764 = vld [vmem:[%s2988 + $0x54] sm:$0xe]
      %v3765 = vld [vmem:[%s2988 + $0x58] sm:$0xf]
      %v3766 = vld [vmem:[%s2988 + $0x5c] sm:$0x1]
      %v3767 = vld [vmem:[%s2988 + $0x60] sm:$0xe]
      %v3768 = vld [vmem:[%s2988 + $0x64] sm:$0xf]
      %v3769 = vld [vmem:[%s2988 + $0x68] sm:$0x1]
      %v3770 = vld [vmem:[%s2988 + $0x6c] sm:$0xe]
      %v3771 = vld [vmem:[%s2988 + $0x70] sm:$0xf]
      %v3772 = vld [vmem:[%s2988 + $0x74] sm:$0x1]
      %v3773 = vld [vmem:[%s2988 + $0x78] sm:$0xe]
      %v3774 = vld [vmem:[%s2988 + $0x7c] sm:$0xf]
      %v3775 = vld [vmem:[%s2988 + $0x80] sm:$0x1]
      %v3776 = vld [vmem:[%s2988 + $0x84] sm:$0xe]
      %v3777 = vld [vmem:[%s2988 + $0x88] sm:$0xf]
      %v3778 = vld [vmem:[%s2988 + $0x8c] sm:$0x1]
      %v3779 = vld [vmem:[%s2988 + $0x90] sm:$0xe]
      %v3780 = vld [vmem:[%s2988 + $0x94] sm:$0xf]
      %v3781 = vld [vmem:[%s2988 + $0x98] sm:$0x1]
      %v3782 = vld [vmem:[%s2988 + $0x9c] sm:$0xe]
      %v3783 = vld [vmem:[%s2988 + $0xa0] sm:$0xf]
      %v3784 = vld [vmem:[%s2988 + $0xa4] sm:$0x1]
      %v3785 = vld [vmem:[%s2988 + $0xa8] sm:$0xe]
      %v3786 = vld [vmem:[%s2988 + $0xac] sm:$0xf]
      %v3787 = vld [vmem:[%s2988 + $0xb0] sm:$0x1]
      %v3788 = vld [vmem:[%s2988 + $0xb4] sm:$0xe]
      %v3789 = vld [vmem:[%s2988 + $0xb8] sm:$0xf]
      %v3790 = vld [vmem:[%s2988 + $0xbc] sm:$0x1]
      %v3839 = vrot.slane %v3743, 5
      %v3840 = vrot.slane %v3839, 4
      %v3841 = vrot.slane %v3744, 5
      %v3842 = vsel %vm1655, %v3840, %v3841
      %v3843 = vrot.slane %v3841, 4
      %v3844 = vrot.slane %v3745, 5
      %v3845 = vsel %vm1655, %v3843, %v3844
      %v3846 = vrot.slane %v3746, 5
      %v3847 = vrot.slane %v3846, 4
      %v3848 = vrot.slane %v3747, 5
      %v3849 = vsel %vm1655, %v3847, %v3848
      %v3850 = vrot.slane %v3848, 4
      %v3851 = vrot.slane %v3748, 5
      %v3852 = vsel %vm1655, %v3850, %v3851
      %v3853 = vrot.slane %v3749, 5
      %v3854 = vrot.slane %v3853, 4
      %v3855 = vrot.slane %v3750, 5
      %v3856 = vsel %vm1655, %v3854, %v3855
      %v3857 = vrot.slane %v3855, 4
      %v3858 = vrot.slane %v3751, 5
      %v3859 = vsel %vm1655, %v3857, %v3858
      %v3860 = vrot.slane %v3752, 5
      %v3861 = vrot.slane %v3860, 4
      %v3862 = vrot.slane %v3753, 5
      %v3863 = vsel %vm1655, %v3861, %v3862
      %v3864 = vrot.slane %v3862, 4
      %v3865 = vrot.slane %v3754, 5
      %v3866 = vsel %vm1655, %v3864, %v3865
      %v3867 = vrot.slane %v3755, 5
      %v3868 = vrot.slane %v3867, 4
      %v3869 = vrot.slane %v3756, 5
      %v3870 = vsel %vm1655, %v3868, %v3869
      %v3871 = vrot.slane %v3869, 4
      %v3872 = vrot.slane %v3757, 5
      %v3873 = vsel %vm1655, %v3871, %v3872
      %v3874 = vrot.slane %v3758, 5
      %v3875 = vrot.slane %v3874, 4
      %v3876 = vrot.slane %v3759, 5
      %v3877 = vsel %vm1655, %v3875, %v3876
      %v3878 = vrot.slane %v3876, 4
      %v3879 = vrot.slane %v3760, 5
      %v3880 = vsel %vm1655, %v3878, %v3879
      %v3881 = vrot.slane %v3761, 5
      %v3882 = vrot.slane %v3881, 4
      %v3883 = vrot.slane %v3762, 5
      %v3884 = vsel %vm1655, %v3882, %v3883
      %v3885 = vrot.slane %v3883, 4
      %v3886 = vrot.slane %v3763, 5
      %v3887 = vsel %vm1655, %v3885, %v3886
      %v3888 = vrot.slane %v3764, 5
      %v3889 = vrot.slane %v3888, 4
      %v3890 = vrot.slane %v3765, 5
      %v3891 = vsel %vm1655, %v3889, %v3890
      %v3892 = vrot.slane %v3890, 4
      %v3893 = vrot.slane %v3766, 5
      %v3894 = vsel %vm1655, %v3892, %v3893
      %v3895 = vrot.slane %v3767, 5
      %v3896 = vrot.slane %v3895, 4
      %v3897 = vrot.slane %v3768, 5
      %v3898 = vsel %vm1655, %v3896, %v3897
      %v3899 = vrot.slane %v3897, 4
      %v3900 = vrot.slane %v3769, 5
      %v3901 = vsel %vm1655, %v3899, %v3900
      %v3902 = vrot.slane %v3770, 5
      %v3903 = vrot.slane %v3902, 4
      %v3904 = vrot.slane %v3771, 5
      %v3905 = vsel %vm1655, %v3903, %v3904
      %v3906 = vrot.slane %v3904, 4
      %v3907 = vrot.slane %v3772, 5
      %v3908 = vsel %vm1655, %v3906, %v3907
      %v3909 = vrot.slane %v3773, 5
      %v3910 = vrot.slane %v3909, 4
      %v3911 = vrot.slane %v3774, 5
      %v3912 = vsel %vm1655, %v3910, %v3911
      %v3913 = vrot.slane %v3911, 4
      %v3914 = vrot.slane %v3775, 5
      %v3915 = vsel %vm1655, %v3913, %v3914
      %v3916 = vrot.slane %v3776, 5
      %v3917 = vrot.slane %v3916, 4
      %v3918 = vrot.slane %v3777, 5
      %v3919 = vsel %vm1655, %v3917, %v3918
      %v3920 = vrot.slane %v3918, 4
      %v3921 = vrot.slane %v3778, 5
      %v3922 = vsel %vm1655, %v3920, %v3921
      %v3923 = vrot.slane %v3779, 5
      %v3924 = vrot.slane %v3923, 4
      %v3925 = vrot.slane %v3780, 5
      %v3926 = vsel %vm1655, %v3924, %v3925
      %v3927 = vrot.slane %v3925, 4
      %v3928 = vrot.slane %v3781, 5
      %v3929 = vsel %vm1655, %v3927, %v3928
      %v3930 = vrot.slane %v3782, 5
      %v3931 = vrot.slane %v3930, 4
      %v3932 = vrot.slane %v3783, 5
      %v3933 = vsel %vm1655, %v3931, %v3932
      %v3934 = vrot.slane %v3932, 4
      %v3935 = vrot.slane %v3784, 5
      %v3936 = vsel %vm1655, %v3934, %v3935
      %v3937 = vrot.slane %v3785, 5
      %v3938 = vrot.slane %v3937, 4
      %v3939 = vrot.slane %v3786, 5
      %v3940 = vsel %vm1655, %v3938, %v3939
      %v3941 = vrot.slane %v3939, 4
      %v3942 = vrot.slane %v3787, 5
      %v3943 = vsel %vm1655, %v3941, %v3942
      %v3944 = vrot.slane %v3788, 5
      %v3945 = vrot.slane %v3944, 4
      %v3946 = vrot.slane %v3789, 5
      %v3947 = vsel %vm1655, %v3945, %v3946
      %v3948 = vrot.slane %v3946, 4
      %v3949 = vrot.slane %v3790, 5
      %v3950 = vsel %vm1655, %v3948, %v3949
      %3951 = vrot.lane.b32.xlu0 %v3842, 64
      %v3952 = vpop.permute.xlu0 %3951
      %3953 = vrot.lane.b32.xlu0 %v3845, 64
      %v3954 = vpop.permute.xlu0 %3953
      %3955 = vrot.lane.b32.xlu0 %v3849, 64
      %v3956 = vpop.permute.xlu0 %3955
      %3957 = vrot.lane.b32.xlu0 %v3852, 64
      %v3958 = vpop.permute.xlu0 %3957
      %3959 = vrot.lane.b32.xlu0 %v3856, 64
      %v3960 = vpop.permute.xlu0 %3959
      %3961 = vrot.lane.b32.xlu0 %v3859, 64
      %v3962 = vpop.permute.xlu0 %3961
      %3963 = vrot.lane.b32.xlu0 %v3863, 64
      %v3964 = vpop.permute.xlu0 %3963
      %3965 = vrot.lane.b32.xlu0 %v3866, 64
      %v3966 = vpop.permute.xlu0 %3965
      %3967 = vrot.lane.b32.xlu0 %v3870, 64
      %v3968 = vpop.permute.xlu0 %3967
      %3969 = vrot.lane.b32.xlu0 %v3873, 64
      %v3970 = vpop.permute.xlu0 %3969
      %3971 = vrot.lane.b32.xlu0 %v3877, 64
      %v3972 = vpop.permute.xlu0 %3971
      %3973 = vrot.lane.b32.xlu0 %v3880, 64
      %v3974 = vpop.permute.xlu0 %3973
      %3975 = vrot.lane.b32.xlu0 %v3884, 64
      %v3976 = vpop.permute.xlu0 %3975
      %3977 = vrot.lane.b32.xlu0 %v3887, 64
      %v3978 = vpop.permute.xlu0 %3977
      %3979 = vrot.lane.b32.xlu0 %v3891, 64
      %v3980 = vpop.permute.xlu0 %3979
      %3981 = vrot.lane.b32.xlu0 %v3894, 64
      %v3982 = vpop.permute.xlu0 %3981
      %3983 = vrot.lane.b32.xlu0 %v3898, 64
      %v3984 = vpop.permute.xlu0 %3983
      %3985 = vrot.lane.b32.xlu0 %v3901, 64
      %v3986 = vpop.permute.xlu0 %3985
      %3987 = vrot.lane.b32.xlu0 %v3905, 64
      %v3988 = vpop.permute.xlu0 %3987
      %3989 = vrot.lane.b32.xlu0 %v3908, 64
      %v3990 = vpop.permute.xlu0 %3989
      %3991 = vrot.lane.b32.xlu0 %v3912, 64
      %v3992 = vpop.permute.xlu0 %3991
      %3993 = vrot.lane.b32.xlu0 %v3915, 64
      %v3994 = vpop.permute.xlu0 %3993
      %3995 = vrot.lane.b32.xlu0 %v3919, 64
      %v3996 = vpop.permute.xlu0 %3995
      %3997 = vrot.lane.b32.xlu0 %v3922, 64
      %v3998 = vpop.permute.xlu0 %3997
      %3999 = vrot.lane.b32.xlu0 %v3926, 64
      %v4000 = vpop.permute.xlu0 %3999
      %4001 = vrot.lane.b32.xlu0 %v3929, 64
      %v4002 = vpop.permute.xlu0 %4001
      %4003 = vrot.lane.b32.xlu0 %v3933, 64
      %v4004 = vpop.permute.xlu0 %4003
      %4005 = vrot.lane.b32.xlu0 %v3936, 64
      %v4006 = vpop.permute.xlu0 %4005
      %4007 = vrot.lane.b32.xlu0 %v3940, 64
      %v4008 = vpop.permute.xlu0 %4007
      %4009 = vrot.lane.b32.xlu0 %v3943, 64
      %v4010 = vpop.permute.xlu0 %4009
      %4011 = vrot.lane.b32.xlu0 %v3947, 64
      %v4012 = vpop.permute.xlu0 %4011
      %4013 = vrot.lane.b32.xlu0 %v3950, 64
      %v4014 = vpop.permute.xlu0 %4013
      %vm4047 = vcmask 585216
      %4048 = vst.msk [vmem:[#allocation3] sm:$0xf] %vm4047, %v3952
      %4049 = vst.msk [vmem:[#allocation3 + $0x4] sm:$0xf] %vm4047, %v3954
      %4050 = vst.msk [vmem:[#allocation3 + $0x8] sm:$0xf] %vm4047, %v3956
      %4051 = vst.msk [vmem:[#allocation3 + $0xc] sm:$0xf] %vm4047, %v3958
      %4052 = vst.msk [vmem:[#allocation3 + $0x10] sm:$0xf] %vm4047, %v3960
      %4053 = vst.msk [vmem:[#allocation3 + $0x14] sm:$0xf] %vm4047, %v3962
      %4054 = vst.msk [vmem:[#allocation3 + $0x18] sm:$0xf] %vm4047, %v3964
      %4055 = vst.msk [vmem:[#allocation3 + $0x1c] sm:$0xf] %vm4047, %v3966
      %4056 = vst.msk [vmem:[#allocation3 + $0x20] sm:$0xf] %vm4047, %v3968
      %4057 = vst.msk [vmem:[#allocation3 + $0x24] sm:$0xf] %vm4047, %v3970
      %4058 = vst.msk [vmem:[#allocation3 + $0x28] sm:$0xf] %vm4047, %v3972
      %4059 = vst.msk [vmem:[#allocation3 + $0x2c] sm:$0xf] %vm4047, %v3974
      %4060 = vst.msk [vmem:[#allocation3 + $0x30] sm:$0xf] %vm4047, %v3976
      %4061 = vst.msk [vmem:[#allocation3 + $0x34] sm:$0xf] %vm4047, %v3978
      %4062 = vst.msk [vmem:[#allocation3 + $0x38] sm:$0xf] %vm4047, %v3980
      %4063 = vst.msk [vmem:[#allocation3 + $0x3c] sm:$0xf] %vm4047, %v3982
      %4064 = vst.msk [vmem:[#allocation3 + $0x40] sm:$0xf] %vm4047, %v3984
      %4065 = vst.msk [vmem:[#allocation3 + $0x44] sm:$0xf] %vm4047, %v3986
      %4066 = vst.msk [vmem:[#allocation3 + $0x48] sm:$0xf] %vm4047, %v3988
      %4067 = vst.msk [vmem:[#allocation3 + $0x4c] sm:$0xf] %vm4047, %v3990
      %4068 = vst.msk [vmem:[#allocation3 + $0x50] sm:$0xf] %vm4047, %v3992
      %4069 = vst.msk [vmem:[#allocation3 + $0x54] sm:$0xf] %vm4047, %v3994
      %4070 = vst.msk [vmem:[#allocation3 + $0x58] sm:$0xf] %vm4047, %v3996
      %4071 = vst.msk [vmem:[#allocation3 + $0x5c] sm:$0xf] %vm4047, %v3998
      %4072 = vst.msk [vmem:[#allocation3 + $0x60] sm:$0xf] %vm4047, %v4000
      %4073 = vst.msk [vmem:[#allocation3 + $0x64] sm:$0xf] %vm4047, %v4002
      %4074 = vst.msk [vmem:[#allocation3 + $0x68] sm:$0xf] %vm4047, %v4004
      %4075 = vst.msk [vmem:[#allocation3 + $0x6c] sm:$0xf] %vm4047, %v4006
      %4076 = vst.msk [vmem:[#allocation3 + $0x70] sm:$0xf] %vm4047, %v4008
      %4077 = vst.msk [vmem:[#allocation3 + $0x74] sm:$0xf] %vm4047, %v4010
      %4078 = vst.msk [vmem:[#allocation3 + $0x78] sm:$0xf] %vm4047, %v4012
      %4079 = vst.msk [vmem:[#allocation3 + $0x7c] sm:$0xf] %vm4047, %v4014
      %v4080 = vld [vmem:[%s3] sm:$0xf]
      %v4081 = vld [vmem:[%s3 + $0x4] sm:$0xf]
      %v4082 = vld [vmem:[%s3 + $0x8] sm:$0xf]
      %v4083 = vld [vmem:[%s3 + $0xc] sm:$0xf]
      %v4084 = vld [vmem:[%s3 + $0x10] sm:$0xf]
      %v4085 = vld [vmem:[%s3 + $0x14] sm:$0xf]
      %v4086 = vld [vmem:[%s3 + $0x18] sm:$0xf]
      %v4087 = vld [vmem:[%s3 + $0x1c] sm:$0xf]
      %v4088 = vld [vmem:[%s3 + $0x20] sm:$0xf]
      %v4089 = vld [vmem:[%s4] sm:$0x1]
      %v4090 = vld [vmem:[#allocation3] sm:$0xf]
      %v4091 = vld [vmem:[#allocation3 + $0x4] sm:$0xf]
      %v4092 = vld [vmem:[#allocation3 + $0x8] sm:$0xf]
      %v4093 = vld [vmem:[#allocation3 + $0xc] sm:$0xf]
      %v4094 = vld [vmem:[#allocation3 + $0x10] sm:$0xf]
      %v4095 = vld [vmem:[#allocation3 + $0x14] sm:$0xf]
      %v4096 = vld [vmem:[#allocation3 + $0x18] sm:$0xf]
      %v4097 = vld [vmem:[#allocation3 + $0x1c] sm:$0xf]
      %v4098 = vld [vmem:[#allocation3 + $0x20] sm:$0xf]
      %v4099 = vld [vmem:[#allocation3 + $0x24] sm:$0xf]
      %v4100 = vld [vmem:[#allocation3 + $0x28] sm:$0xf]
      %v4101 = vld [vmem:[#allocation3 + $0x2c] sm:$0xf]
      %v4102 = vld [vmem:[#allocation3 + $0x30] sm:$0xf]
      %v4103 = vld [vmem:[#allocation3 + $0x34] sm:$0xf]
      %v4104 = vld [vmem:[#allocation3 + $0x38] sm:$0xf]
      %v4105 = vld [vmem:[#allocation3 + $0x3c] sm:$0xf]
      %v4107 = vperm.slane %v4089, 0
      %v4125 = vunpack.c.l.b16 %v4090
      %v4126 = vunpack.c.l.b16 %v4091
      %v4127 = vunpack.c.l.b16 %v4092
      %v4128 = vunpack.c.l.b16 %v4093
      %v4129 = vunpack.c.l.b16 %v4094
      %v4130 = vunpack.c.l.b16 %v4095
      %v4131 = vunpack.c.l.b16 %v4096
      %v4132 = vunpack.c.l.b16 %v4097
      %v4133 = vunpack.c.l.b16 %v4098
      %v4134 = vunpack.c.l.b16 %v4099
      %v4135 = vunpack.c.l.b16 %v4100
      %v4136 = vunpack.c.l.b16 %v4101
      %v4137 = vunpack.c.l.b16 %v4102
      %v4138 = vunpack.c.l.b16 %v4103
      %v4139 = vunpack.c.l.b16 %v4104
      %v4140 = vunpack.c.l.b16 %v4105
      %v4141 = vpack.c.b16 %v4126, %v4125
      %v4142 = vpack.c.b16 %v4128, %v4127
      %v4143 = vpack.c.b16 %v4130, %v4129
      %v4144 = vpack.c.b16 %v4132, %v4131
      %v4145 = vpack.c.b16 %v4134, %v4133
      %v4146 = vpack.c.b16 %v4136, %v4135
      %v4147 = vpack.c.b16 %v4138, %v4137
      %v4148 = vpack.c.b16 %v4140, %v4139
      %v4158 = vunpack.c.l.b16 %v4080
      %v4159 = vunpack.c.l.b16 %v4081
      %v4160 = vunpack.c.l.b16 %v4082
      %v4161 = vunpack.c.l.b16 %v4083
      %v4162 = vunpack.c.l.b16 %v4084
      %v4163 = vunpack.c.l.b16 %v4085
      %v4164 = vunpack.c.l.b16 %v4086
      %v4165 = vunpack.c.l.b16 %v4087
      %v4166 = vunpack.c.l.b16 %v4088
      %v4167 = vpack.c.b16 %v4159, %v4158
      %v4168 = vpack.c.b16 %v4161, %v4160
      %v4169 = vpack.c.b16 %v4163, %v4162
      %v4170 = vpack.c.b16 %v4165, %v4164
      %v4171 = vpack.c.b16 %v4166, %v4166
      %vm4176 = vcmask 588800
      %v4178 = vsel %vm4176, %v4141, 0
      %v4181 = vsel %vm4176, %v4142, 0
      %v4184 = vsel %vm4176, %v4143, 0
      %v4187 = vsel %vm4176, %v4144, 0
      %v4190 = vsel %vm4176, %v4145, 0
      %v4193 = vsel %vm4176, %v4146, 0
      %v4196 = vsel %vm4176, %v4147, 0
      %v4199 = vsel %vm4176, %v4148, 0
      %vm4201 = vcmask 1043456
      %v4203 = vsel %vm4201, %v4171, 0
      %4205 = vmatpush.bf16.msra.mxu0 0
      %4206 = vmatpush.bf16.msra.mxu0 0
      %4207 = vmatpush.bf16.msra.mxu0 0
      %4208 = vmatpush.bf16.msra.mxu0 %v4203
      %4209 = vmatpush.bf16.msra.mxu0 %v4170
      %4210 = vmatpush.bf16.msra.mxu0 %v4169
      %4211 = vmatpush.bf16.msra.mxu0 %v4168
      %4212 = vmatpush.bf16.msra.mxu0 %v4167
      %4213 = vmatmul.bf16.gmra.mxu0 %v4178
      %v4214 = vpop.f32.mrf.mxu0
      %v4215 = vadd.f32 %v4107, %v4214
      %v4216 = vpop.f32.mrf.mxu0
      %v4217 = vadd.f32 %v4107, %v4216
      %4218 = vmatmul.bf16.gmra.mxu0 %v4181
      %v4219 = vpop.f32.mrf.mxu0
      %v4220 = vadd.f32 %v4107, %v4219
      %v4221 = vpop.f32.mrf.mxu0
      %v4222 = vadd.f32 %v4107, %v4221
      %4223 = vmatmul.bf16.gmra.mxu0 %v4184
      %v4224 = vpop.f32.mrf.mxu0
      %v4225 = vadd.f32 %v4107, %v4224
      %v4226 = vpop.f32.mrf.mxu0
      %v4227 = vadd.f32 %v4107, %v4226
      %4228 = vmatmul.bf16.gmra.mxu0 %v4187
      %v4229 = vpop.f32.mrf.mxu0
      %v4230 = vadd.f32 %v4107, %v4229
      %v4231 = vpop.f32.mrf.mxu0
      %v4232 = vadd.f32 %v4107, %v4231
      %4233 = vmatmul.bf16.gmra.mxu0 %v4190
      %v4234 = vpop.f32.mrf.mxu0
      %v4235 = vadd.f32 %v4107, %v4234
      %v4236 = vpop.f32.mrf.mxu0
      %v4237 = vadd.f32 %v4107, %v4236
      %4238 = vmatmul.bf16.gmra.mxu0 %v4193
      %v4239 = vpop.f32.mrf.mxu0
      %v4240 = vadd.f32 %v4107, %v4239
      %v4241 = vpop.f32.mrf.mxu0
      %v4242 = vadd.f32 %v4107, %v4241
      %4243 = vmatmul.bf16.gmra.mxu0 %v4196
      %v4244 = vpop.f32.mrf.mxu0
      %v4245 = vadd.f32 %v4107, %v4244
      %v4246 = vpop.f32.mrf.mxu0
      %v4247 = vadd.f32 %v4107, %v4246
      %4248 = vmatmul.bf16.gmra.mxu0 %v4199
      %v4249 = vpop.f32.mrf.mxu0
      %v4250 = vadd.f32 %v4107, %v4249
      %v4251 = vpop.f32.mrf.mxu0
      %v4252 = vadd.f32 %v4107, %v4251
      %4253 = vdwg.mxu0
      %vm4254 = vcmp.gt.f32.partialorder %v4215, 0.0
      %vm4255 = vcmp.gt.f32.partialorder %v4217, 0.0
      %vm4256 = vcmp.gt.f32.partialorder %v4220, 0.0
      %vm4257 = vcmp.gt.f32.partialorder %v4222, 0.0
      %vm4258 = vcmp.gt.f32.partialorder %v4225, 0.0
      %vm4259 = vcmp.gt.f32.partialorder %v4227, 0.0
      %vm4260 = vcmp.gt.f32.partialorder %v4230, 0.0
      %vm4261 = vcmp.gt.f32.partialorder %v4232, 0.0
      %vm4262 = vcmp.gt.f32.partialorder %v4235, 0.0
      %vm4263 = vcmp.gt.f32.partialorder %v4237, 0.0
      %vm4264 = vcmp.gt.f32.partialorder %v4240, 0.0
      %vm4265 = vcmp.gt.f32.partialorder %v4242, 0.0
      %vm4266 = vcmp.gt.f32.partialorder %v4245, 0.0
      %vm4267 = vcmp.gt.f32.partialorder %v4247, 0.0
      %vm4268 = vcmp.gt.f32.partialorder %v4250, 0.0
      %vm4269 = vcmp.gt.f32.partialorder %v4252, 0.0
      %v4270 = vmin.f32 %v4215, 0.0
      %v4271 = vmin.f32 %v4217, 0.0
      %v4272 = vmin.f32 %v4220, 0.0
      %v4273 = vmin.f32 %v4222, 0.0
      %v4274 = vmin.f32 %v4225, 0.0
      %v4275 = vmin.f32 %v4227, 0.0
      %v4276 = vmin.f32 %v4230, 0.0
      %v4277 = vmin.f32 %v4232, 0.0
      %v4278 = vmin.f32 %v4235, 0.0
      %v4279 = vmin.f32 %v4237, 0.0
      %v4280 = vmin.f32 %v4240, 0.0
      %v4281 = vmin.f32 %v4242, 0.0
      %v4282 = vmin.f32 %v4245, 0.0
      %v4283 = vmin.f32 %v4247, 0.0
      %v4284 = vmin.f32 %v4250, 0.0
      %v4285 = vmin.f32 %v4252, 0.0
      %v4286 = vmul.f32 %v4270, 1.442695
      %v4287 = vpow.pop %v4286
      %v4288 = vmul.f32 %v4271, 1.442695
      %v4289 = vpow.pop %v4288
      %v4290 = vmul.f32 %v4272, 1.442695
      %v4291 = vpow.pop %v4290
      %v4292 = vmul.f32 %v4273, 1.442695
      %v4293 = vpow.pop %v4292
      %v4294 = vmul.f32 %v4274, 1.442695
      %v4295 = vpow.pop %v4294
      %v4296 = vmul.f32 %v4275, 1.442695
      %v4297 = vpow.pop %v4296
      %v4298 = vmul.f32 %v4276, 1.442695
      %v4299 = vpow.pop %v4298
      %v4300 = vmul.f32 %v4277, 1.442695
      %v4301 = vpow.pop %v4300
      %v4302 = vmul.f32 %v4278, 1.442695
      %v4303 = vpow.pop %v4302
      %v4304 = vmul.f32 %v4279, 1.442695
      %v4305 = vpow.pop %v4304
      %v4306 = vmul.f32 %v4280, 1.442695
      %v4307 = vpow.pop %v4306
      %v4308 = vmul.f32 %v4281, 1.442695
      %v4309 = vpow.pop %v4308
      %v4310 = vmul.f32 %v4282, 1.442695
      %v4311 = vpow.pop %v4310
      %v4312 = vmul.f32 %v4283, 1.442695
      %v4313 = vpow.pop %v4312
      %v4314 = vmul.f32 %v4284, 1.442695
      %v4315 = vpow.pop %v4314
      %v4316 = vmul.f32 %v4285, 1.442695
      %v4317 = vpow.pop %v4316
      %v4318 = vsub.f32 %v4287, 1.0
      %v4319 = vsub.f32 %v4289, 1.0
      %v4320 = vsub.f32 %v4291, 1.0
      %v4321 = vsub.f32 %v4293, 1.0
      %v4322 = vsub.f32 %v4295, 1.0
      %v4323 = vsub.f32 %v4297, 1.0
      %v4324 = vsub.f32 %v4299, 1.0
      %v4325 = vsub.f32 %v4301, 1.0
      %v4326 = vsub.f32 %v4303, 1.0
      %v4327 = vsub.f32 %v4305, 1.0
      %v4328 = vsub.f32 %v4307, 1.0
      %v4329 = vsub.f32 %v4309, 1.0
      %v4330 = vsub.f32 %v4311, 1.0
      %v4331 = vsub.f32 %v4313, 1.0
      %v4332 = vsub.f32 %v4315, 1.0
      %v4333 = vsub.f32 %v4317, 1.0
      %v4334 = vsel %vm4254, %v4215, %v4318
      %v4335 = vsel %vm4255, %v4217, %v4319
      %v4336 = vsel %vm4256, %v4220, %v4320
      %v4337 = vsel %vm4257, %v4222, %v4321
      %v4338 = vsel %vm4258, %v4225, %v4322
      %v4339 = vsel %vm4259, %v4227, %v4323
      %v4340 = vsel %vm4260, %v4230, %v4324
      %v4341 = vsel %vm4261, %v4232, %v4325
      %v4342 = vsel %vm4262, %v4235, %v4326
      %v4343 = vsel %vm4263, %v4237, %v4327
      %v4344 = vsel %vm4264, %v4240, %v4328
      %v4345 = vsel %vm4265, %v4242, %v4329
      %v4346 = vsel %vm4266, %v4245, %v4330
      %v4347 = vsel %vm4267, %v4247, %v4331
      %v4348 = vsel %vm4268, %v4250, %v4332
      %v4349 = vsel %vm4269, %v4252, %v4333
      %v4350 = vadd.f32 %v4334, %v4335
      %v4351 = vadd.f32 %v4350, %v4336
      %v4352 = vadd.f32 %v4351, %v4337
      %v4353 = vadd.f32 %v4352, %v4338
      %v4354 = vadd.f32 %v4353, %v4339
      %v4355 = vadd.f32 %v4354, %v4340
      %v4356 = vadd.f32 %v4355, %v4341
      %v4357 = vadd.f32 %v4356, %v4342
      %v4358 = vadd.f32 %v4357, %v4343
      %v4359 = vadd.f32 %v4358, %v4344
      %v4360 = vadd.f32 %v4359, %v4345
      %v4361 = vadd.f32 %v4360, %v4346
      %v4362 = vadd.f32 %v4361, %v4347
      %v4363 = vadd.f32 %v4362, %v4348
      %v4364 = vadd.f32 %v4363, %v4349
      %v4365 = vrot.slane %v4364, 4
      %v4366 = vadd.f32 %v4364, %v4365
      %v4367 = vrot.slane %v4366, 2
      %v4368 = vadd.f32 %v4366, %v4367
      %v4369 = vrot.slane %v4368, 1
      %v4370 = vadd.f32 %v4368, %v4369
      %v4371 = vadd.f32 %v4370, 0.0
      %v4372 = vmul.f32 %v4334, %v4334
      %v4373 = vmul.f32 %v4335, %v4335
      %v4374 = vmul.f32 %v4336, %v4336
      %v4375 = vmul.f32 %v4337, %v4337
      %v4376 = vmul.f32 %v4338, %v4338
      %v4377 = vmul.f32 %v4339, %v4339
      %v4378 = vmul.f32 %v4340, %v4340
      %v4379 = vmul.f32 %v4341, %v4341
      %v4380 = vmul.f32 %v4342, %v4342
      %v4381 = vmul.f32 %v4343, %v4343
      %v4382 = vmul.f32 %v4344, %v4344
      %v4383 = vmul.f32 %v4345, %v4345
      %v4384 = vmul.f32 %v4346, %v4346
      %v4385 = vmul.f32 %v4347, %v4347
      %v4386 = vmul.f32 %v4348, %v4348
      %v4387 = vmul.f32 %v4349, %v4349
      %v4388 = vadd.f32 %v4372, %v4373
      %v4389 = vadd.f32 %v4388, %v4374
      %v4390 = vadd.f32 %v4389, %v4375
      %v4391 = vadd.f32 %v4390, %v4376
      %v4392 = vadd.f32 %v4391, %v4377
      %v4393 = vadd.f32 %v4392, %v4378
      %v4394 = vadd.f32 %v4393, %v4379
      %v4395 = vadd.f32 %v4394, %v4380
      %v4396 = vadd.f32 %v4395, %v4381
      %v4397 = vadd.f32 %v4396, %v4382
      %v4398 = vadd.f32 %v4397, %v4383
      %v4399 = vadd.f32 %v4398, %v4384
      %v4400 = vadd.f32 %v4399, %v4385
      %v4401 = vadd.f32 %v4400, %v4386
      %v4402 = vadd.f32 %v4401, %v4387
      %v4403 = vrot.slane %v4402, 4
      %v4404 = vadd.f32 %v4402, %v4403
      %v4405 = vrot.slane %v4404, 2
      %v4406 = vadd.f32 %v4404, %v4405
      %v4407 = vrot.slane %v4406, 1
      %v4408 = vadd.f32 %v4406, %v4407
      %v4409 = vadd.f32 %v4408, 0.0
      %v4410 = vpack.c.bf16 %v4334, %v4334
      %v4411 = vpack.c.bf16 %v4335, %v4335
      %v4412 = vpack.c.bf16 %v4336, %v4336
      %v4413 = vpack.c.bf16 %v4337, %v4337
      %v4414 = vpack.c.bf16 %v4338, %v4338
      %v4415 = vpack.c.bf16 %v4339, %v4339
      %v4416 = vpack.c.bf16 %v4340, %v4340
      %v4417 = vpack.c.bf16 %v4341, %v4341
      %v4418 = vpack.c.bf16 %v4342, %v4342
      %v4419 = vpack.c.bf16 %v4343, %v4343
      %v4420 = vpack.c.bf16 %v4344, %v4344
      %v4421 = vpack.c.bf16 %v4345, %v4345
      %v4422 = vpack.c.bf16 %v4346, %v4346
      %v4423 = vpack.c.bf16 %v4347, %v4347
      %v4424 = vpack.c.bf16 %v4348, %v4348
      %v4425 = vpack.c.bf16 %v4349, %v4349
      %4426 = vst.msk [vmem:[%s258] sm:$0xf] %vm432, %v4410
      %4427 = vst.msk [vmem:[%s258 + $0x4] sm:$0xf] %vm432, %v4411
      %4428 = vst.msk [vmem:[%s258 + $0x8] sm:$0xf] %vm432, %v4412
      %4429 = vst.msk [vmem:[%s258 + $0xc] sm:$0xf] %vm432, %v4413
      %4430 = vst.msk [vmem:[%s258 + $0x10] sm:$0xf] %vm432, %v4414
      %4431 = vst.msk [vmem:[%s258 + $0x14] sm:$0xf] %vm432, %v4415
      %4432 = vst.msk [vmem:[%s258 + $0x18] sm:$0xf] %vm432, %v4416
      %4433 = vst.msk [vmem:[%s258 + $0x1c] sm:$0xf] %vm432, %v4417
      %4434 = vst.msk [vmem:[%s258 + $0x20] sm:$0xf] %vm432, %v4418
      %4435 = vst.msk [vmem:[%s258 + $0x24] sm:$0xf] %vm432, %v4419
      %4436 = vst.msk [vmem:[%s258 + $0x28] sm:$0xf] %vm432, %v4420
      %4437 = vst.msk [vmem:[%s258 + $0x2c] sm:$0xf] %vm432, %v4421
      %4438 = vst.msk [vmem:[%s258 + $0x30] sm:$0xf] %vm432, %v4422
      %4439 = vst.msk [vmem:[%s258 + $0x34] sm:$0xf] %vm432, %v4423
      %4440 = vst.msk [vmem:[%s258 + $0x38] sm:$0xf] %vm432, %v4424
      %4441 = vst.msk [vmem:[%s258 + $0x3c] sm:$0xf] %vm432, %v4425
      %v4442 = vld [vmem:[#allocation3 + $0x40] sm:$0xf]
      %v4443 = vld [vmem:[#allocation3 + $0x44] sm:$0xf]
      %v4444 = vld [vmem:[#allocation3 + $0x48] sm:$0xf]
      %v4445 = vld [vmem:[#allocation3 + $0x4c] sm:$0xf]
      %v4446 = vld [vmem:[#allocation3 + $0x50] sm:$0xf]
      %v4447 = vld [vmem:[#allocation3 + $0x54] sm:$0xf]
      %v4448 = vld [vmem:[#allocation3 + $0x58] sm:$0xf]
      %v4449 = vld [vmem:[#allocation3 + $0x5c] sm:$0xf]
      %v4450 = vld [vmem:[#allocation3 + $0x60] sm:$0xf]
      %v4451 = vld [vmem:[#allocation3 + $0x64] sm:$0xf]
      %v4452 = vld [vmem:[#allocation3 + $0x68] sm:$0xf]
      %v4453 = vld [vmem:[#allocation3 + $0x6c] sm:$0xf]
      %v4454 = vld [vmem:[#allocation3 + $0x70] sm:$0xf]
      %v4455 = vld [vmem:[#allocation3 + $0x74] sm:$0xf]
      %v4456 = vld [vmem:[#allocation3 + $0x78] sm:$0xf]
      %v4457 = vld [vmem:[#allocation3 + $0x7c] sm:$0xf]
      %v4474 = vunpack.c.l.b16 %v4442
      %v4475 = vunpack.c.l.b16 %v4443
      %v4476 = vunpack.c.l.b16 %v4444
      %v4477 = vunpack.c.l.b16 %v4445
      %v4478 = vunpack.c.l.b16 %v4446
      %v4479 = vunpack.c.l.b16 %v4447
      %v4480 = vunpack.c.l.b16 %v4448
      %v4481 = vunpack.c.l.b16 %v4449
      %v4482 = vunpack.c.l.b16 %v4450
      %v4483 = vunpack.c.l.b16 %v4451
      %v4484 = vunpack.c.l.b16 %v4452
      %v4485 = vunpack.c.l.b16 %v4453
      %v4486 = vunpack.c.l.b16 %v4454
      %v4487 = vunpack.c.l.b16 %v4455
      %v4488 = vunpack.c.l.b16 %v4456
      %v4489 = vunpack.c.l.b16 %v4457
      %v4490 = vpack.c.b16 %v4475, %v4474
      %v4491 = vpack.c.b16 %v4477, %v4476
      %v4492 = vpack.c.b16 %v4479, %v4478
      %v4493 = vpack.c.b16 %v4481, %v4480
      %v4494 = vpack.c.b16 %v4483, %v4482
      %v4495 = vpack.c.b16 %v4485, %v4484
      %v4496 = vpack.c.b16 %v4487, %v4486
      %v4497 = vpack.c.b16 %v4489, %v4488
      %v4499 = vsel %vm4176, %v4490, 0
      %v4502 = vsel %vm4176, %v4491, 0
      %v4505 = vsel %vm4176, %v4492, 0
      %v4508 = vsel %vm4176, %v4493, 0
      %v4511 = vsel %vm4176, %v4494, 0
      %v4514 = vsel %vm4176, %v4495, 0
      %v4517 = vsel %vm4176, %v4496, 0
      %v4520 = vsel %vm4176, %v4497, 0
      %4522 = vmatpush.bf16.msra.mxu0 0
      %4523 = vmatpush.bf16.msra.mxu0 0
      %4524 = vmatpush.bf16.msra.mxu0 0
      %4525 = vmatpush.bf16.msra.mxu0 %v4203
      %4526 = vmatpush.bf16.msra.mxu0 %v4170
      %4527 = vmatpush.bf16.msra.mxu0 %v4169
      %4528 = vmatpush.bf16.msra.mxu0 %v4168
      %4529 = vmatpush.bf16.msra.mxu0 %v4167
      %4530 = vmatmul.bf16.gmra.mxu0 %v4499
      %v4531 = vpop.f32.mrf.mxu0
      %v4532 = vadd.f32 %v4107, %v4531
      %v4533 = vpop.f32.mrf.mxu0
      %v4534 = vadd.f32 %v4107, %v4533
      %4535 = vmatmul.bf16.gmra.mxu0 %v4502
      %v4536 = vpop.f32.mrf.mxu0
      %v4537 = vadd.f32 %v4107, %v4536
      %v4538 = vpop.f32.mrf.mxu0
      %v4539 = vadd.f32 %v4107, %v4538
      %4540 = vmatmul.bf16.gmra.mxu0 %v4505
      %v4541 = vpop.f32.mrf.mxu0
      %v4542 = vadd.f32 %v4107, %v4541
      %v4543 = vpop.f32.mrf.mxu0
      %v4544 = vadd.f32 %v4107, %v4543
      %4545 = vmatmul.bf16.gmra.mxu0 %v4508
      %v4546 = vpop.f32.mrf.mxu0
      %v4547 = vadd.f32 %v4107, %v4546
      %v4548 = vpop.f32.mrf.mxu0
      %v4549 = vadd.f32 %v4107, %v4548
      %4550 = vmatmul.bf16.gmra.mxu0 %v4511
      %v4551 = vpop.f32.mrf.mxu0
      %v4552 = vadd.f32 %v4107, %v4551
      %v4553 = vpop.f32.mrf.mxu0
      %v4554 = vadd.f32 %v4107, %v4553
      %4555 = vmatmul.bf16.gmra.mxu0 %v4514
      %v4556 = vpop.f32.mrf.mxu0
      %v4557 = vadd.f32 %v4107, %v4556
      %v4558 = vpop.f32.mrf.mxu0
      %v4559 = vadd.f32 %v4107, %v4558
      %4560 = vmatmul.bf16.gmra.mxu0 %v4517
      %v4561 = vpop.f32.mrf.mxu0
      %v4562 = vadd.f32 %v4107, %v4561
      %v4563 = vpop.f32.mrf.mxu0
      %v4564 = vadd.f32 %v4107, %v4563
      %4565 = vmatmul.bf16.gmra.mxu0 %v4520
      %v4566 = vpop.f32.mrf.mxu0
      %v4567 = vadd.f32 %v4107, %v4566
      %v4568 = vpop.f32.mrf.mxu0
      %v4569 = vadd.f32 %v4107, %v4568
      %4570 = vdwg.mxu0
      %vm4571 = vcmp.gt.f32.partialorder %v4532, 0.0
      %vm4572 = vcmp.gt.f32.partialorder %v4534, 0.0
      %vm4573 = vcmp.gt.f32.partialorder %v4537, 0.0
      %vm4574 = vcmp.gt.f32.partialorder %v4539, 0.0
      %vm4575 = vcmp.gt.f32.partialorder %v4542, 0.0
      %vm4576 = vcmp.gt.f32.partialorder %v4544, 0.0
      %vm4577 = vcmp.gt.f32.partialorder %v4547, 0.0
      %vm4578 = vcmp.gt.f32.partialorder %v4549, 0.0
      %vm4579 = vcmp.gt.f32.partialorder %v4552, 0.0
      %vm4580 = vcmp.gt.f32.partialorder %v4554, 0.0
      %vm4581 = vcmp.gt.f32.partialorder %v4557, 0.0
      %vm4582 = vcmp.gt.f32.partialorder %v4559, 0.0
      %vm4583 = vcmp.gt.f32.partialorder %v4562, 0.0
      %vm4584 = vcmp.gt.f32.partialorder %v4564, 0.0
      %vm4585 = vcmp.gt.f32.partialorder %v4567, 0.0
      %vm4586 = vcmp.gt.f32.partialorder %v4569, 0.0
      %v4587 = vmin.f32 %v4532, 0.0
      %v4588 = vmin.f32 %v4534, 0.0
      %v4589 = vmin.f32 %v4537, 0.0
      %v4590 = vmin.f32 %v4539, 0.0
      %v4591 = vmin.f32 %v4542, 0.0
      %v4592 = vmin.f32 %v4544, 0.0
      %v4593 = vmin.f32 %v4547, 0.0
      %v4594 = vmin.f32 %v4549, 0.0
      %v4595 = vmin.f32 %v4552, 0.0
      %v4596 = vmin.f32 %v4554, 0.0
      %v4597 = vmin.f32 %v4557, 0.0
      %v4598 = vmin.f32 %v4559, 0.0
      %v4599 = vmin.f32 %v4562, 0.0
      %v4600 = vmin.f32 %v4564, 0.0
      %v4601 = vmin.f32 %v4567, 0.0
      %v4602 = vmin.f32 %v4569, 0.0
      %v4603 = vmul.f32 %v4587, 1.442695
      %v4604 = vpow.pop %v4603
      %v4605 = vmul.f32 %v4588, 1.442695
      %v4606 = vpow.pop %v4605
      %v4607 = vmul.f32 %v4589, 1.442695
      %v4608 = vpow.pop %v4607
      %v4609 = vmul.f32 %v4590, 1.442695
      %v4610 = vpow.pop %v4609
      %v4611 = vmul.f32 %v4591, 1.442695
      %v4612 = vpow.pop %v4611
      %v4613 = vmul.f32 %v4592, 1.442695
      %v4614 = vpow.pop %v4613
      %v4615 = vmul.f32 %v4593, 1.442695
      %v4616 = vpow.pop %v4615
      %v4617 = vmul.f32 %v4594, 1.442695
      %v4618 = vpow.pop %v4617
      %v4619 = vmul.f32 %v4595, 1.442695
      %v4620 = vpow.pop %v4619
      %v4621 = vmul.f32 %v4596, 1.442695
      %v4622 = vpow.pop %v4621
      %v4623 = vmul.f32 %v4597, 1.442695
      %v4624 = vpow.pop %v4623
      %v4625 = vmul.f32 %v4598, 1.442695
      %v4626 = vpow.pop %v4625
      %v4627 = vmul.f32 %v4599, 1.442695
      %v4628 = vpow.pop %v4627
      %v4629 = vmul.f32 %v4600, 1.442695
      %v4630 = vpow.pop %v4629
      %v4631 = vmul.f32 %v4601, 1.442695
      %v4632 = vpow.pop %v4631
      %v4633 = vmul.f32 %v4602, 1.442695
      %v4634 = vpow.pop %v4633
      %v4635 = vsub.f32 %v4604, 1.0
      %v4636 = vsub.f32 %v4606, 1.0
      %v4637 = vsub.f32 %v4608, 1.0
      %v4638 = vsub.f32 %v4610, 1.0
      %v4639 = vsub.f32 %v4612, 1.0
      %v4640 = vsub.f32 %v4614, 1.0
      %v4641 = vsub.f32 %v4616, 1.0
      %v4642 = vsub.f32 %v4618, 1.0
      %v4643 = vsub.f32 %v4620, 1.0
      %v4644 = vsub.f32 %v4622, 1.0
      %v4645 = vsub.f32 %v4624, 1.0
      %v4646 = vsub.f32 %v4626, 1.0
      %v4647 = vsub.f32 %v4628, 1.0
      %v4648 = vsub.f32 %v4630, 1.0
      %v4649 = vsub.f32 %v4632, 1.0
      %v4650 = vsub.f32 %v4634, 1.0
      %v4651 = vsel %vm4571, %v4532, %v4635
      %v4652 = vsel %vm4572, %v4534, %v4636
      %v4653 = vsel %vm4573, %v4537, %v4637
      %v4654 = vsel %vm4574, %v4539, %v4638
      %v4655 = vsel %vm4575, %v4542, %v4639
      %v4656 = vsel %vm4576, %v4544, %v4640
      %v4657 = vsel %vm4577, %v4547, %v4641
      %v4658 = vsel %vm4578, %v4549, %v4642
      %v4659 = vsel %vm4579, %v4552, %v4643
      %v4660 = vsel %vm4580, %v4554, %v4644
      %v4661 = vsel %vm4581, %v4557, %v4645
      %v4662 = vsel %vm4582, %v4559, %v4646
      %v4663 = vsel %vm4583, %v4562, %v4647
      %v4664 = vsel %vm4584, %v4564, %v4648
      %v4665 = vsel %vm4585, %v4567, %v4649
      %v4666 = vsel %vm4586, %v4569, %v4650
      %v4667 = vadd.f32 %v4651, %v4652
      %v4668 = vadd.f32 %v4667, %v4653
      %v4669 = vadd.f32 %v4668, %v4654
      %v4670 = vadd.f32 %v4669, %v4655
      %v4671 = vadd.f32 %v4670, %v4656
      %v4672 = vadd.f32 %v4671, %v4657
      %v4673 = vadd.f32 %v4672, %v4658
      %v4674 = vadd.f32 %v4673, %v4659
      %v4675 = vadd.f32 %v4674, %v4660
      %v4676 = vadd.f32 %v4675, %v4661
      %v4677 = vadd.f32 %v4676, %v4662
      %v4678 = vadd.f32 %v4677, %v4663
      %v4679 = vadd.f32 %v4678, %v4664
      %v4680 = vadd.f32 %v4679, %v4665
      %v4681 = vadd.f32 %v4680, %v4666
      %v4682 = vrot.slane %v4681, 4
      %v4683 = vadd.f32 %v4681, %v4682
      %v4684 = vrot.slane %v4683, 2
      %v4685 = vadd.f32 %v4683, %v4684
      %v4686 = vrot.slane %v4685, 1
      %v4687 = vadd.f32 %v4685, %v4686
      %v4688 = vadd.f32 %v4371, %v4687
      %v4689 = vmul.f32 %v4651, %v4651
      %v4690 = vmul.f32 %v4652, %v4652
      %v4691 = vmul.f32 %v4653, %v4653
      %v4692 = vmul.f32 %v4654, %v4654
      %v4693 = vmul.f32 %v4655, %v4655
      %v4694 = vmul.f32 %v4656, %v4656
      %v4695 = vmul.f32 %v4657, %v4657
      %v4696 = vmul.f32 %v4658, %v4658
      %v4697 = vmul.f32 %v4659, %v4659
      %v4698 = vmul.f32 %v4660, %v4660
      %v4699 = vmul.f32 %v4661, %v4661
      %v4700 = vmul.f32 %v4662, %v4662
      %v4701 = vmul.f32 %v4663, %v4663
      %v4702 = vmul.f32 %v4664, %v4664
      %v4703 = vmul.f32 %v4665, %v4665
      %v4704 = vmul.f32 %v4666, %v4666
      %v4705 = vadd.f32 %v4689, %v4690
      %v4706 = vadd.f32 %v4705, %v4691
      %v4707 = vadd.f32 %v4706, %v4692
      %v4708 = vadd.f32 %v4707, %v4693
      %v4709 = vadd.f32 %v4708, %v4694
      %v4710 = vadd.f32 %v4709, %v4695
      %v4711 = vadd.f32 %v4710, %v4696
      %v4712 = vadd.f32 %v4711, %v4697
      %v4713 = vadd.f32 %v4712, %v4698
      %v4714 = vadd.f32 %v4713, %v4699
      %v4715 = vadd.f32 %v4714, %v4700
      %v4716 = vadd.f32 %v4715, %v4701
      %v4717 = vadd.f32 %v4716, %v4702
      %v4718 = vadd.f32 %v4717, %v4703
      %v4719 = vadd.f32 %v4718, %v4704
      %v4720 = vrot.slane %v4719, 4
      %v4721 = vadd.f32 %v4719, %v4720
      %v4722 = vrot.slane %v4721, 2
      %v4723 = vadd.f32 %v4721, %v4722
      %v4724 = vrot.slane %v4723, 1
      %v4725 = vadd.f32 %v4723, %v4724
      %v4726 = vadd.f32 %v4409, %v4725
      %v4727 = vpack.c.bf16 %v4651, %v4651
      %v4728 = vpack.c.bf16 %v4652, %v4652
      %v4729 = vpack.c.bf16 %v4653, %v4653
      %v4730 = vpack.c.bf16 %v4654, %v4654
      %v4731 = vpack.c.bf16 %v4655, %v4655
      %v4732 = vpack.c.bf16 %v4656, %v4656
      %v4733 = vpack.c.bf16 %v4657, %v4657
      %v4734 = vpack.c.bf16 %v4658, %v4658
      %v4735 = vpack.c.bf16 %v4659, %v4659
      %v4736 = vpack.c.bf16 %v4660, %v4660
      %v4737 = vpack.c.bf16 %v4661, %v4661
      %v4738 = vpack.c.bf16 %v4662, %v4662
      %v4739 = vpack.c.bf16 %v4663, %v4663
      %v4740 = vpack.c.bf16 %v4664, %v4664
      %v4741 = vpack.c.bf16 %v4665, %v4665
      %v4742 = vpack.c.bf16 %v4666, %v4666
      %s4743 = scalar_lea.vmem %s258, 64
      %4744 = vst.msk [vmem:[%s4743] sm:$0xf] %vm432, %v4727
      %4745 = vst.msk [vmem:[%s4743 + $0x4] sm:$0xf] %vm432, %v4728
      %4746 = vst.msk [vmem:[%s4743 + $0x8] sm:$0xf] %vm432, %v4729
      %4747 = vst.msk [vmem:[%s4743 + $0xc] sm:$0xf] %vm432, %v4730
      %4748 = vst.msk [vmem:[%s4743 + $0x10] sm:$0xf] %vm432, %v4731
      %4749 = vst.msk [vmem:[%s4743 + $0x14] sm:$0xf] %vm432, %v4732
      %4750 = vst.msk [vmem:[%s4743 + $0x18] sm:$0xf] %vm432, %v4733
      %4751 = vst.msk [vmem:[%s4743 + $0x1c] sm:$0xf] %vm432, %v4734
      %4752 = vst.msk [vmem:[%s4743 + $0x20] sm:$0xf] %vm432, %v4735
      %4753 = vst.msk [vmem:[%s4743 + $0x24] sm:$0xf] %vm432, %v4736
      %4754 = vst.msk [vmem:[%s4743 + $0x28] sm:$0xf] %vm432, %v4737
      %4755 = vst.msk [vmem:[%s4743 + $0x2c] sm:$0xf] %vm432, %v4738
      %4756 = vst.msk [vmem:[%s4743 + $0x30] sm:$0xf] %vm432, %v4739
      %4757 = vst.msk [vmem:[%s4743 + $0x34] sm:$0xf] %vm432, %v4740
      %4758 = vst.msk [vmem:[%s4743 + $0x38] sm:$0xf] %vm432, %v4741
      %4759 = vst.msk [vmem:[%s4743 + $0x3c] sm:$0xf] %vm432, %v4742
      %vm4760 = vcmask 1040384
      %v4761 = vsel %vm4760, %v4688, %v4726
      %4762 = vst [vmem:[%s262] sm:$0x3] %v4761
      %p4763 = scmp.lt.s32.totalorder %s18, 1
      %s4764 = scalar_select %p4763, %s18, 1
      %s4765 = smul.addr %s4764, 32
      %s4766 = smul.addr %s4765, 4
      %s4767 = scalar_lea.vmem %s5, %s4766
      %p4768 = scmp.lt.s32.totalorder %s18, 1
      %s4769 = scalar_select %p4768, %s18, 1
      %s4770 = smul.addr %s4769, 2
      %s4771 = scalar_lea.vmem %s6, %s4770
      // Predicated region
      $region41: #{encoder_block_forward.4} parent=39 // pred_check
        %p4772 = pneg %p146
      $region42: #{encoder_block_forward.4} parent=39 // pred_check_branch
        %4774 = sbr.rel (%p4772) target = $region44
      $region43: #{encoder_block_forward.4} parent=39 // pred_region
        _
      $region44: #{encoder_block_forward.4} parent=39 // pred_fallthru
        _
      // Predicated region
      $region45: #{encoder_block_forward.4} parent=39 // pred_check
        %p4775 = pneg %p172
      $region46: #{encoder_block_forward.4} parent=39 // pred_check_branch
        %4777 = sbr.rel (%p4775) target = $region48
      $region47: #{encoder_block_forward.4} parent=39 // pred_region
        _
      $region48: #{encoder_block_forward.4} parent=39 // pred_fallthru
        _
    $region40: #{encoder_block_forward.4} parent=5 // pred_fallthru
      _
    %p4778 = scmp.le.s32.totalorder 2, %s13
    // Predicated region
    $region49: #{encoder_block_forward.4} parent=5 // pred_check
      %p4779 = pneg %p4778
    $region50: #{encoder_block_forward.4} parent=5 // pred_check_branch
      %4781 = sbr.rel (%p4779) target = $region52
    $region51: #{encoder_block_forward.4} parent=5 // pred_region
      %s4782 = ssub.s32 %s13, 2
      // Predicated region
      $region53: #{encoder_block_forward.4} parent=51 // pred_check
        %p4783 = pneg %p152
      $region54: #{encoder_block_forward.4} parent=51 // pred_check_branch
        %4785 = sbr.rel (%p4783) target = $region56
      $region55: #{encoder_block_forward.4} parent=51 // pred_region
        %p4786 = scmp.lt.s32.totalorder %s19, 1
        %s4787 = scalar_select %p4786, %s19, 1
        %s4788 = smul.addr %s4787, 32
        %s4789 = smul.addr %s4788, 4
        %s4790 = scalar_lea.vmem %s5, %s4789
      $region56: #{encoder_block_forward.4} parent=51 // pred_fallthru
        _
      // Predicated region
      $region57: #{encoder_block_forward.4} parent=51 // pred_check
        %p4791 = pneg %p178
      $region58: #{encoder_block_forward.4} parent=51 // pred_check_branch
        %4793 = sbr.rel (%p4791) target = $region60
      $region59: #{encoder_block_forward.4} parent=51 // pred_region
        %p4794 = scmp.lt.s32.totalorder %s19, 1
        %s4795 = scalar_select %p4794, %s19, 1
        %s4796 = smul.addr %s4795, 2
        %s4797 = scalar_lea.vmem %s6, %s4796
      $region60: #{encoder_block_forward.4} parent=51 // pred_fallthru
        _
    $region52: #{encoder_block_forward.4} parent=5 // pred_fallthru
      _
  $region6: #{encoder_block_forward.4} parent=0 // loop_footer
    %s17 = sadd.s32 1, %s13
  $region7: #{encoder_block_forward.4} parent=0 // loop_footer_branch
    %12 = sbr.rel target = $region3
  $region8: #{encoder_block_forward.4} parent=0 // loop_exit
    _

// kernel: encoder_block_forward.3
$region0: #{encoder_block_forward.3}
  #allocation0 [shape = 'u32[]', space=smem, size = 0x4, offset = 0x4, fixed_abs, tag = 'smem constant byte address 0x4 - core index']
  #allocation1 [shape = 'u32[72,128]{1,0:T(1,128)}', space=vmem, size = 0x9000, scoped, tag = 'internal scratch']
  #allocation2 [shape = 'bf16[18,18,4]{2,1,0:T(8,128)(2,1)}', space=vmem, size = 0x1b000, scoped, tag = 'scratch operand']
  #allocation3 [shape = 'bf16[256,36]{1,0:T(8,128)(2,1)}', space=vmem, size = 0x10000, scoped, tag = 'scratch operand']
  %s0 = inlined_call_operand.vmem [shape: f32[2,16,16,4], index: 0, kind: input, shape index: {}]
  %s1 = inlined_call_operand.vmem [shape: f32[1,4], index: 1, kind: input, shape index: {}]
  %s2 = inlined_call_operand.vmem [shape: f32[1,4], index: 2, kind: input, shape index: {}]
  %s3 = inlined_call_operand.vmem [shape: bf16[36,128], index: 3, kind: input, shape index: {}]
  %s4 = inlined_call_operand.vmem [shape: f32[1,128], index: 4, kind: input, shape index: {}]
  %s5 = inlined_call_operand.vmem [shape: bf16[2,16,16,8], index: 5, kind: output, shape index: {0}]
  %s6 = inlined_call_operand.vmem [shape: f32[2,2,128], index: 6, kind: output, shape index: {1}]
  %7 = xla_tuple %s5, %s6
  %s8 = sld [smem:[#allocation0]]
  $region61: #{encoder_block_forward.3} parent=0
    _
  %s10 = ssub.s32 1, %s8
  %s11 = scalar_select 0, %s10, %s8
  loop: start=0, step=1, limit=4
  $region2: #{encoder_block_forward.3} parent=0 // loop_pre_header
    _
  $region3: #{encoder_block_forward.3} parent=0 // loop_header
    %s13 = sphi 0, %s17
    %p14 = scmp.ge.s32.totalorder %s13, 4
    %s23 = sphi 0, %s25
    %s26 = sphi 0, %s23
    %s27 = sphi 0, %s26
    %s43 = sphi 0, %s27
    %s47 = sphi 0, %s47
    %s49 = sphi 0, %s47
    %s50 = sphi 0, %s49
    %s64 = sphi 0, %s50
    %s68 = sphi 0, %s68
    %s70 = sphi 0, %s68
    %s71 = sphi 0, %s70
    %s85 = sphi 0, %s71
    %s89 = sphi 0, %s89
    %s91 = sphi 0, %s89
    %s92 = sphi 0, %s91
    %s106 = sphi 0, %s92
    %s110 = sphi 0, %s110
    %s112 = sphi 0, %s110
    %s113 = sphi 0, %s112
    %s127 = sphi 0, %s113
    %s133 = sphi 0, %s135
    %s136 = sphi 0, %s133
    %s137 = sphi 0, %s136
    %s153 = sphi 0, %s137
    %s159 = sphi 0, %s161
    %s162 = sphi 0, %s159
    %s163 = sphi 0, %s162
    %s179 = sphi 0, %s163
  $region4: #{encoder_block_forward.3} parent=0 // loop_header_branch
    %16 = sbr.rel (%p14) target = $region8
  $region5: #{encoder_block_forward.3} parent=0 // loop_body
    %s18 = ssub.s32 %s13, 1
    %s19 = ssub.s32 %s13, 2
    %s20 = sadd.s32 %s13, 1
    %s21 = ssub.s32 %s13, %s20
    %p22 = scmp.eq.s32.totalorder %s21, 0
    %s24 = sadd.s32 %s23, 1
    %s25 = scalar_select %p22, %s23, %s24
    %p28 = pneg %p22
    %p29 = scmp.eq.s32.totalorder %s13, 1
    %p30 = por %p28, %p29
    %p31 = scmp.ne.s32.totalorder %s23, %s26
    %p32 = scmp.eq.s32.totalorder %s13, 0
    %p33 = por %p31, %p32
    %p34 = scmp.ne.s32.totalorder %s23, %s26
    %p35 = scmp.eq.s32.totalorder %s18, 1
    %p36 = por %p34, %p35
    %p37 = scmp.ne.s32.totalorder %s26, %s27
    %p38 = scmp.eq.s32.totalorder %s18, 0
    %p39 = por %p37, %p38
    %p40 = scmp.ne.s32.totalorder %s26, %s27
    %p41 = scmp.eq.s32.totalorder %s19, 1
    %p42 = por %p40, %p41
    %p44 = scmp.ne.s32.totalorder %s27, %s43
    %p45 = scmp.eq.s32.totalorder %s19, 0
    %p46 = por %p44, %p45
    %s48 = sadd.s32 %s47, 1
    %p51 = scmp.eq.s32.totalorder %s13, 1
    %p52 = scmp.ne.s32.totalorder %s47, %s49
    %p53 = scmp.eq.s32.totalorder %s13, 0
    %p54 = por %p52, %p53
    %p55 = scmp.ne.s32.totalorder %s47, %s49
    %p56 = scmp.eq.s32.totalorder %s18, 1
    %p57 = por %p55, %p56
    %p58 = scmp.ne.s32.totalorder %s49, %s50
    %p59 = scmp.eq.s32.totalorder %s18, 0
    %p60 = por %p58, %p59
    %p61 = scmp.ne.s32.totalorder %s49, %s50
    %p62 = scmp.eq.s32.totalorder %s19, 1
    %p63 = por %p61, %p62
    %p65 = scmp.ne.s32.totalorder %s50, %s64
    %p66 = scmp.eq.s32.totalorder %s19, 0
    %p67 = por %p65, %p66
    %s69 = sadd.s32 %s68, 1
    %p72 = scmp.eq.s32.totalorder %s13, 1
    %p73 = scmp.ne.s32.totalorder %s68, %s70
    %p74 = scmp.eq.s32.totalorder %s13, 0
    %p75 = por %p73, %p74
    %p76 = scmp.ne.s32.totalorder %s68, %s70
    %p77 = scmp.eq.s32.totalorder %s18, 1
    %p78 = por %p76, %p77
    %p79 = scmp.ne.s32.totalorder %s70, %s71
    %p80 = scmp.eq.s32.totalorder %s18, 0
    %p81 = por %p79, %p80
    %p82 = scmp.ne.s32.totalorder %s70, %s71
    %p83 = scmp.eq.s32.totalorder %s19, 1
    %p84 = por %p82, %p83
    %p86 = scmp.ne.s32.totalorder %s71, %s85
    %p87 = scmp.eq.s32.totalorder %s19, 0
    %p88 = por %p86, %p87
    %s90 = sadd.s32 %s89, 1
    %p93 = scmp.eq.s32.totalorder %s13, 1
    %p94 = scmp.ne.s32.totalorder %s89, %s91
    %p95 = scmp.eq.s32.totalorder %s13, 0
    %p96 = por %p94, %p95
    %p97 = scmp.ne.s32.totalorder %s89, %s91
    %p98 = scmp.eq.s32.totalorder %s18, 1
    %p99 = por %p97, %p98
    %p100 = scmp.ne.s32.totalorder %s91, %s92
    %p101 = scmp.eq.s32.totalorder %s18, 0
    %p102 = por %p100, %p101
    %p103 = scmp.ne.s32.totalorder %s91, %s92
    %p104 = scmp.eq.s32.totalorder %s19, 1
    %p105 = por %p103, %p104
    %p107 = scmp.ne.s32.totalorder %s92, %s106
    %p108 = scmp.eq.s32.totalorder %s19, 0
    %p109 = por %p107, %p108
    %s111 = sadd.s32 %s110, 1
    %p114 = scmp.eq.s32.totalorder %s13, 1
    %p115 = scmp.ne.s32.totalorder %s110, %s112
    %p116 = scmp.eq.s32.totalorder %s13, 0
    %p117 = por %p115, %p116
    %p118 = scmp.ne.s32.totalorder %s110, %s112
    %p119 = scmp.eq.s32.totalorder %s18, 1
    %p120 = por %p118, %p119
    %p121 = scmp.ne.s32.totalorder %s112, %s113
    %p122 = scmp.eq.s32.totalorder %s18, 0
    %p123 = por %p121, %p122
    %p124 = scmp.ne.s32.totalorder %s112, %s113
    %p125 = scmp.eq.s32.totalorder %s19, 1
    %p126 = por %p124, %p125
    %p128 = scmp.ne.s32.totalorder %s113, %s127
    %p129 = scmp.eq.s32.totalorder %s19, 0
    %p130 = por %p128, %p129
    %s131 = ssub.s32 %s13, %s20
    %p132 = scmp.eq.s32.totalorder %s131, 0
    %s134 = sadd.s32 %s133, 1
    %s135 = scalar_select %p132, %s133, %s134
    %p138 = pneg %p132
    %p139 = scmp.eq.s32.totalorder %s13, 1
    %p140 = por %p138, %p139
    %p141 = scmp.ne.s32.totalorder %s133, %s136
    %p142 = scmp.eq.s32.totalorder %s13, 0
    %p143 = por %p141, %p142
    %p144 = scmp.ne.s32.totalorder %s133, %s136
    %p145 = scmp.eq.s32.totalorder %s18, 1
    %p146 = por %p144, %p145
    %p147 = scmp.ne.s32.totalorder %s136, %s137
    %p148 = scmp.eq.s32.totalorder %s18, 0
    %p149 = por %p147, %p148
    %p150 = scmp.ne.s32.totalorder %s136, %s137
    %p151 = scmp.eq.s32.totalorder %s19, 1
    %p152 = por %p150, %p151
    %p154 = scmp.ne.s32.totalorder %s137, %s153
    %p155 = scmp.eq.s32.totalorder %s19, 0
    %p156 = por %p154, %p155
    %s157 = ssub.s32 %s13, %s20
    %p158 = scmp.eq.s32.totalorder %s157, 0
    %s160 = sadd.s32 %s159, 1
    %s161 = scalar_select %p158, %s159, %s160
    %p164 = pneg %p158
    %p165 = scmp.eq.s32.totalorder %s13, 1
    %p166 = por %p164, %p165
    %p167 = scmp.ne.s32.totalorder %s159, %s162
    %p168 = scmp.eq.s32.totalorder %s13, 0
    %p169 = por %p167, %p168
    %p170 = scmp.ne.s32.totalorder %s159, %s162
    %p171 = scmp.eq.s32.totalorder %s18, 1
    %p172 = por %p170, %p171
    %p173 = scmp.ne.s32.totalorder %s162, %s163
    %p174 = scmp.eq.s32.totalorder %s18, 0
    %p175 = por %p173, %p174
    %p176 = scmp.ne.s32.totalorder %s162, %s163
    %p177 = scmp.eq.s32.totalorder %s19, 1
    %p178 = por %p176, %p177
    %p180 = scmp.ne.s32.totalorder %s163, %s179
    %p181 = scmp.eq.s32.totalorder %s19, 0
    %p182 = por %p180, %p181
    %p183 = scmp.le.s32.totalorder 1, %s13
    %p184 = scmp.lt.s32.totalorder %s13, 3
    %p185 = pnand %p183, %p184
    %p186 = pneg %p185
    // Predicated region
    $region9: #{encoder_block_forward.3} parent=5 // pred_check
      _
    $region10: #{encoder_block_forward.3} parent=5 // pred_check_branch
      %188 = sbr.rel (%p185) target = $region12
    $region11: #{encoder_block_forward.3} parent=5 // pred_region
      %s189 = ssub.s32 %s13, 1
      // Predicated region
      $region13: #{encoder_block_forward.3} parent=11 // pred_check
        %p190 = pneg %p60
      $region14: #{encoder_block_forward.3} parent=11 // pred_check_branch
        %192 = sbr.rel (%p190) target = $region16
      $region15: #{encoder_block_forward.3} parent=11 // pred_region
        _
      $region16: #{encoder_block_forward.3} parent=11 // pred_fallthru
        _
      // Predicated region
      $region17: #{encoder_block_forward.3} parent=11 // pred_check
        %p193 = pneg %p81
      $region18: #{encoder_block_forward.3} parent=11 // pred_check_branch
        %195 = sbr.rel (%p193) target = $region20
      $region19: #{encoder_block_forward.3} parent=11 // pred_region
        _
      $region20: #{encoder_block_forward.3} parent=11 // pred_fallthru
        _
      // Predicated region
      $region21: #{encoder_block_forward.3} parent=11 // pred_check
        %p196 = pneg %p102
      $region22: #{encoder_block_forward.3} parent=11 // pred_check_branch
        %198 = sbr.rel (%p196) target = $region24
      $region23: #{encoder_block_forward.3} parent=11 // pred_region
        _
      $region24: #{encoder_block_forward.3} parent=11 // pred_fallthru
        _
      // Predicated region
      $region25: #{encoder_block_forward.3} parent=11 // pred_check
        %p199 = pneg %p123
      $region26: #{encoder_block_forward.3} parent=11 // pred_check_branch
        %201 = sbr.rel (%p199) target = $region28
      $region27: #{encoder_block_forward.3} parent=11 // pred_region
        _
      $region28: #{encoder_block_forward.3} parent=11 // pred_fallthru
        _
    $region12: #{encoder_block_forward.3} parent=5 // pred_fallthru
      _
    %p202 = scmp.lt.s32.totalorder %s13, 2
    // Predicated region
    $region29: #{encoder_block_forward.3} parent=5 // pred_check
      %p203 = pneg %p202
    $region30: #{encoder_block_forward.3} parent=5 // pred_check_branch
      %205 = sbr.rel (%p203) target = $region32
    $region31: #{encoder_block_forward.3} parent=5 // pred_region
      // Predicated region
      $region33: #{encoder_block_forward.3} parent=31 // pred_check
        %p206 = pneg %p33
      $region34: #{encoder_block_forward.3} parent=31 // pred_check_branch
        %208 = sbr.rel (%p206) target = $region36
      $region35: #{encoder_block_forward.3} parent=31 // pred_region
        %p209 = scmp.lt.s32.totalorder %s13, 1
        %s210 = scalar_select %p209, %s13, 1
        %s211 = smul.addr %s210, 32
        %s212 = smul.addr %s211, 8
        %s213 = scalar_lea.vmem %s0, %s212
      $region36: #{encoder_block_forward.3} parent=31 // pred_fallthru
        _
    $region32: #{encoder_block_forward.3} parent=5 // pred_fallthru
      _
    %p214 = scmp.le.s32.totalorder 1, %s13
    %p215 = scmp.lt.s32.totalorder %s13, 3
    %p216 = pnand %p214, %p215
    %p217 = pneg %p216
    // Predicated region
    $region37: #{encoder_block_forward.3} parent=5 // pred_check
      _
    $region38: #{encoder_block_forward.3} parent=5 // pred_check_branch
      %219 = sbr.rel (%p216) target = $region40
    $region39: #{encoder_block_forward.3} parent=5 // pred_region
      %s220 = ssub.s32 %s13, 1
      %p221 = scmp.lt.s32.totalorder %s18, 1
      %s222 = scalar_select %p221, %s18, 1
      %s223 = smul.addr %s222, 32
      %s224 = smul.addr %s223, 8
      %s225 = scalar_lea.vmem %s0, %s224
      %p226 = pneg %p39
      %p227 = pneg %p36
      %p228 = pneg %p60
      %p229 = pneg %p57
      %p230 = pneg %p81
      %p231 = pneg %p78
      %p232 = pneg %p102
      %p233 = pneg %p99
      %p234 = pneg %p123
      %p235 = pneg %p120
      %p236 = pneg %p149
      %p237 = pneg %p146
      %p238 = scmp.lt.s32.totalorder %s18, 1
      %s239 = scalar_select %p238, %s18, 1
      %s240 = smul.addr %s239, 32
      %s241 = smul.addr %s240, 4
      %s242 = scalar_lea.vmem %s5, %s241
      %p243 = pneg %p175
      %p244 = pneg %p172
      %p245 = scmp.lt.s32.totalorder %s18, 1
      %s246 = scalar_select %p245, %s18, 1
      %s247 = smul.addr %s246, 2
      %s248 = scalar_lea.vmem %s6, %s247
      %p249 = scmp.lt.s32.totalorder %s18, 1
      %s250 = scalar_select %p249, %s18, 1
      %s251 = smul.addr %s250, 32
      %s252 = smul.addr %s251, 8
      %s253 = scalar_lea.vmem %s0, %s252
      %p254 = scmp.lt.s32.totalorder %s18, 1
      %s255 = scalar_select %p254, %s18, 1
      %s256 = smul.addr %s255, 32
      %s257 = smul.addr %s256, 4
      %s258 = scalar_lea.vmem %s5, %s257
      %p259 = scmp.lt.s32.totalorder %s18, 1
      %s260 = scalar_select %p259, %s18, 1
      %s261 = smul.addr %s260, 2
      %s262 = scalar_lea.vmem %s6, %s261
      %v264 = vld [vmem:[%s253] sm:$0xff]
      %v265 = vld [vmem:[%s253 + $0x8] sm:$0xff]
      %v266 = vld [vmem:[%s253 + $0x10] sm:$0xff]
      %v267 = vld [vmem:[%s253 + $0x18] sm:$0xff]
      %v268 = vld [vmem:[%s253 + $0x20] sm:$0xff]
      %v269 = vld [vmem:[%s253 + $0x28] sm:$0xff]
      %v270 = vld [vmem:[%s253 + $0x30] sm:$0xff]
      %v271 = vld [vmem:[%s253 + $0x38] sm:$0xff]
      %v272 = vld [vmem:[%s253 + $0x40] sm:$0xff]
      %v273 = vld [vmem:[%s253 + $0x48] sm:$0xff]
      %v274 = vld [vmem:[%s253 + $0x50] sm:$0xff]
      %v275 = vld [vmem:[%s253 + $0x58] sm:$0xff]
      %v276 = vld [vmem:[%s253 + $0x60] sm:$0xff]
      %v277 = vld [vmem:[%s253 + $0x68] sm:$0xff]
      %v278 = vld [vmem:[%s253 + $0x70] sm:$0xff]
      %v279 = vld [vmem:[%s253 + $0x78] sm:$0xff]
      %v280 = vld [vmem:[%s253 + $0x80] sm:$0xff]
      %v281 = vld [vmem:[%s253 + $0x88] sm:$0xff]
      %v282 = vld [vmem:[%s253 + $0x90] sm:$0xff]
      %v283 = vld [vmem:[%s253 + $0x98] sm:$0xff]
      %v284 = vld [vmem:[%s253 + $0xa0] sm:$0xff]
      %v285 = vld [vmem:[%s253 + $0xa8] sm:$0xff]
      %v286 = vld [vmem:[%s253 + $0xb0] sm:$0xff]
      %v287 = vld [vmem:[%s253 + $0xb8] sm:$0xff]
      %v288 = vld [vmem:[%s253 + $0xc0] sm:$0xff]
      %v289 = vld [vmem:[%s253 + $0xc8] sm:$0xff]
      %v290 = vld [vmem:[%s253 + $0xd0] sm:$0xff]
      %v291 = vld [vmem:[%s253 + $0xd8] sm:$0xff]
      %v292 = vld [vmem:[%s253 + $0xe0] sm:$0xff]
      %v293 = vld [vmem:[%s253 + $0xe8] sm:$0xff]
      %v294 = vld [vmem:[%s253 + $0xf0] sm:$0xff]
      %v295 = vld [vmem:[%s253 + $0xf8] sm:$0xff]
      %v296 = vld [vmem:[%s1] sm:$0x1]
      %v298 = vperm.slane %v296, 0
      %v300 = vmul.f32 %v264, %v298
      %v301 = vmul.f32 %v265, %v298
      %v302 = vmul.f32 %v266, %v298
      %v303 = vmul.f32 %v267, %v298
      %v304 = vmul.f32 %v268, %v298
      %v305 = vmul.f32 %v269, %v298
      %v306 = vmul.f32 %v270, %v298
      %v307 = vmul.f32 %v271, %v298
      %v308 = vmul.f32 %v272, %v298
      %v309 = vmul.f32 %v273, %v298
      %v310 = vmul.f32 %v274, %v298
      %v311 = vmul.f32 %v275, %v298
      %v312 = vmul.f32 %v276, %v298
      %v313 = vmul.f32 %v277, %v298
      %v314 = vmul.f32 %v278, %v298
      %v315 = vmul.f32 %v279, %v298
      %v316 = vmul.f32 %v280, %v298
      %v317 = vmul.f32 %v281, %v298
      %v318 = vmul.f32 %v282, %v298
      %v319 = vmul.f32 %v283, %v298
      %v320 = vmul.f32 %v284, %v298
      %v321 = vmul.f32 %v285, %v298
      %v322 = vmul.f32 %v286, %v298
      %v323 = vmul.f32 %v287, %v298
      %v324 = vmul.f32 %v288, %v298
      %v325 = vmul.f32 %v289, %v298
      %v326 = vmul.f32 %v290, %v298
      %v327 = vmul.f32 %v291, %v298
      %v328 = vmul.f32 %v292, %v298
      %v329 = vmul.f32 %v293, %v298
      %v330 = vmul.f32 %v294, %v298
      %v331 = vmul.f32 %v295, %v298
      %v332 = vld [vmem:[%s2] sm:$0x1]
      %v334 = vperm.slane %v332, 0
      %v336 = vadd.f32 %v300, %v334
      %v337 = vadd.f32 %v301, %v334
      %v338 = vadd.f32 %v302, %v334
      %v339 = vadd.f32 %v303, %v334
      %v340 = vadd.f32 %v304, %v334
      %v341 = vadd.f32 %v305, %v334
      %v342 = vadd.f32 %v306, %v334
      %v343 = vadd.f32 %v307, %v334
      %v344 = vadd.f32 %v308, %v334
      %v345 = vadd.f32 %v309, %v334
      %v346 = vadd.f32 %v310, %v334
      %v347 = vadd.f32 %v311, %v334
      %v348 = vadd.f32 %v312, %v334
      %v349 = vadd.f32 %v313, %v334
      %v350 = vadd.f32 %v314, %v334
      %v351 = vadd.f32 %v315, %v334
      %v352 = vadd.f32 %v316, %v334
      %v353 = vadd.f32 %v317, %v334
      %v354 = vadd.f32 %v318, %v334
      %v355 = vadd.f32 %v319, %v334
      %v356 = vadd.f32 %v320, %v334
      %v357 = vadd.f32 %v321, %v334
      %v358 = vadd.f32 %v322, %v334
      %v359 = vadd.f32 %v323, %v334
      %v360 = vadd.f32 %v324, %v334
      %v361 = vadd.f32 %v325, %v334
      %v362 = vadd.f32 %v326, %v334
      %v363 = vadd.f32 %v327, %v334
      %v364 = vadd.f32 %v328, %v334
      %v365 = vadd.f32 %v329, %v334
      %v366 = vadd.f32 %v330, %v334
      %v367 = vadd.f32 %v331, %v334
      %v368 = vpack.c.bf16 %v336, %v336
      %v369 = vpack.c.bf16 %v337, %v337
      %v370 = vpack.c.bf16 %v338, %v338
      %v371 = vpack.c.bf16 %v339, %v339
      %v372 = vpack.c.bf16 %v340, %v340
      %v373 = vpack.c.bf16 %v341, %v341
      %v374 = vpack.c.bf16 %v342, %v342
      %v375 = vpack.c.bf16 %v343, %v343
      %v376 = vpack.c.bf16 %v344, %v344
      %v377 = vpack.c.bf16 %v345, %v345
      %v378 = vpack.c.bf16 %v346, %v346
      %v379 = vpack.c.bf16 %v347, %v347
      %v380 = vpack.c.bf16 %v348, %v348
      %v381 = vpack.c.bf16 %v349, %v349
      %v382 = vpack.c.bf16 %v350, %v350
      %v383 = vpack.c.bf16 %v351, %v351
      %v384 = vpack.c.bf16 %v352, %v352
      %v385 = vpack.c.bf16 %v353, %v353
      %v386 = vpack.c.bf16 %v354, %v354
      %v387 = vpack.c.bf16 %v355, %v355
      %v388 = vpack.c.bf16 %v356, %v356
      %v389 = vpack.c.bf16 %v357, %v357
      %v390 = vpack.c.bf16 %v358, %v358
      %v391 = vpack.c.bf16 %v359, %v359
      %v392 = vpack.c.bf16 %v360, %v360
      %v393 = vpack.c.bf16 %v361, %v361
      %v394 = vpack.c.bf16 %v362, %v362
      %v395 = vpack.c.bf16 %v363, %v363
      %v396 = vpack.c.bf16 %v364, %v364
      %v397 = vpack.c.bf16 %v365, %v365
      %v398 = vpack.c.bf16 %v366, %v366
      %v399 = vpack.c.bf16 %v367, %v367
      %vm400 = vcmask 27648
      %401 = vst.msk [vmem:[#allocation2] sm:$0xf] %vm400, 0
      %402 = vst.msk [vmem:[#allocation2 + $0x4] sm:$0xf] %vm400, 0
      %vm403 = vcmask 24576
      %404 = vst.msk [vmem:[#allocation2 + $0x8] sm:$0x1] %vm403, 0
      %405 = vst.msk [vmem:[#allocation2 + $0xc] sm:$0xf] %vm400, 0
      %406 = vst.msk [vmem:[#allocation2 + $0x10] sm:$0xf] %vm400, 0
      %407 = vst.msk [vmem:[#allocation2 + $0x14] sm:$0x1] %vm403, 0
      %408 = vst.msk [vmem:[#allocation2 + $0x18] sm:$0xf] %vm400, 0
      %409 = vst.msk [vmem:[#allocation2 + $0x1c] sm:$0xf] %vm400, 0
      %410 = vst.msk [vmem:[#allocation2 + $0x20] sm:$0x1] %vm403, 0
      %411 = vst.msk [vmem:[#allocation2 + $0x24] sm:$0xf] %vm400, 0
      %412 = vst.msk [vmem:[#allocation2 + $0x28] sm:$0xf] %vm400, 0
      %413 = vst.msk [vmem:[#allocation2 + $0x2c] sm:$0x1] %vm403, 0
      %414 = vst.msk [vmem:[#allocation2 + $0x30] sm:$0xf] %vm400, 0
      %415 = vst.msk [vmem:[#allocation2 + $0x34] sm:$0xf] %vm400, 0
      %416 = vst.msk [vmem:[#allocation2 + $0x38] sm:$0x1] %vm403, 0
      %417 = vst.msk [vmem:[#allocation2 + $0x3c] sm:$0xf] %vm400, 0
      %418 = vst.msk [vmem:[#allocation2 + $0x40] sm:$0xf] %vm400, 0
      %419 = vst.msk [vmem:[#allocation2 + $0x44] sm:$0x1] %vm403, 0
      %420 = vst.msk [vmem:[#allocation2 + $0x48] sm:$0xf] %vm400, 0
      %421 = vst.msk [vmem:[#allocation2 + $0x4c] sm:$0xf] %vm400, 0
      %422 = vst.msk [vmem:[#allocation2 + $0x50] sm:$0x1] %vm403, 0
      %423 = vst.msk [vmem:[#allocation2 + $0x54] sm:$0xf] %vm400, 0
      %424 = vst.msk [vmem:[#allocation2 + $0x58] sm:$0xf] %vm400, 0
      %425 = vst.msk [vmem:[#allocation2 + $0x5c] sm:$0x1] %vm403, 0
      %426 = vst.msk [vmem:[#allocation2 + $0x60] sm:$0xf] %vm400, 0
      %427 = vst.msk [vmem:[#allocation2 + $0x64] sm:$0xf] %vm400, 0
      %428 = vst.msk [vmem:[#allocation2 + $0x68] sm:$0x1] %vm403, 0
      %429 = vst.msk [vmem:[#allocation2 + $0x6c] sm:$0xf] %vm400, 0
      %430 = vst.msk [vmem:[#allocation2 + $0x70] sm:$0xf] %vm400, 0
      %431 = vst.msk [vmem:[#allocation2 + $0x74] sm:$0x1] %vm403, 0
      %432 = vst.msk [vmem:[#allocation2 + $0x78] sm:$0xf] %vm400, 0
      %433 = vst.msk [vmem:[#allocation2 + $0x7c] sm:$0xf] %vm400, 0
      %434 = vst.msk [vmem:[#allocation2 + $0x80] sm:$0x1] %vm403, 0
      %435 = vst.msk [vmem:[#allocation2 + $0x84] sm:$0xf] %vm400, 0
      %436 = vst.msk [vmem:[#allocation2 + $0x88] sm:$0xf] %vm400, 0
      %437 = vst.msk [vmem:[#allocation2 + $0x8c] sm:$0x1] %vm403, 0
      %438 = vst.msk [vmem:[#allocation2 + $0x90] sm:$0xf] %vm400, 0
      %439 = vst.msk [vmem:[#allocation2 + $0x94] sm:$0xf] %vm400, 0
      %440 = vst.msk [vmem:[#allocation2 + $0x98] sm:$0x1] %vm403, 0
      %441 = vst.msk [vmem:[#allocation2 + $0x9c] sm:$0xf] %vm400, 0
      %442 = vst.msk [vmem:[#allocation2 + $0xa0] sm:$0xf] %vm400, 0
      %443 = vst.msk [vmem:[#allocation2 + $0xa4] sm:$0x1] %vm403, 0
      %444 = vst.msk [vmem:[#allocation2 + $0xa8] sm:$0xf] %vm400, 0
      %445 = vst.msk [vmem:[#allocation2 + $0xac] sm:$0xf] %vm400, 0
      %446 = vst.msk [vmem:[#allocation2 + $0xb0] sm:$0x1] %vm403, 0
      %447 = vst.msk [vmem:[#allocation2 + $0xb4] sm:$0xf] %vm400, 0
      %448 = vst.msk [vmem:[#allocation2 + $0xb8] sm:$0xf] %vm400, 0
      %449 = vst.msk [vmem:[#allocation2 + $0xbc] sm:$0x1] %vm403, 0
      %450 = vst.msk [vmem:[#allocation2 + $0xc0] sm:$0xf] %vm400, 0
      %451 = vst.msk [vmem:[#allocation2 + $0xc4] sm:$0xf] %vm400, 0
      %452 = vst.msk [vmem:[#allocation2 + $0xc8] sm:$0x1] %vm403, 0
      %453 = vst.msk [vmem:[#allocation2 + $0xcc] sm:$0xf] %vm400, 0
      %454 = vst.msk [vmem:[#allocation2 + $0xd0] sm:$0xf] %vm400, 0
      %455 = vst.msk [vmem:[#allocation2 + $0xd4] sm:$0x1] %vm403, 0
      %vm456 = vsmask.f32 256
      %vm457 = vsmask.f32 4368
      %vm458 = vmor %vm456, %vm457
      %v460 = vshrl.u32 %v368, 16
      %v462 = vrot.slane %v460, 7
      %v463 = vshll.u32 %v368, 16
      %v465 = vor.u32 %v462, %v463
      %v466 = vrot.slane %v462, 4
      %v468 = vshrl.u32 %v369, 16
      %v470 = vrot.slane %v468, 7
      %v471 = vshll.u32 %v369, 16
      %v473 = vor.u32 %v470, %v471
      %v474 = vsel %vm458, %v466, %v473
      %v475 = vrot.slane %v470, 4
      %v477 = vshrl.u32 %v370, 16
      %v479 = vrot.slane %v477, 7
      %v480 = vshll.u32 %v370, 16
      %v482 = vor.u32 %v479, %v480
      %v483 = vrot.slane %v479, 4
      %v485 = vshrl.u32 %v371, 16
      %v487 = vrot.slane %v485, 7
      %v488 = vshll.u32 %v371, 16
      %v490 = vor.u32 %v487, %v488
      %v491 = vsel %vm458, %v483, %v490
      %v492 = vrot.slane %v487, 4
      %v494 = vshrl.u32 %v372, 16
      %v496 = vrot.slane %v494, 7
      %v497 = vshll.u32 %v372, 16
      %v499 = vor.u32 %v496, %v497
      %v500 = vrot.slane %v496, 4
      %v502 = vshrl.u32 %v373, 16
      %v504 = vrot.slane %v502, 7
      %v505 = vshll.u32 %v373, 16
      %v507 = vor.u32 %v504, %v505
      %v508 = vsel %vm458, %v500, %v507
      %v509 = vrot.slane %v504, 4
      %v511 = vshrl.u32 %v374, 16
      %v513 = vrot.slane %v511, 7
      %v514 = vshll.u32 %v374, 16
      %v516 = vor.u32 %v513, %v514
      %v517 = vrot.slane %v513, 4
      %v519 = vshrl.u32 %v375, 16
      %v521 = vrot.slane %v519, 7
      %v522 = vshll.u32 %v375, 16
      %v524 = vor.u32 %v521, %v522
      %v525 = vsel %vm458, %v517, %v524
      %v526 = vrot.slane %v521, 4
      %v528 = vshrl.u32 %v376, 16
      %v530 = vrot.slane %v528, 7
      %v531 = vshll.u32 %v376, 16
      %v533 = vor.u32 %v530, %v531
      %v534 = vrot.slane %v530, 4
      %v536 = vshrl.u32 %v377, 16
      %v538 = vrot.slane %v536, 7
      %v539 = vshll.u32 %v377, 16
      %v541 = vor.u32 %v538, %v539
      %v542 = vsel %vm458, %v534, %v541
      %v543 = vrot.slane %v538, 4
      %v545 = vshrl.u32 %v378, 16
      %v547 = vrot.slane %v545, 7
      %v548 = vshll.u32 %v378, 16
      %v550 = vor.u32 %v547, %v548
      %v551 = vrot.slane %v547, 4
      %v553 = vshrl.u32 %v379, 16
      %v555 = vrot.slane %v553, 7
      %v556 = vshll.u32 %v379, 16
      %v558 = vor.u32 %v555, %v556
      %v559 = vsel %vm458, %v551, %v558
      %v560 = vrot.slane %v555, 4
      %v562 = vshrl.u32 %v380, 16
      %v564 = vrot.slane %v562, 7
      %v565 = vshll.u32 %v380, 16
      %v567 = vor.u32 %v564, %v565
      %v568 = vrot.slane %v564, 4
      %v570 = vshrl.u32 %v381, 16
      %v572 = vrot.slane %v570, 7
      %v573 = vshll.u32 %v381, 16
      %v575 = vor.u32 %v572, %v573
      %v576 = vsel %vm458, %v568, %v575
      %v577 = vrot.slane %v572, 4
      %v579 = vshrl.u32 %v382, 16
      %v581 = vrot.slane %v579, 7
      %v582 = vshll.u32 %v382, 16
      %v584 = vor.u32 %v581, %v582
      %v585 = vrot.slane %v581, 4
      %v587 = vshrl.u32 %v383, 16
      %v589 = vrot.slane %v587, 7
      %v590 = vshll.u32 %v383, 16
      %v592 = vor.u32 %v589, %v590
      %v593 = vsel %vm458, %v585, %v592
      %v594 = vrot.slane %v589, 4
      %v596 = vshrl.u32 %v384, 16
      %v598 = vrot.slane %v596, 7
      %v599 = vshll.u32 %v384, 16
      %v601 = vor.u32 %v598, %v599
      %v602 = vrot.slane %v598, 4
      %v604 = vshrl.u32 %v385, 16
      %v606 = vrot.slane %v604, 7
      %v607 = vshll.u32 %v385, 16
      %v609 = vor.u32 %v606, %v607
      %v610 = vsel %vm458, %v602, %v609
      %v611 = vrot.slane %v606, 4
      %v613 = vshrl.u32 %v386, 16
      %v615 = vrot.slane %v613, 7
      %v616 = vshll.u32 %v386, 16
      %v618 = vor.u32 %v615, %v616
      %v619 = vrot.slane %v615, 4
      %v621 = vshrl.u32 %v387, 16
      %v623 = vrot.slane %v621, 7
      %v624 = vshll.u32 %v387, 16
      %v626 = vor.u32 %v623, %v624
      %v627 = vsel %vm458, %v619, %v626
      %v628 = vrot.slane %v623, 4
      %v630 = vshrl.u32 %v388, 16
      %v632 = vrot.slane %v630, 7
      %v633 = vshll.u32 %v388, 16
      %v635 = vor.u32 %v632, %v633
      %v636 = vrot.slane %v632, 4
      %v638 = vshrl.u32 %v389, 16
      %v640 = vrot.slane %v638, 7
      %v641 = vshll.u32 %v389, 16
      %v643 = vor.u32 %v640, %v641
      %v644 = vsel %vm458, %v636, %v643
      %v645 = vrot.slane %v640, 4
      %v647 = vshrl.u32 %v390, 16
      %v649 = vrot.slane %v647, 7
      %v650 = vshll.u32 %v390, 16
      %v652 = vor.u32 %v649, %v650
      %v653 = vrot.slane %v649, 4
      %v655 = vshrl.u32 %v391, 16
      %v657 = vrot.slane %v655, 7
      %v658 = vshll.u32 %v391, 16
      %v660 = vor.u32 %v657, %v658
      %v661 = vsel %vm458, %v653, %v660
      %v662 = vrot.slane %v657, 4
      %v664 = vshrl.u32 %v392, 16
      %v666 = vrot.slane %v664, 7
      %v667 = vshll.u32 %v392, 16
      %v669 = vor.u32 %v666, %v667
      %v670 = vrot.slane %v666, 4
      %v672 = vshrl.u32 %v393, 16
      %v674 = vrot.slane %v672, 7
      %v675 = vshll.u32 %v393, 16
      %v677 = vor.u32 %v674, %v675
      %v678 = vsel %vm458, %v670, %v677
      %v679 = vrot.slane %v674, 4
      %v681 = vshrl.u32 %v394, 16
      %v683 = vrot.slane %v681, 7
      %v684 = vshll.u32 %v394, 16
      %v686 = vor.u32 %v683, %v684
      %v687 = vrot.slane %v683, 4
      %v689 = vshrl.u32 %v395, 16
      %v691 = vrot.slane %v689, 7
      %v692 = vshll.u32 %v395, 16
      %v694 = vor.u32 %v691, %v692
      %v695 = vsel %vm458, %v687, %v694
      %v696 = vrot.slane %v691, 4
      %v698 = vshrl.u32 %v396, 16
      %v700 = vrot.slane %v698, 7
      %v701 = vshll.u32 %v396, 16
      %v703 = vor.u32 %v700, %v701
      %v704 = vrot.slane %v700, 4
      %v706 = vshrl.u32 %v397, 16
      %v708 = vrot.slane %v706, 7
      %v709 = vshll.u32 %v397, 16
      %v711 = vor.u32 %v708, %v709
      %v712 = vsel %vm458, %v704, %v711
      %v713 = vrot.slane %v708, 4
      %v715 = vshrl.u32 %v398, 16
      %v717 = vrot.slane %v715, 7
      %v718 = vshll.u32 %v398, 16
      %v720 = vor.u32 %v717, %v718
      %v721 = vrot.slane %v717, 4
      %v723 = vshrl.u32 %v399, 16
      %v725 = vrot.slane %v723, 7
      %v726 = vshll.u32 %v399, 16
      %v728 = vor.u32 %v725, %v726
      %v729 = vsel %vm458, %v721, %v728
      %v730 = vrot.slane %v725, 4
      %s779 = scalar_lea.vmem [#allocation2], 12
      %vm780 = vcmask 27648
      %vm781 = vsmask.f32 7938
      %vm782 = vmand %vm780, %vm781
      %v783 = vld [vmem:[%s779] sm:$0xf]
      %v784 = vsel %vm782, %v465, %v783
      %785 = vst [vmem:[%s779] sm:$0xf] %v784
      %786 = vst.msk [vmem:[%s779 + $0x4] sm:$0xf] %vm400, %v474
      %vm787 = vcmask 24576
      %vm788 = vmand %vm787, %vm456
      %v789 = vld [vmem:[%s779 + $0x8] sm:$0x1]
      %v790 = vsel %vm788, %v475, %v789
      %791 = vst [vmem:[%s779 + $0x8] sm:$0x1] %v790
      %v792 = vld [vmem:[%s779 + $0xc] sm:$0xf]
      %v793 = vsel %vm782, %v482, %v792
      %794 = vst [vmem:[%s779 + $0xc] sm:$0xf] %v793
      %795 = vst.msk [vmem:[%s779 + $0x10] sm:$0xf] %vm400, %v491
      %v796 = vld [vmem:[%s779 + $0x14] sm:$0x1]
      %v797 = vsel %vm788, %v492, %v796
      %798 = vst [vmem:[%s779 + $0x14] sm:$0x1] %v797
      %v799 = vld [vmem:[%s779 + $0x18] sm:$0xf]
      %v800 = vsel %vm782, %v499, %v799
      %801 = vst [vmem:[%s779 + $0x18] sm:$0xf] %v800
      %802 = vst.msk [vmem:[%s779 + $0x1c] sm:$0xf] %vm400, %v508
      %v803 = vld [vmem:[%s779 + $0x20] sm:$0x1]
      %v804 = vsel %vm788, %v509, %v803
      %805 = vst [vmem:[%s779 + $0x20] sm:$0x1] %v804
      %v806 = vld [vmem:[%s779 + $0x24] sm:$0xf]
      %v807 = vsel %vm782, %v516, %v806
      %808 = vst [vmem:[%s779 + $0x24] sm:$0xf] %v807
      %809 = vst.msk [vmem:[%s779 + $0x28] sm:$0xf] %vm400, %v525
      %v810 = vld [vmem:[%s779 + $0x2c] sm:$0x1]
      %v811 = vsel %vm788, %v526, %v810
      %812 = vst [vmem:[%s779 + $0x2c] sm:$0x1] %v811
      %v813 = vld [vmem:[%s779 + $0x30] sm:$0xf]
      %v814 = vsel %vm782, %v533, %v813
      %815 = vst [vmem:[%s779 + $0x30] sm:$0xf] %v814
      %816 = vst.msk [vmem:[%s779 + $0x34] sm:$0xf] %vm400, %v542
      %v817 = vld [vmem:[%s779 + $0x38] sm:$0x1]
      %v818 = vsel %vm788, %v543, %v817
      %819 = vst [vmem:[%s779 + $0x38] sm:$0x1] %v818
      %v820 = vld [vmem:[%s779 + $0x3c] sm:$0xf]
      %v821 = vsel %vm782, %v550, %v820
      %822 = vst [vmem:[%s779 + $0x3c] sm:$0xf] %v821
      %823 = vst.msk [vmem:[%s779 + $0x40] sm:$0xf] %vm400, %v559
      %v824 = vld [vmem:[%s779 + $0x44] sm:$0x1]
      %v825 = vsel %vm788, %v560, %v824
      %826 = vst [vmem:[%s779 + $0x44] sm:$0x1] %v825
      %v827 = vld [vmem:[%s779 + $0x48] sm:$0xf]
      %v828 = vsel %vm782, %v567, %v827
      %829 = vst [vmem:[%s779 + $0x48] sm:$0xf] %v828
      %830 = vst.msk [vmem:[%s779 + $0x4c] sm:$0xf] %vm400, %v576
      %v831 = vld [vmem:[%s779 + $0x50] sm:$0x1]
      %v832 = vsel %vm788, %v577, %v831
      %833 = vst [vmem:[%s779 + $0x50] sm:$0x1] %v832
      %v834 = vld [vmem:[%s779 + $0x54] sm:$0xf]
      %v835 = vsel %vm782, %v584, %v834
      %836 = vst [vmem:[%s779 + $0x54] sm:$0xf] %v835
      %837 = vst.msk [vmem:[%s779 + $0x58] sm:$0xf] %vm400, %v593
      %v838 = vld [vmem:[%s779 + $0x5c] sm:$0x1]
      %v839 = vsel %vm788, %v594, %v838
      %840 = vst [vmem:[%s779 + $0x5c] sm:$0x1] %v839
      %v841 = vld [vmem:[%s779 + $0x60] sm:$0xf]
      %v842 = vsel %vm782, %v601, %v841
      %843 = vst [vmem:[%s779 + $0x60] sm:$0xf] %v842
      %844 = vst.msk [vmem:[%s779 + $0x64] sm:$0xf] %vm400, %v610
      %v845 = vld [vmem:[%s779 + $0x68] sm:$0x1]
      %v846 = vsel %vm788, %v611, %v845
      %847 = vst [vmem:[%s779 + $0x68] sm:$0x1] %v846
      %v848 = vld [vmem:[%s779 + $0x6c] sm:$0xf]
      %v849 = vsel %vm782, %v618, %v848
      %850 = vst [vmem:[%s779 + $0x6c] sm:$0xf] %v849
      %851 = vst.msk [vmem:[%s779 + $0x70] sm:$0xf] %vm400, %v627
      %v852 = vld [vmem:[%s779 + $0x74] sm:$0x1]
      %v853 = vsel %vm788, %v628, %v852
      %854 = vst [vmem:[%s779 + $0x74] sm:$0x1] %v853
      %v855 = vld [vmem:[%s779 + $0x78] sm:$0xf]
      %v856 = vsel %vm782, %v635, %v855
      %857 = vst [vmem:[%s779 + $0x78] sm:$0xf] %v856
      %858 = vst.msk [vmem:[%s779 + $0x7c] sm:$0xf] %vm400, %v644
      %v859 = vld [vmem:[%s779 + $0x80] sm:$0x1]
      %v860 = vsel %vm788, %v645, %v859
      %861 = vst [vmem:[%s779 + $0x80] sm:$0x1] %v860
      %v862 = vld [vmem:[%s779 + $0x84] sm:$0xf]
      %v863 = vsel %vm782, %v652, %v862
      %864 = vst [vmem:[%s779 + $0x84] sm:$0xf] %v863
      %865 = vst.msk [vmem:[%s779 + $0x88] sm:$0xf] %vm400, %v661
      %v866 = vld [vmem:[%s779 + $0x8c] sm:$0x1]
      %v867 = vsel %vm788, %v662, %v866
      %868 = vst [vmem:[%s779 + $0x8c] sm:$0x1] %v867
      %v869 = vld [vmem:[%s779 + $0x90] sm:$0xf]
      %v870 = vsel %vm782, %v669, %v869
      %871 = vst [vmem:[%s779 + $0x90] sm:$0xf] %v870
      %872 = vst.msk [vmem:[%s779 + $0x94] sm:$0xf] %vm400, %v678
      %v873 = vld [vmem:[%s779 + $0x98] sm:$0x1]
      %v874 = vsel %vm788, %v679, %v873
      %875 = vst [vmem:[%s779 + $0x98] sm:$0x1] %v874
      %v876 = vld [vmem:[%s779 + $0x9c] sm:$0xf]
      %v877 = vsel %vm782, %v686, %v876
      %878 = vst [vmem:[%s779 + $0x9c] sm:$0xf] %v877
      %879 = vst.msk [vmem:[%s779 + $0xa0] sm:$0xf] %vm400, %v695
      %v880 = vld [vmem:[%s779 + $0xa4] sm:$0x1]
      %v881 = vsel %vm788, %v696, %v880
      %882 = vst [vmem:[%s779 + $0xa4] sm:$0x1] %v881
      %v883 = vld [vmem:[%s779 + $0xa8] sm:$0xf]
      %v884 = vsel %vm782, %v703, %v883
      %885 = vst [vmem:[%s779 + $0xa8] sm:$0xf] %v884
      %886 = vst.msk [vmem:[%s779 + $0xac] sm:$0xf] %vm400, %v712
      %v887 = vld [vmem:[%s779 + $0xb0] sm:$0x1]
      %v888 = vsel %vm788, %v713, %v887
      %889 = vst [vmem:[%s779 + $0xb0] sm:$0x1] %v888
      %v890 = vld [vmem:[%s779 + $0xb4] sm:$0xf]
      %v891 = vsel %vm782, %v720, %v890
      %892 = vst [vmem:[%s779 + $0xb4] sm:$0xf] %v891
      %893 = vst.msk [vmem:[%s779 + $0xb8] sm:$0xf] %vm400, %v729
      %v894 = vld [vmem:[%s779 + $0xbc] sm:$0x1]
      %v895 = vsel %vm788, %v730, %v894
      %896 = vst [vmem:[%s779 + $0xbc] sm:$0x1] %v895
      %v897 = vld [vmem:[#allocation2] sm:$0xf]
      %v898 = vld [vmem:[#allocation2 + $0x4] sm:$0xf]
      %v899 = vld [vmem:[#allocation2 + $0xc] sm:$0xf]
      %v900 = vld [vmem:[#allocation2 + $0x10] sm:$0xf]
      %v901 = vld [vmem:[#allocation2 + $0x18] sm:$0xf]
      %v902 = vld [vmem:[#allocation2 + $0x1c] sm:$0xf]
      %v903 = vld [vmem:[#allocation2 + $0x24] sm:$0xf]
      %v904 = vld [vmem:[#allocation2 + $0x28] sm:$0xf]
      %v905 = vld [vmem:[#allocation2 + $0x30] sm:$0xf]
      %v906 = vld [vmem:[#allocation2 + $0x34] sm:$0xf]
      %v907 = vld [vmem:[#allocation2 + $0x3c] sm:$0xf]
      %v908 = vld [vmem:[#allocation2 + $0x40] sm:$0xf]
      %v909 = vld [vmem:[#allocation2 + $0x48] sm:$0xf]
      %v910 = vld [vmem:[#allocation2 + $0x4c] sm:$0xf]
      %v911 = vld [vmem:[#allocation2 + $0x54] sm:$0xf]
      %v912 = vld [vmem:[#allocation2 + $0x58] sm:$0xf]
      %v913 = vld [vmem:[#allocation2 + $0x60] sm:$0xf]
      %v914 = vld [vmem:[#allocation2 + $0x64] sm:$0xf]
      %v915 = vld [vmem:[#allocation2 + $0x6c] sm:$0xf]
      %v916 = vld [vmem:[#allocation2 + $0x70] sm:$0xf]
      %v917 = vld [vmem:[#allocation2 + $0x78] sm:$0xf]
      %v918 = vld [vmem:[#allocation2 + $0x7c] sm:$0xf]
      %v919 = vld [vmem:[#allocation2 + $0x84] sm:$0xf]
      %v920 = vld [vmem:[#allocation2 + $0x88] sm:$0xf]
      %v921 = vld [vmem:[#allocation2 + $0x90] sm:$0xf]
      %v922 = vld [vmem:[#allocation2 + $0x94] sm:$0xf]
      %v923 = vld [vmem:[#allocation2 + $0x9c] sm:$0xf]
      %v924 = vld [vmem:[#allocation2 + $0xa0] sm:$0xf]
      %v925 = vld [vmem:[#allocation2 + $0xa8] sm:$0xf]
      %v926 = vld [vmem:[#allocation2 + $0xac] sm:$0xf]
      %v927 = vld [vmem:[#allocation2 + $0xb4] sm:$0xf]
      %v928 = vld [vmem:[#allocation2 + $0xb8] sm:$0xf]
      %929 = vst.msk [vmem:[#allocation3] sm:$0xf] %vm400, %v897
      %930 = vst.msk [vmem:[#allocation3 + $0x4] sm:$0xf] %vm400, %v898
      %931 = vst.msk [vmem:[#allocation3 + $0x8] sm:$0xf] %vm400, %v899
      %932 = vst.msk [vmem:[#allocation3 + $0xc] sm:$0xf] %vm400, %v900
      %933 = vst.msk [vmem:[#allocation3 + $0x10] sm:$0xf] %vm400, %v901
      %934 = vst.msk [vmem:[#allocation3 + $0x14] sm:$0xf] %vm400, %v902
      %935 = vst.msk [vmem:[#allocation3 + $0x18] sm:$0xf] %vm400, %v903
      %936 = vst.msk [vmem:[#allocation3 + $0x1c] sm:$0xf] %vm400, %v904
      %937 = vst.msk [vmem:[#allocation3 + $0x20] sm:$0xf] %vm400, %v905
      %938 = vst.msk [vmem:[#allocation3 + $0x24] sm:$0xf] %vm400, %v906
      %939 = vst.msk [vmem:[#allocation3 + $0x28] sm:$0xf] %vm400, %v907
      %940 = vst.msk [vmem:[#allocation3 + $0x2c] sm:$0xf] %vm400, %v908
      %941 = vst.msk [vmem:[#allocation3 + $0x30] sm:$0xf] %vm400, %v909
      %942 = vst.msk [vmem:[#allocation3 + $0x34] sm:$0xf] %vm400, %v910
      %943 = vst.msk [vmem:[#allocation3 + $0x38] sm:$0xf] %vm400, %v911
      %944 = vst.msk [vmem:[#allocation3 + $0x3c] sm:$0xf] %vm400, %v912
      %945 = vst.msk [vmem:[#allocation3 + $0x40] sm:$0xf] %vm400, %v913
      %946 = vst.msk [vmem:[#allocation3 + $0x44] sm:$0xf] %vm400, %v914
      %947 = vst.msk [vmem:[#allocation3 + $0x48] sm:$0xf] %vm400, %v915
      %948 = vst.msk [vmem:[#allocation3 + $0x4c] sm:$0xf] %vm400, %v916
      %949 = vst.msk [vmem:[#allocation3 + $0x50] sm:$0xf] %vm400, %v917
      %950 = vst.msk [vmem:[#allocation3 + $0x54] sm:$0xf] %vm400, %v918
      %951 = vst.msk [vmem:[#allocation3 + $0x58] sm:$0xf] %vm400, %v919
      %952 = vst.msk [vmem:[#allocation3 + $0x5c] sm:$0xf] %vm400, %v920
      %953 = vst.msk [vmem:[#allocation3 + $0x60] sm:$0xf] %vm400, %v921
      %954 = vst.msk [vmem:[#allocation3 + $0x64] sm:$0xf] %vm400, %v922
      %955 = vst.msk [vmem:[#allocation3 + $0x68] sm:$0xf] %vm400, %v923
      %956 = vst.msk [vmem:[#allocation3 + $0x6c] sm:$0xf] %vm400, %v924
      %957 = vst.msk [vmem:[#allocation3 + $0x70] sm:$0xf] %vm400, %v925
      %958 = vst.msk [vmem:[#allocation3 + $0x74] sm:$0xf] %vm400, %v926
      %959 = vst.msk [vmem:[#allocation3 + $0x78] sm:$0xf] %vm400, %v927
      %960 = vst.msk [vmem:[#allocation3 + $0x7c] sm:$0xf] %vm400, %v928
      %v961 = vld [vmem:[#allocation2] sm:$0xf]
      %v962 = vld [vmem:[#allocation2 + $0x4] sm:$0xf]
      %v963 = vld [vmem:[#allocation2 + $0x8] sm:$0x1]
      %v964 = vld [vmem:[#allocation2 + $0xc] sm:$0xf]
      %v965 = vld [vmem:[#allocation2 + $0x10] sm:$0xf]
      %v966 = vld [vmem:[#allocation2 + $0x14] sm:$0x1]
      %v967 = vld [vmem:[#allocation2 + $0x18] sm:$0xf]
      %v968 = vld [vmem:[#allocation2 + $0x1c] sm:$0xf]
      %v969 = vld [vmem:[#allocation2 + $0x20] sm:$0x1]
      %v970 = vld [vmem:[#allocation2 + $0x24] sm:$0xf]
      %v971 = vld [vmem:[#allocation2 + $0x28] sm:$0xf]
      %v972 = vld [vmem:[#allocation2 + $0x2c] sm:$0x1]
      %v973 = vld [vmem:[#allocation2 + $0x30] sm:$0xf]
      %v974 = vld [vmem:[#allocation2 + $0x34] sm:$0xf]
      %v975 = vld [vmem:[#allocation2 + $0x38] sm:$0x1]
      %v976 = vld [vmem:[#allocation2 + $0x3c] sm:$0xf]
      %v977 = vld [vmem:[#allocation2 + $0x40] sm:$0xf]
      %v978 = vld [vmem:[#allocation2 + $0x44] sm:$0x1]
      %v979 = vld [vmem:[#allocation2 + $0x48] sm:$0xf]
      %v980 = vld [vmem:[#allocation2 + $0x4c] sm:$0xf]
      %v981 = vld [vmem:[#allocation2 + $0x50] sm:$0x1]
      %v982 = vld [vmem:[#allocation2 + $0x54] sm:$0xf]
      %v983 = vld [vmem:[#allocation2 + $0x58] sm:$0xf]
      %v984 = vld [vmem:[#allocation2 + $0x5c] sm:$0x1]
      %v985 = vld [vmem:[#allocation2 + $0x60] sm:$0xf]
      %v986 = vld [vmem:[#allocation2 + $0x64] sm:$0xf]
      %v987 = vld [vmem:[#allocation2 + $0x68] sm:$0x1]
      %v988 = vld [vmem:[#allocation2 + $0x6c] sm:$0xf]
      %v989 = vld [vmem:[#allocation2 + $0x70] sm:$0xf]
      %v990 = vld [vmem:[#allocation2 + $0x74] sm:$0x1]
      %v991 = vld [vmem:[#allocation2 + $0x78] sm:$0xf]
      %v992 = vld [vmem:[#allocation2 + $0x7c] sm:$0xf]
      %v993 = vld [vmem:[#allocation2 + $0x80] sm:$0x1]
      %v994 = vld [vmem:[#allocation2 + $0x84] sm:$0xf]
      %v995 = vld [vmem:[#allocation2 + $0x88] sm:$0xf]
      %v996 = vld [vmem:[#allocation2 + $0x8c] sm:$0x1]
      %v997 = vld [vmem:[#allocation2 + $0x90] sm:$0xf]
      %v998 = vld [vmem:[#allocation2 + $0x94] sm:$0xf]
      %v999 = vld [vmem:[#allocation2 + $0x98] sm:$0x1]
      %v1000 = vld [vmem:[#allocation2 + $0x9c] sm:$0xf]
      %v1001 = vld [vmem:[#allocation2 + $0xa0] sm:$0xf]
      %v1002 = vld [vmem:[#allocation2 + $0xa4] sm:$0x1]
      %v1003 = vld [vmem:[#allocation2 + $0xa8] sm:$0xf]
      %v1004 = vld [vmem:[#allocation2 + $0xac] sm:$0xf]
      %v1005 = vld [vmem:[#allocation2 + $0xb0] sm:$0x1]
      %v1006 = vld [vmem:[#allocation2 + $0xb4] sm:$0xf]
      %v1007 = vld [vmem:[#allocation2 + $0xb8] sm:$0xf]
      %v1008 = vld [vmem:[#allocation2 + $0xbc] sm:$0x1]
      %vm1009 = vsmask.f32 3328
      %vm1010 = vsmask.f32 7440
      %vm1011 = vmor %vm1009, %vm1010
      %v1013 = vshrl.u32 %v961, 16
      %v1015 = vrot.slane %v1013, 4
      %v1016 = vshll.u32 %v961, 16
      %v1018 = vrot.slane %v1016, 5
      %v1019 = vor.u32 %v1015, %v1018
      %v1020 = vrot.slane %v1019, 4
      %v1022 = vshll.u32 %v962, 16
      %v1024 = vrot.slane %v1022, 5
      %v1025 = vsel %vm1011, %v1020, %v1024
      %v1026 = vshrl.u32 %v962, 16
      %v1028 = vrot.slane %v1026, 4
      %v1029 = vor.u32 %v1028, %v1024
      %v1030 = vrot.slane %v1029, 4
      %v1032 = vshll.u32 %v963, 16
      %v1034 = vrot.slane %v1032, 5
      %v1035 = vsel %vm1011, %v1030, %v1034
      %v1037 = vshrl.u32 %v964, 16
      %v1039 = vrot.slane %v1037, 4
      %v1040 = vshll.u32 %v964, 16
      %v1042 = vrot.slane %v1040, 5
      %v1043 = vor.u32 %v1039, %v1042
      %v1044 = vrot.slane %v1043, 4
      %v1046 = vshll.u32 %v965, 16
      %v1048 = vrot.slane %v1046, 5
      %v1049 = vsel %vm1011, %v1044, %v1048
      %v1050 = vshrl.u32 %v965, 16
      %v1052 = vrot.slane %v1050, 4
      %v1053 = vor.u32 %v1052, %v1048
      %v1054 = vrot.slane %v1053, 4
      %v1056 = vshll.u32 %v966, 16
      %v1058 = vrot.slane %v1056, 5
      %v1059 = vsel %vm1011, %v1054, %v1058
      %v1061 = vshrl.u32 %v967, 16
      %v1063 = vrot.slane %v1061, 4
      %v1064 = vshll.u32 %v967, 16
      %v1066 = vrot.slane %v1064, 5
      %v1067 = vor.u32 %v1063, %v1066
      %v1068 = vrot.slane %v1067, 4
      %v1070 = vshll.u32 %v968, 16
      %v1072 = vrot.slane %v1070, 5
      %v1073 = vsel %vm1011, %v1068, %v1072
      %v1074 = vshrl.u32 %v968, 16
      %v1076 = vrot.slane %v1074, 4
      %v1077 = vor.u32 %v1076, %v1072
      %v1078 = vrot.slane %v1077, 4
      %v1080 = vshll.u32 %v969, 16
      %v1082 = vrot.slane %v1080, 5
      %v1083 = vsel %vm1011, %v1078, %v1082
      %v1085 = vshrl.u32 %v970, 16
      %v1087 = vrot.slane %v1085, 4
      %v1088 = vshll.u32 %v970, 16
      %v1090 = vrot.slane %v1088, 5
      %v1091 = vor.u32 %v1087, %v1090
      %v1092 = vrot.slane %v1091, 4
      %v1094 = vshll.u32 %v971, 16
      %v1096 = vrot.slane %v1094, 5
      %v1097 = vsel %vm1011, %v1092, %v1096
      %v1098 = vshrl.u32 %v971, 16
      %v1100 = vrot.slane %v1098, 4
      %v1101 = vor.u32 %v1100, %v1096
      %v1102 = vrot.slane %v1101, 4
      %v1104 = vshll.u32 %v972, 16
      %v1106 = vrot.slane %v1104, 5
      %v1107 = vsel %vm1011, %v1102, %v1106
      %v1109 = vshrl.u32 %v973, 16
      %v1111 = vrot.slane %v1109, 4
      %v1112 = vshll.u32 %v973, 16
      %v1114 = vrot.slane %v1112, 5
      %v1115 = vor.u32 %v1111, %v1114
      %v1116 = vrot.slane %v1115, 4
      %v1118 = vshll.u32 %v974, 16
      %v1120 = vrot.slane %v1118, 5
      %v1121 = vsel %vm1011, %v1116, %v1120
      %v1122 = vshrl.u32 %v974, 16
      %v1124 = vrot.slane %v1122, 4
      %v1125 = vor.u32 %v1124, %v1120
      %v1126 = vrot.slane %v1125, 4
      %v1128 = vshll.u32 %v975, 16
      %v1130 = vrot.slane %v1128, 5
      %v1131 = vsel %vm1011, %v1126, %v1130
      %v1133 = vshrl.u32 %v976, 16
      %v1135 = vrot.slane %v1133, 4
      %v1136 = vshll.u32 %v976, 16
      %v1138 = vrot.slane %v1136, 5
      %v1139 = vor.u32 %v1135, %v1138
      %v1140 = vrot.slane %v1139, 4
      %v1142 = vshll.u32 %v977, 16
      %v1144 = vrot.slane %v1142, 5
      %v1145 = vsel %vm1011, %v1140, %v1144
      %v1146 = vshrl.u32 %v977, 16
      %v1148 = vrot.slane %v1146, 4
      %v1149 = vor.u32 %v1148, %v1144
      %v1150 = vrot.slane %v1149, 4
      %v1152 = vshll.u32 %v978, 16
      %v1154 = vrot.slane %v1152, 5
      %v1155 = vsel %vm1011, %v1150, %v1154
      %v1157 = vshrl.u32 %v979, 16
      %v1159 = vrot.slane %v1157, 4
      %v1160 = vshll.u32 %v979, 16
      %v1162 = vrot.slane %v1160, 5
      %v1163 = vor.u32 %v1159, %v1162
      %v1164 = vrot.slane %v1163, 4
      %v1166 = vshll.u32 %v980, 16
      %v1168 = vrot.slane %v1166, 5
      %v1169 = vsel %vm1011, %v1164, %v1168
      %v1170 = vshrl.u32 %v980, 16
      %v1172 = vrot.slane %v1170, 4
      %v1173 = vor.u32 %v1172, %v1168
      %v1174 = vrot.slane %v1173, 4
      %v1176 = vshll.u32 %v981, 16
      %v1178 = vrot.slane %v1176, 5
      %v1179 = vsel %vm1011, %v1174, %v1178
      %v1181 = vshrl.u32 %v982, 16
      %v1183 = vrot.slane %v1181, 4
      %v1184 = vshll.u32 %v982, 16
      %v1186 = vrot.slane %v1184, 5
      %v1187 = vor.u32 %v1183, %v1186
      %v1188 = vrot.slane %v1187, 4
      %v1190 = vshll.u32 %v983, 16
      %v1192 = vrot.slane %v1190, 5
      %v1193 = vsel %vm1011, %v1188, %v1192
      %v1194 = vshrl.u32 %v983, 16
      %v1196 = vrot.slane %v1194, 4
      %v1197 = vor.u32 %v1196, %v1192
      %v1198 = vrot.slane %v1197, 4
      %v1200 = vshll.u32 %v984, 16
      %v1202 = vrot.slane %v1200, 5
      %v1203 = vsel %vm1011, %v1198, %v1202
      %v1205 = vshrl.u32 %v985, 16
      %v1207 = vrot.slane %v1205, 4
      %v1208 = vshll.u32 %v985, 16
      %v1210 = vrot.slane %v1208, 5
      %v1211 = vor.u32 %v1207, %v1210
      %v1212 = vrot.slane %v1211, 4
      %v1214 = vshll.u32 %v986, 16
      %v1216 = vrot.slane %v1214, 5
      %v1217 = vsel %vm1011, %v1212, %v1216
      %v1218 = vshrl.u32 %v986, 16
      %v1220 = vrot.slane %v1218, 4
      %v1221 = vor.u32 %v1220, %v1216
      %v1222 = vrot.slane %v1221, 4
      %v1224 = vshll.u32 %v987, 16
      %v1226 = vrot.slane %v1224, 5
      %v1227 = vsel %vm1011, %v1222, %v1226
      %v1229 = vshrl.u32 %v988, 16
      %v1231 = vrot.slane %v1229, 4
      %v1232 = vshll.u32 %v988, 16
      %v1234 = vrot.slane %v1232, 5
      %v1235 = vor.u32 %v1231, %v1234
      %v1236 = vrot.slane %v1235, 4
      %v1238 = vshll.u32 %v989, 16
      %v1240 = vrot.slane %v1238, 5
      %v1241 = vsel %vm1011, %v1236, %v1240
      %v1242 = vshrl.u32 %v989, 16
      %v1244 = vrot.slane %v1242, 4
      %v1245 = vor.u32 %v1244, %v1240
      %v1246 = vrot.slane %v1245, 4
      %v1248 = vshll.u32 %v990, 16
      %v1250 = vrot.slane %v1248, 5
      %v1251 = vsel %vm1011, %v1246, %v1250
      %v1253 = vshrl.u32 %v991, 16
      %v1255 = vrot.slane %v1253, 4
      %v1256 = vshll.u32 %v991, 16
      %v1258 = vrot.slane %v1256, 5
      %v1259 = vor.u32 %v1255, %v1258
      %v1260 = vrot.slane %v1259, 4
      %v1262 = vshll.u32 %v992, 16
      %v1264 = vrot.slane %v1262, 5
      %v1265 = vsel %vm1011, %v1260, %v1264
      %v1266 = vshrl.u32 %v992, 16
      %v1268 = vrot.slane %v1266, 4
      %v1269 = vor.u32 %v1268, %v1264
      %v1270 = vrot.slane %v1269, 4
      %v1272 = vshll.u32 %v993, 16
      %v1274 = vrot.slane %v1272, 5
      %v1275 = vsel %vm1011, %v1270, %v1274
      %v1277 = vshrl.u32 %v994, 16
      %v1279 = vrot.slane %v1277, 4
      %v1280 = vshll.u32 %v994, 16
      %v1282 = vrot.slane %v1280, 5
      %v1283 = vor.u32 %v1279, %v1282
      %v1284 = vrot.slane %v1283, 4
      %v1286 = vshll.u32 %v995, 16
      %v1288 = vrot.slane %v1286, 5
      %v1289 = vsel %vm1011, %v1284, %v1288
      %v1290 = vshrl.u32 %v995, 16
      %v1292 = vrot.slane %v1290, 4
      %v1293 = vor.u32 %v1292, %v1288
      %v1294 = vrot.slane %v1293, 4
      %v1296 = vshll.u32 %v996, 16
      %v1298 = vrot.slane %v1296, 5
      %v1299 = vsel %vm1011, %v1294, %v1298
      %v1301 = vshrl.u32 %v997, 16
      %v1303 = vrot.slane %v1301, 4
      %v1304 = vshll.u32 %v997, 16
      %v1306 = vrot.slane %v1304, 5
      %v1307 = vor.u32 %v1303, %v1306
      %v1308 = vrot.slane %v1307, 4
      %v1310 = vshll.u32 %v998, 16
      %v1312 = vrot.slane %v1310, 5
      %v1313 = vsel %vm1011, %v1308, %v1312
      %v1314 = vshrl.u32 %v998, 16
      %v1316 = vrot.slane %v1314, 4
      %v1317 = vor.u32 %v1316, %v1312
      %v1318 = vrot.slane %v1317, 4
      %v1320 = vshll.u32 %v999, 16
      %v1322 = vrot.slane %v1320, 5
      %v1323 = vsel %vm1011, %v1318, %v1322
      %v1325 = vshrl.u32 %v1000, 16
      %v1327 = vrot.slane %v1325, 4
      %v1328 = vshll.u32 %v1000, 16
      %v1330 = vrot.slane %v1328, 5
      %v1331 = vor.u32 %v1327, %v1330
      %v1332 = vrot.slane %v1331, 4
      %v1334 = vshll.u32 %v1001, 16
      %v1336 = vrot.slane %v1334, 5
      %v1337 = vsel %vm1011, %v1332, %v1336
      %v1338 = vshrl.u32 %v1001, 16
      %v1340 = vrot.slane %v1338, 4
      %v1341 = vor.u32 %v1340, %v1336
      %v1342 = vrot.slane %v1341, 4
      %v1344 = vshll.u32 %v1002, 16
      %v1346 = vrot.slane %v1344, 5
      %v1347 = vsel %vm1011, %v1342, %v1346
      %v1349 = vshrl.u32 %v1003, 16
      %v1351 = vrot.slane %v1349, 4
      %v1352 = vshll.u32 %v1003, 16
      %v1354 = vrot.slane %v1352, 5
      %v1355 = vor.u32 %v1351, %v1354
      %v1356 = vrot.slane %v1355, 4
      %v1358 = vshll.u32 %v1004, 16
      %v1360 = vrot.slane %v1358, 5
      %v1361 = vsel %vm1011, %v1356, %v1360
      %v1362 = vshrl.u32 %v1004, 16
      %v1364 = vrot.slane %v1362, 4
      %v1365 = vor.u32 %v1364, %v1360
      %v1366 = vrot.slane %v1365, 4
      %v1368 = vshll.u32 %v1005, 16
      %v1370 = vrot.slane %v1368, 5
      %v1371 = vsel %vm1011, %v1366, %v1370
      %v1373 = vshrl.u32 %v1006, 16
      %v1375 = vrot.slane %v1373, 4
      %v1376 = vshll.u32 %v1006, 16
      %v1378 = vrot.slane %v1376, 5
      %v1379 = vor.u32 %v1375, %v1378
      %v1380 = vrot.slane %v1379, 4
      %v1382 = vshll.u32 %v1007, 16
      %v1384 = vrot.slane %v1382, 5
      %v1385 = vsel %vm1011, %v1380, %v1384
      %v1386 = vshrl.u32 %v1007, 16
      %v1388 = vrot.slane %v1386, 4
      %v1389 = vor.u32 %v1388, %v1384
      %v1390 = vrot.slane %v1389, 4
      %v1392 = vshll.u32 %v1008, 16
      %v1394 = vrot.slane %v1392, 5
      %v1395 = vsel %vm1011, %v1390, %v1394
      %1396 = vrot.lane.b32.xlu0 %v1025, 4
      %v1397 = vpop.permute.xlu0 %1396
      %1398 = vrot.lane.b32.xlu0 %v1035, 4
      %v1399 = vpop.permute.xlu0 %1398
      %1400 = vrot.lane.b32.xlu0 %v1049, 4
      %v1401 = vpop.permute.xlu0 %1400
      %1402 = vrot.lane.b32.xlu0 %v1059, 4
      %v1403 = vpop.permute.xlu0 %1402
      %1404 = vrot.lane.b32.xlu0 %v1073, 4
      %v1405 = vpop.permute.xlu0 %1404
      %1406 = vrot.lane.b32.xlu0 %v1083, 4
      %v1407 = vpop.permute.xlu0 %1406
      %1408 = vrot.lane.b32.xlu0 %v1097, 4
      %v1409 = vpop.permute.xlu0 %1408
      %1410 = vrot.lane.b32.xlu0 %v1107, 4
      %v1411 = vpop.permute.xlu0 %1410
      %1412 = vrot.lane.b32.xlu0 %v1121, 4
      %v1413 = vpop.permute.xlu0 %1412
      %1414 = vrot.lane.b32.xlu0 %v1131, 4
      %v1415 = vpop.permute.xlu0 %1414
      %1416 = vrot.lane.b32.xlu0 %v1145, 4
      %v1417 = vpop.permute.xlu0 %1416
      %1418 = vrot.lane.b32.xlu0 %v1155, 4
      %v1419 = vpop.permute.xlu0 %1418
      %1420 = vrot.lane.b32.xlu0 %v1169, 4
      %v1421 = vpop.permute.xlu0 %1420
      %1422 = vrot.lane.b32.xlu0 %v1179, 4
      %v1423 = vpop.permute.xlu0 %1422
      %1424 = vrot.lane.b32.xlu0 %v1193, 4
      %v1425 = vpop.permute.xlu0 %1424
      %1426 = vrot.lane.b32.xlu0 %v1203, 4
      %v1427 = vpop.permute.xlu0 %1426
      %1428 = vrot.lane.b32.xlu0 %v1217, 4
      %v1429 = vpop.permute.xlu0 %1428
      %1430 = vrot.lane.b32.xlu0 %v1227, 4
      %v1431 = vpop.permute.xlu0 %1430
      %1432 = vrot.lane.b32.xlu0 %v1241, 4
      %v1433 = vpop.permute.xlu0 %1432
      %1434 = vrot.lane.b32.xlu0 %v1251, 4
      %v1435 = vpop.permute.xlu0 %1434
      %1436 = vrot.lane.b32.xlu0 %v1265, 4
      %v1437 = vpop.permute.xlu0 %1436
      %1438 = vrot.lane.b32.xlu0 %v1275, 4
      %v1439 = vpop.permute.xlu0 %1438
      %1440 = vrot.lane.b32.xlu0 %v1289, 4
      %v1441 = vpop.permute.xlu0 %1440
      %1442 = vrot.lane.b32.xlu0 %v1299, 4
      %v1443 = vpop.permute.xlu0 %1442
      %1444 = vrot.lane.b32.xlu0 %v1313, 4
      %v1445 = vpop.permute.xlu0 %1444
      %1446 = vrot.lane.b32.xlu0 %v1323, 4
      %v1447 = vpop.permute.xlu0 %1446
      %1448 = vrot.lane.b32.xlu0 %v1337, 4
      %v1449 = vpop.permute.xlu0 %1448
      %1450 = vrot.lane.b32.xlu0 %v1347, 4
      %v1451 = vpop.permute.xlu0 %1450
      %1452 = vrot.lane.b32.xlu0 %v1361, 4
      %v1453 = vpop.permute.xlu0 %1452
      %1454 = vrot.lane.b32.xlu0 %v1371, 4
      %v1455 = vpop.permute.xlu0 %1454
      %1456 = vrot.lane.b32.xlu0 %v1385, 4
      %v1457 = vpop.permute.xlu0 %1456
      %1458 = vrot.lane.b32.xlu0 %v1395, 4
      %v1459 = vpop.permute.xlu0 %1458
      %vm1492 = vcmask 60448
      %1493 = vst.msk [vmem:[#allocation3] sm:$0xf] %vm1492, %v1397
      %1494 = vst.msk [vmem:[#allocation3 + $0x4] sm:$0xf] %vm1492, %v1399
      %1495 = vst.msk [vmem:[#allocation3 + $0x8] sm:$0xf] %vm1492, %v1401
      %1496 = vst.msk [vmem:[#allocation3 + $0xc] sm:$0xf] %vm1492, %v1403
      %1497 = vst.msk [vmem:[#allocation3 + $0x10] sm:$0xf] %vm1492, %v1405
      %1498 = vst.msk [vmem:[#allocation3 + $0x14] sm:$0xf] %vm1492, %v1407
      %1499 = vst.msk [vmem:[#allocation3 + $0x18] sm:$0xf] %vm1492, %v1409
      %1500 = vst.msk [vmem:[#allocation3 + $0x1c] sm:$0xf] %vm1492, %v1411
      %1501 = vst.msk [vmem:[#allocation3 + $0x20] sm:$0xf] %vm1492, %v1413
      %1502 = vst.msk [vmem:[#allocation3 + $0x24] sm:$0xf] %vm1492, %v1415
      %1503 = vst.msk [vmem:[#allocation3 + $0x28] sm:$0xf] %vm1492, %v1417
      %1504 = vst.msk [vmem:[#allocation3 + $0x2c] sm:$0xf] %vm1492, %v1419
      %1505 = vst.msk [vmem:[#allocation3 + $0x30] sm:$0xf] %vm1492, %v1421
      %1506 = vst.msk [vmem:[#allocation3 + $0x34] sm:$0xf] %vm1492, %v1423
      %1507 = vst.msk [vmem:[#allocation3 + $0x38] sm:$0xf] %vm1492, %v1425
      %1508 = vst.msk [vmem:[#allocation3 + $0x3c] sm:$0xf] %vm1492, %v1427
      %1509 = vst.msk [vmem:[#allocation3 + $0x40] sm:$0xf] %vm1492, %v1429
      %1510 = vst.msk [vmem:[#allocation3 + $0x44] sm:$0xf] %vm1492, %v1431
      %1511 = vst.msk [vmem:[#allocation3 + $0x48] sm:$0xf] %vm1492, %v1433
      %1512 = vst.msk [vmem:[#allocation3 + $0x4c] sm:$0xf] %vm1492, %v1435
      %1513 = vst.msk [vmem:[#allocation3 + $0x50] sm:$0xf] %vm1492, %v1437
      %1514 = vst.msk [vmem:[#allocation3 + $0x54] sm:$0xf] %vm1492, %v1439
      %1515 = vst.msk [vmem:[#allocation3 + $0x58] sm:$0xf] %vm1492, %v1441
      %1516 = vst.msk [vmem:[#allocation3 + $0x5c] sm:$0xf] %vm1492, %v1443
      %1517 = vst.msk [vmem:[#allocation3 + $0x60] sm:$0xf] %vm1492, %v1445
      %1518 = vst.msk [vmem:[#allocation3 + $0x64] sm:$0xf] %vm1492, %v1447
      %1519 = vst.msk [vmem:[#allocation3 + $0x68] sm:$0xf] %vm1492, %v1449
      %1520 = vst.msk [vmem:[#allocation3 + $0x6c] sm:$0xf] %vm1492, %v1451
      %1521 = vst.msk [vmem:[#allocation3 + $0x70] sm:$0xf] %vm1492, %v1453
      %1522 = vst.msk [vmem:[#allocation3 + $0x74] sm:$0xf] %vm1492, %v1455
      %1523 = vst.msk [vmem:[#allocation3 + $0x78] sm:$0xf] %vm1492, %v1457
      %1524 = vst.msk [vmem:[#allocation3 + $0x7c] sm:$0xf] %vm1492, %v1459
      %v1525 = vld [vmem:[#allocation2] sm:$0xe]
      %v1526 = vld [vmem:[#allocation2 + $0x4] sm:$0xf]
      %v1527 = vld [vmem:[#allocation2 + $0x8] sm:$0x1]
      %v1528 = vld [vmem:[#allocation2 + $0xc] sm:$0xe]
      %v1529 = vld [vmem:[#allocation2 + $0x10] sm:$0xf]
      %v1530 = vld [vmem:[#allocation2 + $0x14] sm:$0x1]
      %v1531 = vld [vmem:[#allocation2 + $0x18] sm:$0xe]
      %v1532 = vld [vmem:[#allocation2 + $0x1c] sm:$0xf]
      %v1533 = vld [vmem:[#allocation2 + $0x20] sm:$0x1]
      %v1534 = vld [vmem:[#allocation2 + $0x24] sm:$0xe]
      %v1535 = vld [vmem:[#allocation2 + $0x28] sm:$0xf]
      %v1536 = vld [vmem:[#allocation2 + $0x2c] sm:$0x1]
      %v1537 = vld [vmem:[#allocation2 + $0x30] sm:$0xe]
      %v1538 = vld [vmem:[#allocation2 + $0x34] sm:$0xf]
      %v1539 = vld [vmem:[#allocation2 + $0x38] sm:$0x1]
      %v1540 = vld [vmem:[#allocation2 + $0x3c] sm:$0xe]
      %v1541 = vld [vmem:[#allocation2 + $0x40] sm:$0xf]
      %v1542 = vld [vmem:[#allocation2 + $0x44] sm:$0x1]
      %v1543 = vld [vmem:[#allocation2 + $0x48] sm:$0xe]
      %v1544 = vld [vmem:[#allocation2 + $0x4c] sm:$0xf]
      %v1545 = vld [vmem:[#allocation2 + $0x50] sm:$0x1]
      %v1546 = vld [vmem:[#allocation2 + $0x54] sm:$0xe]
      %v1547 = vld [vmem:[#allocation2 + $0x58] sm:$0xf]
      %v1548 = vld [vmem:[#allocation2 + $0x5c] sm:$0x1]
      %v1549 = vld [vmem:[#allocation2 + $0x60] sm:$0xe]
      %v1550 = vld [vmem:[#allocation2 + $0x64] sm:$0xf]
      %v1551 = vld [vmem:[#allocation2 + $0x68] sm:$0x1]
      %v1552 = vld [vmem:[#allocation2 + $0x6c] sm:$0xe]
      %v1553 = vld [vmem:[#allocation2 + $0x70] sm:$0xf]
      %v1554 = vld [vmem:[#allocation2 + $0x74] sm:$0x1]
      %v1555 = vld [vmem:[#allocation2 + $0x78] sm:$0xe]
      %v1556 = vld [vmem:[#allocation2 + $0x7c] sm:$0xf]
      %v1557 = vld [vmem:[#allocation2 + $0x80] sm:$0x1]
      %v1558 = vld [vmem:[#allocation2 + $0x84] sm:$0xe]
      %v1559 = vld [vmem:[#allocation2 + $0x88] sm:$0xf]
      %v1560 = vld [vmem:[#allocation2 + $0x8c] sm:$0x1]
      %v1561 = vld [vmem:[#allocation2 + $0x90] sm:$0xe]
      %v1562 = vld [vmem:[#allocation2 + $0x94] sm:$0xf]
      %v1563 = vld [vmem:[#allocation2 + $0x98] sm:$0x1]
      %v1564 = vld [vmem:[#allocation2 + $0x9c] sm:$0xe]
      %v1565 = vld [vmem:[#allocation2 + $0xa0] sm:$0xf]
      %v1566 = vld [vmem:[#allocation2 + $0xa4] sm:$0x1]
      %v1567 = vld [vmem:[#allocation2 + $0xa8] sm:$0xe]
      %v1568 = vld [vmem:[#allocation2 + $0xac] sm:$0xf]
      %v1569 = vld [vmem:[#allocation2 + $0xb0] sm:$0x1]
      %v1570 = vld [vmem:[#allocation2 + $0xb4] sm:$0xe]
      %v1571 = vld [vmem:[#allocation2 + $0xb8] sm:$0xf]
      %v1572 = vld [vmem:[#allocation2 + $0xbc] sm:$0x1]
      %vm1621 = vcmask 1042432
      %vm1622 = vcmask 1046532
      %vm1623 = vmor %vm1621, %vm1622
      %v1624 = vrot.slane %v1525, 5
      %v1625 = vrot.slane %v1624, 4
      %v1626 = vrot.slane %v1526, 5
      %v1627 = vsel %vm1623, %v1625, %v1626
      %v1628 = vrot.slane %v1626, 4
      %v1629 = vrot.slane %v1527, 5
      %v1630 = vsel %vm1623, %v1628, %v1629
      %v1631 = vrot.slane %v1528, 5
      %v1632 = vrot.slane %v1631, 4
      %v1633 = vrot.slane %v1529, 5
      %v1634 = vsel %vm1623, %v1632, %v1633
      %v1635 = vrot.slane %v1633, 4
      %v1636 = vrot.slane %v1530, 5
      %v1637 = vsel %vm1623, %v1635, %v1636
      %v1638 = vrot.slane %v1531, 5
      %v1639 = vrot.slane %v1638, 4
      %v1640 = vrot.slane %v1532, 5
      %v1641 = vsel %vm1623, %v1639, %v1640
      %v1642 = vrot.slane %v1640, 4
      %v1643 = vrot.slane %v1533, 5
      %v1644 = vsel %vm1623, %v1642, %v1643
      %v1645 = vrot.slane %v1534, 5
      %v1646 = vrot.slane %v1645, 4
      %v1647 = vrot.slane %v1535, 5
      %v1648 = vsel %vm1623, %v1646, %v1647
      %v1649 = vrot.slane %v1647, 4
      %v1650 = vrot.slane %v1536, 5
      %v1651 = vsel %vm1623, %v1649, %v1650
      %v1652 = vrot.slane %v1537, 5
      %v1653 = vrot.slane %v1652, 4
      %v1654 = vrot.slane %v1538, 5
      %v1655 = vsel %vm1623, %v1653, %v1654
      %v1656 = vrot.slane %v1654, 4
      %v1657 = vrot.slane %v1539, 5
      %v1658 = vsel %vm1623, %v1656, %v1657
      %v1659 = vrot.slane %v1540, 5
      %v1660 = vrot.slane %v1659, 4
      %v1661 = vrot.slane %v1541, 5
      %v1662 = vsel %vm1623, %v1660, %v1661
      %v1663 = vrot.slane %v1661, 4
      %v1664 = vrot.slane %v1542, 5
      %v1665 = vsel %vm1623, %v1663, %v1664
      %v1666 = vrot.slane %v1543, 5
      %v1667 = vrot.slane %v1666, 4
      %v1668 = vrot.slane %v1544, 5
      %v1669 = vsel %vm1623, %v1667, %v1668
      %v1670 = vrot.slane %v1668, 4
      %v1671 = vrot.slane %v1545, 5
      %v1672 = vsel %vm1623, %v1670, %v1671
      %v1673 = vrot.slane %v1546, 5
      %v1674 = vrot.slane %v1673, 4
      %v1675 = vrot.slane %v1547, 5
      %v1676 = vsel %vm1623, %v1674, %v1675
      %v1677 = vrot.slane %v1675, 4
      %v1678 = vrot.slane %v1548, 5
      %v1679 = vsel %vm1623, %v1677, %v1678
      %v1680 = vrot.slane %v1549, 5
      %v1681 = vrot.slane %v1680, 4
      %v1682 = vrot.slane %v1550, 5
      %v1683 = vsel %vm1623, %v1681, %v1682
      %v1684 = vrot.slane %v1682, 4
      %v1685 = vrot.slane %v1551, 5
      %v1686 = vsel %vm1623, %v1684, %v1685
      %v1687 = vrot.slane %v1552, 5
      %v1688 = vrot.slane %v1687, 4
      %v1689 = vrot.slane %v1553, 5
      %v1690 = vsel %vm1623, %v1688, %v1689
      %v1691 = vrot.slane %v1689, 4
      %v1692 = vrot.slane %v1554, 5
      %v1693 = vsel %vm1623, %v1691, %v1692
      %v1694 = vrot.slane %v1555, 5
      %v1695 = vrot.slane %v1694, 4
      %v1696 = vrot.slane %v1556, 5
      %v1697 = vsel %vm1623, %v1695, %v1696
      %v1698 = vrot.slane %v1696, 4
      %v1699 = vrot.slane %v1557, 5
      %v1700 = vsel %vm1623, %v1698, %v1699
      %v1701 = vrot.slane %v1558, 5
      %v1702 = vrot.slane %v1701, 4
      %v1703 = vrot.slane %v1559, 5
      %v1704 = vsel %vm1623, %v1702, %v1703
      %v1705 = vrot.slane %v1703, 4
      %v1706 = vrot.slane %v1560, 5
      %v1707 = vsel %vm1623, %v1705, %v1706
      %v1708 = vrot.slane %v1561, 5
      %v1709 = vrot.slane %v1708, 4
      %v1710 = vrot.slane %v1562, 5
      %v1711 = vsel %vm1623, %v1709, %v1710
      %v1712 = vrot.slane %v1710, 4
      %v1713 = vrot.slane %v1563, 5
      %v1714 = vsel %vm1623, %v1712, %v1713
      %v1715 = vrot.slane %v1564, 5
      %v1716 = vrot.slane %v1715, 4
      %v1717 = vrot.slane %v1565, 5
      %v1718 = vsel %vm1623, %v1716, %v1717
      %v1719 = vrot.slane %v1717, 4
      %v1720 = vrot.slane %v1566, 5
      %v1721 = vsel %vm1623, %v1719, %v1720
      %v1722 = vrot.slane %v1567, 5
      %v1723 = vrot.slane %v1722, 4
      %v1724 = vrot.slane %v1568, 5
      %v1725 = vsel %vm1623, %v1723, %v1724
      %v1726 = vrot.slane %v1724, 4
      %v1727 = vrot.slane %v1569, 5
      %v1728 = vsel %vm1623, %v1726, %v1727
      %v1729 = vrot.slane %v1570, 5
      %v1730 = vrot.slane %v1729, 4
      %v1731 = vrot.slane %v1571, 5
      %v1732 = vsel %vm1623, %v1730, %v1731
      %v1733 = vrot.slane %v1731, 4
      %v1734 = vrot.slane %v1572, 5
      %v1735 = vsel %vm1623, %v1733, %v1734
      %1736 = vrot.lane.b32.xlu0 %v1627, 8
      %v1737 = vpop.permute.xlu0 %1736
      %1738 = vrot.lane.b32.xlu0 %v1630, 8
      %v1739 = vpop.permute.xlu0 %1738
      %1740 = vrot.lane.b32.xlu0 %v1634, 8
      %v1741 = vpop.permute.xlu0 %1740
      %1742 = vrot.lane.b32.xlu0 %v1637, 8
      %v1743 = vpop.permute.xlu0 %1742
      %1744 = vrot.lane.b32.xlu0 %v1641, 8
      %v1745 = vpop.permute.xlu0 %1744
      %1746 = vrot.lane.b32.xlu0 %v1644, 8
      %v1747 = vpop.permute.xlu0 %1746
      %1748 = vrot.lane.b32.xlu0 %v1648, 8
      %v1749 = vpop.permute.xlu0 %1748
      %1750 = vrot.lane.b32.xlu0 %v1651, 8
      %v1751 = vpop.permute.xlu0 %1750
      %1752 = vrot.lane.b32.xlu0 %v1655, 8
      %v1753 = vpop.permute.xlu0 %1752
      %1754 = vrot.lane.b32.xlu0 %v1658, 8
      %v1755 = vpop.permute.xlu0 %1754
      %1756 = vrot.lane.b32.xlu0 %v1662, 8
      %v1757 = vpop.permute.xlu0 %1756
      %1758 = vrot.lane.b32.xlu0 %v1665, 8
      %v1759 = vpop.permute.xlu0 %1758
      %1760 = vrot.lane.b32.xlu0 %v1669, 8
      %v1761 = vpop.permute.xlu0 %1760
      %1762 = vrot.lane.b32.xlu0 %v1672, 8
      %v1763 = vpop.permute.xlu0 %1762
      %1764 = vrot.lane.b32.xlu0 %v1676, 8
      %v1765 = vpop.permute.xlu0 %1764
      %1766 = vrot.lane.b32.xlu0 %v1679, 8
      %v1767 = vpop.permute.xlu0 %1766
      %1768 = vrot.lane.b32.xlu0 %v1683, 8
      %v1769 = vpop.permute.xlu0 %1768
      %1770 = vrot.lane.b32.xlu0 %v1686, 8
      %v1771 = vpop.permute.xlu0 %1770
      %1772 = vrot.lane.b32.xlu0 %v1690, 8
      %v1773 = vpop.permute.xlu0 %1772
      %1774 = vrot.lane.b32.xlu0 %v1693, 8
      %v1775 = vpop.permute.xlu0 %1774
      %1776 = vrot.lane.b32.xlu0 %v1697, 8
      %v1777 = vpop.permute.xlu0 %1776
      %1778 = vrot.lane.b32.xlu0 %v1700, 8
      %v1779 = vpop.permute.xlu0 %1778
      %1780 = vrot.lane.b32.xlu0 %v1704, 8
      %v1781 = vpop.permute.xlu0 %1780
      %1782 = vrot.lane.b32.xlu0 %v1707, 8
      %v1783 = vpop.permute.xlu0 %1782
      %1784 = vrot.lane.b32.xlu0 %v1711, 8
      %v1785 = vpop.permute.xlu0 %1784
      %1786 = vrot.lane.b32.xlu0 %v1714, 8
      %v1787 = vpop.permute.xlu0 %1786
      %1788 = vrot.lane.b32.xlu0 %v1718, 8
      %v1789 = vpop.permute.xlu0 %1788
      %1790 = vrot.lane.b32.xlu0 %v1721, 8
      %v1791 = vpop.permute.xlu0 %1790
      %1792 = vrot.lane.b32.xlu0 %v1725, 8
      %v1793 = vpop.permute.xlu0 %1792
      %1794 = vrot.lane.b32.xlu0 %v1728, 8
      %v1795 = vpop.permute.xlu0 %1794
      %1796 = vrot.lane.b32.xlu0 %v1732, 8
      %v1797 = vpop.permute.xlu0 %1796
      %1798 = vrot.lane.b32.xlu0 %v1735, 8
      %v1799 = vpop.permute.xlu0 %1798
      %vm1832 = vcmask 93248
      %1833 = vst.msk [vmem:[#allocation3] sm:$0xf] %vm1832, %v1737
      %1834 = vst.msk [vmem:[#allocation3 + $0x4] sm:$0xf] %vm1832, %v1739
      %1835 = vst.msk [vmem:[#allocation3 + $0x8] sm:$0xf] %vm1832, %v1741
      %1836 = vst.msk [vmem:[#allocation3 + $0xc] sm:$0xf] %vm1832, %v1743
      %1837 = vst.msk [vmem:[#allocation3 + $0x10] sm:$0xf] %vm1832, %v1745
      %1838 = vst.msk [vmem:[#allocation3 + $0x14] sm:$0xf] %vm1832, %v1747
      %1839 = vst.msk [vmem:[#allocation3 + $0x18] sm:$0xf] %vm1832, %v1749
      %1840 = vst.msk [vmem:[#allocation3 + $0x1c] sm:$0xf] %vm1832, %v1751
      %1841 = vst.msk [vmem:[#allocation3 + $0x20] sm:$0xf] %vm1832, %v1753
      %1842 = vst.msk [vmem:[#allocation3 + $0x24] sm:$0xf] %vm1832, %v1755
      %1843 = vst.msk [vmem:[#allocation3 + $0x28] sm:$0xf] %vm1832, %v1757
      %1844 = vst.msk [vmem:[#allocation3 + $0x2c] sm:$0xf] %vm1832, %v1759
      %1845 = vst.msk [vmem:[#allocation3 + $0x30] sm:$0xf] %vm1832, %v1761
      %1846 = vst.msk [vmem:[#allocation3 + $0x34] sm:$0xf] %vm1832, %v1763
      %1847 = vst.msk [vmem:[#allocation3 + $0x38] sm:$0xf] %vm1832, %v1765
      %1848 = vst.msk [vmem:[#allocation3 + $0x3c] sm:$0xf] %vm1832, %v1767
      %1849 = vst.msk [vmem:[#allocation3 + $0x40] sm:$0xf] %vm1832, %v1769
      %1850 = vst.msk [vmem:[#allocation3 + $0x44] sm:$0xf] %vm1832, %v1771
      %1851 = vst.msk [vmem:[#allocation3 + $0x48] sm:$0xf] %vm1832, %v1773
      %1852 = vst.msk [vmem:[#allocation3 + $0x4c] sm:$0xf] %vm1832, %v1775
      %1853 = vst.msk [vmem:[#allocation3 + $0x50] sm:$0xf] %vm1832, %v1777
      %1854 = vst.msk [vmem:[#allocation3 + $0x54] sm:$0xf] %vm1832, %v1779
      %1855 = vst.msk [vmem:[#allocation3 + $0x58] sm:$0xf] %vm1832, %v1781
      %1856 = vst.msk [vmem:[#allocation3 + $0x5c] sm:$0xf] %vm1832, %v1783
      %1857 = vst.msk [vmem:[#allocation3 + $0x60] sm:$0xf] %vm1832, %v1785
      %1858 = vst.msk [vmem:[#allocation3 + $0x64] sm:$0xf] %vm1832, %v1787
      %1859 = vst.msk [vmem:[#allocation3 + $0x68] sm:$0xf] %vm1832, %v1789
      %1860 = vst.msk [vmem:[#allocation3 + $0x6c] sm:$0xf] %vm1832, %v1791
      %1861 = vst.msk [vmem:[#allocation3 + $0x70] sm:$0xf] %vm1832, %v1793
      %1862 = vst.msk [vmem:[#allocation3 + $0x74] sm:$0xf] %vm1832, %v1795
      %1863 = vst.msk [vmem:[#allocation3 + $0x78] sm:$0xf] %vm1832, %v1797
      %1864 = vst.msk [vmem:[#allocation3 + $0x7c] sm:$0xf] %vm1832, %v1799
      %v1865 = vld [vmem:[%s779] sm:$0xf]
      %v1866 = vld [vmem:[%s779 + $0x4] sm:$0xf]
      %v1867 = vld [vmem:[%s779 + $0xc] sm:$0xf]
      %v1868 = vld [vmem:[%s779 + $0x10] sm:$0xf]
      %v1869 = vld [vmem:[%s779 + $0x18] sm:$0xf]
      %v1870 = vld [vmem:[%s779 + $0x1c] sm:$0xf]
      %v1871 = vld [vmem:[%s779 + $0x24] sm:$0xf]
      %v1872 = vld [vmem:[%s779 + $0x28] sm:$0xf]
      %v1873 = vld [vmem:[%s779 + $0x30] sm:$0xf]
      %v1874 = vld [vmem:[%s779 + $0x34] sm:$0xf]
      %v1875 = vld [vmem:[%s779 + $0x3c] sm:$0xf]
      %v1876 = vld [vmem:[%s779 + $0x40] sm:$0xf]
      %v1877 = vld [vmem:[%s779 + $0x48] sm:$0xf]
      %v1878 = vld [vmem:[%s779 + $0x4c] sm:$0xf]
      %v1879 = vld [vmem:[%s779 + $0x54] sm:$0xf]
      %v1880 = vld [vmem:[%s779 + $0x58] sm:$0xf]
      %v1881 = vld [vmem:[%s779 + $0x60] sm:$0xf]
      %v1882 = vld [vmem:[%s779 + $0x64] sm:$0xf]
      %v1883 = vld [vmem:[%s779 + $0x6c] sm:$0xf]
      %v1884 = vld [vmem:[%s779 + $0x70] sm:$0xf]
      %v1885 = vld [vmem:[%s779 + $0x78] sm:$0xf]
      %v1886 = vld [vmem:[%s779 + $0x7c] sm:$0xf]
      %v1887 = vld [vmem:[%s779 + $0x84] sm:$0xf]
      %v1888 = vld [vmem:[%s779 + $0x88] sm:$0xf]
      %v1889 = vld [vmem:[%s779 + $0x90] sm:$0xf]
      %v1890 = vld [vmem:[%s779 + $0x94] sm:$0xf]
      %v1891 = vld [vmem:[%s779 + $0x9c] sm:$0xf]
      %v1892 = vld [vmem:[%s779 + $0xa0] sm:$0xf]
      %v1893 = vld [vmem:[%s779 + $0xa8] sm:$0xf]
      %v1894 = vld [vmem:[%s779 + $0xac] sm:$0xf]
      %v1895 = vld [vmem:[%s779 + $0xb4] sm:$0xf]
      %v1896 = vld [vmem:[%s779 + $0xb8] sm:$0xf]
      %1929 = vrot.lane.b32.xlu0 %v1865, 12
      %v1930 = vpop.permute.xlu0 %1929
      %1931 = vrot.lane.b32.xlu0 %v1866, 12
      %v1932 = vpop.permute.xlu0 %1931
      %1933 = vrot.lane.b32.xlu0 %v1867, 12
      %v1934 = vpop.permute.xlu0 %1933
      %1935 = vrot.lane.b32.xlu0 %v1868, 12
      %v1936 = vpop.permute.xlu0 %1935
      %1937 = vrot.lane.b32.xlu0 %v1869, 12
      %v1938 = vpop.permute.xlu0 %1937
      %1939 = vrot.lane.b32.xlu0 %v1870, 12
      %v1940 = vpop.permute.xlu0 %1939
      %1941 = vrot.lane.b32.xlu0 %v1871, 12
      %v1942 = vpop.permute.xlu0 %1941
      %1943 = vrot.lane.b32.xlu0 %v1872, 12
      %v1944 = vpop.permute.xlu0 %1943
      %1945 = vrot.lane.b32.xlu0 %v1873, 12
      %v1946 = vpop.permute.xlu0 %1945
      %1947 = vrot.lane.b32.xlu0 %v1874, 12
      %v1948 = vpop.permute.xlu0 %1947
      %1949 = vrot.lane.b32.xlu0 %v1875, 12
      %v1950 = vpop.permute.xlu0 %1949
      %1951 = vrot.lane.b32.xlu0 %v1876, 12
      %v1952 = vpop.permute.xlu0 %1951
      %1953 = vrot.lane.b32.xlu0 %v1877, 12
      %v1954 = vpop.permute.xlu0 %1953
      %1955 = vrot.lane.b32.xlu0 %v1878, 12
      %v1956 = vpop.permute.xlu0 %1955
      %1957 = vrot.lane.b32.xlu0 %v1879, 12
      %v1958 = vpop.permute.xlu0 %1957
      %1959 = vrot.lane.b32.xlu0 %v1880, 12
      %v1960 = vpop.permute.xlu0 %1959
      %1961 = vrot.lane.b32.xlu0 %v1881, 12
      %v1962 = vpop.permute.xlu0 %1961
      %1963 = vrot.lane.b32.xlu0 %v1882, 12
      %v1964 = vpop.permute.xlu0 %1963
      %1965 = vrot.lane.b32.xlu0 %v1883, 12
      %v1966 = vpop.permute.xlu0 %1965
      %1967 = vrot.lane.b32.xlu0 %v1884, 12
      %v1968 = vpop.permute.xlu0 %1967
      %1969 = vrot.lane.b32.xlu0 %v1885, 12
      %v1970 = vpop.permute.xlu0 %1969
      %1971 = vrot.lane.b32.xlu0 %v1886, 12
      %v1972 = vpop.permute.xlu0 %1971
      %1973 = vrot.lane.b32.xlu0 %v1887, 12
      %v1974 = vpop.permute.xlu0 %1973
      %1975 = vrot.lane.b32.xlu0 %v1888, 12
      %v1976 = vpop.permute.xlu0 %1975
      %1977 = vrot.lane.b32.xlu0 %v1889, 12
      %v1978 = vpop.permute.xlu0 %1977
      %1979 = vrot.lane.b32.xlu0 %v1890, 12
      %v1980 = vpop.permute.xlu0 %1979
      %1981 = vrot.lane.b32.xlu0 %v1891, 12
      %v1982 = vpop.permute.xlu0 %1981
      %1983 = vrot.lane.b32.xlu0 %v1892, 12
      %v1984 = vpop.permute.xlu0 %1983
      %1985 = vrot.lane.b32.xlu0 %v1893, 12
      %v1986 = vpop.permute.xlu0 %1985
      %1987 = vrot.lane.b32.xlu0 %v1894, 12
      %v1988 = vpop.permute.xlu0 %1987
      %1989 = vrot.lane.b32.xlu0 %v1895, 12
      %v1990 = vpop.permute.xlu0 %1989
      %1991 = vrot.lane.b32.xlu0 %v1896, 12
      %v1992 = vpop.permute.xlu0 %1991
      %vm2025 = vcmask 126048
      %2026 = vst.msk [vmem:[#allocation3] sm:$0xf] %vm2025, %v1930
      %2027 = vst.msk [vmem:[#allocation3 + $0x4] sm:$0xf] %vm2025, %v1932
      %2028 = vst.msk [vmem:[#allocation3 + $0x8] sm:$0xf] %vm2025, %v1934
      %2029 = vst.msk [vmem:[#allocation3 + $0xc] sm:$0xf] %vm2025, %v1936
      %2030 = vst.msk [vmem:[#allocation3 + $0x10] sm:$0xf] %vm2025, %v1938
      %2031 = vst.msk [vmem:[#allocation3 + $0x14] sm:$0xf] %vm2025, %v1940
      %2032 = vst.msk [vmem:[#allocation3 + $0x18] sm:$0xf] %vm2025, %v1942
      %2033 = vst.msk [vmem:[#allocation3 + $0x1c] sm:$0xf] %vm2025, %v1944
      %2034 = vst.msk [vmem:[#allocation3 + $0x20] sm:$0xf] %vm2025, %v1946
      %2035 = vst.msk [vmem:[#allocation3 + $0x24] sm:$0xf] %vm2025, %v1948
      %2036 = vst.msk [vmem:[#allocation3 + $0x28] sm:$0xf] %vm2025, %v1950
      %2037 = vst.msk [vmem:[#allocation3 + $0x2c] sm:$0xf] %vm2025, %v1952
      %2038 = vst.msk [vmem:[#allocation3 + $0x30] sm:$0xf] %vm2025, %v1954
      %2039 = vst.msk [vmem:[#allocation3 + $0x34] sm:$0xf] %vm2025, %v1956
      %2040 = vst.msk [vmem:[#allocation3 + $0x38] sm:$0xf] %vm2025, %v1958
      %2041 = vst.msk [vmem:[#allocation3 + $0x3c] sm:$0xf] %vm2025, %v1960
      %2042 = vst.msk [vmem:[#allocation3 + $0x40] sm:$0xf] %vm2025, %v1962
      %2043 = vst.msk [vmem:[#allocation3 + $0x44] sm:$0xf] %vm2025, %v1964
      %2044 = vst.msk [vmem:[#allocation3 + $0x48] sm:$0xf] %vm2025, %v1966
      %2045 = vst.msk [vmem:[#allocation3 + $0x4c] sm:$0xf] %vm2025, %v1968
      %2046 = vst.msk [vmem:[#allocation3 + $0x50] sm:$0xf] %vm2025, %v1970
      %2047 = vst.msk [vmem:[#allocation3 + $0x54] sm:$0xf] %vm2025, %v1972
      %2048 = vst.msk [vmem:[#allocation3 + $0x58] sm:$0xf] %vm2025, %v1974
      %2049 = vst.msk [vmem:[#allocation3 + $0x5c] sm:$0xf] %vm2025, %v1976
      %2050 = vst.msk [vmem:[#allocation3 + $0x60] sm:$0xf] %vm2025, %v1978
      %2051 = vst.msk [vmem:[#allocation3 + $0x64] sm:$0xf] %vm2025, %v1980
      %2052 = vst.msk [vmem:[#allocation3 + $0x68] sm:$0xf] %vm2025, %v1982
      %2053 = vst.msk [vmem:[#allocation3 + $0x6c] sm:$0xf] %vm2025, %v1984
      %2054 = vst.msk [vmem:[#allocation3 + $0x70] sm:$0xf] %vm2025, %v1986
      %2055 = vst.msk [vmem:[#allocation3 + $0x74] sm:$0xf] %vm2025, %v1988
      %2056 = vst.msk [vmem:[#allocation3 + $0x78] sm:$0xf] %vm2025, %v1990
      %2057 = vst.msk [vmem:[#allocation3 + $0x7c] sm:$0xf] %vm2025, %v1992
      %v2058 = vld [vmem:[%s779] sm:$0xf]
      %v2059 = vld [vmem:[%s779 + $0x4] sm:$0xf]
      %v2060 = vld [vmem:[%s779 + $0x8] sm:$0x1]
      %v2061 = vld [vmem:[%s779 + $0xc] sm:$0xf]
      %v2062 = vld [vmem:[%s779 + $0x10] sm:$0xf]
      %v2063 = vld [vmem:[%s779 + $0x14] sm:$0x1]
      %v2064 = vld [vmem:[%s779 + $0x18] sm:$0xf]
      %v2065 = vld [vmem:[%s779 + $0x1c] sm:$0xf]
      %v2066 = vld [vmem:[%s779 + $0x20] sm:$0x1]
      %v2067 = vld [vmem:[%s779 + $0x24] sm:$0xf]
      %v2068 = vld [vmem:[%s779 + $0x28] sm:$0xf]
      %v2069 = vld [vmem:[%s779 + $0x2c] sm:$0x1]
      %v2070 = vld [vmem:[%s779 + $0x30] sm:$0xf]
      %v2071 = vld [vmem:[%s779 + $0x34] sm:$0xf]
      %v2072 = vld [vmem:[%s779 + $0x38] sm:$0x1]
      %v2073 = vld [vmem:[%s779 + $0x3c] sm:$0xf]
      %v2074 = vld [vmem:[%s779 + $0x40] sm:$0xf]
      %v2075 = vld [vmem:[%s779 + $0x44] sm:$0x1]
      %v2076 = vld [vmem:[%s779 + $0x48] sm:$0xf]
      %v2077 = vld [vmem:[%s779 + $0x4c] sm:$0xf]
      %v2078 = vld [vmem:[%s779 + $0x50] sm:$0x1]
      %v2079 = vld [vmem:[%s779 + $0x54] sm:$0xf]
      %v2080 = vld [vmem:[%s779 + $0x58] sm:$0xf]
      %v2081 = vld [vmem:[%s779 + $0x5c] sm:$0x1]
      %v2082 = vld [vmem:[%s779 + $0x60] sm:$0xf]
      %v2083 = vld [vmem:[%s779 + $0x64] sm:$0xf]
      %v2084 = vld [vmem:[%s779 + $0x68] sm:$0x1]
      %v2085 = vld [vmem:[%s779 + $0x6c] sm:$0xf]
      %v2086 = vld [vmem:[%s779 + $0x70] sm:$0xf]
      %v2087 = vld [vmem:[%s779 + $0x74] sm:$0x1]
      %v2088 = vld [vmem:[%s779 + $0x78] sm:$0xf]
      %v2089 = vld [vmem:[%s779 + $0x7c] sm:$0xf]
      %v2090 = vld [vmem:[%s779 + $0x80] sm:$0x1]
      %v2091 = vld [vmem:[%s779 + $0x84] sm:$0xf]
      %v2092 = vld [vmem:[%s779 + $0x88] sm:$0xf]
      %v2093 = vld [vmem:[%s779 + $0x8c] sm:$0x1]
      %v2094 = vld [vmem:[%s779 + $0x90] sm:$0xf]
      %v2095 = vld [vmem:[%s779 + $0x94] sm:$0xf]
      %v2096 = vld [vmem:[%s779 + $0x98] sm:$0x1]
      %v2097 = vld [vmem:[%s779 + $0x9c] sm:$0xf]
      %v2098 = vld [vmem:[%s779 + $0xa0] sm:$0xf]
      %v2099 = vld [vmem:[%s779 + $0xa4] sm:$0x1]
      %v2100 = vld [vmem:[%s779 + $0xa8] sm:$0xf]
      %v2101 = vld [vmem:[%s779 + $0xac] sm:$0xf]
      %v2102 = vld [vmem:[%s779 + $0xb0] sm:$0x1]
      %v2103 = vld [vmem:[%s779 + $0xb4] sm:$0xf]
      %v2104 = vld [vmem:[%s779 + $0xb8] sm:$0xf]
      %v2105 = vld [vmem:[%s779 + $0xbc] sm:$0x1]
      %v2107 = vshrl.u32 %v2058, 16
      %v2109 = vrot.slane %v2107, 4
      %v2110 = vshll.u32 %v2058, 16
      %v2112 = vrot.slane %v2110, 5
      %v2113 = vor.u32 %v2109, %v2112
      %v2114 = vrot.slane %v2113, 4
      %v2116 = vshll.u32 %v2059, 16
      %v2118 = vrot.slane %v2116, 5
      %v2119 = vsel %vm1011, %v2114, %v2118
      %v2120 = vshrl.u32 %v2059, 16
      %v2122 = vrot.slane %v2120, 4
      %v2123 = vor.u32 %v2122, %v2118
      %v2124 = vrot.slane %v2123, 4
      %v2126 = vshll.u32 %v2060, 16
      %v2128 = vrot.slane %v2126, 5
      %v2129 = vsel %vm1011, %v2124, %v2128
      %v2131 = vshrl.u32 %v2061, 16
      %v2133 = vrot.slane %v2131, 4
      %v2134 = vshll.u32 %v2061, 16
      %v2136 = vrot.slane %v2134, 5
      %v2137 = vor.u32 %v2133, %v2136
      %v2138 = vrot.slane %v2137, 4
      %v2140 = vshll.u32 %v2062, 16
      %v2142 = vrot.slane %v2140, 5
      %v2143 = vsel %vm1011, %v2138, %v2142
      %v2144 = vshrl.u32 %v2062, 16
      %v2146 = vrot.slane %v2144, 4
      %v2147 = vor.u32 %v2146, %v2142
      %v2148 = vrot.slane %v2147, 4
      %v2150 = vshll.u32 %v2063, 16
      %v2152 = vrot.slane %v2150, 5
      %v2153 = vsel %vm1011, %v2148, %v2152
      %v2155 = vshrl.u32 %v2064, 16
      %v2157 = vrot.slane %v2155, 4
      %v2158 = vshll.u32 %v2064, 16
      %v2160 = vrot.slane %v2158, 5
      %v2161 = vor.u32 %v2157, %v2160
      %v2162 = vrot.slane %v2161, 4
      %v2164 = vshll.u32 %v2065, 16
      %v2166 = vrot.slane %v2164, 5
      %v2167 = vsel %vm1011, %v2162, %v2166
      %v2168 = vshrl.u32 %v2065, 16
      %v2170 = vrot.slane %v2168, 4
      %v2171 = vor.u32 %v2170, %v2166
      %v2172 = vrot.slane %v2171, 4
      %v2174 = vshll.u32 %v2066, 16
      %v2176 = vrot.slane %v2174, 5
      %v2177 = vsel %vm1011, %v2172, %v2176
      %v2179 = vshrl.u32 %v2067, 16
      %v2181 = vrot.slane %v2179, 4
      %v2182 = vshll.u32 %v2067, 16
      %v2184 = vrot.slane %v2182, 5
      %v2185 = vor.u32 %v2181, %v2184
      %v2186 = vrot.slane %v2185, 4
      %v2188 = vshll.u32 %v2068, 16
      %v2190 = vrot.slane %v2188, 5
      %v2191 = vsel %vm1011, %v2186, %v2190
      %v2192 = vshrl.u32 %v2068, 16
      %v2194 = vrot.slane %v2192, 4
      %v2195 = vor.u32 %v2194, %v2190
      %v2196 = vrot.slane %v2195, 4
      %v2198 = vshll.u32 %v2069, 16
      %v2200 = vrot.slane %v2198, 5
      %v2201 = vsel %vm1011, %v2196, %v2200
      %v2203 = vshrl.u32 %v2070, 16
      %v2205 = vrot.slane %v2203, 4
      %v2206 = vshll.u32 %v2070, 16
      %v2208 = vrot.slane %v2206, 5
      %v2209 = vor.u32 %v2205, %v2208
      %v2210 = vrot.slane %v2209, 4
      %v2212 = vshll.u32 %v2071, 16
      %v2214 = vrot.slane %v2212, 5
      %v2215 = vsel %vm1011, %v2210, %v2214
      %v2216 = vshrl.u32 %v2071, 16
      %v2218 = vrot.slane %v2216, 4
      %v2219 = vor.u32 %v2218, %v2214
      %v2220 = vrot.slane %v2219, 4
      %v2222 = vshll.u32 %v2072, 16
      %v2224 = vrot.slane %v2222, 5
      %v2225 = vsel %vm1011, %v2220, %v2224
      %v2227 = vshrl.u32 %v2073, 16
      %v2229 = vrot.slane %v2227, 4
      %v2230 = vshll.u32 %v2073, 16
      %v2232 = vrot.slane %v2230, 5
      %v2233 = vor.u32 %v2229, %v2232
      %v2234 = vrot.slane %v2233, 4
      %v2236 = vshll.u32 %v2074, 16
      %v2238 = vrot.slane %v2236, 5
      %v2239 = vsel %vm1011, %v2234, %v2238
      %v2240 = vshrl.u32 %v2074, 16
      %v2242 = vrot.slane %v2240, 4
      %v2243 = vor.u32 %v2242, %v2238
      %v2244 = vrot.slane %v2243, 4
      %v2246 = vshll.u32 %v2075, 16
      %v2248 = vrot.slane %v2246, 5
      %v2249 = vsel %vm1011, %v2244, %v2248
      %v2251 = vshrl.u32 %v2076, 16
      %v2253 = vrot.slane %v2251, 4
      %v2254 = vshll.u32 %v2076, 16
      %v2256 = vrot.slane %v2254, 5
      %v2257 = vor.u32 %v2253, %v2256
      %v2258 = vrot.slane %v2257, 4
      %v2260 = vshll.u32 %v2077, 16
      %v2262 = vrot.slane %v2260, 5
      %v2263 = vsel %vm1011, %v2258, %v2262
      %v2264 = vshrl.u32 %v2077, 16
      %v2266 = vrot.slane %v2264, 4
      %v2267 = vor.u32 %v2266, %v2262
      %v2268 = vrot.slane %v2267, 4
      %v2270 = vshll.u32 %v2078, 16
      %v2272 = vrot.slane %v2270, 5
      %v2273 = vsel %vm1011, %v2268, %v2272
      %v2275 = vshrl.u32 %v2079, 16
      %v2277 = vrot.slane %v2275, 4
      %v2278 = vshll.u32 %v2079, 16
      %v2280 = vrot.slane %v2278, 5
      %v2281 = vor.u32 %v2277, %v2280
      %v2282 = vrot.slane %v2281, 4
      %v2284 = vshll.u32 %v2080, 16
      %v2286 = vrot.slane %v2284, 5
      %v2287 = vsel %vm1011, %v2282, %v2286
      %v2288 = vshrl.u32 %v2080, 16
      %v2290 = vrot.slane %v2288, 4
      %v2291 = vor.u32 %v2290, %v2286
      %v2292 = vrot.slane %v2291, 4
      %v2294 = vshll.u32 %v2081, 16
      %v2296 = vrot.slane %v2294, 5
      %v2297 = vsel %vm1011, %v2292, %v2296
      %v2299 = vshrl.u32 %v2082, 16
      %v2301 = vrot.slane %v2299, 4
      %v2302 = vshll.u32 %v2082, 16
      %v2304 = vrot.slane %v2302, 5
      %v2305 = vor.u32 %v2301, %v2304
      %v2306 = vrot.slane %v2305, 4
      %v2308 = vshll.u32 %v2083, 16
      %v2310 = vrot.slane %v2308, 5
      %v2311 = vsel %vm1011, %v2306, %v2310
      %v2312 = vshrl.u32 %v2083, 16
      %v2314 = vrot.slane %v2312, 4
      %v2315 = vor.u32 %v2314, %v2310
      %v2316 = vrot.slane %v2315, 4
      %v2318 = vshll.u32 %v2084, 16
      %v2320 = vrot.slane %v2318, 5
      %v2321 = vsel %vm1011, %v2316, %v2320
      %v2323 = vshrl.u32 %v2085, 16
      %v2325 = vrot.slane %v2323, 4
      %v2326 = vshll.u32 %v2085, 16
      %v2328 = vrot.slane %v2326, 5
      %v2329 = vor.u32 %v2325, %v2328
      %v2330 = vrot.slane %v2329, 4
      %v2332 = vshll.u32 %v2086, 16
      %v2334 = vrot.slane %v2332, 5
      %v2335 = vsel %vm1011, %v2330, %v2334
      %v2336 = vshrl.u32 %v2086, 16
      %v2338 = vrot.slane %v2336, 4
      %v2339 = vor.u32 %v2338, %v2334
      %v2340 = vrot.slane %v2339, 4
      %v2342 = vshll.u32 %v2087, 16
      %v2344 = vrot.slane %v2342, 5
      %v2345 = vsel %vm1011, %v2340, %v2344
      %v2347 = vshrl.u32 %v2088, 16
      %v2349 = vrot.slane %v2347, 4
      %v2350 = vshll.u32 %v2088, 16
      %v2352 = vrot.slane %v2350, 5
      %v2353 = vor.u32 %v2349, %v2352
      %v2354 = vrot.slane %v2353, 4
      %v2356 = vshll.u32 %v2089, 16
      %v2358 = vrot.slane %v2356, 5
      %v2359 = vsel %vm1011, %v2354, %v2358
      %v2360 = vshrl.u32 %v2089, 16
      %v2362 = vrot.slane %v2360, 4
      %v2363 = vor.u32 %v2362, %v2358
      %v2364 = vrot.slane %v2363, 4
      %v2366 = vshll.u32 %v2090, 16
      %v2368 = vrot.slane %v2366, 5
      %v2369 = vsel %vm1011, %v2364, %v2368
      %v2371 = vshrl.u32 %v2091, 16
      %v2373 = vrot.slane %v2371, 4
      %v2374 = vshll.u32 %v2091, 16
      %v2376 = vrot.slane %v2374, 5
      %v2377 = vor.u32 %v2373, %v2376
      %v2378 = vrot.slane %v2377, 4
      %v2380 = vshll.u32 %v2092, 16
      %v2382 = vrot.slane %v2380, 5
      %v2383 = vsel %vm1011, %v2378, %v2382
      %v2384 = vshrl.u32 %v2092, 16
      %v2386 = vrot.slane %v2384, 4
      %v2387 = vor.u32 %v2386, %v2382
      %v2388 = vrot.slane %v2387, 4
      %v2390 = vshll.u32 %v2093, 16
      %v2392 = vrot.slane %v2390, 5
      %v2393 = vsel %vm1011, %v2388, %v2392
      %v2395 = vshrl.u32 %v2094, 16
      %v2397 = vrot.slane %v2395, 4
      %v2398 = vshll.u32 %v2094, 16
      %v2400 = vrot.slane %v2398, 5
      %v2401 = vor.u32 %v2397, %v2400
      %v2402 = vrot.slane %v2401, 4
      %v2404 = vshll.u32 %v2095, 16
      %v2406 = vrot.slane %v2404, 5
      %v2407 = vsel %vm1011, %v2402, %v2406
      %v2408 = vshrl.u32 %v2095, 16
      %v2410 = vrot.slane %v2408, 4
      %v2411 = vor.u32 %v2410, %v2406
      %v2412 = vrot.slane %v2411, 4
      %v2414 = vshll.u32 %v2096, 16
      %v2416 = vrot.slane %v2414, 5
      %v2417 = vsel %vm1011, %v2412, %v2416
      %v2419 = vshrl.u32 %v2097, 16
      %v2421 = vrot.slane %v2419, 4
      %v2422 = vshll.u32 %v2097, 16
      %v2424 = vrot.slane %v2422, 5
      %v2425 = vor.u32 %v2421, %v2424
      %v2426 = vrot.slane %v2425, 4
      %v2428 = vshll.u32 %v2098, 16
      %v2430 = vrot.slane %v2428, 5
      %v2431 = vsel %vm1011, %v2426, %v2430
      %v2432 = vshrl.u32 %v2098, 16
      %v2434 = vrot.slane %v2432, 4
      %v2435 = vor.u32 %v2434, %v2430
      %v2436 = vrot.slane %v2435, 4
      %v2438 = vshll.u32 %v2099, 16
      %v2440 = vrot.slane %v2438, 5
      %v2441 = vsel %vm1011, %v2436, %v2440
      %v2443 = vshrl.u32 %v2100, 16
      %v2445 = vrot.slane %v2443, 4
      %v2446 = vshll.u32 %v2100, 16
      %v2448 = vrot.slane %v2446, 5
      %v2449 = vor.u32 %v2445, %v2448
      %v2450 = vrot.slane %v2449, 4
      %v2452 = vshll.u32 %v2101, 16
      %v2454 = vrot.slane %v2452, 5
      %v2455 = vsel %vm1011, %v2450, %v2454
      %v2456 = vshrl.u32 %v2101, 16
      %v2458 = vrot.slane %v2456, 4
      %v2459 = vor.u32 %v2458, %v2454
      %v2460 = vrot.slane %v2459, 4
      %v2462 = vshll.u32 %v2102, 16
      %v2464 = vrot.slane %v2462, 5
      %v2465 = vsel %vm1011, %v2460, %v2464
      %v2467 = vshrl.u32 %v2103, 16
      %v2469 = vrot.slane %v2467, 4
      %v2470 = vshll.u32 %v2103, 16
      %v2472 = vrot.slane %v2470, 5
      %v2473 = vor.u32 %v2469, %v2472
      %v2474 = vrot.slane %v2473, 4
      %v2476 = vshll.u32 %v2104, 16
      %v2478 = vrot.slane %v2476, 5
      %v2479 = vsel %vm1011, %v2474, %v2478
      %v2480 = vshrl.u32 %v2104, 16
      %v2482 = vrot.slane %v2480, 4
      %v2483 = vor.u32 %v2482, %v2478
      %v2484 = vrot.slane %v2483, 4
      %v2486 = vshll.u32 %v2105, 16
      %v2488 = vrot.slane %v2486, 5
      %v2489 = vsel %vm1011, %v2484, %v2488
      %2490 = vrot.lane.b32.xlu0 %v2119, 16
      %v2491 = vpop.permute.xlu0 %2490
      %2492 = vrot.lane.b32.xlu0 %v2129, 16
      %v2493 = vpop.permute.xlu0 %2492
      %2494 = vrot.lane.b32.xlu0 %v2143, 16
      %v2495 = vpop.permute.xlu0 %2494
      %2496 = vrot.lane.b32.xlu0 %v2153, 16
      %v2497 = vpop.permute.xlu0 %2496
      %2498 = vrot.lane.b32.xlu0 %v2167, 16
      %v2499 = vpop.permute.xlu0 %2498
      %2500 = vrot.lane.b32.xlu0 %v2177, 16
      %v2501 = vpop.permute.xlu0 %2500
      %2502 = vrot.lane.b32.xlu0 %v2191, 16
      %v2503 = vpop.permute.xlu0 %2502
      %2504 = vrot.lane.b32.xlu0 %v2201, 16
      %v2505 = vpop.permute.xlu0 %2504
      %2506 = vrot.lane.b32.xlu0 %v2215, 16
      %v2507 = vpop.permute.xlu0 %2506
      %2508 = vrot.lane.b32.xlu0 %v2225, 16
      %v2509 = vpop.permute.xlu0 %2508
      %2510 = vrot.lane.b32.xlu0 %v2239, 16
      %v2511 = vpop.permute.xlu0 %2510
      %2512 = vrot.lane.b32.xlu0 %v2249, 16
      %v2513 = vpop.permute.xlu0 %2512
      %2514 = vrot.lane.b32.xlu0 %v2263, 16
      %v2515 = vpop.permute.xlu0 %2514
      %2516 = vrot.lane.b32.xlu0 %v2273, 16
      %v2517 = vpop.permute.xlu0 %2516
      %2518 = vrot.lane.b32.xlu0 %v2287, 16
      %v2519 = vpop.permute.xlu0 %2518
      %2520 = vrot.lane.b32.xlu0 %v2297, 16
      %v2521 = vpop.permute.xlu0 %2520
      %2522 = vrot.lane.b32.xlu0 %v2311, 16
      %v2523 = vpop.permute.xlu0 %2522
      %2524 = vrot.lane.b32.xlu0 %v2321, 16
      %v2525 = vpop.permute.xlu0 %2524
      %2526 = vrot.lane.b32.xlu0 %v2335, 16
      %v2527 = vpop.permute.xlu0 %2526
      %2528 = vrot.lane.b32.xlu0 %v2345, 16
      %v2529 = vpop.permute.xlu0 %2528
      %2530 = vrot.lane.b32.xlu0 %v2359, 16
      %v2531 = vpop.permute.xlu0 %2530
      %2532 = vrot.lane.b32.xlu0 %v2369, 16
      %v2533 = vpop.permute.xlu0 %2532
      %2534 = vrot.lane.b32.xlu0 %v2383, 16
      %v2535 = vpop.permute.xlu0 %2534
      %2536 = vrot.lane.b32.xlu0 %v2393, 16
      %v2537 = vpop.permute.xlu0 %2536
      %2538 = vrot.lane.b32.xlu0 %v2407, 16
      %v2539 = vpop.permute.xlu0 %2538
      %2540 = vrot.lane.b32.xlu0 %v2417, 16
      %v2541 = vpop.permute.xlu0 %2540
      %2542 = vrot.lane.b32.xlu0 %v2431, 16
      %v2543 = vpop.permute.xlu0 %2542
      %2544 = vrot.lane.b32.xlu0 %v2441, 16
      %v2545 = vpop.permute.xlu0 %2544
      %2546 = vrot.lane.b32.xlu0 %v2455, 16
      %v2547 = vpop.permute.xlu0 %2546
      %2548 = vrot.lane.b32.xlu0 %v2465, 16
      %v2549 = vpop.permute.xlu0 %2548
      %2550 = vrot.lane.b32.xlu0 %v2479, 16
      %v2551 = vpop.permute.xlu0 %2550
      %2552 = vrot.lane.b32.xlu0 %v2489, 16
      %v2553 = vpop.permute.xlu0 %2552
      %vm2586 = vcmask 158848
      %2587 = vst.msk [vmem:[#allocation3] sm:$0xf] %vm2586, %v2491
      %2588 = vst.msk [vmem:[#allocation3 + $0x4] sm:$0xf] %vm2586, %v2493
      %2589 = vst.msk [vmem:[#allocation3 + $0x8] sm:$0xf] %vm2586, %v2495
      %2590 = vst.msk [vmem:[#allocation3 + $0xc] sm:$0xf] %vm2586, %v2497
      %2591 = vst.msk [vmem:[#allocation3 + $0x10] sm:$0xf] %vm2586, %v2499
      %2592 = vst.msk [vmem:[#allocation3 + $0x14] sm:$0xf] %vm2586, %v2501
      %2593 = vst.msk [vmem:[#allocation3 + $0x18] sm:$0xf] %vm2586, %v2503
      %2594 = vst.msk [vmem:[#allocation3 + $0x1c] sm:$0xf] %vm2586, %v2505
      %2595 = vst.msk [vmem:[#allocation3 + $0x20] sm:$0xf] %vm2586, %v2507
      %2596 = vst.msk [vmem:[#allocation3 + $0x24] sm:$0xf] %vm2586, %v2509
      %2597 = vst.msk [vmem:[#allocation3 + $0x28] sm:$0xf] %vm2586, %v2511
      %2598 = vst.msk [vmem:[#allocation3 + $0x2c] sm:$0xf] %vm2586, %v2513
      %2599 = vst.msk [vmem:[#allocation3 + $0x30] sm:$0xf] %vm2586, %v2515
      %2600 = vst.msk [vmem:[#allocation3 + $0x34] sm:$0xf] %vm2586, %v2517
      %2601 = vst.msk [vmem:[#allocation3 + $0x38] sm:$0xf] %vm2586, %v2519
      %2602 = vst.msk [vmem:[#allocation3 + $0x3c] sm:$0xf] %vm2586, %v2521
      %2603 = vst.msk [vmem:[#allocation3 + $0x40] sm:$0xf] %vm2586, %v2523
      %2604 = vst.msk [vmem:[#allocation3 + $0x44] sm:$0xf] %vm2586, %v2525
      %2605 = vst.msk [vmem:[#allocation3 + $0x48] sm:$0xf] %vm2586, %v2527
      %2606 = vst.msk [vmem:[#allocation3 + $0x4c] sm:$0xf] %vm2586, %v2529
      %2607 = vst.msk [vmem:[#allocation3 + $0x50] sm:$0xf] %vm2586, %v2531
      %2608 = vst.msk [vmem:[#allocation3 + $0x54] sm:$0xf] %vm2586, %v2533
      %2609 = vst.msk [vmem:[#allocation3 + $0x58] sm:$0xf] %vm2586, %v2535
      %2610 = vst.msk [vmem:[#allocation3 + $0x5c] sm:$0xf] %vm2586, %v2537
      %2611 = vst.msk [vmem:[#allocation3 + $0x60] sm:$0xf] %vm2586, %v2539
      %2612 = vst.msk [vmem:[#allocation3 + $0x64] sm:$0xf] %vm2586, %v2541
      %2613 = vst.msk [vmem:[#allocation3 + $0x68] sm:$0xf] %vm2586, %v2543
      %2614 = vst.msk [vmem:[#allocation3 + $0x6c] sm:$0xf] %vm2586, %v2545
      %2615 = vst.msk [vmem:[#allocation3 + $0x70] sm:$0xf] %vm2586, %v2547
      %2616 = vst.msk [vmem:[#allocation3 + $0x74] sm:$0xf] %vm2586, %v2549
      %2617 = vst.msk [vmem:[#allocation3 + $0x78] sm:$0xf] %vm2586, %v2551
      %2618 = vst.msk [vmem:[#allocation3 + $0x7c] sm:$0xf] %vm2586, %v2553
      %v2619 = vld [vmem:[%s779] sm:$0xe]
      %v2620 = vld [vmem:[%s779 + $0x4] sm:$0xf]
      %v2621 = vld [vmem:[%s779 + $0x8] sm:$0x1]
      %v2622 = vld [vmem:[%s779 + $0xc] sm:$0xe]
      %v2623 = vld [vmem:[%s779 + $0x10] sm:$0xf]
      %v2624 = vld [vmem:[%s779 + $0x14] sm:$0x1]
      %v2625 = vld [vmem:[%s779 + $0x18] sm:$0xe]
      %v2626 = vld [vmem:[%s779 + $0x1c] sm:$0xf]
      %v2627 = vld [vmem:[%s779 + $0x20] sm:$0x1]
      %v2628 = vld [vmem:[%s779 + $0x24] sm:$0xe]
      %v2629 = vld [vmem:[%s779 + $0x28] sm:$0xf]
      %v2630 = vld [vmem:[%s779 + $0x2c] sm:$0x1]
      %v2631 = vld [vmem:[%s779 + $0x30] sm:$0xe]
      %v2632 = vld [vmem:[%s779 + $0x34] sm:$0xf]
      %v2633 = vld [vmem:[%s779 + $0x38] sm:$0x1]
      %v2634 = vld [vmem:[%s779 + $0x3c] sm:$0xe]
      %v2635 = vld [vmem:[%s779 + $0x40] sm:$0xf]
      %v2636 = vld [vmem:[%s779 + $0x44] sm:$0x1]
      %v2637 = vld [vmem:[%s779 + $0x48] sm:$0xe]
      %v2638 = vld [vmem:[%s779 + $0x4c] sm:$0xf]
      %v2639 = vld [vmem:[%s779 + $0x50] sm:$0x1]
      %v2640 = vld [vmem:[%s779 + $0x54] sm:$0xe]
      %v2641 = vld [vmem:[%s779 + $0x58] sm:$0xf]
      %v2642 = vld [vmem:[%s779 + $0x5c] sm:$0x1]
      %v2643 = vld [vmem:[%s779 + $0x60] sm:$0xe]
      %v2644 = vld [vmem:[%s779 + $0x64] sm:$0xf]
      %v2645 = vld [vmem:[%s779 + $0x68] sm:$0x1]
      %v2646 = vld [vmem:[%s779 + $0x6c] sm:$0xe]
      %v2647 = vld [vmem:[%s779 + $0x70] sm:$0xf]
      %v2648 = vld [vmem:[%s779 + $0x74] sm:$0x1]
      %v2649 = vld [vmem:[%s779 + $0x78] sm:$0xe]
      %v2650 = vld [vmem:[%s779 + $0x7c] sm:$0xf]
      %v2651 = vld [vmem:[%s779 + $0x80] sm:$0x1]
      %v2652 = vld [vmem:[%s779 + $0x84] sm:$0xe]
      %v2653 = vld [vmem:[%s779 + $0x88] sm:$0xf]
      %v2654 = vld [vmem:[%s779 + $0x8c] sm:$0x1]
      %v2655 = vld [vmem:[%s779 + $0x90] sm:$0xe]
      %v2656 = vld [vmem:[%s779 + $0x94] sm:$0xf]
      %v2657 = vld [vmem:[%s779 + $0x98] sm:$0x1]
      %v2658 = vld [vmem:[%s779 + $0x9c] sm:$0xe]
      %v2659 = vld [vmem:[%s779 + $0xa0] sm:$0xf]
      %v2660 = vld [vmem:[%s779 + $0xa4] sm:$0x1]
      %v2661 = vld [vmem:[%s779 + $0xa8] sm:$0xe]
      %v2662 = vld [vmem:[%s779 + $0xac] sm:$0xf]
      %v2663 = vld [vmem:[%s779 + $0xb0] sm:$0x1]
      %v2664 = vld [vmem:[%s779 + $0xb4] sm:$0xe]
      %v2665 = vld [vmem:[%s779 + $0xb8] sm:$0xf]
      %v2666 = vld [vmem:[%s779 + $0xbc] sm:$0x1]
      %v2715 = vrot.slane %v2619, 5
      %v2716 = vrot.slane %v2715, 4
      %v2717 = vrot.slane %v2620, 5
      %v2718 = vsel %vm1623, %v2716, %v2717
      %v2719 = vrot.slane %v2717, 4
      %v2720 = vrot.slane %v2621, 5
      %v2721 = vsel %vm1623, %v2719, %v2720
      %v2722 = vrot.slane %v2622, 5
      %v2723 = vrot.slane %v2722, 4
      %v2724 = vrot.slane %v2623, 5
      %v2725 = vsel %vm1623, %v2723, %v2724
      %v2726 = vrot.slane %v2724, 4
      %v2727 = vrot.slane %v2624, 5
      %v2728 = vsel %vm1623, %v2726, %v2727
      %v2729 = vrot.slane %v2625, 5
      %v2730 = vrot.slane %v2729, 4
      %v2731 = vrot.slane %v2626, 5
      %v2732 = vsel %vm1623, %v2730, %v2731
      %v2733 = vrot.slane %v2731, 4
      %v2734 = vrot.slane %v2627, 5
      %v2735 = vsel %vm1623, %v2733, %v2734
      %v2736 = vrot.slane %v2628, 5
      %v2737 = vrot.slane %v2736, 4
      %v2738 = vrot.slane %v2629, 5
      %v2739 = vsel %vm1623, %v2737, %v2738
      %v2740 = vrot.slane %v2738, 4
      %v2741 = vrot.slane %v2630, 5
      %v2742 = vsel %vm1623, %v2740, %v2741
      %v2743 = vrot.slane %v2631, 5
      %v2744 = vrot.slane %v2743, 4
      %v2745 = vrot.slane %v2632, 5
      %v2746 = vsel %vm1623, %v2744, %v2745
      %v2747 = vrot.slane %v2745, 4
      %v2748 = vrot.slane %v2633, 5
      %v2749 = vsel %vm1623, %v2747, %v2748
      %v2750 = vrot.slane %v2634, 5
      %v2751 = vrot.slane %v2750, 4
      %v2752 = vrot.slane %v2635, 5
      %v2753 = vsel %vm1623, %v2751, %v2752
      %v2754 = vrot.slane %v2752, 4
      %v2755 = vrot.slane %v2636, 5
      %v2756 = vsel %vm1623, %v2754, %v2755
      %v2757 = vrot.slane %v2637, 5
      %v2758 = vrot.slane %v2757, 4
      %v2759 = vrot.slane %v2638, 5
      %v2760 = vsel %vm1623, %v2758, %v2759
      %v2761 = vrot.slane %v2759, 4
      %v2762 = vrot.slane %v2639, 5
      %v2763 = vsel %vm1623, %v2761, %v2762
      %v2764 = vrot.slane %v2640, 5
      %v2765 = vrot.slane %v2764, 4
      %v2766 = vrot.slane %v2641, 5
      %v2767 = vsel %vm1623, %v2765, %v2766
      %v2768 = vrot.slane %v2766, 4
      %v2769 = vrot.slane %v2642, 5
      %v2770 = vsel %vm1623, %v2768, %v2769
      %v2771 = vrot.slane %v2643, 5
      %v2772 = vrot.slane %v2771, 4
      %v2773 = vrot.slane %v2644, 5
      %v2774 = vsel %vm1623, %v2772, %v2773
      %v2775 = vrot.slane %v2773, 4
      %v2776 = vrot.slane %v2645, 5
      %v2777 = vsel %vm1623, %v2775, %v2776
      %v2778 = vrot.slane %v2646, 5
      %v2779 = vrot.slane %v2778, 4
      %v2780 = vrot.slane %v2647, 5
      %v2781 = vsel %vm1623, %v2779, %v2780
      %v2782 = vrot.slane %v2780, 4
      %v2783 = vrot.slane %v2648, 5
      %v2784 = vsel %vm1623, %v2782, %v2783
      %v2785 = vrot.slane %v2649, 5
      %v2786 = vrot.slane %v2785, 4
      %v2787 = vrot.slane %v2650, 5
      %v2788 = vsel %vm1623, %v2786, %v2787
      %v2789 = vrot.slane %v2787, 4
      %v2790 = vrot.slane %v2651, 5
      %v2791 = vsel %vm1623, %v2789, %v2790
      %v2792 = vrot.slane %v2652, 5
      %v2793 = vrot.slane %v2792, 4
      %v2794 = vrot.slane %v2653, 5
      %v2795 = vsel %vm1623, %v2793, %v2794
      %v2796 = vrot.slane %v2794, 4
      %v2797 = vrot.slane %v2654, 5
      %v2798 = vsel %vm1623, %v2796, %v2797
      %v2799 = vrot.slane %v2655, 5
      %v2800 = vrot.slane %v2799, 4
      %v2801 = vrot.slane %v2656, 5
      %v2802 = vsel %vm1623, %v2800, %v2801
      %v2803 = vrot.slane %v2801, 4
      %v2804 = vrot.slane %v2657, 5
      %v2805 = vsel %vm1623, %v2803, %v2804
      %v2806 = vrot.slane %v2658, 5
      %v2807 = vrot.slane %v2806, 4
      %v2808 = vrot.slane %v2659, 5
      %v2809 = vsel %vm1623, %v2807, %v2808
      %v2810 = vrot.slane %v2808, 4
      %v2811 = vrot.slane %v2660, 5
      %v2812 = vsel %vm1623, %v2810, %v2811
      %v2813 = vrot.slane %v2661, 5
      %v2814 = vrot.slane %v2813, 4
      %v2815 = vrot.slane %v2662, 5
      %v2816 = vsel %vm1623, %v2814, %v2815
      %v2817 = vrot.slane %v2815, 4
      %v2818 = vrot.slane %v2663, 5
      %v2819 = vsel %vm1623, %v2817, %v2818
      %v2820 = vrot.slane %v2664, 5
      %v2821 = vrot.slane %v2820, 4
      %v2822 = vrot.slane %v2665, 5
      %v2823 = vsel %vm1623, %v2821, %v2822
      %v2824 = vrot.slane %v2822, 4
      %v2825 = vrot.slane %v2666, 5
      %v2826 = vsel %vm1623, %v2824, %v2825
      %2827 = vrot.lane.b32.xlu0 %v2718, 20
      %v2828 = vpop.permute.xlu0 %2827
      %2829 = vrot.lane.b32.xlu0 %v2721, 20
      %v2830 = vpop.permute.xlu0 %2829
      %2831 = vrot.lane.b32.xlu0 %v2725, 20
      %v2832 = vpop.permute.xlu0 %2831
      %2833 = vrot.lane.b32.xlu0 %v2728, 20
      %v2834 = vpop.permute.xlu0 %2833
      %2835 = vrot.lane.b32.xlu0 %v2732, 20
      %v2836 = vpop.permute.xlu0 %2835
      %2837 = vrot.lane.b32.xlu0 %v2735, 20
      %v2838 = vpop.permute.xlu0 %2837
      %2839 = vrot.lane.b32.xlu0 %v2739, 20
      %v2840 = vpop.permute.xlu0 %2839
      %2841 = vrot.lane.b32.xlu0 %v2742, 20
      %v2842 = vpop.permute.xlu0 %2841
      %2843 = vrot.lane.b32.xlu0 %v2746, 20
      %v2844 = vpop.permute.xlu0 %2843
      %2845 = vrot.lane.b32.xlu0 %v2749, 20
      %v2846 = vpop.permute.xlu0 %2845
      %2847 = vrot.lane.b32.xlu0 %v2753, 20
      %v2848 = vpop.permute.xlu0 %2847
      %2849 = vrot.lane.b32.xlu0 %v2756, 20
      %v2850 = vpop.permute.xlu0 %2849
      %2851 = vrot.lane.b32.xlu0 %v2760, 20
      %v2852 = vpop.permute.xlu0 %2851
      %2853 = vrot.lane.b32.xlu0 %v2763, 20
      %v2854 = vpop.permute.xlu0 %2853
      %2855 = vrot.lane.b32.xlu0 %v2767, 20
      %v2856 = vpop.permute.xlu0 %2855
      %2857 = vrot.lane.b32.xlu0 %v2770, 20
      %v2858 = vpop.permute.xlu0 %2857
      %2859 = vrot.lane.b32.xlu0 %v2774, 20
      %v2860 = vpop.permute.xlu0 %2859
      %2861 = vrot.lane.b32.xlu0 %v2777, 20
      %v2862 = vpop.permute.xlu0 %2861
      %2863 = vrot.lane.b32.xlu0 %v2781, 20
      %v2864 = vpop.permute.xlu0 %2863
      %2865 = vrot.lane.b32.xlu0 %v2784, 20
      %v2866 = vpop.permute.xlu0 %2865
      %2867 = vrot.lane.b32.xlu0 %v2788, 20
      %v2868 = vpop.permute.xlu0 %2867
      %2869 = vrot.lane.b32.xlu0 %v2791, 20
      %v2870 = vpop.permute.xlu0 %2869
      %2871 = vrot.lane.b32.xlu0 %v2795, 20
      %v2872 = vpop.permute.xlu0 %2871
      %2873 = vrot.lane.b32.xlu0 %v2798, 20
      %v2874 = vpop.permute.xlu0 %2873
      %2875 = vrot.lane.b32.xlu0 %v2802, 20
      %v2876 = vpop.permute.xlu0 %2875
      %2877 = vrot.lane.b32.xlu0 %v2805, 20
      %v2878 = vpop.permute.xlu0 %2877
      %2879 = vrot.lane.b32.xlu0 %v2809, 20
      %v2880 = vpop.permute.xlu0 %2879
      %2881 = vrot.lane.b32.xlu0 %v2812, 20
      %v2882 = vpop.permute.xlu0 %2881
      %2883 = vrot.lane.b32.xlu0 %v2816, 20
      %v2884 = vpop.permute.xlu0 %2883
      %2885 = vrot.lane.b32.xlu0 %v2819, 20
      %v2886 = vpop.permute.xlu0 %2885
      %2887 = vrot.lane.b32.xlu0 %v2823, 20
      %v2888 = vpop.permute.xlu0 %2887
      %2889 = vrot.lane.b32.xlu0 %v2826, 20
      %v2890 = vpop.permute.xlu0 %2889
      %vm2923 = vcmask 191648
      %2924 = vst.msk [vmem:[#allocation3] sm:$0xf] %vm2923, %v2828
      %2925 = vst.msk [vmem:[#allocation3 + $0x4] sm:$0xf] %vm2923, %v2830
      %2926 = vst.msk [vmem:[#allocation3 + $0x8] sm:$0xf] %vm2923, %v2832
      %2927 = vst.msk [vmem:[#allocation3 + $0xc] sm:$0xf] %vm2923, %v2834
      %2928 = vst.msk [vmem:[#allocation3 + $0x10] sm:$0xf] %vm2923, %v2836
      %2929 = vst.msk [vmem:[#allocation3 + $0x14] sm:$0xf] %vm2923, %v2838
      %2930 = vst.msk [vmem:[#allocation3 + $0x18] sm:$0xf] %vm2923, %v2840
      %2931 = vst.msk [vmem:[#allocation3 + $0x1c] sm:$0xf] %vm2923, %v2842
      %2932 = vst.msk [vmem:[#allocation3 + $0x20] sm:$0xf] %vm2923, %v2844
      %2933 = vst.msk [vmem:[#allocation3 + $0x24] sm:$0xf] %vm2923, %v2846
      %2934 = vst.msk [vmem:[#allocation3 + $0x28] sm:$0xf] %vm2923, %v2848
      %2935 = vst.msk [vmem:[#allocation3 + $0x2c] sm:$0xf] %vm2923, %v2850
      %2936 = vst.msk [vmem:[#allocation3 + $0x30] sm:$0xf] %vm2923, %v2852
      %2937 = vst.msk [vmem:[#allocation3 + $0x34] sm:$0xf] %vm2923, %v2854
      %2938 = vst.msk [vmem:[#allocation3 + $0x38] sm:$0xf] %vm2923, %v2856
      %2939 = vst.msk [vmem:[#allocation3 + $0x3c] sm:$0xf] %vm2923, %v2858
      %2940 = vst.msk [vmem:[#allocation3 + $0x40] sm:$0xf] %vm2923, %v2860
      %2941 = vst.msk [vmem:[#allocation3 + $0x44] sm:$0xf] %vm2923, %v2862
      %2942 = vst.msk [vmem:[#allocation3 + $0x48] sm:$0xf] %vm2923, %v2864
      %2943 = vst.msk [vmem:[#allocation3 + $0x4c] sm:$0xf] %vm2923, %v2866
      %2944 = vst.msk [vmem:[#allocation3 + $0x50] sm:$0xf] %vm2923, %v2868
      %2945 = vst.msk [vmem:[#allocation3 + $0x54] sm:$0xf] %vm2923, %v2870
      %2946 = vst.msk [vmem:[#allocation3 + $0x58] sm:$0xf] %vm2923, %v2872
      %2947 = vst.msk [vmem:[#allocation3 + $0x5c] sm:$0xf] %vm2923, %v2874
      %2948 = vst.msk [vmem:[#allocation3 + $0x60] sm:$0xf] %vm2923, %v2876
      %2949 = vst.msk [vmem:[#allocation3 + $0x64] sm:$0xf] %vm2923, %v2878
      %2950 = vst.msk [vmem:[#allocation3 + $0x68] sm:$0xf] %vm2923, %v2880
      %2951 = vst.msk [vmem:[#allocation3 + $0x6c] sm:$0xf] %vm2923, %v2882
      %2952 = vst.msk [vmem:[#allocation3 + $0x70] sm:$0xf] %vm2923, %v2884
      %2953 = vst.msk [vmem:[#allocation3 + $0x74] sm:$0xf] %vm2923, %v2886
      %2954 = vst.msk [vmem:[#allocation3 + $0x78] sm:$0xf] %vm2923, %v2888
      %2955 = vst.msk [vmem:[#allocation3 + $0x7c] sm:$0xf] %vm2923, %v2890
      %s2956 = scalar_lea.vmem [#allocation2], 24
      %v2957 = vld [vmem:[%s2956] sm:$0xf]
      %v2958 = vld [vmem:[%s2956 + $0x4] sm:$0xf]
      %v2959 = vld [vmem:[%s2956 + $0xc] sm:$0xf]
      %v2960 = vld [vmem:[%s2956 + $0x10] sm:$0xf]
      %v2961 = vld [vmem:[%s2956 + $0x18] sm:$0xf]
      %v2962 = vld [vmem:[%s2956 + $0x1c] sm:$0xf]
      %v2963 = vld [vmem:[%s2956 + $0x24] sm:$0xf]
      %v2964 = vld [vmem:[%s2956 + $0x28] sm:$0xf]
      %v2965 = vld [vmem:[%s2956 + $0x30] sm:$0xf]
      %v2966 = vld [vmem:[%s2956 + $0x34] sm:$0xf]
      %v2967 = vld [vmem:[%s2956 + $0x3c] sm:$0xf]
      %v2968 = vld [vmem:[%s2956 + $0x40] sm:$0xf]
      %v2969 = vld [vmem:[%s2956 + $0x48] sm:$0xf]
      %v2970 = vld [vmem:[%s2956 + $0x4c] sm:$0xf]
      %v2971 = vld [vmem:[%s2956 + $0x54] sm:$0xf]
      %v2972 = vld [vmem:[%s2956 + $0x58] sm:$0xf]
      %v2973 = vld [vmem:[%s2956 + $0x60] sm:$0xf]
      %v2974 = vld [vmem:[%s2956 + $0x64] sm:$0xf]
      %v2975 = vld [vmem:[%s2956 + $0x6c] sm:$0xf]
      %v2976 = vld [vmem:[%s2956 + $0x70] sm:$0xf]
      %v2977 = vld [vmem:[%s2956 + $0x78] sm:$0xf]
      %v2978 = vld [vmem:[%s2956 + $0x7c] sm:$0xf]
      %v2979 = vld [vmem:[%s2956 + $0x84] sm:$0xf]
      %v2980 = vld [vmem:[%s2956 + $0x88] sm:$0xf]
      %v2981 = vld [vmem:[%s2956 + $0x90] sm:$0xf]
      %v2982 = vld [vmem:[%s2956 + $0x94] sm:$0xf]
      %v2983 = vld [vmem:[%s2956 + $0x9c] sm:$0xf]
      %v2984 = vld [vmem:[%s2956 + $0xa0] sm:$0xf]
      %v2985 = vld [vmem:[%s2956 + $0xa8] sm:$0xf]
      %v2986 = vld [vmem:[%s2956 + $0xac] sm:$0xf]
      %v2987 = vld [vmem:[%s2956 + $0xb4] sm:$0xf]
      %v2988 = vld [vmem:[%s2956 + $0xb8] sm:$0xf]
      %3021 = vrot.lane.b32.xlu0 %v2957, 24
      %v3022 = vpop.permute.xlu0 %3021
      %3023 = vrot.lane.b32.xlu0 %v2958, 24
      %v3024 = vpop.permute.xlu0 %3023
      %3025 = vrot.lane.b32.xlu0 %v2959, 24
      %v3026 = vpop.permute.xlu0 %3025
      %3027 = vrot.lane.b32.xlu0 %v2960, 24
      %v3028 = vpop.permute.xlu0 %3027
      %3029 = vrot.lane.b32.xlu0 %v2961, 24
      %v3030 = vpop.permute.xlu0 %3029
      %3031 = vrot.lane.b32.xlu0 %v2962, 24
      %v3032 = vpop.permute.xlu0 %3031
      %3033 = vrot.lane.b32.xlu0 %v2963, 24
      %v3034 = vpop.permute.xlu0 %3033
      %3035 = vrot.lane.b32.xlu0 %v2964, 24
      %v3036 = vpop.permute.xlu0 %3035
      %3037 = vrot.lane.b32.xlu0 %v2965, 24
      %v3038 = vpop.permute.xlu0 %3037
      %3039 = vrot.lane.b32.xlu0 %v2966, 24
      %v3040 = vpop.permute.xlu0 %3039
      %3041 = vrot.lane.b32.xlu0 %v2967, 24
      %v3042 = vpop.permute.xlu0 %3041
      %3043 = vrot.lane.b32.xlu0 %v2968, 24
      %v3044 = vpop.permute.xlu0 %3043
      %3045 = vrot.lane.b32.xlu0 %v2969, 24
      %v3046 = vpop.permute.xlu0 %3045
      %3047 = vrot.lane.b32.xlu0 %v2970, 24
      %v3048 = vpop.permute.xlu0 %3047
      %3049 = vrot.lane.b32.xlu0 %v2971, 24
      %v3050 = vpop.permute.xlu0 %3049
      %3051 = vrot.lane.b32.xlu0 %v2972, 24
      %v3052 = vpop.permute.xlu0 %3051
      %3053 = vrot.lane.b32.xlu0 %v2973, 24
      %v3054 = vpop.permute.xlu0 %3053
      %3055 = vrot.lane.b32.xlu0 %v2974, 24
      %v3056 = vpop.permute.xlu0 %3055
      %3057 = vrot.lane.b32.xlu0 %v2975, 24
      %v3058 = vpop.permute.xlu0 %3057
      %3059 = vrot.lane.b32.xlu0 %v2976, 24
      %v3060 = vpop.permute.xlu0 %3059
      %3061 = vrot.lane.b32.xlu0 %v2977, 24
      %v3062 = vpop.permute.xlu0 %3061
      %3063 = vrot.lane.b32.xlu0 %v2978, 24
      %v3064 = vpop.permute.xlu0 %3063
      %3065 = vrot.lane.b32.xlu0 %v2979, 24
      %v3066 = vpop.permute.xlu0 %3065
      %3067 = vrot.lane.b32.xlu0 %v2980, 24
      %v3068 = vpop.permute.xlu0 %3067
      %3069 = vrot.lane.b32.xlu0 %v2981, 24
      %v3070 = vpop.permute.xlu0 %3069
      %3071 = vrot.lane.b32.xlu0 %v2982, 24
      %v3072 = vpop.permute.xlu0 %3071
      %3073 = vrot.lane.b32.xlu0 %v2983, 24
      %v3074 = vpop.permute.xlu0 %3073
      %3075 = vrot.lane.b32.xlu0 %v2984, 24
      %v3076 = vpop.permute.xlu0 %3075
      %3077 = vrot.lane.b32.xlu0 %v2985, 24
      %v3078 = vpop.permute.xlu0 %3077
      %3079 = vrot.lane.b32.xlu0 %v2986, 24
      %v3080 = vpop.permute.xlu0 %3079
      %3081 = vrot.lane.b32.xlu0 %v2987, 24
      %v3082 = vpop.permute.xlu0 %3081
      %3083 = vrot.lane.b32.xlu0 %v2988, 24
      %v3084 = vpop.permute.xlu0 %3083
      %vm3117 = vcmask 224448
      %3118 = vst.msk [vmem:[#allocation3] sm:$0xf] %vm3117, %v3022
      %3119 = vst.msk [vmem:[#allocation3 + $0x4] sm:$0xf] %vm3117, %v3024
      %3120 = vst.msk [vmem:[#allocation3 + $0x8] sm:$0xf] %vm3117, %v3026
      %3121 = vst.msk [vmem:[#allocation3 + $0xc] sm:$0xf] %vm3117, %v3028
      %3122 = vst.msk [vmem:[#allocation3 + $0x10] sm:$0xf] %vm3117, %v3030
      %3123 = vst.msk [vmem:[#allocation3 + $0x14] sm:$0xf] %vm3117, %v3032
      %3124 = vst.msk [vmem:[#allocation3 + $0x18] sm:$0xf] %vm3117, %v3034
      %3125 = vst.msk [vmem:[#allocation3 + $0x1c] sm:$0xf] %vm3117, %v3036
      %3126 = vst.msk [vmem:[#allocation3 + $0x20] sm:$0xf] %vm3117, %v3038
      %3127 = vst.msk [vmem:[#allocation3 + $0x24] sm:$0xf] %vm3117, %v3040
      %3128 = vst.msk [vmem:[#allocation3 + $0x28] sm:$0xf] %vm3117, %v3042
      %3129 = vst.msk [vmem:[#allocation3 + $0x2c] sm:$0xf] %vm3117, %v3044
      %3130 = vst.msk [vmem:[#allocation3 + $0x30] sm:$0xf] %vm3117, %v3046
      %3131 = vst.msk [vmem:[#allocation3 + $0x34] sm:$0xf] %vm3117, %v3048
      %3132 = vst.msk [vmem:[#allocation3 + $0x38] sm:$0xf] %vm3117, %v3050
      %3133 = vst.msk [vmem:[#allocation3 + $0x3c] sm:$0xf] %vm3117, %v3052
      %3134 = vst.msk [vmem:[#allocation3 + $0x40] sm:$0xf] %vm3117, %v3054
      %3135 = vst.msk [vmem:[#allocation3 + $0x44] sm:$0xf] %vm3117, %v3056
      %3136 = vst.msk [vmem:[#allocation3 + $0x48] sm:$0xf] %vm3117, %v3058
      %3137 = vst.msk [vmem:[#allocation3 + $0x4c] sm:$0xf] %vm3117, %v3060
      %3138 = vst.msk [vmem:[#allocation3 + $0x50] sm:$0xf] %vm3117, %v3062
      %3139 = vst.msk [vmem:[#allocation3 + $0x54] sm:$0xf] %vm3117, %v3064
      %3140 = vst.msk [vmem:[#allocation3 + $0x58] sm:$0xf] %vm3117, %v3066
      %3141 = vst.msk [vmem:[#allocation3 + $0x5c] sm:$0xf] %vm3117, %v3068
      %3142 = vst.msk [vmem:[#allocation3 + $0x60] sm:$0xf] %vm3117, %v3070
      %3143 = vst.msk [vmem:[#allocation3 + $0x64] sm:$0xf] %vm3117, %v3072
      %3144 = vst.msk [vmem:[#allocation3 + $0x68] sm:$0xf] %vm3117, %v3074
      %3145 = vst.msk [vmem:[#allocation3 + $0x6c] sm:$0xf] %vm3117, %v3076
      %3146 = vst.msk [vmem:[#allocation3 + $0x70] sm:$0xf] %vm3117, %v3078
      %3147 = vst.msk [vmem:[#allocation3 + $0x74] sm:$0xf] %vm3117, %v3080
      %3148 = vst.msk [vmem:[#allocation3 + $0x78] sm:$0xf] %vm3117, %v3082
      %3149 = vst.msk [vmem:[#allocation3 + $0x7c] sm:$0xf] %vm3117, %v3084
      %v3150 = vld [vmem:[%s2956] sm:$0xf]
      %v3151 = vld [vmem:[%s2956 + $0x4] sm:$0xf]
      %v3152 = vld [vmem:[%s2956 + $0x8] sm:$0x1]
      %v3153 = vld [vmem:[%s2956 + $0xc] sm:$0xf]
      %v3154 = vld [vmem:[%s2956 + $0x10] sm:$0xf]
      %v3155 = vld [vmem:[%s2956 + $0x14] sm:$0x1]
      %v3156 = vld [vmem:[%s2956 + $0x18] sm:$0xf]
      %v3157 = vld [vmem:[%s2956 + $0x1c] sm:$0xf]
      %v3158 = vld [vmem:[%s2956 + $0x20] sm:$0x1]
      %v3159 = vld [vmem:[%s2956 + $0x24] sm:$0xf]
      %v3160 = vld [vmem:[%s2956 + $0x28] sm:$0xf]
      %v3161 = vld [vmem:[%s2956 + $0x2c] sm:$0x1]
      %v3162 = vld [vmem:[%s2956 + $0x30] sm:$0xf]
      %v3163 = vld [vmem:[%s2956 + $0x34] sm:$0xf]
      %v3164 = vld [vmem:[%s2956 + $0x38] sm:$0x1]
      %v3165 = vld [vmem:[%s2956 + $0x3c] sm:$0xf]
      %v3166 = vld [vmem:[%s2956 + $0x40] sm:$0xf]
      %v3167 = vld [vmem:[%s2956 + $0x44] sm:$0x1]
      %v3168 = vld [vmem:[%s2956 + $0x48] sm:$0xf]
      %v3169 = vld [vmem:[%s2956 + $0x4c] sm:$0xf]
      %v3170 = vld [vmem:[%s2956 + $0x50] sm:$0x1]
      %v3171 = vld [vmem:[%s2956 + $0x54] sm:$0xf]
      %v3172 = vld [vmem:[%s2956 + $0x58] sm:$0xf]
      %v3173 = vld [vmem:[%s2956 + $0x5c] sm:$0x1]
      %v3174 = vld [vmem:[%s2956 + $0x60] sm:$0xf]
      %v3175 = vld [vmem:[%s2956 + $0x64] sm:$0xf]
      %v3176 = vld [vmem:[%s2956 + $0x68] sm:$0x1]
      %v3177 = vld [vmem:[%s2956 + $0x6c] sm:$0xf]
      %v3178 = vld [vmem:[%s2956 + $0x70] sm:$0xf]
      %v3179 = vld [vmem:[%s2956 + $0x74] sm:$0x1]
      %v3180 = vld [vmem:[%s2956 + $0x78] sm:$0xf]
      %v3181 = vld [vmem:[%s2956 + $0x7c] sm:$0xf]
      %v3182 = vld [vmem:[%s2956 + $0x80] sm:$0x1]
      %v3183 = vld [vmem:[%s2956 + $0x84] sm:$0xf]
      %v3184 = vld [vmem:[%s2956 + $0x88] sm:$0xf]
      %v3185 = vld [vmem:[%s2956 + $0x8c] sm:$0x1]
      %v3186 = vld [vmem:[%s2956 + $0x90] sm:$0xf]
      %v3187 = vld [vmem:[%s2956 + $0x94] sm:$0xf]
      %v3188 = vld [vmem:[%s2956 + $0x98] sm:$0x1]
      %v3189 = vld [vmem:[%s2956 + $0x9c] sm:$0xf]
      %v3190 = vld [vmem:[%s2956 + $0xa0] sm:$0xf]
      %v3191 = vld [vmem:[%s2956 + $0xa4] sm:$0x1]
      %v3192 = vld [vmem:[%s2956 + $0xa8] sm:$0xf]
      %v3193 = vld [vmem:[%s2956 + $0xac] sm:$0xf]
      %v3194 = vld [vmem:[%s2956 + $0xb0] sm:$0x1]
      %v3195 = vld [vmem:[%s2956 + $0xb4] sm:$0xf]
      %v3196 = vld [vmem:[%s2956 + $0xb8] sm:$0xf]
      %v3197 = vld [vmem:[%s2956 + $0xbc] sm:$0x1]
      %v3199 = vshrl.u32 %v3150, 16
      %v3201 = vrot.slane %v3199, 4
      %v3202 = vshll.u32 %v3150, 16
      %v3204 = vrot.slane %v3202, 5
      %v3205 = vor.u32 %v3201, %v3204
      %v3206 = vrot.slane %v3205, 4
      %v3208 = vshll.u32 %v3151, 16
      %v3210 = vrot.slane %v3208, 5
      %v3211 = vsel %vm1011, %v3206, %v3210
      %v3212 = vshrl.u32 %v3151, 16
      %v3214 = vrot.slane %v3212, 4
      %v3215 = vor.u32 %v3214, %v3210
      %v3216 = vrot.slane %v3215, 4
      %v3218 = vshll.u32 %v3152, 16
      %v3220 = vrot.slane %v3218, 5
      %v3221 = vsel %vm1011, %v3216, %v3220
      %v3223 = vshrl.u32 %v3153, 16
      %v3225 = vrot.slane %v3223, 4
      %v3226 = vshll.u32 %v3153, 16
      %v3228 = vrot.slane %v3226, 5
      %v3229 = vor.u32 %v3225, %v3228
      %v3230 = vrot.slane %v3229, 4
      %v3232 = vshll.u32 %v3154, 16
      %v3234 = vrot.slane %v3232, 5
      %v3235 = vsel %vm1011, %v3230, %v3234
      %v3236 = vshrl.u32 %v3154, 16
      %v3238 = vrot.slane %v3236, 4
      %v3239 = vor.u32 %v3238, %v3234
      %v3240 = vrot.slane %v3239, 4
      %v3242 = vshll.u32 %v3155, 16
      %v3244 = vrot.slane %v3242, 5
      %v3245 = vsel %vm1011, %v3240, %v3244
      %v3247 = vshrl.u32 %v3156, 16
      %v3249 = vrot.slane %v3247, 4
      %v3250 = vshll.u32 %v3156, 16
      %v3252 = vrot.slane %v3250, 5
      %v3253 = vor.u32 %v3249, %v3252
      %v3254 = vrot.slane %v3253, 4
      %v3256 = vshll.u32 %v3157, 16
      %v3258 = vrot.slane %v3256, 5
      %v3259 = vsel %vm1011, %v3254, %v3258
      %v3260 = vshrl.u32 %v3157, 16
      %v3262 = vrot.slane %v3260, 4
      %v3263 = vor.u32 %v3262, %v3258
      %v3264 = vrot.slane %v3263, 4
      %v3266 = vshll.u32 %v3158, 16
      %v3268 = vrot.slane %v3266, 5
      %v3269 = vsel %vm1011, %v3264, %v3268
      %v3271 = vshrl.u32 %v3159, 16
      %v3273 = vrot.slane %v3271, 4
      %v3274 = vshll.u32 %v3159, 16
      %v3276 = vrot.slane %v3274, 5
      %v3277 = vor.u32 %v3273, %v3276
      %v3278 = vrot.slane %v3277, 4
      %v3280 = vshll.u32 %v3160, 16
      %v3282 = vrot.slane %v3280, 5
      %v3283 = vsel %vm1011, %v3278, %v3282
      %v3284 = vshrl.u32 %v3160, 16
      %v3286 = vrot.slane %v3284, 4
      %v3287 = vor.u32 %v3286, %v3282
      %v3288 = vrot.slane %v3287, 4
      %v3290 = vshll.u32 %v3161, 16
      %v3292 = vrot.slane %v3290, 5
      %v3293 = vsel %vm1011, %v3288, %v3292
      %v3295 = vshrl.u32 %v3162, 16
      %v3297 = vrot.slane %v3295, 4
      %v3298 = vshll.u32 %v3162, 16
      %v3300 = vrot.slane %v3298, 5
      %v3301 = vor.u32 %v3297, %v3300
      %v3302 = vrot.slane %v3301, 4
      %v3304 = vshll.u32 %v3163, 16
      %v3306 = vrot.slane %v3304, 5
      %v3307 = vsel %vm1011, %v3302, %v3306
      %v3308 = vshrl.u32 %v3163, 16
      %v3310 = vrot.slane %v3308, 4
      %v3311 = vor.u32 %v3310, %v3306
      %v3312 = vrot.slane %v3311, 4
      %v3314 = vshll.u32 %v3164, 16
      %v3316 = vrot.slane %v3314, 5
      %v3317 = vsel %vm1011, %v3312, %v3316
      %v3319 = vshrl.u32 %v3165, 16
      %v3321 = vrot.slane %v3319, 4
      %v3322 = vshll.u32 %v3165, 16
      %v3324 = vrot.slane %v3322, 5
      %v3325 = vor.u32 %v3321, %v3324
      %v3326 = vrot.slane %v3325, 4
      %v3328 = vshll.u32 %v3166, 16
      %v3330 = vrot.slane %v3328, 5
      %v3331 = vsel %vm1011, %v3326, %v3330
      %v3332 = vshrl.u32 %v3166, 16
      %v3334 = vrot.slane %v3332, 4
      %v3335 = vor.u32 %v3334, %v3330
      %v3336 = vrot.slane %v3335, 4
      %v3338 = vshll.u32 %v3167, 16
      %v3340 = vrot.slane %v3338, 5
      %v3341 = vsel %vm1011, %v3336, %v3340
      %v3343 = vshrl.u32 %v3168, 16
      %v3345 = vrot.slane %v3343, 4
      %v3346 = vshll.u32 %v3168, 16
      %v3348 = vrot.slane %v3346, 5
      %v3349 = vor.u32 %v3345, %v3348
      %v3350 = vrot.slane %v3349, 4
      %v3352 = vshll.u32 %v3169, 16
      %v3354 = vrot.slane %v3352, 5
      %v3355 = vsel %vm1011, %v3350, %v3354
      %v3356 = vshrl.u32 %v3169, 16
      %v3358 = vrot.slane %v3356, 4
      %v3359 = vor.u32 %v3358, %v3354
      %v3360 = vrot.slane %v3359, 4
      %v3362 = vshll.u32 %v3170, 16
      %v3364 = vrot.slane %v3362, 5
      %v3365 = vsel %vm1011, %v3360, %v3364
      %v3367 = vshrl.u32 %v3171, 16
      %v3369 = vrot.slane %v3367, 4
      %v3370 = vshll.u32 %v3171, 16
      %v3372 = vrot.slane %v3370, 5
      %v3373 = vor.u32 %v3369, %v3372
      %v3374 = vrot.slane %v3373, 4
      %v3376 = vshll.u32 %v3172, 16
      %v3378 = vrot.slane %v3376, 5
      %v3379 = vsel %vm1011, %v3374, %v3378
      %v3380 = vshrl.u32 %v3172, 16
      %v3382 = vrot.slane %v3380, 4
      %v3383 = vor.u32 %v3382, %v3378
      %v3384 = vrot.slane %v3383, 4
      %v3386 = vshll.u32 %v3173, 16
      %v3388 = vrot.slane %v3386, 5
      %v3389 = vsel %vm1011, %v3384, %v3388
      %v3391 = vshrl.u32 %v3174, 16
      %v3393 = vrot.slane %v3391, 4
      %v3394 = vshll.u32 %v3174, 16
      %v3396 = vrot.slane %v3394, 5
      %v3397 = vor.u32 %v3393, %v3396
      %v3398 = vrot.slane %v3397, 4
      %v3400 = vshll.u32 %v3175, 16
      %v3402 = vrot.slane %v3400, 5
      %v3403 = vsel %vm1011, %v3398, %v3402
      %v3404 = vshrl.u32 %v3175, 16
      %v3406 = vrot.slane %v3404, 4
      %v3407 = vor.u32 %v3406, %v3402
      %v3408 = vrot.slane %v3407, 4
      %v3410 = vshll.u32 %v3176, 16
      %v3412 = vrot.slane %v3410, 5
      %v3413 = vsel %vm1011, %v3408, %v3412
      %v3415 = vshrl.u32 %v3177, 16
      %v3417 = vrot.slane %v3415, 4
      %v3418 = vshll.u32 %v3177, 16
      %v3420 = vrot.slane %v3418, 5
      %v3421 = vor.u32 %v3417, %v3420
      %v3422 = vrot.slane %v3421, 4
      %v3424 = vshll.u32 %v3178, 16
      %v3426 = vrot.slane %v3424, 5
      %v3427 = vsel %vm1011, %v3422, %v3426
      %v3428 = vshrl.u32 %v3178, 16
      %v3430 = vrot.slane %v3428, 4
      %v3431 = vor.u32 %v3430, %v3426
      %v3432 = vrot.slane %v3431, 4
      %v3434 = vshll.u32 %v3179, 16
      %v3436 = vrot.slane %v3434, 5
      %v3437 = vsel %vm1011, %v3432, %v3436
      %v3439 = vshrl.u32 %v3180, 16
      %v3441 = vrot.slane %v3439, 4
      %v3442 = vshll.u32 %v3180, 16
      %v3444 = vrot.slane %v3442, 5
      %v3445 = vor.u32 %v3441, %v3444
      %v3446 = vrot.slane %v3445, 4
      %v3448 = vshll.u32 %v3181, 16
      %v3450 = vrot.slane %v3448, 5
      %v3451 = vsel %vm1011, %v3446, %v3450
      %v3452 = vshrl.u32 %v3181, 16
      %v3454 = vrot.slane %v3452, 4
      %v3455 = vor.u32 %v3454, %v3450
      %v3456 = vrot.slane %v3455, 4
      %v3458 = vshll.u32 %v3182, 16
      %v3460 = vrot.slane %v3458, 5
      %v3461 = vsel %vm1011, %v3456, %v3460
      %v3463 = vshrl.u32 %v3183, 16
      %v3465 = vrot.slane %v3463, 4
      %v3466 = vshll.u32 %v3183, 16
      %v3468 = vrot.slane %v3466, 5
      %v3469 = vor.u32 %v3465, %v3468
      %v3470 = vrot.slane %v3469, 4
      %v3472 = vshll.u32 %v3184, 16
      %v3474 = vrot.slane %v3472, 5
      %v3475 = vsel %vm1011, %v3470, %v3474
      %v3476 = vshrl.u32 %v3184, 16
      %v3478 = vrot.slane %v3476, 4
      %v3479 = vor.u32 %v3478, %v3474
      %v3480 = vrot.slane %v3479, 4
      %v3482 = vshll.u32 %v3185, 16
      %v3484 = vrot.slane %v3482, 5
      %v3485 = vsel %vm1011, %v3480, %v3484
      %v3487 = vshrl.u32 %v3186, 16
      %v3489 = vrot.slane %v3487, 4
      %v3490 = vshll.u32 %v3186, 16
      %v3492 = vrot.slane %v3490, 5
      %v3493 = vor.u32 %v3489, %v3492
      %v3494 = vrot.slane %v3493, 4
      %v3496 = vshll.u32 %v3187, 16
      %v3498 = vrot.slane %v3496, 5
      %v3499 = vsel %vm1011, %v3494, %v3498
      %v3500 = vshrl.u32 %v3187, 16
      %v3502 = vrot.slane %v3500, 4
      %v3503 = vor.u32 %v3502, %v3498
      %v3504 = vrot.slane %v3503, 4
      %v3506 = vshll.u32 %v3188, 16
      %v3508 = vrot.slane %v3506, 5
      %v3509 = vsel %vm1011, %v3504, %v3508
      %v3511 = vshrl.u32 %v3189, 16
      %v3513 = vrot.slane %v3511, 4
      %v3514 = vshll.u32 %v3189, 16
      %v3516 = vrot.slane %v3514, 5
      %v3517 = vor.u32 %v3513, %v3516
      %v3518 = vrot.slane %v3517, 4
      %v3520 = vshll.u32 %v3190, 16
      %v3522 = vrot.slane %v3520, 5
      %v3523 = vsel %vm1011, %v3518, %v3522
      %v3524 = vshrl.u32 %v3190, 16
      %v3526 = vrot.slane %v3524, 4
      %v3527 = vor.u32 %v3526, %v3522
      %v3528 = vrot.slane %v3527, 4
      %v3530 = vshll.u32 %v3191, 16
      %v3532 = vrot.slane %v3530, 5
      %v3533 = vsel %vm1011, %v3528, %v3532
      %v3535 = vshrl.u32 %v3192, 16
      %v3537 = vrot.slane %v3535, 4
      %v3538 = vshll.u32 %v3192, 16
      %v3540 = vrot.slane %v3538, 5
      %v3541 = vor.u32 %v3537, %v3540
      %v3542 = vrot.slane %v3541, 4
      %v3544 = vshll.u32 %v3193, 16
      %v3546 = vrot.slane %v3544, 5
      %v3547 = vsel %vm1011, %v3542, %v3546
      %v3548 = vshrl.u32 %v3193, 16
      %v3550 = vrot.slane %v3548, 4
      %v3551 = vor.u32 %v3550, %v3546
      %v3552 = vrot.slane %v3551, 4
      %v3554 = vshll.u32 %v3194, 16
      %v3556 = vrot.slane %v3554, 5
      %v3557 = vsel %vm1011, %v3552, %v3556
      %v3559 = vshrl.u32 %v3195, 16
      %v3561 = vrot.slane %v3559, 4
      %v3562 = vshll.u32 %v3195, 16
      %v3564 = vrot.slane %v3562, 5
      %v3565 = vor.u32 %v3561, %v3564
      %v3566 = vrot.slane %v3565, 4
      %v3568 = vshll.u32 %v3196, 16
      %v3570 = vrot.slane %v3568, 5
      %v3571 = vsel %vm1011, %v3566, %v3570
      %v3572 = vshrl.u32 %v3196, 16
      %v3574 = vrot.slane %v3572, 4
      %v3575 = vor.u32 %v3574, %v3570
      %v3576 = vrot.slane %v3575, 4
      %v3578 = vshll.u32 %v3197, 16
      %v3580 = vrot.slane %v3578, 5
      %v3581 = vsel %vm1011, %v3576, %v3580
      %3582 = vrot.lane.b32.xlu0 %v3211, 28
      %v3583 = vpop.permute.xlu0 %3582
      %3584 = vrot.lane.b32.xlu0 %v3221, 28
      %v3585 = vpop.permute.xlu0 %3584
      %3586 = vrot.lane.b32.xlu0 %v3235, 28
      %v3587 = vpop.permute.xlu0 %3586
      %3588 = vrot.lane.b32.xlu0 %v3245, 28
      %v3589 = vpop.permute.xlu0 %3588
      %3590 = vrot.lane.b32.xlu0 %v3259, 28
      %v3591 = vpop.permute.xlu0 %3590
      %3592 = vrot.lane.b32.xlu0 %v3269, 28
      %v3593 = vpop.permute.xlu0 %3592
      %3594 = vrot.lane.b32.xlu0 %v3283, 28
      %v3595 = vpop.permute.xlu0 %3594
      %3596 = vrot.lane.b32.xlu0 %v3293, 28
      %v3597 = vpop.permute.xlu0 %3596
      %3598 = vrot.lane.b32.xlu0 %v3307, 28
      %v3599 = vpop.permute.xlu0 %3598
      %3600 = vrot.lane.b32.xlu0 %v3317, 28
      %v3601 = vpop.permute.xlu0 %3600
      %3602 = vrot.lane.b32.xlu0 %v3331, 28
      %v3603 = vpop.permute.xlu0 %3602
      %3604 = vrot.lane.b32.xlu0 %v3341, 28
      %v3605 = vpop.permute.xlu0 %3604
      %3606 = vrot.lane.b32.xlu0 %v3355, 28
      %v3607 = vpop.permute.xlu0 %3606
      %3608 = vrot.lane.b32.xlu0 %v3365, 28
      %v3609 = vpop.permute.xlu0 %3608
      %3610 = vrot.lane.b32.xlu0 %v3379, 28
      %v3611 = vpop.permute.xlu0 %3610
      %3612 = vrot.lane.b32.xlu0 %v3389, 28
      %v3613 = vpop.permute.xlu0 %3612
      %3614 = vrot.lane.b32.xlu0 %v3403, 28
      %v3615 = vpop.permute.xlu0 %3614
      %3616 = vrot.lane.b32.xlu0 %v3413, 28
      %v3617 = vpop.permute.xlu0 %3616
      %3618 = vrot.lane.b32.xlu0 %v3427, 28
      %v3619 = vpop.permute.xlu0 %3618
      %3620 = vrot.lane.b32.xlu0 %v3437, 28
      %v3621 = vpop.permute.xlu0 %3620
      %3622 = vrot.lane.b32.xlu0 %v3451, 28
      %v3623 = vpop.permute.xlu0 %3622
      %3624 = vrot.lane.b32.xlu0 %v3461, 28
      %v3625 = vpop.permute.xlu0 %3624
      %3626 = vrot.lane.b32.xlu0 %v3475, 28
      %v3627 = vpop.permute.xlu0 %3626
      %3628 = vrot.lane.b32.xlu0 %v3485, 28
      %v3629 = vpop.permute.xlu0 %3628
      %3630 = vrot.lane.b32.xlu0 %v3499, 28
      %v3631 = vpop.permute.xlu0 %3630
      %3632 = vrot.lane.b32.xlu0 %v3509, 28
      %v3633 = vpop.permute.xlu0 %3632
      %3634 = vrot.lane.b32.xlu0 %v3523, 28
      %v3635 = vpop.permute.xlu0 %3634
      %3636 = vrot.lane.b32.xlu0 %v3533, 28
      %v3637 = vpop.permute.xlu0 %3636
      %3638 = vrot.lane.b32.xlu0 %v3547, 28
      %v3639 = vpop.permute.xlu0 %3638
      %3640 = vrot.lane.b32.xlu0 %v3557, 28
      %v3641 = vpop.permute.xlu0 %3640
      %3642 = vrot.lane.b32.xlu0 %v3571, 28
      %v3643 = vpop.permute.xlu0 %3642
      %3644 = vrot.lane.b32.xlu0 %v3581, 28
      %v3645 = vpop.permute.xlu0 %3644
      %vm3678 = vcmask 257248
      %3679 = vst.msk [vmem:[#allocation3] sm:$0xf] %vm3678, %v3583
      %3680 = vst.msk [vmem:[#allocation3 + $0x4] sm:$0xf] %vm3678, %v3585
      %3681 = vst.msk [vmem:[#allocation3 + $0x8] sm:$0xf] %vm3678, %v3587
      %3682 = vst.msk [vmem:[#allocation3 + $0xc] sm:$0xf] %vm3678, %v3589
      %3683 = vst.msk [vmem:[#allocation3 + $0x10] sm:$0xf] %vm3678, %v3591
      %3684 = vst.msk [vmem:[#allocation3 + $0x14] sm:$0xf] %vm3678, %v3593
      %3685 = vst.msk [vmem:[#allocation3 + $0x18] sm:$0xf] %vm3678, %v3595
      %3686 = vst.msk [vmem:[#allocation3 + $0x1c] sm:$0xf] %vm3678, %v3597
      %3687 = vst.msk [vmem:[#allocation3 + $0x20] sm:$0xf] %vm3678, %v3599
      %3688 = vst.msk [vmem:[#allocation3 + $0x24] sm:$0xf] %vm3678, %v3601
      %3689 = vst.msk [vmem:[#allocation3 + $0x28] sm:$0xf] %vm3678, %v3603
      %3690 = vst.msk [vmem:[#allocation3 + $0x2c] sm:$0xf] %vm3678, %v3605
      %3691 = vst.msk [vmem:[#allocation3 + $0x30] sm:$0xf] %vm3678, %v3607
      %3692 = vst.msk [vmem:[#allocation3 + $0x34] sm:$0xf] %vm3678, %v3609
      %3693 = vst.msk [vmem:[#allocation3 + $0x38] sm:$0xf] %vm3678, %v3611
      %3694 = vst.msk [vmem:[#allocation3 + $0x3c] sm:$0xf] %vm3678, %v3613
      %3695 = vst.msk [vmem:[#allocation3 + $0x40] sm:$0xf] %vm3678, %v3615
      %3696 = vst.msk [vmem:[#allocation3 + $0x44] sm:$0xf] %vm3678, %v3617
      %3697 = vst.msk [vmem:[#allocation3 + $0x48] sm:$0xf] %vm3678, %v3619
      %3698 = vst.msk [vmem:[#allocation3 + $0x4c] sm:$0xf] %vm3678, %v3621
      %3699 = vst.msk [vmem:[#allocation3 + $0x50] sm:$0xf] %vm3678, %v3623
      %3700 = vst.msk [vmem:[#allocation3 + $0x54] sm:$0xf] %vm3678, %v3625
      %3701 = vst.msk [vmem:[#allocation3 + $0x58] sm:$0xf] %vm3678, %v3627
      %3702 = vst.msk [vmem:[#allocation3 + $0x5c] sm:$0xf] %vm3678, %v3629
      %3703 = vst.msk [vmem:[#allocation3 + $0x60] sm:$0xf] %vm3678, %v3631
      %3704 = vst.msk [vmem:[#allocation3 + $0x64] sm:$0xf] %vm3678, %v3633
      %3705 = vst.msk [vmem:[#allocation3 + $0x68] sm:$0xf] %vm3678, %v3635
      %3706 = vst.msk [vmem:[#allocation3 + $0x6c] sm:$0xf] %vm3678, %v3637
      %3707 = vst.msk [vmem:[#allocation3 + $0x70] sm:$0xf] %vm3678, %v3639
      %3708 = vst.msk [vmem:[#allocation3 + $0x74] sm:$0xf] %vm3678, %v3641
      %3709 = vst.msk [vmem:[#allocation3 + $0x78] sm:$0xf] %vm3678, %v3643
      %3710 = vst.msk [vmem:[#allocation3 + $0x7c] sm:$0xf] %vm3678, %v3645
      %v3711 = vld [vmem:[%s2956] sm:$0xe]
      %v3712 = vld [vmem:[%s2956 + $0x4] sm:$0xf]
      %v3713 = vld [vmem:[%s2956 + $0x8] sm:$0x1]
      %v3714 = vld [vmem:[%s2956 + $0xc] sm:$0xe]
      %v3715 = vld [vmem:[%s2956 + $0x10] sm:$0xf]
      %v3716 = vld [vmem:[%s2956 + $0x14] sm:$0x1]
      %v3717 = vld [vmem:[%s2956 + $0x18] sm:$0xe]
      %v3718 = vld [vmem:[%s2956 + $0x1c] sm:$0xf]
      %v3719 = vld [vmem:[%s2956 + $0x20] sm:$0x1]
      %v3720 = vld [vmem:[%s2956 + $0x24] sm:$0xe]
      %v3721 = vld [vmem:[%s2956 + $0x28] sm:$0xf]
      %v3722 = vld [vmem:[%s2956 + $0x2c] sm:$0x1]
      %v3723 = vld [vmem:[%s2956 + $0x30] sm:$0xe]
      %v3724 = vld [vmem:[%s2956 + $0x34] sm:$0xf]
      %v3725 = vld [vmem:[%s2956 + $0x38] sm:$0x1]
      %v3726 = vld [vmem:[%s2956 + $0x3c] sm:$0xe]
      %v3727 = vld [vmem:[%s2956 + $0x40] sm:$0xf]
      %v3728 = vld [vmem:[%s2956 + $0x44] sm:$0x1]
      %v3729 = vld [vmem:[%s2956 + $0x48] sm:$0xe]
      %v3730 = vld [vmem:[%s2956 + $0x4c] sm:$0xf]
      %v3731 = vld [vmem:[%s2956 + $0x50] sm:$0x1]
      %v3732 = vld [vmem:[%s2956 + $0x54] sm:$0xe]
      %v3733 = vld [vmem:[%s2956 + $0x58] sm:$0xf]
      %v3734 = vld [vmem:[%s2956 + $0x5c] sm:$0x1]
      %v3735 = vld [vmem:[%s2956 + $0x60] sm:$0xe]
      %v3736 = vld [vmem:[%s2956 + $0x64] sm:$0xf]
      %v3737 = vld [vmem:[%s2956 + $0x68] sm:$0x1]
      %v3738 = vld [vmem:[%s2956 + $0x6c] sm:$0xe]
      %v3739 = vld [vmem:[%s2956 + $0x70] sm:$0xf]
      %v3740 = vld [vmem:[%s2956 + $0x74] sm:$0x1]
      %v3741 = vld [vmem:[%s2956 + $0x78] sm:$0xe]
      %v3742 = vld [vmem:[%s2956 + $0x7c] sm:$0xf]
      %v3743 = vld [vmem:[%s2956 + $0x80] sm:$0x1]
      %v3744 = vld [vmem:[%s2956 + $0x84] sm:$0xe]
      %v3745 = vld [vmem:[%s2956 + $0x88] sm:$0xf]
      %v3746 = vld [vmem:[%s2956 + $0x8c] sm:$0x1]
      %v3747 = vld [vmem:[%s2956 + $0x90] sm:$0xe]
      %v3748 = vld [vmem:[%s2956 + $0x94] sm:$0xf]
      %v3749 = vld [vmem:[%s2956 + $0x98] sm:$0x1]
      %v3750 = vld [vmem:[%s2956 + $0x9c] sm:$0xe]
      %v3751 = vld [vmem:[%s2956 + $0xa0] sm:$0xf]
      %v3752 = vld [vmem:[%s2956 + $0xa4] sm:$0x1]
      %v3753 = vld [vmem:[%s2956 + $0xa8] sm:$0xe]
      %v3754 = vld [vmem:[%s2956 + $0xac] sm:$0xf]
      %v3755 = vld [vmem:[%s2956 + $0xb0] sm:$0x1]
      %v3756 = vld [vmem:[%s2956 + $0xb4] sm:$0xe]
      %v3757 = vld [vmem:[%s2956 + $0xb8] sm:$0xf]
      %v3758 = vld [vmem:[%s2956 + $0xbc] sm:$0x1]
      %v3807 = vrot.slane %v3711, 5
      %v3808 = vrot.slane %v3807, 4
      %v3809 = vrot.slane %v3712, 5
      %v3810 = vsel %vm1623, %v3808, %v3809
      %v3811 = vrot.slane %v3809, 4
      %v3812 = vrot.slane %v3713, 5
      %v3813 = vsel %vm1623, %v3811, %v3812
      %v3814 = vrot.slane %v3714, 5
      %v3815 = vrot.slane %v3814, 4
      %v3816 = vrot.slane %v3715, 5
      %v3817 = vsel %vm1623, %v3815, %v3816
      %v3818 = vrot.slane %v3816, 4
      %v3819 = vrot.slane %v3716, 5
      %v3820 = vsel %vm1623, %v3818, %v3819
      %v3821 = vrot.slane %v3717, 5
      %v3822 = vrot.slane %v3821, 4
      %v3823 = vrot.slane %v3718, 5
      %v3824 = vsel %vm1623, %v3822, %v3823
      %v3825 = vrot.slane %v3823, 4
      %v3826 = vrot.slane %v3719, 5
      %v3827 = vsel %vm1623, %v3825, %v3826
      %v3828 = vrot.slane %v3720, 5
      %v3829 = vrot.slane %v3828, 4
      %v3830 = vrot.slane %v3721, 5
      %v3831 = vsel %vm1623, %v3829, %v3830
      %v3832 = vrot.slane %v3830, 4
      %v3833 = vrot.slane %v3722, 5
      %v3834 = vsel %vm1623, %v3832, %v3833
      %v3835 = vrot.slane %v3723, 5
      %v3836 = vrot.slane %v3835, 4
      %v3837 = vrot.slane %v3724, 5
      %v3838 = vsel %vm1623, %v3836, %v3837
      %v3839 = vrot.slane %v3837, 4
      %v3840 = vrot.slane %v3725, 5
      %v3841 = vsel %vm1623, %v3839, %v3840
      %v3842 = vrot.slane %v3726, 5
      %v3843 = vrot.slane %v3842, 4
      %v3844 = vrot.slane %v3727, 5
      %v3845 = vsel %vm1623, %v3843, %v3844
      %v3846 = vrot.slane %v3844, 4
      %v3847 = vrot.slane %v3728, 5
      %v3848 = vsel %vm1623, %v3846, %v3847
      %v3849 = vrot.slane %v3729, 5
      %v3850 = vrot.slane %v3849, 4
      %v3851 = vrot.slane %v3730, 5
      %v3852 = vsel %vm1623, %v3850, %v3851
      %v3853 = vrot.slane %v3851, 4
      %v3854 = vrot.slane %v3731, 5
      %v3855 = vsel %vm1623, %v3853, %v3854
      %v3856 = vrot.slane %v3732, 5
      %v3857 = vrot.slane %v3856, 4
      %v3858 = vrot.slane %v3733, 5
      %v3859 = vsel %vm1623, %v3857, %v3858
      %v3860 = vrot.slane %v3858, 4
      %v3861 = vrot.slane %v3734, 5
      %v3862 = vsel %vm1623, %v3860, %v3861
      %v3863 = vrot.slane %v3735, 5
      %v3864 = vrot.slane %v3863, 4
      %v3865 = vrot.slane %v3736, 5
      %v3866 = vsel %vm1623, %v3864, %v3865
      %v3867 = vrot.slane %v3865, 4
      %v3868 = vrot.slane %v3737, 5
      %v3869 = vsel %vm1623, %v3867, %v3868
      %v3870 = vrot.slane %v3738, 5
      %v3871 = vrot.slane %v3870, 4
      %v3872 = vrot.slane %v3739, 5
      %v3873 = vsel %vm1623, %v3871, %v3872
      %v3874 = vrot.slane %v3872, 4
      %v3875 = vrot.slane %v3740, 5
      %v3876 = vsel %vm1623, %v3874, %v3875
      %v3877 = vrot.slane %v3741, 5
      %v3878 = vrot.slane %v3877, 4
      %v3879 = vrot.slane %v3742, 5
      %v3880 = vsel %vm1623, %v3878, %v3879
      %v3881 = vrot.slane %v3879, 4
      %v3882 = vrot.slane %v3743, 5
      %v3883 = vsel %vm1623, %v3881, %v3882
      %v3884 = vrot.slane %v3744, 5
      %v3885 = vrot.slane %v3884, 4
      %v3886 = vrot.slane %v3745, 5
      %v3887 = vsel %vm1623, %v3885, %v3886
      %v3888 = vrot.slane %v3886, 4
      %v3889 = vrot.slane %v3746, 5
      %v3890 = vsel %vm1623, %v3888, %v3889
      %v3891 = vrot.slane %v3747, 5
      %v3892 = vrot.slane %v3891, 4
      %v3893 = vrot.slane %v3748, 5
      %v3894 = vsel %vm1623, %v3892, %v3893
      %v3895 = vrot.slane %v3893, 4
      %v3896 = vrot.slane %v3749, 5
      %v3897 = vsel %vm1623, %v3895, %v3896
      %v3898 = vrot.slane %v3750, 5
      %v3899 = vrot.slane %v3898, 4
      %v3900 = vrot.slane %v3751, 5
      %v3901 = vsel %vm1623, %v3899, %v3900
      %v3902 = vrot.slane %v3900, 4
      %v3903 = vrot.slane %v3752, 5
      %v3904 = vsel %vm1623, %v3902, %v3903
      %v3905 = vrot.slane %v3753, 5
      %v3906 = vrot.slane %v3905, 4
      %v3907 = vrot.slane %v3754, 5
      %v3908 = vsel %vm1623, %v3906, %v3907
      %v3909 = vrot.slane %v3907, 4
      %v3910 = vrot.slane %v3755, 5
      %v3911 = vsel %vm1623, %v3909, %v3910
      %v3912 = vrot.slane %v3756, 5
      %v3913 = vrot.slane %v3912, 4
      %v3914 = vrot.slane %v3757, 5
      %v3915 = vsel %vm1623, %v3913, %v3914
      %v3916 = vrot.slane %v3914, 4
      %v3917 = vrot.slane %v3758, 5
      %v3918 = vsel %vm1623, %v3916, %v3917
      %3919 = vrot.lane.b32.xlu0 %v3810, 32
      %v3920 = vpop.permute.xlu0 %3919
      %3921 = vrot.lane.b32.xlu0 %v3813, 32
      %v3922 = vpop.permute.xlu0 %3921
      %3923 = vrot.lane.b32.xlu0 %v3817, 32
      %v3924 = vpop.permute.xlu0 %3923
      %3925 = vrot.lane.b32.xlu0 %v3820, 32
      %v3926 = vpop.permute.xlu0 %3925
      %3927 = vrot.lane.b32.xlu0 %v3824, 32
      %v3928 = vpop.permute.xlu0 %3927
      %3929 = vrot.lane.b32.xlu0 %v3827, 32
      %v3930 = vpop.permute.xlu0 %3929
      %3931 = vrot.lane.b32.xlu0 %v3831, 32
      %v3932 = vpop.permute.xlu0 %3931
      %3933 = vrot.lane.b32.xlu0 %v3834, 32
      %v3934 = vpop.permute.xlu0 %3933
      %3935 = vrot.lane.b32.xlu0 %v3838, 32
      %v3936 = vpop.permute.xlu0 %3935
      %3937 = vrot.lane.b32.xlu0 %v3841, 32
      %v3938 = vpop.permute.xlu0 %3937
      %3939 = vrot.lane.b32.xlu0 %v3845, 32
      %v3940 = vpop.permute.xlu0 %3939
      %3941 = vrot.lane.b32.xlu0 %v3848, 32
      %v3942 = vpop.permute.xlu0 %3941
      %3943 = vrot.lane.b32.xlu0 %v3852, 32
      %v3944 = vpop.permute.xlu0 %3943
      %3945 = vrot.lane.b32.xlu0 %v3855, 32
      %v3946 = vpop.permute.xlu0 %3945
      %3947 = vrot.lane.b32.xlu0 %v3859, 32
      %v3948 = vpop.permute.xlu0 %3947
      %3949 = vrot.lane.b32.xlu0 %v3862, 32
      %v3950 = vpop.permute.xlu0 %3949
      %3951 = vrot.lane.b32.xlu0 %v3866, 32
      %v3952 = vpop.permute.xlu0 %3951
      %3953 = vrot.lane.b32.xlu0 %v3869, 32
      %v3954 = vpop.permute.xlu0 %3953
      %3955 = vrot.lane.b32.xlu0 %v3873, 32
      %v3956 = vpop.permute.xlu0 %3955
      %3957 = vrot.lane.b32.xlu0 %v3876, 32
      %v3958 = vpop.permute.xlu0 %3957
      %3959 = vrot.lane.b32.xlu0 %v3880, 32
      %v3960 = vpop.permute.xlu0 %3959
      %3961 = vrot.lane.b32.xlu0 %v3883, 32
      %v3962 = vpop.permute.xlu0 %3961
      %3963 = vrot.lane.b32.xlu0 %v3887, 32
      %v3964 = vpop.permute.xlu0 %3963
      %3965 = vrot.lane.b32.xlu0 %v3890, 32
      %v3966 = vpop.permute.xlu0 %3965
      %3967 = vrot.lane.b32.xlu0 %v3894, 32
      %v3968 = vpop.permute.xlu0 %3967
      %3969 = vrot.lane.b32.xlu0 %v3897, 32
      %v3970 = vpop.permute.xlu0 %3969
      %3971 = vrot.lane.b32.xlu0 %v3901, 32
      %v3972 = vpop.permute.xlu0 %3971
      %3973 = vrot.lane.b32.xlu0 %v3904, 32
      %v3974 = vpop.permute.xlu0 %3973
      %3975 = vrot.lane.b32.xlu0 %v3908, 32
      %v3976 = vpop.permute.xlu0 %3975
      %3977 = vrot.lane.b32.xlu0 %v3911, 32
      %v3978 = vpop.permute.xlu0 %3977
      %3979 = vrot.lane.b32.xlu0 %v3915, 32
      %v3980 = vpop.permute.xlu0 %3979
      %3981 = vrot.lane.b32.xlu0 %v3918, 32
      %v3982 = vpop.permute.xlu0 %3981
      %vm4015 = vcmask 290048
      %4016 = vst.msk [vmem:[#allocation3] sm:$0xf] %vm4015, %v3920
      %4017 = vst.msk [vmem:[#allocation3 + $0x4] sm:$0xf] %vm4015, %v3922
      %4018 = vst.msk [vmem:[#allocation3 + $0x8] sm:$0xf] %vm4015, %v3924
      %4019 = vst.msk [vmem:[#allocation3 + $0xc] sm:$0xf] %vm4015, %v3926
      %4020 = vst.msk [vmem:[#allocation3 + $0x10] sm:$0xf] %vm4015, %v3928
      %4021 = vst.msk [vmem:[#allocation3 + $0x14] sm:$0xf] %vm4015, %v3930
      %4022 = vst.msk [vmem:[#allocation3 + $0x18] sm:$0xf] %vm4015, %v3932
      %4023 = vst.msk [vmem:[#allocation3 + $0x1c] sm:$0xf] %vm4015, %v3934
      %4024 = vst.msk [vmem:[#allocation3 + $0x20] sm:$0xf] %vm4015, %v3936
      %4025 = vst.msk [vmem:[#allocation3 + $0x24] sm:$0xf] %vm4015, %v3938
      %4026 = vst.msk [vmem:[#allocation3 + $0x28] sm:$0xf] %vm4015, %v3940
      %4027 = vst.msk [vmem:[#allocation3 + $0x2c] sm:$0xf] %vm4015, %v3942
      %4028 = vst.msk [vmem:[#allocation3 + $0x30] sm:$0xf] %vm4015, %v3944
      %4029 = vst.msk [vmem:[#allocation3 + $0x34] sm:$0xf] %vm4015, %v3946
      %4030 = vst.msk [vmem:[#allocation3 + $0x38] sm:$0xf] %vm4015, %v3948
      %4031 = vst.msk [vmem:[#allocation3 + $0x3c] sm:$0xf] %vm4015, %v3950
      %4032 = vst.msk [vmem:[#allocation3 + $0x40] sm:$0xf] %vm4015, %v3952
      %4033 = vst.msk [vmem:[#allocation3 + $0x44] sm:$0xf] %vm4015, %v3954
      %4034 = vst.msk [vmem:[#allocation3 + $0x48] sm:$0xf] %vm4015, %v3956
      %4035 = vst.msk [vmem:[#allocation3 + $0x4c] sm:$0xf] %vm4015, %v3958
      %4036 = vst.msk [vmem:[#allocation3 + $0x50] sm:$0xf] %vm4015, %v3960
      %4037 = vst.msk [vmem:[#allocation3 + $0x54] sm:$0xf] %vm4015, %v3962
      %4038 = vst.msk [vmem:[#allocation3 + $0x58] sm:$0xf] %vm4015, %v3964
      %4039 = vst.msk [vmem:[#allocation3 + $0x5c] sm:$0xf] %vm4015, %v3966
      %4040 = vst.msk [vmem:[#allocation3 + $0x60] sm:$0xf] %vm4015, %v3968
      %4041 = vst.msk [vmem:[#allocation3 + $0x64] sm:$0xf] %vm4015, %v3970
      %4042 = vst.msk [vmem:[#allocation3 + $0x68] sm:$0xf] %vm4015, %v3972
      %4043 = vst.msk [vmem:[#allocation3 + $0x6c] sm:$0xf] %vm4015, %v3974
      %4044 = vst.msk [vmem:[#allocation3 + $0x70] sm:$0xf] %vm4015, %v3976
      %4045 = vst.msk [vmem:[#allocation3 + $0x74] sm:$0xf] %vm4015, %v3978
      %4046 = vst.msk [vmem:[#allocation3 + $0x78] sm:$0xf] %vm4015, %v3980
      %4047 = vst.msk [vmem:[#allocation3 + $0x7c] sm:$0xf] %vm4015, %v3982
      %v4048 = vld [vmem:[%s3] sm:$0xf]
      %v4049 = vld [vmem:[%s3 + $0x4] sm:$0xf]
      %v4050 = vld [vmem:[%s3 + $0x8] sm:$0xf]
      %v4051 = vld [vmem:[%s3 + $0xc] sm:$0xf]
      %v4052 = vld [vmem:[%s3 + $0x10] sm:$0x3]
      %v4053 = vld [vmem:[%s4] sm:$0x1]
      %v4054 = vld [vmem:[#allocation3] sm:$0xf]
      %v4055 = vld [vmem:[#allocation3 + $0x4] sm:$0xf]
      %v4056 = vld [vmem:[#allocation3 + $0x8] sm:$0xf]
      %v4057 = vld [vmem:[#allocation3 + $0xc] sm:$0xf]
      %v4058 = vld [vmem:[#allocation3 + $0x10] sm:$0xf]
      %v4059 = vld [vmem:[#allocation3 + $0x14] sm:$0xf]
      %v4060 = vld [vmem:[#allocation3 + $0x18] sm:$0xf]
      %v4061 = vld [vmem:[#allocation3 + $0x1c] sm:$0xf]
      %v4062 = vld [vmem:[#allocation3 + $0x20] sm:$0xf]
      %v4063 = vld [vmem:[#allocation3 + $0x24] sm:$0xf]
      %v4064 = vld [vmem:[#allocation3 + $0x28] sm:$0xf]
      %v4065 = vld [vmem:[#allocation3 + $0x2c] sm:$0xf]
      %v4066 = vld [vmem:[#allocation3 + $0x30] sm:$0xf]
      %v4067 = vld [vmem:[#allocation3 + $0x34] sm:$0xf]
      %v4068 = vld [vmem:[#allocation3 + $0x38] sm:$0xf]
      %v4069 = vld [vmem:[#allocation3 + $0x3c] sm:$0xf]
      %v4071 = vperm.slane %v4053, 0
      %v4089 = vunpack.c.l.b16 %v4054
      %v4090 = vunpack.c.l.b16 %v4055
      %v4091 = vunpack.c.l.b16 %v4056
      %v4092 = vunpack.c.l.b16 %v4057
      %v4093 = vunpack.c.l.b16 %v4058
      %v4094 = vunpack.c.l.b16 %v4059
      %v4095 = vunpack.c.l.b16 %v4060
      %v4096 = vunpack.c.l.b16 %v4061
      %v4097 = vunpack.c.l.b16 %v4062
      %v4098 = vunpack.c.l.b16 %v4063
      %v4099 = vunpack.c.l.b16 %v4064
      %v4100 = vunpack.c.l.b16 %v4065
      %v4101 = vunpack.c.l.b16 %v4066
      %v4102 = vunpack.c.l.b16 %v4067
      %v4103 = vunpack.c.l.b16 %v4068
      %v4104 = vunpack.c.l.b16 %v4069
      %v4105 = vpack.c.b16 %v4090, %v4089
      %v4106 = vpack.c.b16 %v4092, %v4091
      %v4107 = vpack.c.b16 %v4094, %v4093
      %v4108 = vpack.c.b16 %v4096, %v4095
      %v4109 = vpack.c.b16 %v4098, %v4097
      %v4110 = vpack.c.b16 %v4100, %v4099
      %v4111 = vpack.c.b16 %v4102, %v4101
      %v4112 = vpack.c.b16 %v4104, %v4103
      %v4118 = vunpack.c.l.b16 %v4048
      %v4119 = vunpack.c.l.b16 %v4049
      %v4120 = vunpack.c.l.b16 %v4050
      %v4121 = vunpack.c.l.b16 %v4051
      %v4122 = vunpack.c.l.b16 %v4052
      %v4123 = vpack.c.b16 %v4119, %v4118
      %v4124 = vpack.c.b16 %v4121, %v4120
      %v4125 = vpack.c.b16 %v4122, %v4122
      %vm4128 = vcmask 293888
      %v4130 = vsel %vm4128, %v4105, 0
      %v4133 = vsel %vm4128, %v4106, 0
      %v4136 = vsel %vm4128, %v4107, 0
      %v4139 = vsel %vm4128, %v4108, 0
      %v4142 = vsel %vm4128, %v4109, 0
      %v4145 = vsel %vm4128, %v4110, 0
      %v4148 = vsel %vm4128, %v4111, 0
      %v4151 = vsel %vm4128, %v4112, 0
      %vm4153 = vcmask 1041408
      %v4155 = vsel %vm4153, %v4125, 0
      %4157 = vmatpush.bf16.msra.mxu0 0
      %4158 = vmatpush.bf16.msra.mxu0 0
      %4159 = vmatpush.bf16.msra.mxu0 0
      %4160 = vmatpush.bf16.msra.mxu0 0
      %4161 = vmatpush.bf16.msra.mxu0 0
      %4162 = vmatpush.bf16.msra.mxu0 %v4155
      %4163 = vmatpush.bf16.msra.mxu0 %v4124
      %4164 = vmatpush.bf16.msra.mxu0 %v4123
      %4165 = vmatmul.bf16.gmra.mxu0 %v4130
      %v4166 = vpop.f32.mrf.mxu0
      %v4167 = vadd.f32 %v4071, %v4166
      %v4168 = vpop.f32.mrf.mxu0
      %v4169 = vadd.f32 %v4071, %v4168
      %4170 = vmatmul.bf16.gmra.mxu0 %v4133
      %v4171 = vpop.f32.mrf.mxu0
      %v4172 = vadd.f32 %v4071, %v4171
      %v4173 = vpop.f32.mrf.mxu0
      %v4174 = vadd.f32 %v4071, %v4173
      %4175 = vmatmul.bf16.gmra.mxu0 %v4136
      %v4176 = vpop.f32.mrf.mxu0
      %v4177 = vadd.f32 %v4071, %v4176
      %v4178 = vpop.f32.mrf.mxu0
      %v4179 = vadd.f32 %v4071, %v4178
      %4180 = vmatmul.bf16.gmra.mxu0 %v4139
      %v4181 = vpop.f32.mrf.mxu0
      %v4182 = vadd.f32 %v4071, %v4181
      %v4183 = vpop.f32.mrf.mxu0
      %v4184 = vadd.f32 %v4071, %v4183
      %4185 = vmatmul.bf16.gmra.mxu0 %v4142
      %v4186 = vpop.f32.mrf.mxu0
      %v4187 = vadd.f32 %v4071, %v4186
      %v4188 = vpop.f32.mrf.mxu0
      %v4189 = vadd.f32 %v4071, %v4188
      %4190 = vmatmul.bf16.gmra.mxu0 %v4145
      %v4191 = vpop.f32.mrf.mxu0
      %v4192 = vadd.f32 %v4071, %v4191
      %v4193 = vpop.f32.mrf.mxu0
      %v4194 = vadd.f32 %v4071, %v4193
      %4195 = vmatmul.bf16.gmra.mxu0 %v4148
      %v4196 = vpop.f32.mrf.mxu0
      %v4197 = vadd.f32 %v4071, %v4196
      %v4198 = vpop.f32.mrf.mxu0
      %v4199 = vadd.f32 %v4071, %v4198
      %4200 = vmatmul.bf16.gmra.mxu0 %v4151
      %v4201 = vpop.f32.mrf.mxu0
      %v4202 = vadd.f32 %v4071, %v4201
      %v4203 = vpop.f32.mrf.mxu0
      %v4204 = vadd.f32 %v4071, %v4203
      %4205 = vdwg.mxu0
      %vm4206 = vcmp.gt.f32.partialorder %v4167, 0.0
      %vm4207 = vcmp.gt.f32.partialorder %v4169, 0.0
      %vm4208 = vcmp.gt.f32.partialorder %v4172, 0.0
      %vm4209 = vcmp.gt.f32.partialorder %v4174, 0.0
      %vm4210 = vcmp.gt.f32.partialorder %v4177, 0.0
      %vm4211 = vcmp.gt.f32.partialorder %v4179, 0.0
      %vm4212 = vcmp.gt.f32.partialorder %v4182, 0.0
      %vm4213 = vcmp.gt.f32.partialorder %v4184, 0.0
      %vm4214 = vcmp.gt.f32.partialorder %v4187, 0.0
      %vm4215 = vcmp.gt.f32.partialorder %v4189, 0.0
      %vm4216 = vcmp.gt.f32.partialorder %v4192, 0.0
      %vm4217 = vcmp.gt.f32.partialorder %v4194, 0.0
      %vm4218 = vcmp.gt.f32.partialorder %v4197, 0.0
      %vm4219 = vcmp.gt.f32.partialorder %v4199, 0.0
      %vm4220 = vcmp.gt.f32.partialorder %v4202, 0.0
      %vm4221 = vcmp.gt.f32.partialorder %v4204, 0.0
      %v4222 = vmin.f32 %v4167, 0.0
      %v4223 = vmin.f32 %v4169, 0.0
      %v4224 = vmin.f32 %v4172, 0.0
      %v4225 = vmin.f32 %v4174, 0.0
      %v4226 = vmin.f32 %v4177, 0.0
      %v4227 = vmin.f32 %v4179, 0.0
      %v4228 = vmin.f32 %v4182, 0.0
      %v4229 = vmin.f32 %v4184, 0.0
      %v4230 = vmin.f32 %v4187, 0.0
      %v4231 = vmin.f32 %v4189, 0.0
      %v4232 = vmin.f32 %v4192, 0.0
      %v4233 = vmin.f32 %v4194, 0.0
      %v4234 = vmin.f32 %v4197, 0.0
      %v4235 = vmin.f32 %v4199, 0.0
      %v4236 = vmin.f32 %v4202, 0.0
      %v4237 = vmin.f32 %v4204, 0.0
      %v4238 = vmul.f32 %v4222, 1.442695
      %v4239 = vpow.pop %v4238
      %v4240 = vmul.f32 %v4223, 1.442695
      %v4241 = vpow.pop %v4240
      %v4242 = vmul.f32 %v4224, 1.442695
      %v4243 = vpow.pop %v4242
      %v4244 = vmul.f32 %v4225, 1.442695
      %v4245 = vpow.pop %v4244
      %v4246 = vmul.f32 %v4226, 1.442695
      %v4247 = vpow.pop %v4246
      %v4248 = vmul.f32 %v4227, 1.442695
      %v4249 = vpow.pop %v4248
      %v4250 = vmul.f32 %v4228, 1.442695
      %v4251 = vpow.pop %v4250
      %v4252 = vmul.f32 %v4229, 1.442695
      %v4253 = vpow.pop %v4252
      %v4254 = vmul.f32 %v4230, 1.442695
      %v4255 = vpow.pop %v4254
      %v4256 = vmul.f32 %v4231, 1.442695
      %v4257 = vpow.pop %v4256
      %v4258 = vmul.f32 %v4232, 1.442695
      %v4259 = vpow.pop %v4258
      %v4260 = vmul.f32 %v4233, 1.442695
      %v4261 = vpow.pop %v4260
      %v4262 = vmul.f32 %v4234, 1.442695
      %v4263 = vpow.pop %v4262
      %v4264 = vmul.f32 %v4235, 1.442695
      %v4265 = vpow.pop %v4264
      %v4266 = vmul.f32 %v4236, 1.442695
      %v4267 = vpow.pop %v4266
      %v4268 = vmul.f32 %v4237, 1.442695
      %v4269 = vpow.pop %v4268
      %v4270 = vsub.f32 %v4239, 1.0
      %v4271 = vsub.f32 %v4241, 1.0
      %v4272 = vsub.f32 %v4243, 1.0
      %v4273 = vsub.f32 %v4245, 1.0
      %v4274 = vsub.f32 %v4247, 1.0
      %v4275 = vsub.f32 %v4249, 1.0
      %v4276 = vsub.f32 %v4251, 1.0
      %v4277 = vsub.f32 %v4253, 1.0
      %v4278 = vsub.f32 %v4255, 1.0
      %v4279 = vsub.f32 %v4257, 1.0
      %v4280 = vsub.f32 %v4259, 1.0
      %v4281 = vsub.f32 %v4261, 1.0
      %v4282 = vsub.f32 %v4263, 1.0
      %v4283 = vsub.f32 %v4265, 1.0
      %v4284 = vsub.f32 %v4267, 1.0
      %v4285 = vsub.f32 %v4269, 1.0
      %v4286 = vsel %vm4206, %v4167, %v4270
      %v4287 = vsel %vm4207, %v4169, %v4271
      %v4288 = vsel %vm4208, %v4172, %v4272
      %v4289 = vsel %vm4209, %v4174, %v4273
      %v4290 = vsel %vm4210, %v4177, %v4274
      %v4291 = vsel %vm4211, %v4179, %v4275
      %v4292 = vsel %vm4212, %v4182, %v4276
      %v4293 = vsel %vm4213, %v4184, %v4277
      %v4294 = vsel %vm4214, %v4187, %v4278
      %v4295 = vsel %vm4215, %v4189, %v4279
      %v4296 = vsel %vm4216, %v4192, %v4280
      %v4297 = vsel %vm4217, %v4194, %v4281
      %v4298 = vsel %vm4218, %v4197, %v4282
      %v4299 = vsel %vm4219, %v4199, %v4283
      %v4300 = vsel %vm4220, %v4202, %v4284
      %v4301 = vsel %vm4221, %v4204, %v4285
      %v4302 = vadd.f32 %v4286, %v4287
      %v4303 = vadd.f32 %v4302, %v4288
      %v4304 = vadd.f32 %v4303, %v4289
      %v4305 = vadd.f32 %v4304, %v4290
      %v4306 = vadd.f32 %v4305, %v4291
      %v4307 = vadd.f32 %v4306, %v4292
      %v4308 = vadd.f32 %v4307, %v4293
      %v4309 = vadd.f32 %v4308, %v4294
      %v4310 = vadd.f32 %v4309, %v4295
      %v4311 = vadd.f32 %v4310, %v4296
      %v4312 = vadd.f32 %v4311, %v4297
      %v4313 = vadd.f32 %v4312, %v4298
      %v4314 = vadd.f32 %v4313, %v4299
      %v4315 = vadd.f32 %v4314, %v4300
      %v4316 = vadd.f32 %v4315, %v4301
      %v4317 = vrot.slane %v4316, 4
      %v4318 = vadd.f32 %v4316, %v4317
      %v4319 = vrot.slane %v4318, 2
      %v4320 = vadd.f32 %v4318, %v4319
      %v4321 = vrot.slane %v4320, 1
      %v4322 = vadd.f32 %v4320, %v4321
      %v4323 = vadd.f32 %v4322, 0.0
      %v4324 = vmul.f32 %v4286, %v4286
      %v4325 = vmul.f32 %v4287, %v4287
      %v4326 = vmul.f32 %v4288, %v4288
      %v4327 = vmul.f32 %v4289, %v4289
      %v4328 = vmul.f32 %v4290, %v4290
      %v4329 = vmul.f32 %v4291, %v4291
      %v4330 = vmul.f32 %v4292, %v4292
      %v4331 = vmul.f32 %v4293, %v4293
      %v4332 = vmul.f32 %v4294, %v4294
      %v4333 = vmul.f32 %v4295, %v4295
      %v4334 = vmul.f32 %v4296, %v4296
      %v4335 = vmul.f32 %v4297, %v4297
      %v4336 = vmul.f32 %v4298, %v4298
      %v4337 = vmul.f32 %v4299, %v4299
      %v4338 = vmul.f32 %v4300, %v4300
      %v4339 = vmul.f32 %v4301, %v4301
      %v4340 = vadd.f32 %v4324, %v4325
      %v4341 = vadd.f32 %v4340, %v4326
      %v4342 = vadd.f32 %v4341, %v4327
      %v4343 = vadd.f32 %v4342, %v4328
      %v4344 = vadd.f32 %v4343, %v4329
      %v4345 = vadd.f32 %v4344, %v4330
      %v4346 = vadd.f32 %v4345, %v4331
      %v4347 = vadd.f32 %v4346, %v4332
      %v4348 = vadd.f32 %v4347, %v4333
      %v4349 = vadd.f32 %v4348, %v4334
      %v4350 = vadd.f32 %v4349, %v4335
      %v4351 = vadd.f32 %v4350, %v4336
      %v4352 = vadd.f32 %v4351, %v4337
      %v4353 = vadd.f32 %v4352, %v4338
      %v4354 = vadd.f32 %v4353, %v4339
      %v4355 = vrot.slane %v4354, 4
      %v4356 = vadd.f32 %v4354, %v4355
      %v4357 = vrot.slane %v4356, 2
      %v4358 = vadd.f32 %v4356, %v4357
      %v4359 = vrot.slane %v4358, 1
      %v4360 = vadd.f32 %v4358, %v4359
      %v4361 = vadd.f32 %v4360, 0.0
      %v4362 = vpack.c.bf16 %v4286, %v4286
      %v4363 = vpack.c.bf16 %v4287, %v4287
      %v4364 = vpack.c.bf16 %v4288, %v4288
      %v4365 = vpack.c.bf16 %v4289, %v4289
      %v4366 = vpack.c.bf16 %v4290, %v4290
      %v4367 = vpack.c.bf16 %v4291, %v4291
      %v4368 = vpack.c.bf16 %v4292, %v4292
      %v4369 = vpack.c.bf16 %v4293, %v4293
      %v4370 = vpack.c.bf16 %v4294, %v4294
      %v4371 = vpack.c.bf16 %v4295, %v4295
      %v4372 = vpack.c.bf16 %v4296, %v4296
      %v4373 = vpack.c.bf16 %v4297, %v4297
      %v4374 = vpack.c.bf16 %v4298, %v4298
      %v4375 = vpack.c.bf16 %v4299, %v4299
      %v4376 = vpack.c.bf16 %v4300, %v4300
      %v4377 = vpack.c.bf16 %v4301, %v4301
      %vm4378 = vcmask 60416
      %4379 = vst.msk [vmem:[%s258] sm:$0xf] %vm4378, %v4362
      %4380 = vst.msk [vmem:[%s258 + $0x4] sm:$0xf] %vm4378, %v4363
      %4381 = vst.msk [vmem:[%s258 + $0x8] sm:$0xf] %vm4378, %v4364
      %4382 = vst.msk [vmem:[%s258 + $0xc] sm:$0xf] %vm4378, %v4365
      %4383 = vst.msk [vmem:[%s258 + $0x10] sm:$0xf] %vm4378, %v4366
      %4384 = vst.msk [vmem:[%s258 + $0x14] sm:$0xf] %vm4378, %v4367
      %4385 = vst.msk [vmem:[%s258 + $0x18] sm:$0xf] %vm4378, %v4368
      %4386 = vst.msk [vmem:[%s258 + $0x1c] sm:$0xf] %vm4378, %v4369
      %4387 = vst.msk [vmem:[%s258 + $0x20] sm:$0xf] %vm4378, %v4370
      %4388 = vst.msk [vmem:[%s258 + $0x24] sm:$0xf] %vm4378, %v4371
      %4389 = vst.msk [vmem:[%s258 + $0x28] sm:$0xf] %vm4378, %v4372
      %4390 = vst.msk [vmem:[%s258 + $0x2c] sm:$0xf] %vm4378, %v4373
      %4391 = vst.msk [vmem:[%s258 + $0x30] sm:$0xf] %vm4378, %v4374
      %4392 = vst.msk [vmem:[%s258 + $0x34] sm:$0xf] %vm4378, %v4375
      %4393 = vst.msk [vmem:[%s258 + $0x38] sm:$0xf] %vm4378, %v4376
      %4394 = vst.msk [vmem:[%s258 + $0x3c] sm:$0xf] %vm4378, %v4377
      %v4395 = vld [vmem:[#allocation3 + $0x40] sm:$0xf]
      %v4396 = vld [vmem:[#allocation3 + $0x44] sm:$0xf]
      %v4397 = vld [vmem:[#allocation3 + $0x48] sm:$0xf]
      %v4398 = vld [vmem:[#allocation3 + $0x4c] sm:$0xf]
      %v4399 = vld [vmem:[#allocation3 + $0x50] sm:$0xf]
      %v4400 = vld [vmem:[#allocation3 + $0x54] sm:$0xf]
      %v4401 = vld [vmem:[#allocation3 + $0x58] sm:$0xf]
      %v4402 = vld [vmem:[#allocation3 + $0x5c] sm:$0xf]
      %v4403 = vld [vmem:[#allocation3 + $0x60] sm:$0xf]
      %v4404 = vld [vmem:[#allocation3 + $0x64] sm:$0xf]
      %v4405 = vld [vmem:[#allocation3 + $0x68] sm:$0xf]
      %v4406 = vld [vmem:[#allocation3 + $0x6c] sm:$0xf]
      %v4407 = vld [vmem:[#allocation3 + $0x70] sm:$0xf]
      %v4408 = vld [vmem:[#allocation3 + $0x74] sm:$0xf]
      %v4409 = vld [vmem:[#allocation3 + $0x78] sm:$0xf]
      %v4410 = vld [vmem:[#allocation3 + $0x7c] sm:$0xf]
      %v4427 = vunpack.c.l.b16 %v4395
      %v4428 = vunpack.c.l.b16 %v4396
      %v4429 = vunpack.c.l.b16 %v4397
      %v4430 = vunpack.c.l.b16 %v4398
      %v4431 = vunpack.c.l.b16 %v4399
      %v4432 = vunpack.c.l.b16 %v4400
      %v4433 = vunpack.c.l.b16 %v4401
      %v4434 = vunpack.c.l.b16 %v4402
      %v4435 = vunpack.c.l.b16 %v4403
      %v4436 = vunpack.c.l.b16 %v4404
      %v4437 = vunpack.c.l.b16 %v4405
      %v4438 = vunpack.c.l.b16 %v4406
      %v4439 = vunpack.c.l.b16 %v4407
      %v4440 = vunpack.c.l.b16 %v4408
      %v4441 = vunpack.c.l.b16 %v4409
      %v4442 = vunpack.c.l.b16 %v4410
      %v4443 = vpack.c.b16 %v4428, %v4427
      %v4444 = vpack.c.b16 %v4430, %v4429
      %v4445 = vpack.c.b16 %v4432, %v4431
      %v4446 = vpack.c.b16 %v4434, %v4433
      %v4447 = vpack.c.b16 %v4436, %v4435
      %v4448 = vpack.c.b16 %v4438, %v4437
      %v4449 = vpack.c.b16 %v4440, %v4439
      %v4450 = vpack.c.b16 %v4442, %v4441
      %v4452 = vsel %vm4128, %v4443, 0
      %v4455 = vsel %vm4128, %v4444, 0
      %v4458 = vsel %vm4128, %v4445, 0
      %v4461 = vsel %vm4128, %v4446, 0
      %v4464 = vsel %vm4128, %v4447, 0
      %v4467 = vsel %vm4128, %v4448, 0
      %v4470 = vsel %vm4128, %v4449, 0
      %v4473 = vsel %vm4128, %v4450, 0
      %4475 = vmatpush.bf16.msra.mxu0 0
      %4476 = vmatpush.bf16.msra.mxu0 0
      %4477 = vmatpush.bf16.msra.mxu0 0
      %4478 = vmatpush.bf16.msra.mxu0 0
      %4479 = vmatpush.bf16.msra.mxu0 0
      %4480 = vmatpush.bf16.msra.mxu0 %v4155
      %4481 = vmatpush.bf16.msra.mxu0 %v4124
      %4482 = vmatpush.bf16.msra.mxu0 %v4123
      %4483 = vmatmul.bf16.gmra.mxu0 %v4452
      %v4484 = vpop.f32.mrf.mxu0
      %v4485 = vadd.f32 %v4071, %v4484
      %v4486 = vpop.f32.mrf.mxu0
      %v4487 = vadd.f32 %v4071, %v4486
      %4488 = vmatmul.bf16.gmra.mxu0 %v4455
      %v4489 = vpop.f32.mrf.mxu0
      %v4490 = vadd.f32 %v4071, %v4489
      %v4491 = vpop.f32.mrf.mxu0
      %v4492 = vadd.f32 %v4071, %v4491
      %4493 = vmatmul.bf16.gmra.mxu0 %v4458
      %v4494 = vpop.f32.mrf.mxu0
      %v4495 = vadd.f32 %v4071, %v4494
      %v4496 = vpop.f32.mrf.mxu0
      %v4497 = vadd.f32 %v4071, %v4496
      %4498 = vmatmul.bf16.gmra.mxu0 %v4461
      %v4499 = vpop.f32.mrf.mxu0
      %v4500 = vadd.f32 %v4071, %v4499
      %v4501 = vpop.f32.mrf.mxu0
      %v4502 = vadd.f32 %v4071, %v4501
      %4503 = vmatmul.bf16.gmra.mxu0 %v4464
      %v4504 = vpop.f32.mrf.mxu0
      %v4505 = vadd.f32 %v4071, %v4504
      %v4506 = vpop.f32.mrf.mxu0
      %v4507 = vadd.f32 %v4071, %v4506
      %4508 = vmatmul.bf16.gmra.mxu0 %v4467
      %v4509 = vpop.f32.mrf.mxu0
      %v4510 = vadd.f32 %v4071, %v4509
      %v4511 = vpop.f32.mrf.mxu0
      %v4512 = vadd.f32 %v4071, %v4511
      %4513 = vmatmul.bf16.gmra.mxu0 %v4470
      %v4514 = vpop.f32.mrf.mxu0
      %v4515 = vadd.f32 %v4071, %v4514
      %v4516 = vpop.f32.mrf.mxu0
      %v4517 = vadd.f32 %v4071, %v4516
      %4518 = vmatmul.bf16.gmra.mxu0 %v4473
      %v4519 = vpop.f32.mrf.mxu0
      %v4520 = vadd.f32 %v4071, %v4519
      %v4521 = vpop.f32.mrf.mxu0
      %v4522 = vadd.f32 %v4071, %v4521
      %4523 = vdwg.mxu0
      %vm4524 = vcmp.gt.f32.partialorder %v4485, 0.0
      %vm4525 = vcmp.gt.f32.partialorder %v4487, 0.0
      %vm4526 = vcmp.gt.f32.partialorder %v4490, 0.0
      %vm4527 = vcmp.gt.f32.partialorder %v4492, 0.0
      %vm4528 = vcmp.gt.f32.partialorder %v4495, 0.0
      %vm4529 = vcmp.gt.f32.partialorder %v4497, 0.0
      %vm4530 = vcmp.gt.f32.partialorder %v4500, 0.0
      %vm4531 = vcmp.gt.f32.partialorder %v4502, 0.0
      %vm4532 = vcmp.gt.f32.partialorder %v4505, 0.0
      %vm4533 = vcmp.gt.f32.partialorder %v4507, 0.0
      %vm4534 = vcmp.gt.f32.partialorder %v4510, 0.0
      %vm4535 = vcmp.gt.f32.partialorder %v4512, 0.0
      %vm4536 = vcmp.gt.f32.partialorder %v4515, 0.0
      %vm4537 = vcmp.gt.f32.partialorder %v4517, 0.0
      %vm4538 = vcmp.gt.f32.partialorder %v4520, 0.0
      %vm4539 = vcmp.gt.f32.partialorder %v4522, 0.0
      %v4540 = vmin.f32 %v4485, 0.0
      %v4541 = vmin.f32 %v4487, 0.0
      %v4542 = vmin.f32 %v4490, 0.0
      %v4543 = vmin.f32 %v4492, 0.0
      %v4544 = vmin.f32 %v4495, 0.0
      %v4545 = vmin.f32 %v4497, 0.0
      %v4546 = vmin.f32 %v4500, 0.0
      %v4547 = vmin.f32 %v4502, 0.0
      %v4548 = vmin.f32 %v4505, 0.0
      %v4549 = vmin.f32 %v4507, 0.0
      %v4550 = vmin.f32 %v4510, 0.0
      %v4551 = vmin.f32 %v4512, 0.0
      %v4552 = vmin.f32 %v4515, 0.0
      %v4553 = vmin.f32 %v4517, 0.0
      %v4554 = vmin.f32 %v4520, 0.0
      %v4555 = vmin.f32 %v4522, 0.0
      %v4556 = vmul.f32 %v4540, 1.442695
      %v4557 = vpow.pop %v4556
      %v4558 = vmul.f32 %v4541, 1.442695
      %v4559 = vpow.pop %v4558
      %v4560 = vmul.f32 %v4542, 1.442695
      %v4561 = vpow.pop %v4560
      %v4562 = vmul.f32 %v4543, 1.442695
      %v4563 = vpow.pop %v4562
      %v4564 = vmul.f32 %v4544, 1.442695
      %v4565 = vpow.pop %v4564
      %v4566 = vmul.f32 %v4545, 1.442695
      %v4567 = vpow.pop %v4566
      %v4568 = vmul.f32 %v4546, 1.442695
      %v4569 = vpow.pop %v4568
      %v4570 = vmul.f32 %v4547, 1.442695
      %v4571 = vpow.pop %v4570
      %v4572 = vmul.f32 %v4548, 1.442695
      %v4573 = vpow.pop %v4572
      %v4574 = vmul.f32 %v4549, 1.442695
      %v4575 = vpow.pop %v4574
      %v4576 = vmul.f32 %v4550, 1.442695
      %v4577 = vpow.pop %v4576
      %v4578 = vmul.f32 %v4551, 1.442695
      %v4579 = vpow.pop %v4578
      %v4580 = vmul.f32 %v4552, 1.442695
      %v4581 = vpow.pop %v4580
      %v4582 = vmul.f32 %v4553, 1.442695
      %v4583 = vpow.pop %v4582
      %v4584 = vmul.f32 %v4554, 1.442695
      %v4585 = vpow.pop %v4584
      %v4586 = vmul.f32 %v4555, 1.442695
      %v4587 = vpow.pop %v4586
      %v4588 = vsub.f32 %v4557, 1.0
      %v4589 = vsub.f32 %v4559, 1.0
      %v4590 = vsub.f32 %v4561, 1.0
      %v4591 = vsub.f32 %v4563, 1.0
      %v4592 = vsub.f32 %v4565, 1.0
      %v4593 = vsub.f32 %v4567, 1.0
      %v4594 = vsub.f32 %v4569, 1.0
      %v4595 = vsub.f32 %v4571, 1.0
      %v4596 = vsub.f32 %v4573, 1.0
      %v4597 = vsub.f32 %v4575, 1.0
      %v4598 = vsub.f32 %v4577, 1.0
      %v4599 = vsub.f32 %v4579, 1.0
      %v4600 = vsub.f32 %v4581, 1.0
      %v4601 = vsub.f32 %v4583, 1.0
      %v4602 = vsub.f32 %v4585, 1.0
      %v4603 = vsub.f32 %v4587, 1.0
      %v4604 = vsel %vm4524, %v4485, %v4588
      %v4605 = vsel %vm4525, %v4487, %v4589
      %v4606 = vsel %vm4526, %v4490, %v4590
      %v4607 = vsel %vm4527, %v4492, %v4591
      %v4608 = vsel %vm4528, %v4495, %v4592
      %v4609 = vsel %vm4529, %v4497, %v4593
      %v4610 = vsel %vm4530, %v4500, %v4594
      %v4611 = vsel %vm4531, %v4502, %v4595
      %v4612 = vsel %vm4532, %v4505, %v4596
      %v4613 = vsel %vm4533, %v4507, %v4597
      %v4614 = vsel %vm4534, %v4510, %v4598
      %v4615 = vsel %vm4535, %v4512, %v4599
      %v4616 = vsel %vm4536, %v4515, %v4600
      %v4617 = vsel %vm4537, %v4517, %v4601
      %v4618 = vsel %vm4538, %v4520, %v4602
      %v4619 = vsel %vm4539, %v4522, %v4603
      %v4620 = vadd.f32 %v4604, %v4605
      %v4621 = vadd.f32 %v4620, %v4606
      %v4622 = vadd.f32 %v4621, %v4607
      %v4623 = vadd.f32 %v4622, %v4608
      %v4624 = vadd.f32 %v4623, %v4609
      %v4625 = vadd.f32 %v4624, %v4610
      %v4626 = vadd.f32 %v4625, %v4611
      %v4627 = vadd.f32 %v4626, %v4612
      %v4628 = vadd.f32 %v4627, %v4613
      %v4629 = vadd.f32 %v4628, %v4614
      %v4630 = vadd.f32 %v4629, %v4615
      %v4631 = vadd.f32 %v4630, %v4616
      %v4632 = vadd.f32 %v4631, %v4617
      %v4633 = vadd.f32 %v4632, %v4618
      %v4634 = vadd.f32 %v4633, %v4619
      %v4635 = vrot.slane %v4634, 4
      %v4636 = vadd.f32 %v4634, %v4635
      %v4637 = vrot.slane %v4636, 2
      %v4638 = vadd.f32 %v4636, %v4637
      %v4639 = vrot.slane %v4638, 1
      %v4640 = vadd.f32 %v4638, %v4639
      %v4641 = vadd.f32 %v4323, %v4640
      %v4642 = vmul.f32 %v4604, %v4604
      %v4643 = vmul.f32 %v4605, %v4605
      %v4644 = vmul.f32 %v4606, %v4606
      %v4645 = vmul.f32 %v4607, %v4607
      %v4646 = vmul.f32 %v4608, %v4608
      %v4647 = vmul.f32 %v4609, %v4609
      %v4648 = vmul.f32 %v4610, %v4610
      %v4649 = vmul.f32 %v4611, %v4611
      %v4650 = vmul.f32 %v4612, %v4612
      %v4651 = vmul.f32 %v4613, %v4613
      %v4652 = vmul.f32 %v4614, %v4614
      %v4653 = vmul.f32 %v4615, %v4615
      %v4654 = vmul.f32 %v4616, %v4616
      %v4655 = vmul.f32 %v4617, %v4617
      %v4656 = vmul.f32 %v4618, %v4618
      %v4657 = vmul.f32 %v4619, %v4619
      %v4658 = vadd.f32 %v4642, %v4643
      %v4659 = vadd.f32 %v4658, %v4644
      %v4660 = vadd.f32 %v4659, %v4645
      %v4661 = vadd.f32 %v4660, %v4646
      %v4662 = vadd.f32 %v4661, %v4647
      %v4663 = vadd.f32 %v4662, %v4648
      %v4664 = vadd.f32 %v4663, %v4649
      %v4665 = vadd.f32 %v4664, %v4650
      %v4666 = vadd.f32 %v4665, %v4651
      %v4667 = vadd.f32 %v4666, %v4652
      %v4668 = vadd.f32 %v4667, %v4653
      %v4669 = vadd.f32 %v4668, %v4654
      %v4670 = vadd.f32 %v4669, %v4655
      %v4671 = vadd.f32 %v4670, %v4656
      %v4672 = vadd.f32 %v4671, %v4657
      %v4673 = vrot.slane %v4672, 4
      %v4674 = vadd.f32 %v4672, %v4673
      %v4675 = vrot.slane %v4674, 2
      %v4676 = vadd.f32 %v4674, %v4675
      %v4677 = vrot.slane %v4676, 1
      %v4678 = vadd.f32 %v4676, %v4677
      %v4679 = vadd.f32 %v4361, %v4678
      %v4680 = vpack.c.bf16 %v4604, %v4604
      %v4681 = vpack.c.bf16 %v4605, %v4605
      %v4682 = vpack.c.bf16 %v4606, %v4606
      %v4683 = vpack.c.bf16 %v4607, %v4607
      %v4684 = vpack.c.bf16 %v4608, %v4608
      %v4685 = vpack.c.bf16 %v4609, %v4609
      %v4686 = vpack.c.bf16 %v4610, %v4610
      %v4687 = vpack.c.bf16 %v4611, %v4611
      %v4688 = vpack.c.bf16 %v4612, %v4612
      %v4689 = vpack.c.bf16 %v4613, %v4613
      %v4690 = vpack.c.bf16 %v4614, %v4614
      %v4691 = vpack.c.bf16 %v4615, %v4615
      %v4692 = vpack.c.bf16 %v4616, %v4616
      %v4693 = vpack.c.bf16 %v4617, %v4617
      %v4694 = vpack.c.bf16 %v4618, %v4618
      %v4695 = vpack.c.bf16 %v4619, %v4619
      %s4696 = scalar_lea.vmem %s258, 64
      %4697 = vst.msk [vmem:[%s4696] sm:$0xf] %vm4378, %v4680
      %4698 = vst.msk [vmem:[%s4696 + $0x4] sm:$0xf] %vm4378, %v4681
      %4699 = vst.msk [vmem:[%s4696 + $0x8] sm:$0xf] %vm4378, %v4682
      %4700 = vst.msk [vmem:[%s4696 + $0xc] sm:$0xf] %vm4378, %v4683
      %4701 = vst.msk [vmem:[%s4696 + $0x10] sm:$0xf] %vm4378, %v4684
      %4702 = vst.msk [vmem:[%s4696 + $0x14] sm:$0xf] %vm4378, %v4685
      %4703 = vst.msk [vmem:[%s4696 + $0x18] sm:$0xf] %vm4378, %v4686
      %4704 = vst.msk [vmem:[%s4696 + $0x1c] sm:$0xf] %vm4378, %v4687
      %4705 = vst.msk [vmem:[%s4696 + $0x20] sm:$0xf] %vm4378, %v4688
      %4706 = vst.msk [vmem:[%s4696 + $0x24] sm:$0xf] %vm4378, %v4689
      %4707 = vst.msk [vmem:[%s4696 + $0x28] sm:$0xf] %vm4378, %v4690
      %4708 = vst.msk [vmem:[%s4696 + $0x2c] sm:$0xf] %vm4378, %v4691
      %4709 = vst.msk [vmem:[%s4696 + $0x30] sm:$0xf] %vm4378, %v4692
      %4710 = vst.msk [vmem:[%s4696 + $0x34] sm:$0xf] %vm4378, %v4693
      %4711 = vst.msk [vmem:[%s4696 + $0x38] sm:$0xf] %vm4378, %v4694
      %4712 = vst.msk [vmem:[%s4696 + $0x3c] sm:$0xf] %vm4378, %v4695
      %vm4713 = vcmask 1040384
      %v4714 = vsel %vm4713, %v4641, %v4679
      %4715 = vst [vmem:[%s262] sm:$0x3] %v4714
      %p4716 = scmp.lt.s32.totalorder %s18, 1
      %s4717 = scalar_select %p4716, %s18, 1
      %s4718 = smul.addr %s4717, 32
      %s4719 = smul.addr %s4718, 4
      %s4720 = scalar_lea.vmem %s5, %s4719
      %p4721 = scmp.lt.s32.totalorder %s18, 1
      %s4722 = scalar_select %p4721, %s18, 1
      %s4723 = smul.addr %s4722, 2
      %s4724 = scalar_lea.vmem %s6, %s4723
      // Predicated region
      $region41: #{encoder_block_forward.3} parent=39 // pred_check
        %p4725 = pneg %p146
      $region42: #{encoder_block_forward.3} parent=39 // pred_check_branch
        %4727 = sbr.rel (%p4725) target = $region44
      $region43: #{encoder_block_forward.3} parent=39 // pred_region
        _
      $region44: #{encoder_block_forward.3} parent=39 // pred_fallthru
        _
      // Predicated region
      $region45: #{encoder_block_forward.3} parent=39 // pred_check
        %p4728 = pneg %p172
      $region46: #{encoder_block_forward.3} parent=39 // pred_check_branch
        %4730 = sbr.rel (%p4728) target = $region48
      $region47: #{encoder_block_forward.3} parent=39 // pred_region
        _
      $region48: #{encoder_block_forward.3} parent=39 // pred_fallthru
        _
    $region40: #{encoder_block_forward.3} parent=5 // pred_fallthru
      _
    %p4731 = scmp.le.s32.totalorder 2, %s13
    // Predicated region
    $region49: #{encoder_block_forward.3} parent=5 // pred_check
      %p4732 = pneg %p4731
    $region50: #{encoder_block_forward.3} parent=5 // pred_check_branch
      %4734 = sbr.rel (%p4732) target = $region52
    $region51: #{encoder_block_forward.3} parent=5 // pred_region
      %s4735 = ssub.s32 %s13, 2
      // Predicated region
      $region53: #{encoder_block_forward.3} parent=51 // pred_check
        %p4736 = pneg %p152
      $region54: #{encoder_block_forward.3} parent=51 // pred_check_branch
        %4738 = sbr.rel (%p4736) target = $region56
      $region55: #{encoder_block_forward.3} parent=51 // pred_region
        %p4739 = scmp.lt.s32.totalorder %s19, 1
        %s4740 = scalar_select %p4739, %s19, 1
        %s4741 = smul.addr %s4740, 32
        %s4742 = smul.addr %s4741, 4
        %s4743 = scalar_lea.vmem %s5, %s4742
      $region56: #{encoder_block_forward.3} parent=51 // pred_fallthru
        _
      // Predicated region
      $region57: #{encoder_block_forward.3} parent=51 // pred_check
        %p4744 = pneg %p178
      $region58: #{encoder_block_forward.3} parent=51 // pred_check_branch
        %4746 = sbr.rel (%p4744) target = $region60
      $region59: #{encoder_block_forward.3} parent=51 // pred_region
        %p4747 = scmp.lt.s32.totalorder %s19, 1
        %s4748 = scalar_select %p4747, %s19, 1
        %s4749 = smul.addr %s4748, 2
        %s4750 = scalar_lea.vmem %s6, %s4749
      $region60: #{encoder_block_forward.3} parent=51 // pred_fallthru
        _
    $region52: #{encoder_block_forward.3} parent=5 // pred_fallthru
      _
  $region6: #{encoder_block_forward.3} parent=0 // loop_footer
    %s17 = sadd.s32 1, %s13
  $region7: #{encoder_block_forward.3} parent=0 // loop_footer_branch
    %12 = sbr.rel target = $region3
  $region8: #{encoder_block_forward.3} parent=0 // loop_exit
    _

</llo_original>
